<compile_context>
chip_gen: v6e
topology: v6e:2x2x1
jax: 0.10.0
libtpu: 0.0.40
codegen_flags: <defaults>
</compile_context>

<pallas_src>
import functools

import jax
import jax.numpy as jnp
import numpy as np
from jax import lax
from jax.experimental import pallas as pl
from jax.experimental.pallas import tpu as pltpu

HIDDEN = 200          # fixed by the module (self.hidden_size = 200)
HP = 256              # HIDDEN padded to a multiple of 128
GP = 4 * HP           # padded gate width (1024)
OUT_PAD = 128         # recovery output padded to one full lane group


# ---------------------------------------------------------------------------
# Generation-aware tiling policy
# ---------------------------------------------------------------------------
def _round_up(n, m):
    return ((n + m - 1) // m) * m


def _tpu_generation():
    try:
        kind = jax.devices()[0].device_kind.lower()
    except Exception:
        return "unknown"
    if "v7" in kind or "7x" in kind:
        return "v7x"
    if "v6" in kind:
        return "v6e"
    if "v5 lite" in kind or "v5lite" in kind or "v5e" in kind:
        return "v5e"
    return "unknown"


# two_tc      -> split batch into 2 "parallel" blocks only on 2-TC parts (v7x).
# gate_budget -> VMEM budget for the per-block f32 gate scratch (t*b*4 KiB).
# vmem_limit  -> pltpu.CompilerParams(vmem_limit_bytes=...) override.
_GEN_CFG = {
    "v5e":     dict(two_tc=False, gate_budget=6 << 20, vmem_limit=64 << 20),
    "v6e":     dict(two_tc=False, gate_budget=8 << 20, vmem_limit=64 << 20),
    "v7x":     dict(two_tc=True,  gate_budget=4 << 20, vmem_limit=48 << 20),
    "unknown": dict(two_tc=False, gate_budget=2 << 20, vmem_limit=None),
}


def _pick_b_block(bp, cap=1024):
    """Largest multiple-of-16 divisor of bp that is <= cap (bp if bp <= cap)."""
    if bp <= cap:
        return bp
    for d in range(cap, 15, -1):
        if bp % d == 0 and d % 16 == 0:
            return d
    return bp


# ---------------------------------------------------------------------------
# One LSTM layer over a (time_block, batch_block) tile, input projection fused.
#   gates for the whole block = (t*b, k_in) @ W_ih + b  -> VMEM scratch
#   per step: g = gates[s] + h_prev @ W_hh ; gate math in f32; (h,c) in VMEM.
#   Last layer: recovery Linear fused (outputs Y instead of H).
#   Gate order follows PyTorch: i, f, g, o (each padded to 256 lanes).
# ---------------------------------------------------------------------------
def _lstm_layer_kernel(*refs, t_block, project, unroll):
    if project:
        (x_ref, w_ih_ref, b_ref, w_hh_ref, pw_ref, pb_ref, out_ref,
         h_scr, c_scr, gx_scr) = refs
    else:
        (x_ref, w_ih_ref, b_ref, w_hh_ref, out_ref,
         h_scr, c_scr, gx_scr) = refs

    # New batch block starts a fresh (h, c) = 0 recurrence.
    @pl.when(pl.program_id(1) == 0)
    def _():
        h_scr[...] = jnp.zeros_like(h_scr)
        c_scr[...] = jnp.zeros_like(c_scr)

    w_ih = w_ih_ref[...]                    # (k_in, GP)  f32 or bf16
    w_hh = w_hh_ref[...]                    # (HP, GP)    f32 or bf16
    bias = b_ref[...]                       # (1, GP)     f32

    # Whole-block input projection: one big MXU matmul, f32 accumulation.
    tb, bb, k_in = x_ref.shape
    x2d = x_ref[...].reshape(tb * bb, k_in).astype(w_ih.dtype)
    gx = jnp.dot(x2d, w_ih, preferred_element_type=jnp.float32) + bias
    gx_scr[...] = gx.reshape(tb, bb, GP)

    if project:
        pw = pw_ref[...]                    # (HP, OUT_PAD)
        pb = pb_ref[...]                    # (1, OUT_PAD) f32

    def step(s, carry):
        h_prev, c_prev = carry              # (b_block, HP) f32
        g = gx_scr[s] + jnp.dot(h_prev.astype(w_hh.dtype), w_hh,
                                preferred_element_type=jnp.float32)
        i_g = jax.nn.sigmoid(g[:, 0 * HP:1 * HP])
        f_g = jax.nn.sigmoid(g[:, 1 * HP:2 * HP])
        g_g = jnp.tanh(g[:, 2 * HP:3 * HP])
        o_g = jax.nn.sigmoid(g[:, 3 * HP:4 * HP])
        c = f_g * c_prev + i_g * g_g
        h = o_g * jnp.tanh(c)
        if project:   # fused recovery Linear (lane-dense padded output)
            out_ref[s] = (jnp.dot(h.astype(pw.dtype), pw,
                                  preferred_element_type=jnp.float32) + pb)
        else:
            out_ref[s] = h.astype(out_ref.dtype)
        return h, c

    h, c = lax.fori_loop(0, t_block, step, (h_scr[...], c_scr[...]),
                         unroll=unroll)
    h_scr[...] = h
    c_scr[...] = c


def lstm_layer(seq, w_ih_t, bias, w_hh_t, proj, *,
               t_block, b_block, out_dtype, cfg):
    """seq: (Tp, Bp, k_in).  Returns (Tp, Bp, HP) H (out_dtype), or
    (Tp, Bp, OUT_PAD) f32 Y when proj=(pw, pb) is given (last layer)."""
    Tp, Bp, k_in = seq.shape
    project = proj is not None
    out_w = OUT_PAD if project else HP
    unroll = max(1, min(t_block, 8))

    kernel = functools.partial(_lstm_layer_kernel, t_block=t_block,
                               project=project, unroll=unroll)

    in_specs = [
        pl.BlockSpec((t_block, b_block, k_in), lambda bi, ti: (ti, bi, 0)),
        pl.BlockSpec((k_in, GP), lambda bi, ti: (0, 0)),
        pl.BlockSpec((1, GP), lambda bi, ti: (0, 0)),
        pl.BlockSpec((HP, GP), lambda bi, ti: (0, 0)),
    ]
    args = [seq, w_ih_t, bias, w_hh_t]
    if project:
        pw, pb = proj
        in_specs += [
            pl.BlockSpec((HP, OUT_PAD), lambda bi, ti: (0, 0)),
            pl.BlockSpec((1, OUT_PAD), lambda bi, ti: (0, 0)),
        ]
        args += [pw, pb]

    w_bytes = sum(int(np.prod(a.shape)) * a.dtype.itemsize for a in args[1:])
    cost = pl.CostEstimate(
        flops=int(2 * Tp * Bp * GP * (k_in + HP)
                  + (2 * Tp * Bp * HP * OUT_PAD if project else 0)),
        transcendentals=int(5 * Tp * Bp * HP),
        bytes_accessed=int(Tp * Bp * (k_in * seq.dtype.itemsize
                                      + out_w * jnp.dtype(out_dtype).itemsize)
                           + w_bytes),
    )

    cp_kwargs = dict(dimension_semantics=("parallel", "arbitrary"))
    if cfg["vmem_limit"] is not None:
        cp_kwargs["vmem_limit_bytes"] = cfg["vmem_limit"]

    return pl.pallas_call(
        kernel,
        out_shape=jax.ShapeDtypeStruct((Tp, Bp, out_w), out_dtype),
        grid_spec=pltpu.PrefetchScalarGridSpec(
            num_scalar_prefetch=0,
            grid=(Bp // b_block, Tp // t_block),   # (batch-parallel, time-seq)
            in_specs=in_specs,
            out_specs=pl.BlockSpec((t_block, b_block, out_w),
                                   lambda bi, ti: (ti, bi, 0)),
            scratch_shapes=[
                pltpu.VMEM((b_block, HP), jnp.float32),            # h carry
                pltpu.VMEM((b_block, HP), jnp.float32),            # c carry
                pltpu.VMEM((t_block, b_block, GP), jnp.float32),   # block gates
            ],
        ),
        compiler_params=pltpu.CompilerParams(**cp_kwargs),
        cost_estimate=cost,
    )(*args)


# ---------------------------------------------------------------------------
# Full AutoEncoder forward
# ---------------------------------------------------------------------------
def auto_encoder_forward(x_btd, packed):
    """x_btd: (B, T, input_size) batch_first, like PyTorch."""
    input_size = x_btd.shape[-1]
    x = jnp.transpose(x_btd, (1, 0, 2)).astype(jnp.float32)   # (T, B, D)
    T, B, _ = x.shape

    cfg = _GEN_CFG[_tpu_generation()]

    # Batch padded to a multiple of 16 (lane-dense/unmasked stores, free
    # in-kernel (t,b,k)->(t*b,k) reshape for both f32 and bf16 inputs).
    Bp = _round_up(B, 16)
    b_block = _pick_b_block(Bp)
    # Megacore split only on 2-TC parts, only when each core keeps >=64 rows.
    if cfg["two_tc"] and (Bp // b_block) < 2 and Bp % 32 == 0 and Bp // 2 >= 64:
        b_block = Bp // 2

    # Time block sized from the per-generation VMEM budget for the f32 gate
    # scratch (t_block * b_block * 4 KiB); T padded up so it always divides.
    cap = max(1, min(64, cfg["gate_budget"] // (b_block * GP * 4)))
    t_block = min(cap, T)
    Tp = _round_up(T, t_block)

    x = jnp.pad(x, ((0, Tp - T), (0, Bp - B), (0, 0)))

    seq = x
    n_layers = len(packed["lstm"])
    compute_dtype = packed["lstm"][0][0].dtype
    for li, (w_ih_t, w_hh_t, b) in enumerate(packed["lstm"]):
        last = li == n_layers - 1
        proj = (packed["proj_w"], packed["proj_b"]) if last else None
        # Inter-layer H handed off in the compute dtype (bf16 halves HBM
        # traffic of the dominant stream); final projected output stays f32.
        out_dtype = jnp.float32 if last else compute_dtype
        seq = lstm_layer(seq, w_ih_t, b, w_hh_t, proj,
                         t_block=t_block, b_block=b_block,
                         out_dtype=out_dtype, cfg=cfg)

    y = seq[:T, :B, :input_size]                   # drop padded time/batch/lanes
    return jnp.transpose(y, (1, 0, 2))             # back to (B, T, D)


# ---------------------------------------------------------------------------
# Parameter init (PyTorch default U(-1/sqrt(H), 1/sqrt(H))) and packing
# ---------------------------------------------------------------------------
def init_raw_params(key, input_size, num_layers):
    k = 1.0 / np.sqrt(HIDDEN)
    lstm = []
    for layer in range(num_layers):
        d_in = input_size if layer == 0 else HIDDEN
        key, k1, k2, k3, k4 = jax.random.split(key, 5)
        w_ih = jax.random.uniform(k1, (4 * HIDDEN, d_in), jnp.float32, -k, k)
        w_hh = jax.random.uniform(k2, (4 * HIDDEN, HIDDEN), jnp.float32, -k, k)
        b_ih = jax.random.uniform(k3, (4 * HIDDEN,), jnp.float32, -k, k)
        b_hh = jax.random.uniform(k4, (4 * HIDDEN,), jnp.float32, -k, k)
        lstm.append((w_ih, w_hh, b_ih, b_hh))
    key, k1, k2 = jax.random.split(key, 3)
    rec_w = jax.random.uniform(k1, (input_size, HIDDEN), jnp.float32, -k, k)
    rec_b = jax.random.uniform(k2, (input_size,), jnp.float32, -k, k)
    return lstm, (rec_w, rec_b)


def _pad_gates_t(w, in_pad):
    """(4*HIDDEN, d_in) PyTorch layout -> (in_pad, 4*HP) transposed, each gate
    zero-padded 200->256 so gate slices are vreg-aligned."""
    _, d_in = w.shape
    w4 = w.reshape(4, HIDDEN, d_in)
    w4 = jnp.pad(w4, ((0, 0), (0, HP - HIDDEN), (0, in_pad - d_in)))
    return jnp.transpose(w4, (2, 0, 1)).reshape(in_pad, GP)


def _pad_gate_bias(b):
    b4 = jnp.pad(b.reshape(4, HIDDEN), ((0, 0), (0, HP - HIDDEN)))
    return b4.reshape(1, GP)


def pack_params(raw, compute_dtype=jnp.bfloat16):
    """Pad/transpose params for the kernels.  compute_dtype casts only the MXU
    operands (weights; default bf16 on ALL generations — the MXU is bf16-native
    even on v5e); biases, accumulation and gate math stay f32."""
    lstm_raw, (rec_w, rec_b) = raw
    packed = []
    for li, (w_ih, w_hh, b_ih, b_hh) in enumerate(lstm_raw):
        d_in = w_ih.shape[1]
        in_pad = d_in if li == 0 else HP
        w_ih_t = _pad_gates_t(w_ih, in_pad).astype(compute_dtype)
        w_hh_t = _pad_gates_t(w_hh, HP).astype(compute_dtype)
        b = _pad_gate_bias(b_ih + b_hh)
        packed.append((w_ih_t, w_hh_t, b))
    D = rec_w.shape[0]
    pw = jnp.zeros((HP, OUT_PAD), jnp.float32).at[:HIDDEN, :D].set(rec_w.T)
    pb = jnp.zeros((1, OUT_PAD), jnp.float32).at[0, :D].set(rec_b)
    return {"lstm": packed,
            "proj_w": pw.astype(compute_dtype),
            "proj_b": pb}


# ---------------------------------------------------------------------------
# Pure-JAX reference (unpadded, f32 lax.scan LSTM) for correctness check
# ---------------------------------------------------------------------------
def reference_forward(x_btd, raw):
    lstm_raw, (rec_w, rec_b) = raw
    B = x_btd.shape[0]
    h_seq = jnp.transpose(x_btd, (1, 0, 2)).astype(jnp.float32)
    for (w_ih, w_hh, b_ih, b_hh) in lstm_raw:
        w_ih_t, w_hh_t, b = w_ih.T, w_hh.T, (b_ih + b_hh)[None, :]

        def step(carry, x_t, w_ih_t=w_ih_t, w_hh_t=w_hh_t, b=b):
            h_prev, c_prev = carry
            g = x_t @ w_ih_t + h_prev @ w_hh_t + b
            i = jax.nn.sigmoid(g[:, :HIDDEN])
            f = jax.nn.sigmoid(g[:, HIDDEN:2 * HIDDEN])
            gg = jnp.tanh(g[:, 2 * HIDDEN:3 * HIDDEN])
            o = jax.nn.sigmoid(g[:, 3 * HIDDEN:])
            c = f * c_prev + i * gg
            h = o * jnp.tanh(c)
            return (h, c), h

        init = (jnp.zeros((B, HIDDEN), jnp.float32),
                jnp.zeros((B, HIDDEN), jnp.float32))
        _, h_seq = lax.scan(step, init, h_seq)
    y = h_seq @ rec_w.T + rec_b[None, :]
    return jnp.transpose(y, (1, 0, 2))


if __name__ == "__main__":
    B, T, input_size = 2, 8, 8
    num_layers, dropout = 2, 0.0

    key = jax.random.PRNGKey(0)
    key, pkey, xkey = jax.random.split(key, 3)
    raw = init_raw_params(pkey, input_size, num_layers)
    x = jax.random.normal(xkey, (B, T, input_size), jnp.float32)

    ref = reference_forward(x, raw)
    fwd = jax.jit(auto_encoder_forward)

    # f32 path: tight check against the PyTorch-equivalent math.
    packed_f32 = pack_params(raw, jnp.float32)
    out = jax.block_until_ready(fwd(x, packed_f32))
    assert out.shape == (B, T, input_size), out.shape
    np.testing.assert_allclose(np.asarray(out), np.asarray(ref),
                               rtol=1e-4, atol=1e-4)

    # Default perf path (all generations): bf16 MXU operands + bf16 inter-layer
    # H handoff; f32 accumulation/gate math bounds the drift.
    packed_bf16 = pack_params(raw, jnp.bfloat16)
    out_bf16 = jax.block_until_ready(fwd(x, packed_bf16))
    np.testing.assert_allclose(np.asarray(out_bf16), np.asarray(ref),
                               rtol=5e-2, atol=5e-2)

    print("KERNEL_OK")
</pallas_src>

<mosaic_0001>
module attributes {stable_mosaic.version = 11 : i64} {
  func.func @_lstm_layer_kernel(%arg0: i32, %arg1: i32, %arg2: memref<8x16x8xf32, #tpu.memory_space<vmem>>, %arg3: memref<8x1024xf32, #tpu.memory_space<vmem>>, %arg4: memref<1x1024xf32, #tpu.memory_space<vmem>>, %arg5: memref<256x1024xf32, #tpu.memory_space<vmem>>, %arg6: memref<8x16x256xf32, #tpu.memory_space<vmem>>, %arg7: memref<16x256xf32, #tpu.memory_space<vmem>>, %arg8: memref<16x256xf32, #tpu.memory_space<vmem>>, %arg9: memref<8x16x1024xf32, #tpu.memory_space<vmem>>) attributes {dimension_semantics = [#tpu.dimension_semantics<parallel>, #tpu.dimension_semantics<arbitrary>], iteration_bounds = array<i64: 1, 1>, scalar_prefetch = 0 : i64, scratch_operands = 3 : i64, tpu.core_type = #tpu.core_type<tc>, window_params = [{transform_indices = @transform_0, window_bounds = array<i64: 8, 16, 8>}, {pipeline_mode = #tpu.pipeline_mode<synchronous>, transform_indices = @transform_1, window_bounds = array<i64: 8, 1024>}, {pipeline_mode = #tpu.pipeline_mode<synchronous>, transform_indices = @transform_2, window_bounds = array<i64: 1, 1024>}, {pipeline_mode = #tpu.pipeline_mode<synchronous>, transform_indices = @transform_3, window_bounds = array<i64: 256, 1024>}, {transform_indices = @transform_4, window_bounds = array<i64: 8, 16, 256>}]} {
    %c0_i32 = arith.constant 0 : i32
    %0 = arith.cmpi eq, %arg1, %c0_i32 : i32
    %1 = arith.extui %0 : i1 to i32
    %c0_i32_0 = arith.constant 0 : i32
    %2 = arith.cmpi ne, %1, %c0_i32_0 : i32
    scf.if %2 {
      %cst_85 = arith.constant 0.000000e+00 : f32
      %289 = vector.broadcast %cst_85 : f32 to vector<16x256xf32>
      %c0_86 = arith.constant 0 : index
      %c0_87 = arith.constant 0 : index
      %290 = vector.load %arg7[%c0_86, %c0_87] : memref<16x256xf32, #tpu.memory_space<vmem>>, vector<16x256xf32>
      tpu.vector_store %arg7[%c0_86, %c0_87], %289 {strides = array<i32>} : memref<16x256xf32, #tpu.memory_space<vmem>>, vector<16x256xf32>,
      %cst_88 = arith.constant 0.000000e+00 : f32
      %291 = vector.broadcast %cst_88 : f32 to vector<16x256xf32>
      %c0_89 = arith.constant 0 : index
      %c0_90 = arith.constant 0 : index
      %292 = vector.load %arg8[%c0_89, %c0_90] : memref<16x256xf32, #tpu.memory_space<vmem>>, vector<16x256xf32>
      tpu.vector_store %arg8[%c0_89, %c0_90], %291 {strides = array<i32>} : memref<16x256xf32, #tpu.memory_space<vmem>>, vector<16x256xf32>,
    } else {
    }
    %c0 = arith.constant 0 : index
    %c0_1 = arith.constant 0 : index
    %3 = vector.load %arg3[%c0, %c0_1] : memref<8x1024xf32, #tpu.memory_space<vmem>>, vector<8x1024xf32>
    %c0_2 = arith.constant 0 : index
    %c0_3 = arith.constant 0 : index
    %4 = vector.load %arg5[%c0_2, %c0_3] : memref<256x1024xf32, #tpu.memory_space<vmem>>, vector<256x1024xf32>
    %c0_4 = arith.constant 0 : index
    %c0_5 = arith.constant 0 : index
    %5 = vector.load %arg4[%c0_4, %c0_5] : memref<1x1024xf32, #tpu.memory_space<vmem>>, vector<1x1024xf32>
    %c0_6 = arith.constant 0 : index
    %c0_7 = arith.constant 0 : index
    %c0_8 = arith.constant 0 : index
    %6 = vector.load %arg2[%c0_6, %c0_7, %c0_8] : memref<8x16x8xf32, #tpu.memory_space<vmem>>, vector<8x16x8xf32>
    %7 = vector.shape_cast %6 : vector<8x16x8xf32> to vector<128x8xf32>
    %cst = arith.constant dense<0.000000e+00> : vector<128x1024xf32>
    %8 = tpu.matmul %7, %3, %cst {dimension_numbers = #tpu.dot_dimension_numbers<[1], [0], [0], [1], [0, 0, 1, 1], [], []>} : vector<128x8xf32>, vector<8x1024xf32>, vector<128x1024xf32> -> vector<128x1024xf32>
    %9 = vector.broadcast %5 : vector<1x1024xf32> to vector<128x1024xf32>
    %10 = arith.addf %8, %9 : vector<128x1024xf32>
    %11 = vector.shape_cast %10 : vector<128x1024xf32> to vector<8x16x1024xf32>
    %c0_9 = arith.constant 0 : index
    %c0_10 = arith.constant 0 : index
    %c0_11 = arith.constant 0 : index
    %12 = vector.load %arg9[%c0_9, %c0_10, %c0_11] : memref<8x16x1024xf32, #tpu.memory_space<vmem>>, vector<8x16x1024xf32>
    tpu.vector_store %arg9[%c0_9, %c0_10, %c0_11], %11 {strides = array<i32>} : memref<8x16x1024xf32, #tpu.memory_space<vmem>>, vector<8x16x1024xf32>,
    %c0_12 = arith.constant 0 : index
    %c0_13 = arith.constant 0 : index
    %13 = vector.load %arg7[%c0_12, %c0_13] : memref<16x256xf32, #tpu.memory_space<vmem>>, vector<16x256xf32>
    %c0_14 = arith.constant 0 : index
    %c0_15 = arith.constant 0 : index
    %14 = vector.load %arg8[%c0_14, %c0_15] : memref<16x256xf32, #tpu.memory_space<vmem>>, vector<16x256xf32>
    %c0_i32_16 = arith.constant 0 : i32
    %15 = arith.index_cast %c0_i32_16 : i32 to index
    %c0_17 = arith.constant 0 : index
    %c0_18 = arith.constant 0 : index
    %16 = vector.load %arg9[%15, %c0_17, %c0_18] : memref<8x16x1024xf32, #tpu.memory_space<vmem>>, vector<1x16x1024xf32>
    %17 = vector.shape_cast %16 : vector<1x16x1024xf32> to vector<16x1024xf32>
    %cst_19 = arith.constant dense<0.000000e+00> : vector<16x1024xf32>
    %18 = tpu.matmul %13, %4, %cst_19 {dimension_numbers = #tpu.dot_dimension_numbers<[1], [0], [0], [1], [0, 0, 1, 1], [], []>} : vector<16x256xf32>, vector<256x1024xf32>, vector<16x1024xf32> -> vector<16x1024xf32>
    %19 = arith.addf %17, %18 : vector<16x1024xf32>
    %20 = vector.extract_strided_slice %19 {offsets = [0, 0], sizes = [16, 256], strides = [1, 1]} : vector<16x1024xf32> to vector<16x256xf32>
    %21 = arith.negf %20 : vector<16x256xf32>
    %22 = math.exp %21 : vector<16x256xf32>
    %cst_20 = arith.constant 1.000000e+00 : f32
    %23 = vector.broadcast %cst_20 : f32 to vector<16x256xf32>
    %24 = arith.addf %23, %22 : vector<16x256xf32>
    %25 = arith.divf %23, %24 : vector<16x256xf32>
    %26 = vector.extract_strided_slice %19 {offsets = [0, 256], sizes = [16, 256], strides = [1, 1]} : vector<16x1024xf32> to vector<16x256xf32>
    %27 = arith.negf %26 : vector<16x256xf32>
    %28 = math.exp %27 : vector<16x256xf32>
    %cst_21 = arith.constant 1.000000e+00 : f32
    %29 = vector.broadcast %cst_21 : f32 to vector<16x256xf32>
    %30 = arith.addf %29, %28 : vector<16x256xf32>
    %31 = arith.divf %29, %30 : vector<16x256xf32>
    %32 = vector.extract_strided_slice %19 {offsets = [0, 512], sizes = [16, 256], strides = [1, 1]} : vector<16x1024xf32> to vector<16x256xf32>
    %33 = math.tanh %32 : vector<16x256xf32>
    %34 = vector.extract_strided_slice %19 {offsets = [0, 768], sizes = [16, 256], strides = [1, 1]} : vector<16x1024xf32> to vector<16x256xf32>
    %35 = arith.negf %34 : vector<16x256xf32>
    %36 = math.exp %35 : vector<16x256xf32>
    %cst_22 = arith.constant 1.000000e+00 : f32
    %37 = vector.broadcast %cst_22 : f32 to vector<16x256xf32>
    %38 = arith.addf %37, %36 : vector<16x256xf32>
    %39 = arith.divf %37, %38 : vector<16x256xf32>
    %40 = arith.mulf %31, %14 : vector<16x256xf32>
    %41 = arith.mulf %25, %33 : vector<16x256xf32>
    %42 = arith.addf %40, %41 : vector<16x256xf32>
    %43 = math.tanh %42 : vector<16x256xf32>
    %44 = arith.mulf %39, %43 : vector<16x256xf32>
    %45 = arith.index_cast %c0_i32_16 : i32 to index
    %c0_23 = arith.constant 0 : index
    %c0_24 = arith.constant 0 : index
    %46 = vector.load %arg6[%45, %c0_23, %c0_24] : memref<8x16x256xf32, #tpu.memory_space<vmem>>, vector<1x16x256xf32>
    %47 = vector.shape_cast %46 : vector<1x16x256xf32> to vector<16x256xf32>
    %48 = vector.shape_cast %44 : vector<16x256xf32> to vector<1x16x256xf32>
    tpu.vector_store %arg6[%45, %c0_23, %c0_24], %48 {strides = array<i32>} : memref<8x16x256xf32, #tpu.memory_space<vmem>>, vector<1x16x256xf32>,
    %c1_i32 = arith.constant 1 : i32
    %49 = arith.index_cast %c1_i32 : i32 to index
    %c0_25 = arith.constant 0 : index
    %c0_26 = arith.constant 0 : index
    %50 = vector.load %arg9[%49, %c0_25, %c0_26] : memref<8x16x1024xf32, #tpu.memory_space<vmem>>, vector<1x16x1024xf32>
    %51 = vector.shape_cast %50 : vector<1x16x1024xf32> to vector<16x1024xf32>
    %cst_27 = arith.constant dense<0.000000e+00> : vector<16x1024xf32>
    %52 = tpu.matmul %44, %4, %cst_27 {dimension_numbers = #tpu.dot_dimension_numbers<[1], [0], [0], [1], [0, 0, 1, 1], [], []>} : vector<16x256xf32>, vector<256x1024xf32>, vector<16x1024xf32> -> vector<16x1024xf32>
    %53 = arith.addf %51, %52 : vector<16x1024xf32>
    %54 = vector.extract_strided_slice %53 {offsets = [0, 0], sizes = [16, 256], strides = [1, 1]} : vector<16x1024xf32> to vector<16x256xf32>
    %55 = arith.negf %54 : vector<16x256xf32>
    %56 = math.exp %55 : vector<16x256xf32>
    %cst_28 = arith.constant 1.000000e+00 : f32
    %57 = vector.broadcast %cst_28 : f32 to vector<16x256xf32>
    %58 = arith.addf %57, %56 : vector<16x256xf32>
    %59 = arith.divf %57, %58 : vector<16x256xf32>
    %60 = vector.extract_strided_slice %53 {offsets = [0, 256], sizes = [16, 256], strides = [1, 1]} : vector<16x1024xf32> to vector<16x256xf32>
    %61 = arith.negf %60 : vector<16x256xf32>
    %62 = math.exp %61 : vector<16x256xf32>
    %cst_29 = arith.constant 1.000000e+00 : f32
    %63 = vector.broadcast %cst_29 : f32 to vector<16x256xf32>
    %64 = arith.addf %63, %62 : vector<16x256xf32>
    %65 = arith.divf %63, %64 : vector<16x256xf32>
    %66 = vector.extract_strided_slice %53 {offsets = [0, 512], sizes = [16, 256], strides = [1, 1]} : vector<16x1024xf32> to vector<16x256xf32>
    %67 = math.tanh %66 : vector<16x256xf32>
    %68 = vector.extract_strided_slice %53 {offsets = [0, 768], sizes = [16, 256], strides = [1, 1]} : vector<16x1024xf32> to vector<16x256xf32>
    %69 = arith.negf %68 : vector<16x256xf32>
    %70 = math.exp %69 : vector<16x256xf32>
    %cst_30 = arith.constant 1.000000e+00 : f32
    %71 = vector.broadcast %cst_30 : f32 to vector<16x256xf32>
    %72 = arith.addf %71, %70 : vector<16x256xf32>
    %73 = arith.divf %71, %72 : vector<16x256xf32>
    %74 = arith.mulf %65, %42 : vector<16x256xf32>
    %75 = arith.mulf %59, %67 : vector<16x256xf32>
    %76 = arith.addf %74, %75 : vector<16x256xf32>
    %77 = math.tanh %76 : vector<16x256xf32>
    %78 = arith.mulf %73, %77 : vector<16x256xf32>
    %79 = arith.index_cast %c1_i32 : i32 to index
    %c0_31 = arith.constant 0 : index
    %c0_32 = arith.constant 0 : index
    %80 = vector.load %arg6[%79, %c0_31, %c0_32] : memref<8x16x256xf32, #tpu.memory_space<vmem>>, vector<1x16x256xf32>
    %81 = vector.shape_cast %80 : vector<1x16x256xf32> to vector<16x256xf32>
    %82 = vector.shape_cast %78 : vector<16x256xf32> to vector<1x16x256xf32>
    tpu.vector_store %arg6[%79, %c0_31, %c0_32], %82 {strides = array<i32>} : memref<8x16x256xf32, #tpu.memory_space<vmem>>, vector<1x16x256xf32>,
    %c2_i32 = arith.constant 2 : i32
    %83 = arith.index_cast %c2_i32 : i32 to index
    %c0_33 = arith.constant 0 : index
    %c0_34 = arith.constant 0 : index
    %84 = vector.load %arg9[%83, %c0_33, %c0_34] : memref<8x16x1024xf32, #tpu.memory_space<vmem>>, vector<1x16x1024xf32>
    %85 = vector.shape_cast %84 : vector<1x16x1024xf32> to vector<16x1024xf32>
    %cst_35 = arith.constant dense<0.000000e+00> : vector<16x1024xf32>
    %86 = tpu.matmul %78, %4, %cst_35 {dimension_numbers = #tpu.dot_dimension_numbers<[1], [0], [0], [1], [0, 0, 1, 1], [], []>} : vector<16x256xf32>, vector<256x1024xf32>, vector<16x1024xf32> -> vector<16x1024xf32>
    %87 = arith.addf %85, %86 : vector<16x1024xf32>
    %88 = vector.extract_strided_slice %87 {offsets = [0, 0], sizes = [16, 256], strides = [1, 1]} : vector<16x1024xf32> to vector<16x256xf32>
    %89 = arith.negf %88 : vector<16x256xf32>
    %90 = math.exp %89 : vector<16x256xf32>
    %cst_36 = arith.constant 1.000000e+00 : f32
    %91 = vector.broadcast %cst_36 : f32 to vector<16x256xf32>
    %92 = arith.addf %91, %90 : vector<16x256xf32>
    %93 = arith.divf %91, %92 : vector<16x256xf32>
    %94 = vector.extract_strided_slice %87 {offsets = [0, 256], sizes = [16, 256], strides = [1, 1]} : vector<16x1024xf32> to vector<16x256xf32>
    %95 = arith.negf %94 : vector<16x256xf32>
    %96 = math.exp %95 : vector<16x256xf32>
    %cst_37 = arith.constant 1.000000e+00 : f32
    %97 = vector.broadcast %cst_37 : f32 to vector<16x256xf32>
    %98 = arith.addf %97, %96 : vector<16x256xf32>
    %99 = arith.divf %97, %98 : vector<16x256xf32>
    %100 = vector.extract_strided_slice %87 {offsets = [0, 512], sizes = [16, 256], strides = [1, 1]} : vector<16x1024xf32> to vector<16x256xf32>
    %101 = math.tanh %100 : vector<16x256xf32>
    %102 = vector.extract_strided_slice %87 {offsets = [0, 768], sizes = [16, 256], strides = [1, 1]} : vector<16x1024xf32> to vector<16x256xf32>
    %103 = arith.negf %102 : vector<16x256xf32>
    %104 = math.exp %103 : vector<16x256xf32>
    %cst_38 = arith.constant 1.000000e+00 : f32
    %105 = vector.broadcast %cst_38 : f32 to vector<16x256xf32>
    %106 = arith.addf %105, %104 : vector<16x256xf32>
    %107 = arith.divf %105, %106 : vector<16x256xf32>
    %108 = arith.mulf %99, %76 : vector<16x256xf32>
    %109 = arith.mulf %93, %101 : vector<16x256xf32>
    %110 = arith.addf %108, %109 : vector<16x256xf32>
    %111 = math.tanh %110 : vector<16x256xf32>
    %112 = arith.mulf %107, %111 : vector<16x256xf32>
    %113 = arith.index_cast %c2_i32 : i32 to index
    %c0_39 = arith.constant 0 : index
    %c0_40 = arith.constant 0 : index
    %114 = vector.load %arg6[%113, %c0_39, %c0_40] : memref<8x16x256xf32, #tpu.memory_space<vmem>>, vector<1x16x256xf32>
    %115 = vector.shape_cast %114 : vector<1x16x256xf32> to vector<16x256xf32>
    %116 = vector.shape_cast %112 : vector<16x256xf32> to vector<1x16x256xf32>
    tpu.vector_store %arg6[%113, %c0_39, %c0_40], %116 {strides = array<i32>} : memref<8x16x256xf32, #tpu.memory_space<vmem>>, vector<1x16x256xf32>,
    %c3_i32 = arith.constant 3 : i32
    %117 = arith.index_cast %c3_i32 : i32 to index
    %c0_41 = arith.constant 0 : index
    %c0_42 = arith.constant 0 : index
    %118 = vector.load %arg9[%117, %c0_41, %c0_42] : memref<8x16x1024xf32, #tpu.memory_space<vmem>>, vector<1x16x1024xf32>
    %119 = vector.shape_cast %118 : vector<1x16x1024xf32> to vector<16x1024xf32>
    %cst_43 = arith.constant dense<0.000000e+00> : vector<16x1024xf32>
    %120 = tpu.matmul %112, %4, %cst_43 {dimension_numbers = #tpu.dot_dimension_numbers<[1], [0], [0], [1], [0, 0, 1, 1], [], []>} : vector<16x256xf32>, vector<256x1024xf32>, vector<16x1024xf32> -> vector<16x1024xf32>
    %121 = arith.addf %119, %120 : vector<16x1024xf32>
    %122 = vector.extract_strided_slice %121 {offsets = [0, 0], sizes = [16, 256], strides = [1, 1]} : vector<16x1024xf32> to vector<16x256xf32>
    %123 = arith.negf %122 : vector<16x256xf32>
    %124 = math.exp %123 : vector<16x256xf32>
    %cst_44 = arith.constant 1.000000e+00 : f32
    %125 = vector.broadcast %cst_44 : f32 to vector<16x256xf32>
    %126 = arith.addf %125, %124 : vector<16x256xf32>
    %127 = arith.divf %125, %126 : vector<16x256xf32>
    %128 = vector.extract_strided_slice %121 {offsets = [0, 256], sizes = [16, 256], strides = [1, 1]} : vector<16x1024xf32> to vector<16x256xf32>
    %129 = arith.negf %128 : vector<16x256xf32>
    %130 = math.exp %129 : vector<16x256xf32>
    %cst_45 = arith.constant 1.000000e+00 : f32
    %131 = vector.broadcast %cst_45 : f32 to vector<16x256xf32>
    %132 = arith.addf %131, %130 : vector<16x256xf32>
    %133 = arith.divf %131, %132 : vector<16x256xf32>
    %134 = vector.extract_strided_slice %121 {offsets = [0, 512], sizes = [16, 256], strides = [1, 1]} : vector<16x1024xf32> to vector<16x256xf32>
    %135 = math.tanh %134 : vector<16x256xf32>
    %136 = vector.extract_strided_slice %121 {offsets = [0, 768], sizes = [16, 256], strides = [1, 1]} : vector<16x1024xf32> to vector<16x256xf32>
    %137 = arith.negf %136 : vector<16x256xf32>
    %138 = math.exp %137 : vector<16x256xf32>
    %cst_46 = arith.constant 1.000000e+00 : f32
    %139 = vector.broadcast %cst_46 : f32 to vector<16x256xf32>
    %140 = arith.addf %139, %138 : vector<16x256xf32>
    %141 = arith.divf %139, %140 : vector<16x256xf32>
    %142 = arith.mulf %133, %110 : vector<16x256xf32>
    %143 = arith.mulf %127, %135 : vector<16x256xf32>
    %144 = arith.addf %142, %143 : vector<16x256xf32>
    %145 = math.tanh %144 : vector<16x256xf32>
    %146 = arith.mulf %141, %145 : vector<16x256xf32>
    %147 = arith.index_cast %c3_i32 : i32 to index
    %c0_47 = arith.constant 0 : index
    %c0_48 = arith.constant 0 : index
    %148 = vector.load %arg6[%147, %c0_47, %c0_48] : memref<8x16x256xf32, #tpu.memory_space<vmem>>, vector<1x16x256xf32>
    %149 = vector.shape_cast %148 : vector<1x16x256xf32> to vector<16x256xf32>
    %150 = vector.shape_cast %146 : vector<16x256xf32> to vector<1x16x256xf32>
    tpu.vector_store %arg6[%147, %c0_47, %c0_48], %150 {strides = array<i32>} : memref<8x16x256xf32, #tpu.memory_space<vmem>>, vector<1x16x256xf32>,
    %c4_i32 = arith.constant 4 : i32
    %151 = arith.index_cast %c4_i32 : i32 to index
    %c0_49 = arith.constant 0 : index
    %c0_50 = arith.constant 0 : index
    %152 = vector.load %arg9[%151, %c0_49, %c0_50] : memref<8x16x1024xf32, #tpu.memory_space<vmem>>, vector<1x16x1024xf32>
    %153 = vector.shape_cast %152 : vector<1x16x1024xf32> to vector<16x1024xf32>
    %cst_51 = arith.constant dense<0.000000e+00> : vector<16x1024xf32>
    %154 = tpu.matmul %146, %4, %cst_51 {dimension_numbers = #tpu.dot_dimension_numbers<[1], [0], [0], [1], [0, 0, 1, 1], [], []>} : vector<16x256xf32>, vector<256x1024xf32>, vector<16x1024xf32> -> vector<16x1024xf32>
    %155 = arith.addf %153, %154 : vector<16x1024xf32>
    %156 = vector.extract_strided_slice %155 {offsets = [0, 0], sizes = [16, 256], strides = [1, 1]} : vector<16x1024xf32> to vector<16x256xf32>
    %157 = arith.negf %156 : vector<16x256xf32>
    %158 = math.exp %157 : vector<16x256xf32>
    %cst_52 = arith.constant 1.000000e+00 : f32
    %159 = vector.broadcast %cst_52 : f32 to vector<16x256xf32>
    %160 = arith.addf %159, %158 : vector<16x256xf32>
    %161 = arith.divf %159, %160 : vector<16x256xf32>
    %162 = vector.extract_strided_slice %155 {offsets = [0, 256], sizes = [16, 256], strides = [1, 1]} : vector<16x1024xf32> to vector<16x256xf32>
    %163 = arith.negf %162 : vector<16x256xf32>
    %164 = math.exp %163 : vector<16x256xf32>
    %cst_53 = arith.constant 1.000000e+00 : f32
    %165 = vector.broadcast %cst_53 : f32 to vector<16x256xf32>
    %166 = arith.addf %165, %164 : vector<16x256xf32>
    %167 = arith.divf %165, %166 : vector<16x256xf32>
    %168 = vector.extract_strided_slice %155 {offsets = [0, 512], sizes = [16, 256], strides = [1, 1]} : vector<16x1024xf32> to vector<16x256xf32>
    %169 = math.tanh %168 : vector<16x256xf32>
    %170 = vector.extract_strided_slice %155 {offsets = [0, 768], sizes = [16, 256], strides = [1, 1]} : vector<16x1024xf32> to vector<16x256xf32>
    %171 = arith.negf %170 : vector<16x256xf32>
    %172 = math.exp %171 : vector<16x256xf32>
    %cst_54 = arith.constant 1.000000e+00 : f32
    %173 = vector.broadcast %cst_54 : f32 to vector<16x256xf32>
    %174 = arith.addf %173, %172 : vector<16x256xf32>
    %175 = arith.divf %173, %174 : vector<16x256xf32>
    %176 = arith.mulf %167, %144 : vector<16x256xf32>
    %177 = arith.mulf %161, %169 : vector<16x256xf32>
    %178 = arith.addf %176, %177 : vector<16x256xf32>
    %179 = math.tanh %178 : vector<16x256xf32>
    %180 = arith.mulf %175, %179 : vector<16x256xf32>
    %181 = arith.index_cast %c4_i32 : i32 to index
    %c0_55 = arith.constant 0 : index
    %c0_56 = arith.constant 0 : index
    %182 = vector.load %arg6[%181, %c0_55, %c0_56] : memref<8x16x256xf32, #tpu.memory_space<vmem>>, vector<1x16x256xf32>
    %183 = vector.shape_cast %182 : vector<1x16x256xf32> to vector<16x256xf32>
    %184 = vector.shape_cast %180 : vector<16x256xf32> to vector<1x16x256xf32>
    tpu.vector_store %arg6[%181, %c0_55, %c0_56], %184 {strides = array<i32>} : memref<8x16x256xf32, #tpu.memory_space<vmem>>, vector<1x16x256xf32>,
    %c5_i32 = arith.constant 5 : i32
    %185 = arith.index_cast %c5_i32 : i32 to index
    %c0_57 = arith.constant 0 : index
    %c0_58 = arith.constant 0 : index
    %186 = vector.load %arg9[%185, %c0_57, %c0_58] : memref<8x16x1024xf32, #tpu.memory_space<vmem>>, vector<1x16x1024xf32>
    %187 = vector.shape_cast %186 : vector<1x16x1024xf32> to vector<16x1024xf32>
    %cst_59 = arith.constant dense<0.000000e+00> : vector<16x1024xf32>
    %188 = tpu.matmul %180, %4, %cst_59 {dimension_numbers = #tpu.dot_dimension_numbers<[1], [0], [0], [1], [0, 0, 1, 1], [], []>} : vector<16x256xf32>, vector<256x1024xf32>, vector<16x1024xf32> -> vector<16x1024xf32>
    %189 = arith.addf %187, %188 : vector<16x1024xf32>
    %190 = vector.extract_strided_slice %189 {offsets = [0, 0], sizes = [16, 256], strides = [1, 1]} : vector<16x1024xf32> to vector<16x256xf32>
    %191 = arith.negf %190 : vector<16x256xf32>
    %192 = math.exp %191 : vector<16x256xf32>
    %cst_60 = arith.constant 1.000000e+00 : f32
    %193 = vector.broadcast %cst_60 : f32 to vector<16x256xf32>
    %194 = arith.addf %193, %192 : vector<16x256xf32>
    %195 = arith.divf %193, %194 : vector<16x256xf32>
    %196 = vector.extract_strided_slice %189 {offsets = [0, 256], sizes = [16, 256], strides = [1, 1]} : vector<16x1024xf32> to vector<16x256xf32>
    %197 = arith.negf %196 : vector<16x256xf32>
    %198 = math.exp %197 : vector<16x256xf32>
    %cst_61 = arith.constant 1.000000e+00 : f32
    %199 = vector.broadcast %cst_61 : f32 to vector<16x256xf32>
    %200 = arith.addf %199, %198 : vector<16x256xf32>
    %201 = arith.divf %199, %200 : vector<16x256xf32>
    %202 = vector.extract_strided_slice %189 {offsets = [0, 512], sizes = [16, 256], strides = [1, 1]} : vector<16x1024xf32> to vector<16x256xf32>
    %203 = math.tanh %202 : vector<16x256xf32>
    %204 = vector.extract_strided_slice %189 {offsets = [0, 768], sizes = [16, 256], strides = [1, 1]} : vector<16x1024xf32> to vector<16x256xf32>
    %205 = arith.negf %204 : vector<16x256xf32>
    %206 = math.exp %205 : vector<16x256xf32>
    %cst_62 = arith.constant 1.000000e+00 : f32
    %207 = vector.broadcast %cst_62 : f32 to vector<16x256xf32>
    %208 = arith.addf %207, %206 : vector<16x256xf32>
    %209 = arith.divf %207, %208 : vector<16x256xf32>
    %210 = arith.mulf %201, %178 : vector<16x256xf32>
    %211 = arith.mulf %195, %203 : vector<16x256xf32>
    %212 = arith.addf %210, %211 : vector<16x256xf32>
    %213 = math.tanh %212 : vector<16x256xf32>
    %214 = arith.mulf %209, %213 : vector<16x256xf32>
    %215 = arith.index_cast %c5_i32 : i32 to index
    %c0_63 = arith.constant 0 : index
    %c0_64 = arith.constant 0 : index
    %216 = vector.load %arg6[%215, %c0_63, %c0_64] : memref<8x16x256xf32, #tpu.memory_space<vmem>>, vector<1x16x256xf32>
    %217 = vector.shape_cast %216 : vector<1x16x256xf32> to vector<16x256xf32>
    %218 = vector.shape_cast %214 : vector<16x256xf32> to vector<1x16x256xf32>
    tpu.vector_store %arg6[%215, %c0_63, %c0_64], %218 {strides = array<i32>} : memref<8x16x256xf32, #tpu.memory_space<vmem>>, vector<1x16x256xf32>,
    %c6_i32 = arith.constant 6 : i32
    %219 = arith.index_cast %c6_i32 : i32 to index
    %c0_65 = arith.constant 0 : index
    %c0_66 = arith.constant 0 : index
    %220 = vector.load %arg9[%219, %c0_65, %c0_66] : memref<8x16x1024xf32, #tpu.memory_space<vmem>>, vector<1x16x1024xf32>
    %221 = vector.shape_cast %220 : vector<1x16x1024xf32> to vector<16x1024xf32>
    %cst_67 = arith.constant dense<0.000000e+00> : vector<16x1024xf32>
    %222 = tpu.matmul %214, %4, %cst_67 {dimension_numbers = #tpu.dot_dimension_numbers<[1], [0], [0], [1], [0, 0, 1, 1], [], []>} : vector<16x256xf32>, vector<256x1024xf32>, vector<16x1024xf32> -> vector<16x1024xf32>
    %223 = arith.addf %221, %222 : vector<16x1024xf32>
    %224 = vector.extract_strided_slice %223 {offsets = [0, 0], sizes = [16, 256], strides = [1, 1]} : vector<16x1024xf32> to vector<16x256xf32>
    %225 = arith.negf %224 : vector<16x256xf32>
    %226 = math.exp %225 : vector<16x256xf32>
    %cst_68 = arith.constant 1.000000e+00 : f32
    %227 = vector.broadcast %cst_68 : f32 to vector<16x256xf32>
    %228 = arith.addf %227, %226 : vector<16x256xf32>
    %229 = arith.divf %227, %228 : vector<16x256xf32>
    %230 = vector.extract_strided_slice %223 {offsets = [0, 256], sizes = [16, 256], strides = [1, 1]} : vector<16x1024xf32> to vector<16x256xf32>
    %231 = arith.negf %230 : vector<16x256xf32>
    %232 = math.exp %231 : vector<16x256xf32>
    %cst_69 = arith.constant 1.000000e+00 : f32
    %233 = vector.broadcast %cst_69 : f32 to vector<16x256xf32>
    %234 = arith.addf %233, %232 : vector<16x256xf32>
    %235 = arith.divf %233, %234 : vector<16x256xf32>
    %236 = vector.extract_strided_slice %223 {offsets = [0, 512], sizes = [16, 256], strides = [1, 1]} : vector<16x1024xf32> to vector<16x256xf32>
    %237 = math.tanh %236 : vector<16x256xf32>
    %238 = vector.extract_strided_slice %223 {offsets = [0, 768], sizes = [16, 256], strides = [1, 1]} : vector<16x1024xf32> to vector<16x256xf32>
    %239 = arith.negf %238 : vector<16x256xf32>
    %240 = math.exp %239 : vector<16x256xf32>
    %cst_70 = arith.constant 1.000000e+00 : f32
    %241 = vector.broadcast %cst_70 : f32 to vector<16x256xf32>
    %242 = arith.addf %241, %240 : vector<16x256xf32>
    %243 = arith.divf %241, %242 : vector<16x256xf32>
    %244 = arith.mulf %235, %212 : vector<16x256xf32>
    %245 = arith.mulf %229, %237 : vector<16x256xf32>
    %246 = arith.addf %244, %245 : vector<16x256xf32>
    %247 = math.tanh %246 : vector<16x256xf32>
    %248 = arith.mulf %243, %247 : vector<16x256xf32>
    %249 = arith.index_cast %c6_i32 : i32 to index
    %c0_71 = arith.constant 0 : index
    %c0_72 = arith.constant 0 : index
    %250 = vector.load %arg6[%249, %c0_71, %c0_72] : memref<8x16x256xf32, #tpu.memory_space<vmem>>, vector<1x16x256xf32>
    %251 = vector.shape_cast %250 : vector<1x16x256xf32> to vector<16x256xf32>
    %252 = vector.shape_cast %248 : vector<16x256xf32> to vector<1x16x256xf32>
    tpu.vector_store %arg6[%249, %c0_71, %c0_72], %252 {strides = array<i32>} : memref<8x16x256xf32, #tpu.memory_space<vmem>>, vector<1x16x256xf32>,
    %c7_i32 = arith.constant 7 : i32
    %253 = arith.index_cast %c7_i32 : i32 to index
    %c0_73 = arith.constant 0 : index
    %c0_74 = arith.constant 0 : index
    %254 = vector.load %arg9[%253, %c0_73, %c0_74] : memref<8x16x1024xf32, #tpu.memory_space<vmem>>, vector<1x16x1024xf32>
    %255 = vector.shape_cast %254 : vector<1x16x1024xf32> to vector<16x1024xf32>
    %cst_75 = arith.constant dense<0.000000e+00> : vector<16x1024xf32>
    %256 = tpu.matmul %248, %4, %cst_75 {dimension_numbers = #tpu.dot_dimension_numbers<[1], [0], [0], [1], [0, 0, 1, 1], [], []>} : vector<16x256xf32>, vector<256x1024xf32>, vector<16x1024xf32> -> vector<16x1024xf32>
    %257 = arith.addf %255, %256 : vector<16x1024xf32>
    %258 = vector.extract_strided_slice %257 {offsets = [0, 0], sizes = [16, 256], strides = [1, 1]} : vector<16x1024xf32> to vector<16x256xf32>
    %259 = arith.negf %258 : vector<16x256xf32>
    %260 = math.exp %259 : vector<16x256xf32>
    %cst_76 = arith.constant 1.000000e+00 : f32
    %261 = vector.broadcast %cst_76 : f32 to vector<16x256xf32>
    %262 = arith.addf %261, %260 : vector<16x256xf32>
    %263 = arith.divf %261, %262 : vector<16x256xf32>
    %264 = vector.extract_strided_slice %257 {offsets = [0, 256], sizes = [16, 256], strides = [1, 1]} : vector<16x1024xf32> to vector<16x256xf32>
    %265 = arith.negf %264 : vector<16x256xf32>
    %266 = math.exp %265 : vector<16x256xf32>
    %cst_77 = arith.constant 1.000000e+00 : f32
    %267 = vector.broadcast %cst_77 : f32 to vector<16x256xf32>
    %268 = arith.addf %267, %266 : vector<16x256xf32>
    %269 = arith.divf %267, %268 : vector<16x256xf32>
    %270 = vector.extract_strided_slice %257 {offsets = [0, 512], sizes = [16, 256], strides = [1, 1]} : vector<16x1024xf32> to vector<16x256xf32>
    %271 = math.tanh %270 : vector<16x256xf32>
    %272 = vector.extract_strided_slice %257 {offsets = [0, 768], sizes = [16, 256], strides = [1, 1]} : vector<16x1024xf32> to vector<16x256xf32>
    %273 = arith.negf %272 : vector<16x256xf32>
    %274 = math.exp %273 : vector<16x256xf32>
    %cst_78 = arith.constant 1.000000e+00 : f32
    %275 = vector.broadcast %cst_78 : f32 to vector<16x256xf32>
    %276 = arith.addf %275, %274 : vector<16x256xf32>
    %277 = arith.divf %275, %276 : vector<16x256xf32>
    %278 = arith.mulf %269, %246 : vector<16x256xf32>
    %279 = arith.mulf %263, %271 : vector<16x256xf32>
    %280 = arith.addf %278, %279 : vector<16x256xf32>
    %281 = math.tanh %280 : vector<16x256xf32>
    %282 = arith.mulf %277, %281 : vector<16x256xf32>
    %283 = arith.index_cast %c7_i32 : i32 to index
    %c0_79 = arith.constant 0 : index
    %c0_80 = arith.constant 0 : index
    %284 = vector.load %arg6[%283, %c0_79, %c0_80] : memref<8x16x256xf32, #tpu.memory_space<vmem>>, vector<1x16x256xf32>
    %285 = vector.shape_cast %284 : vector<1x16x256xf32> to vector<16x256xf32>
    %286 = vector.shape_cast %282 : vector<16x256xf32> to vector<1x16x256xf32>
    tpu.vector_store %arg6[%283, %c0_79, %c0_80], %286 {strides = array<i32>} : memref<8x16x256xf32, #tpu.memory_space<vmem>>, vector<1x16x256xf32>,
    %c8_i32 = arith.constant 8 : i32
    %c0_81 = arith.constant 0 : index
    %c0_82 = arith.constant 0 : index
    %287 = vector.load %arg7[%c0_81, %c0_82] : memref<16x256xf32, #tpu.memory_space<vmem>>, vector<16x256xf32>
    tpu.vector_store %arg7[%c0_81, %c0_82], %282 {strides = array<i32>} : memref<16x256xf32, #tpu.memory_space<vmem>>, vector<16x256xf32>,
    %c0_83 = arith.constant 0 : index
    %c0_84 = arith.constant 0 : index
    %288 = vector.load %arg8[%c0_83, %c0_84] : memref<16x256xf32, #tpu.memory_space<vmem>>, vector<16x256xf32>
    tpu.vector_store %arg8[%c0_83, %c0_84], %280 {strides = array<i32>} : memref<16x256xf32, #tpu.memory_space<vmem>>, vector<16x256xf32>,
    return
  }
  func.func @transform_0(%arg0: i32, %arg1: i32) -> (i32, i32, i32) {
    %c0_i32 = arith.constant 0 : i32
    %c0_i32_0 = arith.constant 0 : i32
    return %arg1, %arg0, %c0_i32 : i32, i32, i32
  }
  func.func @transform_1(%arg0: i32, %arg1: i32) -> (i32, i32) {
    %c0_i32 = arith.constant 0 : i32
    %c0_i32_0 = arith.constant 0 : i32
    %c0_i32_1 = arith.constant 0 : i32
    return %c0_i32, %c0_i32_0 : i32, i32
  }
  func.func @transform_2(%arg0: i32, %arg1: i32) -> (i32, i32) {
    %c0_i32 = arith.constant 0 : i32
    %c0_i32_0 = arith.constant 0 : i32
    %c0_i32_1 = arith.constant 0 : i32
    return %c0_i32, %c0_i32_0 : i32, i32
  }
  func.func @transform_3(%arg0: i32, %arg1: i32) -> (i32, i32) {
    %c0_i32 = arith.constant 0 : i32
    %c0_i32_0 = arith.constant 0 : i32
    %c0_i32_1 = arith.constant 0 : i32
    return %c0_i32, %c0_i32_0 : i32, i32
  }
  func.func @transform_4(%arg0: i32, %arg1: i32) -> (i32, i32, i32) {
    %c0_i32 = arith.constant 0 : i32
    %c0_i32_0 = arith.constant 0 : i32
    return %arg1, %arg0, %c0_i32 : i32, i32, i32
  }
}

module attributes {stable_mosaic.version = 11 : i64} {
  func.func @_lstm_layer_kernel(%arg0: i32, %arg1: i32, %arg2: memref<8x16x256xf32, #tpu.memory_space<vmem>>, %arg3: memref<256x1024xf32, #tpu.memory_space<vmem>>, %arg4: memref<1x1024xf32, #tpu.memory_space<vmem>>, %arg5: memref<256x1024xf32, #tpu.memory_space<vmem>>, %arg6: memref<256x128xf32, #tpu.memory_space<vmem>>, %arg7: memref<1x128xf32, #tpu.memory_space<vmem>>, %arg8: memref<8x16x128xf32, #tpu.memory_space<vmem>>, %arg9: memref<16x256xf32, #tpu.memory_space<vmem>>, %arg10: memref<16x256xf32, #tpu.memory_space<vmem>>, %arg11: memref<8x16x1024xf32, #tpu.memory_space<vmem>>) attributes {dimension_semantics = [#tpu.dimension_semantics<parallel>, #tpu.dimension_semantics<arbitrary>], iteration_bounds = array<i64: 1, 1>, scalar_prefetch = 0 : i64, scratch_operands = 3 : i64, tpu.core_type = #tpu.core_type<tc>, window_params = [{transform_indices = @transform_0, window_bounds = array<i64: 8, 16, 256>}, {pipeline_mode = #tpu.pipeline_mode<synchronous>, transform_indices = @transform_1, window_bounds = array<i64: 256, 1024>}, {pipeline_mode = #tpu.pipeline_mode<synchronous>, transform_indices = @transform_2, window_bounds = array<i64: 1, 1024>}, {pipeline_mode = #tpu.pipeline_mode<synchronous>, transform_indices = @transform_3, window_bounds = array<i64: 256, 1024>}, {pipeline_mode = #tpu.pipeline_mode<synchronous>, transform_indices = @transform_4, window_bounds = array<i64: 256, 128>}, {pipeline_mode = #tpu.pipeline_mode<synchronous>, transform_indices = @transform_5, window_bounds = array<i64: 1, 128>}, {transform_indices = @transform_6, window_bounds = array<i64: 8, 16, 128>}]} {
    %c0_i32 = arith.constant 0 : i32
    %0 = arith.cmpi eq, %arg1, %c0_i32 : i32
    %1 = arith.extui %0 : i1 to i32
    %c0_i32_0 = arith.constant 0 : i32
    %2 = arith.cmpi ne, %1, %c0_i32_0 : i32
    scf.if %2 {
      %cst_97 = arith.constant 0.000000e+00 : f32
      %315 = vector.broadcast %cst_97 : f32 to vector<16x256xf32>
      %c0_98 = arith.constant 0 : index
      %c0_99 = arith.constant 0 : index
      %316 = vector.load %arg9[%c0_98, %c0_99] : memref<16x256xf32, #tpu.memory_space<vmem>>, vector<16x256xf32>
      tpu.vector_store %arg9[%c0_98, %c0_99], %315 {strides = array<i32>} : memref<16x256xf32, #tpu.memory_space<vmem>>, vector<16x256xf32>,
      %cst_100 = arith.constant 0.000000e+00 : f32
      %317 = vector.broadcast %cst_100 : f32 to vector<16x256xf32>
      %c0_101 = arith.constant 0 : index
      %c0_102 = arith.constant 0 : index
      %318 = vector.load %arg10[%c0_101, %c0_102] : memref<16x256xf32, #tpu.memory_space<vmem>>, vector<16x256xf32>
      tpu.vector_store %arg10[%c0_101, %c0_102], %317 {strides = array<i32>} : memref<16x256xf32, #tpu.memory_space<vmem>>, vector<16x256xf32>,
    } else {
    }
    %c0 = arith.constant 0 : index
    %c0_1 = arith.constant 0 : index
    %3 = vector.load %arg3[%c0, %c0_1] : memref<256x1024xf32, #tpu.memory_space<vmem>>, vector<256x1024xf32>
    %c0_2 = arith.constant 0 : index
    %c0_3 = arith.constant 0 : index
    %4 = vector.load %arg5[%c0_2, %c0_3] : memref<256x1024xf32, #tpu.memory_space<vmem>>, vector<256x1024xf32>
    %c0_4 = arith.constant 0 : index
    %c0_5 = arith.constant 0 : index
    %5 = vector.load %arg4[%c0_4, %c0_5] : memref<1x1024xf32, #tpu.memory_space<vmem>>, vector<1x1024xf32>
    %c0_6 = arith.constant 0 : index
    %c0_7 = arith.constant 0 : index
    %c0_8 = arith.constant 0 : index
    %6 = vector.load %arg2[%c0_6, %c0_7, %c0_8] : memref<8x16x256xf32, #tpu.memory_space<vmem>>, vector<8x16x256xf32>
    %7 = vector.shape_cast %6 : vector<8x16x256xf32> to vector<128x256xf32>
    %cst = arith.constant dense<0.000000e+00> : vector<128x1024xf32>
    %8 = tpu.matmul %7, %3, %cst {dimension_numbers = #tpu.dot_dimension_numbers<[1], [0], [0], [1], [0, 0, 1, 1], [], []>} : vector<128x256xf32>, vector<256x1024xf32>, vector<128x1024xf32> -> vector<128x1024xf32>
    %9 = vector.broadcast %5 : vector<1x1024xf32> to vector<128x1024xf32>
    %10 = arith.addf %8, %9 : vector<128x1024xf32>
    %11 = vector.shape_cast %10 : vector<128x1024xf32> to vector<8x16x1024xf32>
    %c0_9 = arith.constant 0 : index
    %c0_10 = arith.constant 0 : index
    %c0_11 = arith.constant 0 : index
    %12 = vector.load %arg11[%c0_9, %c0_10, %c0_11] : memref<8x16x1024xf32, #tpu.memory_space<vmem>>, vector<8x16x1024xf32>
    tpu.vector_store %arg11[%c0_9, %c0_10, %c0_11], %11 {strides = array<i32>} : memref<8x16x1024xf32, #tpu.memory_space<vmem>>, vector<8x16x1024xf32>,
    %c0_12 = arith.constant 0 : index
    %c0_13 = arith.constant 0 : index
    %13 = vector.load %arg6[%c0_12, %c0_13] : memref<256x128xf32, #tpu.memory_space<vmem>>, vector<256x128xf32>
    %c0_14 = arith.constant 0 : index
    %c0_15 = arith.constant 0 : index
    %14 = vector.load %arg7[%c0_14, %c0_15] : memref<1x128xf32, #tpu.memory_space<vmem>>, vector<1x128xf32>
    %c0_16 = arith.constant 0 : index
    %c0_17 = arith.constant 0 : index
    %15 = vector.load %arg9[%c0_16, %c0_17] : memref<16x256xf32, #tpu.memory_space<vmem>>, vector<16x256xf32>
    %c0_18 = arith.constant 0 : index
    %c0_19 = arith.constant 0 : index
    %16 = vector.load %arg10[%c0_18, %c0_19] : memref<16x256xf32, #tpu.memory_space<vmem>>, vector<16x256xf32>
    %c0_i32_20 = arith.constant 0 : i32
    %17 = arith.index_cast %c0_i32_20 : i32 to index
    %c0_21 = arith.constant 0 : index
    %c0_22 = arith.constant 0 : index
    %18 = vector.load %arg11[%17, %c0_21, %c0_22] : memref<8x16x1024xf32, #tpu.memory_space<vmem>>, vector<1x16x1024xf32>
    %19 = vector.shape_cast %18 : vector<1x16x1024xf32> to vector<16x1024xf32>
    %cst_23 = arith.constant dense<0.000000e+00> : vector<16x1024xf32>
    %20 = tpu.matmul %15, %4, %cst_23 {dimension_numbers = #tpu.dot_dimension_numbers<[1], [0], [0], [1], [0, 0, 1, 1], [], []>} : vector<16x256xf32>, vector<256x1024xf32>, vector<16x1024xf32> -> vector<16x1024xf32>
    %21 = arith.addf %19, %20 : vector<16x1024xf32>
    %22 = vector.extract_strided_slice %21 {offsets = [0, 0], sizes = [16, 256], strides = [1, 1]} : vector<16x1024xf32> to vector<16x256xf32>
    %23 = arith.negf %22 : vector<16x256xf32>
    %24 = math.exp %23 : vector<16x256xf32>
    %cst_24 = arith.constant 1.000000e+00 : f32
    %25 = vector.broadcast %cst_24 : f32 to vector<16x256xf32>
    %26 = arith.addf %25, %24 : vector<16x256xf32>
    %27 = arith.divf %25, %26 : vector<16x256xf32>
    %28 = vector.extract_strided_slice %21 {offsets = [0, 256], sizes = [16, 256], strides = [1, 1]} : vector<16x1024xf32> to vector<16x256xf32>
    %29 = arith.negf %28 : vector<16x256xf32>
    %30 = math.exp %29 : vector<16x256xf32>
    %cst_25 = arith.constant 1.000000e+00 : f32
    %31 = vector.broadcast %cst_25 : f32 to vector<16x256xf32>
    %32 = arith.addf %31, %30 : vector<16x256xf32>
    %33 = arith.divf %31, %32 : vector<16x256xf32>
    %34 = vector.extract_strided_slice %21 {offsets = [0, 512], sizes = [16, 256], strides = [1, 1]} : vector<16x1024xf32> to vector<16x256xf32>
    %35 = math.tanh %34 : vector<16x256xf32>
    %36 = vector.extract_strided_slice %21 {offsets = [0, 768], sizes = [16, 256], strides = [1, 1]} : vector<16x1024xf32> to vector<16x256xf32>
    %37 = arith.negf %36 : vector<16x256xf32>
    %38 = math.exp %37 : vector<16x256xf32>
    %cst_26 = arith.constant 1.000000e+00 : f32
    %39 = vector.broadcast %cst_26 : f32 to vector<16x256xf32>
    %40 = arith.addf %39, %38 : vector<16x256xf32>
    %41 = arith.divf %39, %40 : vector<16x256xf32>
    %42 = arith.mulf %33, %16 : vector<16x256xf32>
    %43 = arith.mulf %27, %35 : vector<16x256xf32>
    %44 = arith.addf %42, %43 : vector<16x256xf32>
    %45 = math.tanh %44 : vector<16x256xf32>
    %46 = arith.mulf %41, %45 : vector<16x256xf32>
    %cst_27 = arith.constant dense<0.000000e+00> : vector<16x128xf32>
    %47 = tpu.matmul %46, %13, %cst_27 {dimension_numbers = #tpu.dot_dimension_numbers<[1], [0], [0], [1], [0, 0, 1, 1], [], []>} : vector<16x256xf32>, vector<256x128xf32>, vector<16x128xf32> -> vector<16x128xf32>
    %48 = vector.broadcast %14 : vector<1x128xf32> to vector<16x128xf32>
    %49 = arith.addf %47, %48 : vector<16x128xf32>
    %50 = arith.index_cast %c0_i32_20 : i32 to index
    %c0_28 = arith.constant 0 : index
    %c0_29 = arith.constant 0 : index
    %51 = vector.load %arg8[%50, %c0_28, %c0_29] : memref<8x16x128xf32, #tpu.memory_space<vmem>>, vector<1x16x128xf32>
    %52 = vector.shape_cast %51 : vector<1x16x128xf32> to vector<16x128xf32>
    %53 = vector.shape_cast %49 : vector<16x128xf32> to vector<1x16x128xf32>
    tpu.vector_store %arg8[%50, %c0_28, %c0_29], %53 {strides = array<i32>} : memref<8x16x128xf32, #tpu.memory_space<vmem>>, vector<1x16x128xf32>,
    %c1_i32 = arith.constant 1 : i32
    %54 = arith.index_cast %c1_i32 : i32 to index
    %c0_30 = arith.constant 0 : index
    %c0_31 = arith.constant 0 : index
    %55 = vector.load %arg11[%54, %c0_30, %c0_31] : memref<8x16x1024xf32, #tpu.memory_space<vmem>>, vector<1x16x1024xf32>
    %56 = vector.shape_cast %55 : vector<1x16x1024xf32> to vector<16x1024xf32>
    %cst_32 = arith.constant dense<0.000000e+00> : vector<16x1024xf32>
    %57 = tpu.matmul %46, %4, %cst_32 {dimension_numbers = #tpu.dot_dimension_numbers<[1], [0], [0], [1], [0, 0, 1, 1], [], []>} : vector<16x256xf32>, vector<256x1024xf32>, vector<16x1024xf32> -> vector<16x1024xf32>
    %58 = arith.addf %56, %57 : vector<16x1024xf32>
    %59 = vector.extract_strided_slice %58 {offsets = [0, 0], sizes = [16, 256], strides = [1, 1]} : vector<16x1024xf32> to vector<16x256xf32>
    %60 = arith.negf %59 : vector<16x256xf32>
    %61 = math.exp %60 : vector<16x256xf32>
    %cst_33 = arith.constant 1.000000e+00 : f32
    %62 = vector.broadcast %cst_33 : f32 to vector<16x256xf32>
    %63 = arith.addf %62, %61 : vector<16x256xf32>
    %64 = arith.divf %62, %63 : vector<16x256xf32>
    %65 = vector.extract_strided_slice %58 {offsets = [0, 256], sizes = [16, 256], strides = [1, 1]} : vector<16x1024xf32> to vector<16x256xf32>
    %66 = arith.negf %65 : vector<16x256xf32>
    %67 = math.exp %66 : vector<16x256xf32>
    %cst_34 = arith.constant 1.000000e+00 : f32
    %68 = vector.broadcast %cst_34 : f32 to vector<16x256xf32>
    %69 = arith.addf %68, %67 : vector<16x256xf32>
    %70 = arith.divf %68, %69 : vector<16x256xf32>
    %71 = vector.extract_strided_slice %58 {offsets = [0, 512], sizes = [16, 256], strides = [1, 1]} : vector<16x1024xf32> to vector<16x256xf32>
    %72 = math.tanh %71 : vector<16x256xf32>
    %73 = vector.extract_strided_slice %58 {offsets = [0, 768], sizes = [16, 256], strides = [1, 1]} : vector<16x1024xf32> to vector<16x256xf32>
    %74 = arith.negf %73 : vector<16x256xf32>
    %75 = math.exp %74 : vector<16x256xf32>
    %cst_35 = arith.constant 1.000000e+00 : f32
    %76 = vector.broadcast %cst_35 : f32 to vector<16x256xf32>
    %77 = arith.addf %76, %75 : vector<16x256xf32>
    %78 = arith.divf %76, %77 : vector<16x256xf32>
    %79 = arith.mulf %70, %44 : vector<16x256xf32>
    %80 = arith.mulf %64, %72 : vector<16x256xf32>
    %81 = arith.addf %79, %80 : vector<16x256xf32>
    %82 = math.tanh %81 : vector<16x256xf32>
    %83 = arith.mulf %78, %82 : vector<16x256xf32>
    %cst_36 = arith.constant dense<0.000000e+00> : vector<16x128xf32>
    %84 = tpu.matmul %83, %13, %cst_36 {dimension_numbers = #tpu.dot_dimension_numbers<[1], [0], [0], [1], [0, 0, 1, 1], [], []>} : vector<16x256xf32>, vector<256x128xf32>, vector<16x128xf32> -> vector<16x128xf32>
    %85 = vector.broadcast %14 : vector<1x128xf32> to vector<16x128xf32>
    %86 = arith.addf %84, %85 : vector<16x128xf32>
    %87 = arith.index_cast %c1_i32 : i32 to index
    %c0_37 = arith.constant 0 : index
    %c0_38 = arith.constant 0 : index
    %88 = vector.load %arg8[%87, %c0_37, %c0_38] : memref<8x16x128xf32, #tpu.memory_space<vmem>>, vector<1x16x128xf32>
    %89 = vector.shape_cast %88 : vector<1x16x128xf32> to vector<16x128xf32>
    %90 = vector.shape_cast %86 : vector<16x128xf32> to vector<1x16x128xf32>
    tpu.vector_store %arg8[%87, %c0_37, %c0_38], %90 {strides = array<i32>} : memref<8x16x128xf32, #tpu.memory_space<vmem>>, vector<1x16x128xf32>,
    %c2_i32 = arith.constant 2 : i32
    %91 = arith.index_cast %c2_i32 : i32 to index
    %c0_39 = arith.constant 0 : index
    %c0_40 = arith.constant 0 : index
    %92 = vector.load %arg11[%91, %c0_39, %c0_40] : memref<8x16x1024xf32, #tpu.memory_space<vmem>>, vector<1x16x1024xf32>
    %93 = vector.shape_cast %92 : vector<1x16x1024xf32> to vector<16x1024xf32>
    %cst_41 = arith.constant dense<0.000000e+00> : vector<16x1024xf32>
    %94 = tpu.matmul %83, %4, %cst_41 {dimension_numbers = #tpu.dot_dimension_numbers<[1], [0], [0], [1], [0, 0, 1, 1], [], []>} : vector<16x256xf32>, vector<256x1024xf32>, vector<16x1024xf32> -> vector<16x1024xf32>
    %95 = arith.addf %93, %94 : vector<16x1024xf32>
    %96 = vector.extract_strided_slice %95 {offsets = [0, 0], sizes = [16, 256], strides = [1, 1]} : vector<16x1024xf32> to vector<16x256xf32>
    %97 = arith.negf %96 : vector<16x256xf32>
    %98 = math.exp %97 : vector<16x256xf32>
    %cst_42 = arith.constant 1.000000e+00 : f32
    %99 = vector.broadcast %cst_42 : f32 to vector<16x256xf32>
    %100 = arith.addf %99, %98 : vector<16x256xf32>
    %101 = arith.divf %99, %100 : vector<16x256xf32>
    %102 = vector.extract_strided_slice %95 {offsets = [0, 256], sizes = [16, 256], strides = [1, 1]} : vector<16x1024xf32> to vector<16x256xf32>
    %103 = arith.negf %102 : vector<16x256xf32>
    %104 = math.exp %103 : vector<16x256xf32>
    %cst_43 = arith.constant 1.000000e+00 : f32
    %105 = vector.broadcast %cst_43 : f32 to vector<16x256xf32>
    %106 = arith.addf %105, %104 : vector<16x256xf32>
    %107 = arith.divf %105, %106 : vector<16x256xf32>
    %108 = vector.extract_strided_slice %95 {offsets = [0, 512], sizes = [16, 256], strides = [1, 1]} : vector<16x1024xf32> to vector<16x256xf32>
    %109 = math.tanh %108 : vector<16x256xf32>
    %110 = vector.extract_strided_slice %95 {offsets = [0, 768], sizes = [16, 256], strides = [1, 1]} : vector<16x1024xf32> to vector<16x256xf32>
    %111 = arith.negf %110 : vector<16x256xf32>
    %112 = math.exp %111 : vector<16x256xf32>
    %cst_44 = arith.constant 1.000000e+00 : f32
    %113 = vector.broadcast %cst_44 : f32 to vector<16x256xf32>
    %114 = arith.addf %113, %112 : vector<16x256xf32>
    %115 = arith.divf %113, %114 : vector<16x256xf32>
    %116 = arith.mulf %107, %81 : vector<16x256xf32>
    %117 = arith.mulf %101, %109 : vector<16x256xf32>
    %118 = arith.addf %116, %117 : vector<16x256xf32>
    %119 = math.tanh %118 : vector<16x256xf32>
    %120 = arith.mulf %115, %119 : vector<16x256xf32>
    %cst_45 = arith.constant dense<0.000000e+00> : vector<16x128xf32>
    %121 = tpu.matmul %120, %13, %cst_45 {dimension_numbers = #tpu.dot_dimension_numbers<[1], [0], [0], [1], [0, 0, 1, 1], [], []>} : vector<16x256xf32>, vector<256x128xf32>, vector<16x128xf32> -> vector<16x128xf32>
    %122 = vector.broadcast %14 : vector<1x128xf32> to vector<16x128xf32>
    %123 = arith.addf %121, %122 : vector<16x128xf32>
    %124 = arith.index_cast %c2_i32 : i32 to index
    %c0_46 = arith.constant 0 : index
    %c0_47 = arith.constant 0 : index
    %125 = vector.load %arg8[%124, %c0_46, %c0_47] : memref<8x16x128xf32, #tpu.memory_space<vmem>>, vector<1x16x128xf32>
    %126 = vector.shape_cast %125 : vector<1x16x128xf32> to vector<16x128xf32>
    %127 = vector.shape_cast %123 : vector<16x128xf32> to vector<1x16x128xf32>
    tpu.vector_store %arg8[%124, %c0_46, %c0_47], %127 {strides = array<i32>} : memref<8x16x128xf32, #tpu.memory_space<vmem>>, vector<1x16x128xf32>,
    %c3_i32 = arith.constant 3 : i32
    %128 = arith.index_cast %c3_i32 : i32 to index
    %c0_48 = arith.constant 0 : index
    %c0_49 = arith.constant 0 : index
    %129 = vector.load %arg11[%128, %c0_48, %c0_49] : memref<8x16x1024xf32, #tpu.memory_space<vmem>>, vector<1x16x1024xf32>
    %130 = vector.shape_cast %129 : vector<1x16x1024xf32> to vector<16x1024xf32>
    %cst_50 = arith.constant dense<0.000000e+00> : vector<16x1024xf32>
    %131 = tpu.matmul %120, %4, %cst_50 {dimension_numbers = #tpu.dot_dimension_numbers<[1], [0], [0], [1], [0, 0, 1, 1], [], []>} : vector<16x256xf32>, vector<256x1024xf32>, vector<16x1024xf32> -> vector<16x1024xf32>
    %132 = arith.addf %130, %131 : vector<16x1024xf32>
    %133 = vector.extract_strided_slice %132 {offsets = [0, 0], sizes = [16, 256], strides = [1, 1]} : vector<16x1024xf32> to vector<16x256xf32>
    %134 = arith.negf %133 : vector<16x256xf32>
    %135 = math.exp %134 : vector<16x256xf32>
    %cst_51 = arith.constant 1.000000e+00 : f32
    %136 = vector.broadcast %cst_51 : f32 to vector<16x256xf32>
    %137 = arith.addf %136, %135 : vector<16x256xf32>
    %138 = arith.divf %136, %137 : vector<16x256xf32>
    %139 = vector.extract_strided_slice %132 {offsets = [0, 256], sizes = [16, 256], strides = [1, 1]} : vector<16x1024xf32> to vector<16x256xf32>
    %140 = arith.negf %139 : vector<16x256xf32>
    %141 = math.exp %140 : vector<16x256xf32>
    %cst_52 = arith.constant 1.000000e+00 : f32
    %142 = vector.broadcast %cst_52 : f32 to vector<16x256xf32>
    %143 = arith.addf %142, %141 : vector<16x256xf32>
    %144 = arith.divf %142, %143 : vector<16x256xf32>
    %145 = vector.extract_strided_slice %132 {offsets = [0, 512], sizes = [16, 256], strides = [1, 1]} : vector<16x1024xf32> to vector<16x256xf32>
    %146 = math.tanh %145 : vector<16x256xf32>
    %147 = vector.extract_strided_slice %132 {offsets = [0, 768], sizes = [16, 256], strides = [1, 1]} : vector<16x1024xf32> to vector<16x256xf32>
    %148 = arith.negf %147 : vector<16x256xf32>
    %149 = math.exp %148 : vector<16x256xf32>
    %cst_53 = arith.constant 1.000000e+00 : f32
    %150 = vector.broadcast %cst_53 : f32 to vector<16x256xf32>
    %151 = arith.addf %150, %149 : vector<16x256xf32>
    %152 = arith.divf %150, %151 : vector<16x256xf32>
    %153 = arith.mulf %144, %118 : vector<16x256xf32>
    %154 = arith.mulf %138, %146 : vector<16x256xf32>
    %155 = arith.addf %153, %154 : vector<16x256xf32>
    %156 = math.tanh %155 : vector<16x256xf32>
    %157 = arith.mulf %152, %156 : vector<16x256xf32>
    %cst_54 = arith.constant dense<0.000000e+00> : vector<16x128xf32>
    %158 = tpu.matmul %157, %13, %cst_54 {dimension_numbers = #tpu.dot_dimension_numbers<[1], [0], [0], [1], [0, 0, 1, 1], [], []>} : vector<16x256xf32>, vector<256x128xf32>, vector<16x128xf32> -> vector<16x128xf32>
    %159 = vector.broadcast %14 : vector<1x128xf32> to vector<16x128xf32>
    %160 = arith.addf %158, %159 : vector<16x128xf32>
    %161 = arith.index_cast %c3_i32 : i32 to index
    %c0_55 = arith.constant 0 : index
    %c0_56 = arith.constant 0 : index
    %162 = vector.load %arg8[%161, %c0_55, %c0_56] : memref<8x16x128xf32, #tpu.memory_space<vmem>>, vector<1x16x128xf32>
    %163 = vector.shape_cast %162 : vector<1x16x128xf32> to vector<16x128xf32>
    %164 = vector.shape_cast %160 : vector<16x128xf32> to vector<1x16x128xf32>
    tpu.vector_store %arg8[%161, %c0_55, %c0_56], %164 {strides = array<i32>} : memref<8x16x128xf32, #tpu.memory_space<vmem>>, vector<1x16x128xf32>,
    %c4_i32 = arith.constant 4 : i32
    %165 = arith.index_cast %c4_i32 : i32 to index
    %c0_57 = arith.constant 0 : index
    %c0_58 = arith.constant 0 : index
    %166 = vector.load %arg11[%165, %c0_57, %c0_58] : memref<8x16x1024xf32, #tpu.memory_space<vmem>>, vector<1x16x1024xf32>
    %167 = vector.shape_cast %166 : vector<1x16x1024xf32> to vector<16x1024xf32>
    %cst_59 = arith.constant dense<0.000000e+00> : vector<16x1024xf32>
    %168 = tpu.matmul %157, %4, %cst_59 {dimension_numbers = #tpu.dot_dimension_numbers<[1], [0], [0], [1], [0, 0, 1, 1], [], []>} : vector<16x256xf32>, vector<256x1024xf32>, vector<16x1024xf32> -> vector<16x1024xf32>
    %169 = arith.addf %167, %168 : vector<16x1024xf32>
    %170 = vector.extract_strided_slice %169 {offsets = [0, 0], sizes = [16, 256], strides = [1, 1]} : vector<16x1024xf32> to vector<16x256xf32>
    %171 = arith.negf %170 : vector<16x256xf32>
    %172 = math.exp %171 : vector<16x256xf32>
    %cst_60 = arith.constant 1.000000e+00 : f32
    %173 = vector.broadcast %cst_60 : f32 to vector<16x256xf32>
    %174 = arith.addf %173, %172 : vector<16x256xf32>
    %175 = arith.divf %173, %174 : vector<16x256xf32>
    %176 = vector.extract_strided_slice %169 {offsets = [0, 256], sizes = [16, 256], strides = [1, 1]} : vector<16x1024xf32> to vector<16x256xf32>
    %177 = arith.negf %176 : vector<16x256xf32>
    %178 = math.exp %177 : vector<16x256xf32>
    %cst_61 = arith.constant 1.000000e+00 : f32
    %179 = vector.broadcast %cst_61 : f32 to vector<16x256xf32>
    %180 = arith.addf %179, %178 : vector<16x256xf32>
    %181 = arith.divf %179, %180 : vector<16x256xf32>
    %182 = vector.extract_strided_slice %169 {offsets = [0, 512], sizes = [16, 256], strides = [1, 1]} : vector<16x1024xf32> to vector<16x256xf32>
    %183 = math.tanh %182 : vector<16x256xf32>
    %184 = vector.extract_strided_slice %169 {offsets = [0, 768], sizes = [16, 256], strides = [1, 1]} : vector<16x1024xf32> to vector<16x256xf32>
    %185 = arith.negf %184 : vector<16x256xf32>
    %186 = math.exp %185 : vector<16x256xf32>
    %cst_62 = arith.constant 1.000000e+00 : f32
    %187 = vector.broadcast %cst_62 : f32 to vector<16x256xf32>
    %188 = arith.addf %187, %186 : vector<16x256xf32>
    %189 = arith.divf %187, %188 : vector<16x256xf32>
    %190 = arith.mulf %181, %155 : vector<16x256xf32>
    %191 = arith.mulf %175, %183 : vector<16x256xf32>
    %192 = arith.addf %190, %191 : vector<16x256xf32>
    %193 = math.tanh %192 : vector<16x256xf32>
    %194 = arith.mulf %189, %193 : vector<16x256xf32>
    %cst_63 = arith.constant dense<0.000000e+00> : vector<16x128xf32>
    %195 = tpu.matmul %194, %13, %cst_63 {dimension_numbers = #tpu.dot_dimension_numbers<[1], [0], [0], [1], [0, 0, 1, 1], [], []>} : vector<16x256xf32>, vector<256x128xf32>, vector<16x128xf32> -> vector<16x128xf32>
    %196 = vector.broadcast %14 : vector<1x128xf32> to vector<16x128xf32>
    %197 = arith.addf %195, %196 : vector<16x128xf32>
    %198 = arith.index_cast %c4_i32 : i32 to index
    %c0_64 = arith.constant 0 : index
    %c0_65 = arith.constant 0 : index
    %199 = vector.load %arg8[%198, %c0_64, %c0_65] : memref<8x16x128xf32, #tpu.memory_space<vmem>>, vector<1x16x128xf32>
    %200 = vector.shape_cast %199 : vector<1x16x128xf32> to vector<16x128xf32>
    %201 = vector.shape_cast %197 : vector<16x128xf32> to vector<1x16x128xf32>
    tpu.vector_store %arg8[%198, %c0_64, %c0_65], %201 {strides = array<i32>} : memref<8x16x128xf32, #tpu.memory_space<vmem>>, vector<1x16x128xf32>,
    %c5_i32 = arith.constant 5 : i32
    %202 = arith.index_cast %c5_i32 : i32 to index
    %c0_66 = arith.constant 0 : index
    %c0_67 = arith.constant 0 : index
    %203 = vector.load %arg11[%202, %c0_66, %c0_67] : memref<8x16x1024xf32, #tpu.memory_space<vmem>>, vector<1x16x1024xf32>
    %204 = vector.shape_cast %203 : vector<1x16x1024xf32> to vector<16x1024xf32>
    %cst_68 = arith.constant dense<0.000000e+00> : vector<16x1024xf32>
    %205 = tpu.matmul %194, %4, %cst_68 {dimension_numbers = #tpu.dot_dimension_numbers<[1], [0], [0], [1], [0, 0, 1, 1], [], []>} : vector<16x256xf32>, vector<256x1024xf32>, vector<16x1024xf32> -> vector<16x1024xf32>
    %206 = arith.addf %204, %205 : vector<16x1024xf32>
    %207 = vector.extract_strided_slice %206 {offsets = [0, 0], sizes = [16, 256], strides = [1, 1]} : vector<16x1024xf32> to vector<16x256xf32>
    %208 = arith.negf %207 : vector<16x256xf32>
    %209 = math.exp %208 : vector<16x256xf32>
    %cst_69 = arith.constant 1.000000e+00 : f32
    %210 = vector.broadcast %cst_69 : f32 to vector<16x256xf32>
    %211 = arith.addf %210, %209 : vector<16x256xf32>
    %212 = arith.divf %210, %211 : vector<16x256xf32>
    %213 = vector.extract_strided_slice %206 {offsets = [0, 256], sizes = [16, 256], strides = [1, 1]} : vector<16x1024xf32> to vector<16x256xf32>
    %214 = arith.negf %213 : vector<16x256xf32>
    %215 = math.exp %214 : vector<16x256xf32>
    %cst_70 = arith.constant 1.000000e+00 : f32
    %216 = vector.broadcast %cst_70 : f32 to vector<16x256xf32>
    %217 = arith.addf %216, %215 : vector<16x256xf32>
    %218 = arith.divf %216, %217 : vector<16x256xf32>
    %219 = vector.extract_strided_slice %206 {offsets = [0, 512], sizes = [16, 256], strides = [1, 1]} : vector<16x1024xf32> to vector<16x256xf32>
    %220 = math.tanh %219 : vector<16x256xf32>
    %221 = vector.extract_strided_slice %206 {offsets = [0, 768], sizes = [16, 256], strides = [1, 1]} : vector<16x1024xf32> to vector<16x256xf32>
    %222 = arith.negf %221 : vector<16x256xf32>
    %223 = math.exp %222 : vector<16x256xf32>
    %cst_71 = arith.constant 1.000000e+00 : f32
    %224 = vector.broadcast %cst_71 : f32 to vector<16x256xf32>
    %225 = arith.addf %224, %223 : vector<16x256xf32>
    %226 = arith.divf %224, %225 : vector<16x256xf32>
    %227 = arith.mulf %218, %192 : vector<16x256xf32>
    %228 = arith.mulf %212, %220 : vector<16x256xf32>
    %229 = arith.addf %227, %228 : vector<16x256xf32>
    %230 = math.tanh %229 : vector<16x256xf32>
    %231 = arith.mulf %226, %230 : vector<16x256xf32>
    %cst_72 = arith.constant dense<0.000000e+00> : vector<16x128xf32>
    %232 = tpu.matmul %231, %13, %cst_72 {dimension_numbers = #tpu.dot_dimension_numbers<[1], [0], [0], [1], [0, 0, 1, 1], [], []>} : vector<16x256xf32>, vector<256x128xf32>, vector<16x128xf32> -> vector<16x128xf32>
    %233 = vector.broadcast %14 : vector<1x128xf32> to vector<16x128xf32>
    %234 = arith.addf %232, %233 : vector<16x128xf32>
    %235 = arith.index_cast %c5_i32 : i32 to index
    %c0_73 = arith.constant 0 : index
    %c0_74 = arith.constant 0 : index
    %236 = vector.load %arg8[%235, %c0_73, %c0_74] : memref<8x16x128xf32, #tpu.memory_space<vmem>>, vector<1x16x128xf32>
    %237 = vector.shape_cast %236 : vector<1x16x128xf32> to vector<16x128xf32>
    %238 = vector.shape_cast %234 : vector<16x128xf32> to vector<1x16x128xf32>
    tpu.vector_store %arg8[%235, %c0_73, %c0_74], %238 {strides = array<i32>} : memref<8x16x128xf32, #tpu.memory_space<vmem>>, vector<1x16x128xf32>,
    %c6_i32 = arith.constant 6 : i32
    %239 = arith.index_cast %c6_i32 : i32 to index
    %c0_75 = arith.constant 0 : index
    %c0_76 = arith.constant 0 : index
    %240 = vector.load %arg11[%239, %c0_75, %c0_76] : memref<8x16x1024xf32, #tpu.memory_space<vmem>>, vector<1x16x1024xf32>
    %241 = vector.shape_cast %240 : vector<1x16x1024xf32> to vector<16x1024xf32>
    %cst_77 = arith.constant dense<0.000000e+00> : vector<16x1024xf32>
    %242 = tpu.matmul %231, %4, %cst_77 {dimension_numbers = #tpu.dot_dimension_numbers<[1], [0], [0], [1], [0, 0, 1, 1], [], []>} : vector<16x256xf32>, vector<256x1024xf32>, vector<16x1024xf32> -> vector<16x1024xf32>
    %243 = arith.addf %241, %242 : vector<16x1024xf32>
    %244 = vector.extract_strided_slice %243 {offsets = [0, 0], sizes = [16, 256], strides = [1, 1]} : vector<16x1024xf32> to vector<16x256xf32>
    %245 = arith.negf %244 : vector<16x256xf32>
    %246 = math.exp %245 : vector<16x256xf32>
    %cst_78 = arith.constant 1.000000e+00 : f32
    %247 = vector.broadcast %cst_78 : f32 to vector<16x256xf32>
    %248 = arith.addf %247, %246 : vector<16x256xf32>
    %249 = arith.divf %247, %248 : vector<16x256xf32>
    %250 = vector.extract_strided_slice %243 {offsets = [0, 256], sizes = [16, 256], strides = [1, 1]} : vector<16x1024xf32> to vector<16x256xf32>
    %251 = arith.negf %250 : vector<16x256xf32>
    %252 = math.exp %251 : vector<16x256xf32>
    %cst_79 = arith.constant 1.000000e+00 : f32
    %253 = vector.broadcast %cst_79 : f32 to vector<16x256xf32>
    %254 = arith.addf %253, %252 : vector<16x256xf32>
    %255 = arith.divf %253, %254 : vector<16x256xf32>
    %256 = vector.extract_strided_slice %243 {offsets = [0, 512], sizes = [16, 256], strides = [1, 1]} : vector<16x1024xf32> to vector<16x256xf32>
    %257 = math.tanh %256 : vector<16x256xf32>
    %258 = vector.extract_strided_slice %243 {offsets = [0, 768], sizes = [16, 256], strides = [1, 1]} : vector<16x1024xf32> to vector<16x256xf32>
    %259 = arith.negf %258 : vector<16x256xf32>
    %260 = math.exp %259 : vector<16x256xf32>
    %cst_80 = arith.constant 1.000000e+00 : f32
    %261 = vector.broadcast %cst_80 : f32 to vector<16x256xf32>
    %262 = arith.addf %261, %260 : vector<16x256xf32>
    %263 = arith.divf %261, %262 : vector<16x256xf32>
    %264 = arith.mulf %255, %229 : vector<16x256xf32>
    %265 = arith.mulf %249, %257 : vector<16x256xf32>
    %266 = arith.addf %264, %265 : vector<16x256xf32>
    %267 = math.tanh %266 : vector<16x256xf32>
    %268 = arith.mulf %263, %267 : vector<16x256xf32>
    %cst_81 = arith.constant dense<0.000000e+00> : vector<16x128xf32>
    %269 = tpu.matmul %268, %13, %cst_81 {dimension_numbers = #tpu.dot_dimension_numbers<[1], [0], [0], [1], [0, 0, 1, 1], [], []>} : vector<16x256xf32>, vector<256x128xf32>, vector<16x128xf32> -> vector<16x128xf32>
    %270 = vector.broadcast %14 : vector<1x128xf32> to vector<16x128xf32>
    %271 = arith.addf %269, %270 : vector<16x128xf32>
    %272 = arith.index_cast %c6_i32 : i32 to index
    %c0_82 = arith.constant 0 : index
    %c0_83 = arith.constant 0 : index
    %273 = vector.load %arg8[%272, %c0_82, %c0_83] : memref<8x16x128xf32, #tpu.memory_space<vmem>>, vector<1x16x128xf32>
    %274 = vector.shape_cast %273 : vector<1x16x128xf32> to vector<16x128xf32>
    %275 = vector.shape_cast %271 : vector<16x128xf32> to vector<1x16x128xf32>
    tpu.vector_store %arg8[%272, %c0_82, %c0_83], %275 {strides = array<i32>} : memref<8x16x128xf32, #tpu.memory_space<vmem>>, vector<1x16x128xf32>,
    %c7_i32 = arith.constant 7 : i32
    %276 = arith.index_cast %c7_i32 : i32 to index
    %c0_84 = arith.constant 0 : index
    %c0_85 = arith.constant 0 : index
    %277 = vector.load %arg11[%276, %c0_84, %c0_85] : memref<8x16x1024xf32, #tpu.memory_space<vmem>>, vector<1x16x1024xf32>
    %278 = vector.shape_cast %277 : vector<1x16x1024xf32> to vector<16x1024xf32>
    %cst_86 = arith.constant dense<0.000000e+00> : vector<16x1024xf32>
    %279 = tpu.matmul %268, %4, %cst_86 {dimension_numbers = #tpu.dot_dimension_numbers<[1], [0], [0], [1], [0, 0, 1, 1], [], []>} : vector<16x256xf32>, vector<256x1024xf32>, vector<16x1024xf32> -> vector<16x1024xf32>
    %280 = arith.addf %278, %279 : vector<16x1024xf32>
    %281 = vector.extract_strided_slice %280 {offsets = [0, 0], sizes = [16, 256], strides = [1, 1]} : vector<16x1024xf32> to vector<16x256xf32>
    %282 = arith.negf %281 : vector<16x256xf32>
    %283 = math.exp %282 : vector<16x256xf32>
    %cst_87 = arith.constant 1.000000e+00 : f32
    %284 = vector.broadcast %cst_87 : f32 to vector<16x256xf32>
    %285 = arith.addf %284, %283 : vector<16x256xf32>
    %286 = arith.divf %284, %285 : vector<16x256xf32>
    %287 = vector.extract_strided_slice %280 {offsets = [0, 256], sizes = [16, 256], strides = [1, 1]} : vector<16x1024xf32> to vector<16x256xf32>
    %288 = arith.negf %287 : vector<16x256xf32>
    %289 = math.exp %288 : vector<16x256xf32>
    %cst_88 = arith.constant 1.000000e+00 : f32
    %290 = vector.broadcast %cst_88 : f32 to vector<16x256xf32>
    %291 = arith.addf %290, %289 : vector<16x256xf32>
    %292 = arith.divf %290, %291 : vector<16x256xf32>
    %293 = vector.extract_strided_slice %280 {offsets = [0, 512], sizes = [16, 256], strides = [1, 1]} : vector<16x1024xf32> to vector<16x256xf32>
    %294 = math.tanh %293 : vector<16x256xf32>
    %295 = vector.extract_strided_slice %280 {offsets = [0, 768], sizes = [16, 256], strides = [1, 1]} : vector<16x1024xf32> to vector<16x256xf32>
    %296 = arith.negf %295 : vector<16x256xf32>
    %297 = math.exp %296 : vector<16x256xf32>
    %cst_89 = arith.constant 1.000000e+00 : f32
    %298 = vector.broadcast %cst_89 : f32 to vector<16x256xf32>
    %299 = arith.addf %298, %297 : vector<16x256xf32>
    %300 = arith.divf %298, %299 : vector<16x256xf32>
    %301 = arith.mulf %292, %266 : vector<16x256xf32>
    %302 = arith.mulf %286, %294 : vector<16x256xf32>
    %303 = arith.addf %301, %302 : vector<16x256xf32>
    %304 = math.tanh %303 : vector<16x256xf32>
    %305 = arith.mulf %300, %304 : vector<16x256xf32>
    %cst_90 = arith.constant dense<0.000000e+00> : vector<16x128xf32>
    %306 = tpu.matmul %305, %13, %cst_90 {dimension_numbers = #tpu.dot_dimension_numbers<[1], [0], [0], [1], [0, 0, 1, 1], [], []>} : vector<16x256xf32>, vector<256x128xf32>, vector<16x128xf32> -> vector<16x128xf32>
    %307 = vector.broadcast %14 : vector<1x128xf32> to vector<16x128xf32>
    %308 = arith.addf %306, %307 : vector<16x128xf32>
    %309 = arith.index_cast %c7_i32 : i32 to index
    %c0_91 = arith.constant 0 : index
    %c0_92 = arith.constant 0 : index
    %310 = vector.load %arg8[%309, %c0_91, %c0_92] : memref<8x16x128xf32, #tpu.memory_space<vmem>>, vector<1x16x128xf32>
    %311 = vector.shape_cast %310 : vector<1x16x128xf32> to vector<16x128xf32>
    %312 = vector.shape_cast %308 : vector<16x128xf32> to vector<1x16x128xf32>
    tpu.vector_store %arg8[%309, %c0_91, %c0_92], %312 {strides = array<i32>} : memref<8x16x128xf32, #tpu.memory_space<vmem>>, vector<1x16x128xf32>,
    %c8_i32 = arith.constant 8 : i32
    %c0_93 = arith.constant 0 : index
    %c0_94 = arith.constant 0 : index
    %313 = vector.load %arg9[%c0_93, %c0_94] : memref<16x256xf32, #tpu.memory_space<vmem>>, vector<16x256xf32>
    tpu.vector_store %arg9[%c0_93, %c0_94], %305 {strides = array<i32>} : memref<16x256xf32, #tpu.memory_space<vmem>>, vector<16x256xf32>,
    %c0_95 = arith.constant 0 : index
    %c0_96 = arith.constant 0 : index
    %314 = vector.load %arg10[%c0_95, %c0_96] : memref<16x256xf32, #tpu.memory_space<vmem>>, vector<16x256xf32>
    tpu.vector_store %arg10[%c0_95, %c0_96], %303 {strides = array<i32>} : memref<16x256xf32, #tpu.memory_space<vmem>>, vector<16x256xf32>,
    return
  }
  func.func @transform_0(%arg0: i32, %arg1: i32) -> (i32, i32, i32) {
    %c0_i32 = arith.constant 0 : i32
    %c0_i32_0 = arith.constant 0 : i32
    return %arg1, %arg0, %c0_i32 : i32, i32, i32
  }
  func.func @transform_1(%arg0: i32, %arg1: i32) -> (i32, i32) {
    %c0_i32 = arith.constant 0 : i32
    %c0_i32_0 = arith.constant 0 : i32
    %c0_i32_1 = arith.constant 0 : i32
    return %c0_i32, %c0_i32_0 : i32, i32
  }
  func.func @transform_2(%arg0: i32, %arg1: i32) -> (i32, i32) {
    %c0_i32 = arith.constant 0 : i32
    %c0_i32_0 = arith.constant 0 : i32
    %c0_i32_1 = arith.constant 0 : i32
    return %c0_i32, %c0_i32_0 : i32, i32
  }
  func.func @transform_3(%arg0: i32, %arg1: i32) -> (i32, i32) {
    %c0_i32 = arith.constant 0 : i32
    %c0_i32_0 = arith.constant 0 : i32
    %c0_i32_1 = arith.constant 0 : i32
    return %c0_i32, %c0_i32_0 : i32, i32
  }
  func.func @transform_4(%arg0: i32, %arg1: i32) -> (i32, i32) {
    %c0_i32 = arith.constant 0 : i32
    %c0_i32_0 = arith.constant 0 : i32
    %c0_i32_1 = arith.constant 0 : i32
    return %c0_i32, %c0_i32_0 : i32, i32
  }
  func.func @transform_5(%arg0: i32, %arg1: i32) -> (i32, i32) {
    %c0_i32 = arith.constant 0 : i32
    %c0_i32_0 = arith.constant 0 : i32
    %c0_i32_1 = arith.constant 0 : i32
    return %c0_i32, %c0_i32_0 : i32, i32
  }
  func.func @transform_6(%arg0: i32, %arg1: i32) -> (i32, i32, i32) {
    %c0_i32 = arith.constant 0 : i32
    %c0_i32_0 = arith.constant 0 : i32
    return %arg1, %arg0, %c0_i32 : i32, i32, i32
  }
}

</mosaic_0001>

<llo_original>
// kernel: auto_encoder_forward.2
$region0: #{auto_encoder_forward.2}
  #allocation0 [shape = 'u32[]', space=smem, size = 0x4, offset = 0x4, fixed_abs, tag = 'smem constant byte address 0x4 - core index']
  #allocation1 [shape = 'u32[144,128]{1,0:T(1,128)}', space=vmem, size = 0x12000, scoped, tag = 'internal scratch']
  #allocation2 [shape = 'f32[16,256]{1,0:T(8,128)}', space=vmem, size = 0x4000, scoped, tag = 'scratch operand']
  #allocation3 [shape = 'f32[16,256]{1,0:T(8,128)}', space=vmem, size = 0x4000, scoped, tag = 'scratch operand']
  #allocation4 [shape = 'f32[8,16,1024]{2,1,0:T(8,128)}', space=vmem, size = 0x80000, scoped, tag = 'scratch operand']
  %s0 = inlined_call_operand.vmem [shape: f32[8,16,8], index: 0, kind: input, shape index: {}]
  %s1 = inlined_call_operand.hbm [shape: f32[8,1024], index: 1, kind: input, shape index: {}]
  %s2 = inlined_call_operand.hbm [shape: f32[1,1024], index: 2, kind: input, shape index: {}]
  %s3 = inlined_call_operand.hbm [shape: f32[256,1024], index: 3, kind: input, shape index: {}]
  %s4 = inlined_call_operand.vmem [shape: f32[8,16,256], index: 4, kind: output, shape index: {}]
  %s5 = sld [smem:[#allocation0]]
  $region42: #{auto_encoder_forward.2} parent=0
    _
  %s7 = ssub.s32 1, %s5
  %s8 = scalar_select 0, %s7, %s5
  $region1: #{auto_encoder_forward.2} parent=0
    #allocation5 [shape = 'u8[32768]{0}', space=vmem, size = 0x8000, scoped, tag = 'input window, operand 1, single buffered']
    #allocation6 [shape = 's32[1]{0}', space=sflag, size = 0x4, scoped, tag = 'scoped memory for auto_encoder_forward.2']
    #allocation7 [shape = 'u8[4096]{0}', space=vmem, size = 0x1000, scoped, tag = 'input window, operand 2, single buffered']
    #allocation8 [shape = 's32[1]{0}', space=sflag, size = 0x4, scoped, tag = 'scoped memory for auto_encoder_forward.2']
    #allocation9 [shape = 'u8[1048576]{0}', space=vmem, size = 0x100000, scoped, tag = 'input window, operand 3, single buffered']
    %9 = vsyncpa [#allocation6], 0
    %10 = vsyncpa [#allocation8], 0
    // Predicated region
    $region2: #{auto_encoder_forward.2} parent=1 // pred_check
      _
    $region3: #{auto_encoder_forward.2} parent=1 // pred_check_branch
      %12 = sbr.rel (0) target = $region5
    $region4: #{auto_encoder_forward.2} parent=1 // pred_region
      _
    $region5: #{auto_encoder_forward.2} parent=1 // pred_fallthru
      _
    // Predicated region
    $region6: #{auto_encoder_forward.2} parent=1 // pred_check
      _
    $region7: #{auto_encoder_forward.2} parent=1 // pred_check_branch
      %14 = sbr.rel (0) target = $region9
    $region8: #{auto_encoder_forward.2} parent=1 // pred_region
      %s16 = ssub.s32 1024, 1024
      %17 = vsyncadd [#allocation6], %s16
      %s19 = sshll.u32 [#allocation5], 4
      %s20 = int_to_ptr.vmem [resolvable:$true] %s19
      %22 = dma.hbm_to_vmem [thread:$0]  %s1, 1024, %s20, [#allocation6]
    $region9: #{auto_encoder_forward.2} parent=1 // pred_fallthru
      _
    // Predicated region
    $region10: #{auto_encoder_forward.2} parent=1 // pred_check
      _
    $region11: #{auto_encoder_forward.2} parent=1 // pred_check_branch
      %24 = sbr.rel (0) target = $region13
    $region12: #{auto_encoder_forward.2} parent=1 // pred_region
      %s26 = ssub.s32 128, 128
      %27 = vsyncadd [#allocation8], %s26
      %s29 = sshll.u32 [#allocation7], 4
      %s30 = int_to_ptr.vmem [resolvable:$true] %s29
      %32 = dma.hbm_to_vmem [thread:$0]  %s2, 128, %s30, [#allocation8]
    $region13: #{auto_encoder_forward.2} parent=1 // pred_fallthru
      _
    // Predicated region
    $region14: #{auto_encoder_forward.2} parent=1 // pred_check
      _
    $region15: #{auto_encoder_forward.2} parent=1 // pred_check_branch
      %34 = sbr.rel (0) target = $region17
    $region16: #{auto_encoder_forward.2} parent=1 // pred_region
      %s36 = ssub.s32 32768, 32768
      %37 = vsyncadd [#allocation8], %s36
      %s38 = sshll.u32 [#allocation9], 4
      %s39 = int_to_ptr.vmem [resolvable:$true] %s38
      %44 = dma.hbm_to_vmem [thread:$0]  %s3, 32768, %s39, [#allocation8], 1024, 1024, 64
    $region17: #{auto_encoder_forward.2} parent=1 // pred_fallthru
      _
    // Predicated region
    $region18: #{auto_encoder_forward.2} parent=1 // pred_check
      _
    $region19: #{auto_encoder_forward.2} parent=1 // pred_check_branch
      %46 = sbr.rel (0) target = $region21
    $region20: #{auto_encoder_forward.2} parent=1 // pred_region
      %47 = dma.done [#allocation6], 1024
    $region21: #{auto_encoder_forward.2} parent=1 // pred_fallthru
      _
    // Predicated region
    $region22: #{auto_encoder_forward.2} parent=1 // pred_check
      _
    $region23: #{auto_encoder_forward.2} parent=1 // pred_check_branch
      %49 = sbr.rel (0) target = $region25
    $region24: #{auto_encoder_forward.2} parent=1 // pred_region
      %50 = dma.done [#allocation8], 128
    $region25: #{auto_encoder_forward.2} parent=1 // pred_fallthru
      _
    // Predicated region
    $region26: #{auto_encoder_forward.2} parent=1 // pred_check
      _
    $region27: #{auto_encoder_forward.2} parent=1 // pred_check_branch
      %52 = sbr.rel (0) target = $region29
    $region28: #{auto_encoder_forward.2} parent=1 // pred_region
      %53 = dma.done [#allocation8], 32768
    $region29: #{auto_encoder_forward.2} parent=1 // pred_fallthru
      _
    %p54 = scmp.eq.s32.totalorder 0, 0
    // Predicated region
    $region30: #{auto_encoder_forward.2} parent=1 // pred_check
      %p55 = pneg %p54
    $region31: #{auto_encoder_forward.2} parent=1 // pred_check_branch
      %57 = sbr.rel (%p55) target = $region33
    $region32: #{auto_encoder_forward.2} parent=1 // pred_region
      %58 = vst [vmem:[#allocation2] sm:$0xff] 0.0
      %59 = vst [vmem:[#allocation2 + $0x8] sm:$0xff] 0.0
      %60 = vst [vmem:[#allocation2 + $0x10] sm:$0xff] 0.0
      %61 = vst [vmem:[#allocation2 + $0x18] sm:$0xff] 0.0
      %62 = vst [vmem:[#allocation3] sm:$0xff] 0.0
      %63 = vst [vmem:[#allocation3 + $0x8] sm:$0xff] 0.0
      %64 = vst [vmem:[#allocation3 + $0x10] sm:$0xff] 0.0
      %65 = vst [vmem:[#allocation3 + $0x18] sm:$0xff] 0.0
    $region33: #{auto_encoder_forward.2} parent=1 // pred_fallthru
      _
    %v66 = vld [vmem:[#allocation5] sm:$0xff]
    %v67 = vld [vmem:[#allocation5 + $0x8] sm:$0xff]
    %v68 = vld [vmem:[#allocation5 + $0x10] sm:$0xff]
    %v69 = vld [vmem:[#allocation5 + $0x18] sm:$0xff]
    %v70 = vld [vmem:[#allocation5 + $0x20] sm:$0xff]
    %v71 = vld [vmem:[#allocation5 + $0x28] sm:$0xff]
    %v72 = vld [vmem:[#allocation5 + $0x30] sm:$0xff]
    %v73 = vld [vmem:[#allocation5 + $0x38] sm:$0xff]
    %v74 = vld [vmem:[#allocation9] sm:$0xff]
    %v75 = vld [vmem:[#allocation9 + $0x8] sm:$0xff]
    %v76 = vld [vmem:[#allocation9 + $0x10] sm:$0xff]
    %v77 = vld [vmem:[#allocation9 + $0x18] sm:$0xff]
    %v78 = vld [vmem:[#allocation9 + $0x20] sm:$0xff]
    %v79 = vld [vmem:[#allocation9 + $0x28] sm:$0xff]
    %v80 = vld [vmem:[#allocation9 + $0x30] sm:$0xff]
    %v81 = vld [vmem:[#allocation9 + $0x38] sm:$0xff]
    %v82 = vld [vmem:[#allocation9 + $0x40] sm:$0xff]
    %v83 = vld [vmem:[#allocation9 + $0x48] sm:$0xff]
    %v84 = vld [vmem:[#allocation9 + $0x50] sm:$0xff]
    %v85 = vld [vmem:[#allocation9 + $0x58] sm:$0xff]
    %v86 = vld [vmem:[#allocation9 + $0x60] sm:$0xff]
    %v87 = vld [vmem:[#allocation9 + $0x68] sm:$0xff]
    %v88 = vld [vmem:[#allocation9 + $0x70] sm:$0xff]
    %v89 = vld [vmem:[#allocation9 + $0x78] sm:$0xff]
    %v90 = vld [vmem:[#allocation9 + $0x80] sm:$0xff]
    %v91 = vld [vmem:[#allocation9 + $0x88] sm:$0xff]
    %v92 = vld [vmem:[#allocation9 + $0x90] sm:$0xff]
    %v93 = vld [vmem:[#allocation9 + $0x98] sm:$0xff]
    %v94 = vld [vmem:[#allocation9 + $0xa0] sm:$0xff]
    %v95 = vld [vmem:[#allocation9 + $0xa8] sm:$0xff]
    %v96 = vld [vmem:[#allocation9 + $0xb0] sm:$0xff]
    %v97 = vld [vmem:[#allocation9 + $0xb8] sm:$0xff]
    %v98 = vld [vmem:[#allocation9 + $0xc0] sm:$0xff]
    %v99 = vld [vmem:[#allocation9 + $0xc8] sm:$0xff]
    %v100 = vld [vmem:[#allocation9 + $0xd0] sm:$0xff]
    %v101 = vld [vmem:[#allocation9 + $0xd8] sm:$0xff]
    %v102 = vld [vmem:[#allocation9 + $0xe0] sm:$0xff]
    %v103 = vld [vmem:[#allocation9 + $0xe8] sm:$0xff]
    %v104 = vld [vmem:[#allocation9 + $0xf0] sm:$0xff]
    %v105 = vld [vmem:[#allocation9 + $0xf8] sm:$0xff]
    %v106 = vld [vmem:[#allocation9 + $0x100] sm:$0xff]
    %v107 = vld [vmem:[#allocation9 + $0x108] sm:$0xff]
    %v108 = vld [vmem:[#allocation9 + $0x110] sm:$0xff]
    %v109 = vld [vmem:[#allocation9 + $0x118] sm:$0xff]
    %v110 = vld [vmem:[#allocation9 + $0x120] sm:$0xff]
    %v111 = vld [vmem:[#allocation9 + $0x128] sm:$0xff]
    %v112 = vld [vmem:[#allocation9 + $0x130] sm:$0xff]
    %v113 = vld [vmem:[#allocation9 + $0x138] sm:$0xff]
    %v114 = vld [vmem:[#allocation9 + $0x140] sm:$0xff]
    %v115 = vld [vmem:[#allocation9 + $0x148] sm:$0xff]
    %v116 = vld [vmem:[#allocation9 + $0x150] sm:$0xff]
    %v117 = vld [vmem:[#allocation9 + $0x158] sm:$0xff]
    %v118 = vld [vmem:[#allocation9 + $0x160] sm:$0xff]
    %v119 = vld [vmem:[#allocation9 + $0x168] sm:$0xff]
    %v120 = vld [vmem:[#allocation9 + $0x170] sm:$0xff]
    %v121 = vld [vmem:[#allocation9 + $0x178] sm:$0xff]
    %v122 = vld [vmem:[#allocation9 + $0x180] sm:$0xff]
    %v123 = vld [vmem:[#allocation9 + $0x188] sm:$0xff]
    %v124 = vld [vmem:[#allocation9 + $0x190] sm:$0xff]
    %v125 = vld [vmem:[#allocation9 + $0x198] sm:$0xff]
    %v126 = vld [vmem:[#allocation9 + $0x1a0] sm:$0xff]
    %v127 = vld [vmem:[#allocation9 + $0x1a8] sm:$0xff]
    %v128 = vld [vmem:[#allocation9 + $0x1b0] sm:$0xff]
    %v129 = vld [vmem:[#allocation9 + $0x1b8] sm:$0xff]
    %v130 = vld [vmem:[#allocation9 + $0x1c0] sm:$0xff]
    %v131 = vld [vmem:[#allocation9 + $0x1c8] sm:$0xff]
    %v132 = vld [vmem:[#allocation9 + $0x1d0] sm:$0xff]
    %v133 = vld [vmem:[#allocation9 + $0x1d8] sm:$0xff]
    %v134 = vld [vmem:[#allocation9 + $0x1e0] sm:$0xff]
    %v135 = vld [vmem:[#allocation9 + $0x1e8] sm:$0xff]
    %v136 = vld [vmem:[#allocation9 + $0x1f0] sm:$0xff]
    %v137 = vld [vmem:[#allocation9 + $0x1f8] sm:$0xff]
    %v138 = vld [vmem:[#allocation9 + $0x200] sm:$0xff]
    %v139 = vld [vmem:[#allocation9 + $0x208] sm:$0xff]
    %v140 = vld [vmem:[#allocation9 + $0x210] sm:$0xff]
    %v141 = vld [vmem:[#allocation9 + $0x218] sm:$0xff]
    %v142 = vld [vmem:[#allocation9 + $0x220] sm:$0xff]
    %v143 = vld [vmem:[#allocation9 + $0x228] sm:$0xff]
    %v144 = vld [vmem:[#allocation9 + $0x230] sm:$0xff]
    %v145 = vld [vmem:[#allocation9 + $0x238] sm:$0xff]
    %v146 = vld [vmem:[#allocation9 + $0x240] sm:$0xff]
    %v147 = vld [vmem:[#allocation9 + $0x248] sm:$0xff]
    %v148 = vld [vmem:[#allocation9 + $0x250] sm:$0xff]
    %v149 = vld [vmem:[#allocation9 + $0x258] sm:$0xff]
    %v150 = vld [vmem:[#allocation9 + $0x260] sm:$0xff]
    %v151 = vld [vmem:[#allocation9 + $0x268] sm:$0xff]
    %v152 = vld [vmem:[#allocation9 + $0x270] sm:$0xff]
    %v153 = vld [vmem:[#allocation9 + $0x278] sm:$0xff]
    %v154 = vld [vmem:[#allocation9 + $0x280] sm:$0xff]
    %v155 = vld [vmem:[#allocation9 + $0x288] sm:$0xff]
    %v156 = vld [vmem:[#allocation9 + $0x290] sm:$0xff]
    %v157 = vld [vmem:[#allocation9 + $0x298] sm:$0xff]
    %v158 = vld [vmem:[#allocation9 + $0x2a0] sm:$0xff]
    %v159 = vld [vmem:[#allocation9 + $0x2a8] sm:$0xff]
    %v160 = vld [vmem:[#allocation9 + $0x2b0] sm:$0xff]
    %v161 = vld [vmem:[#allocation9 + $0x2b8] sm:$0xff]
    %v162 = vld [vmem:[#allocation9 + $0x2c0] sm:$0xff]
    %v163 = vld [vmem:[#allocation9 + $0x2c8] sm:$0xff]
    %v164 = vld [vmem:[#allocation9 + $0x2d0] sm:$0xff]
    %v165 = vld [vmem:[#allocation9 + $0x2d8] sm:$0xff]
    %v166 = vld [vmem:[#allocation9 + $0x2e0] sm:$0xff]
    %v167 = vld [vmem:[#allocation9 + $0x2e8] sm:$0xff]
    %v168 = vld [vmem:[#allocation9 + $0x2f0] sm:$0xff]
    %v169 = vld [vmem:[#allocation9 + $0x2f8] sm:$0xff]
    %v170 = vld [vmem:[#allocation9 + $0x300] sm:$0xff]
    %v171 = vld [vmem:[#allocation9 + $0x308] sm:$0xff]
    %v172 = vld [vmem:[#allocation9 + $0x310] sm:$0xff]
    %v173 = vld [vmem:[#allocation9 + $0x318] sm:$0xff]
    %v174 = vld [vmem:[#allocation9 + $0x320] sm:$0xff]
    %v175 = vld [vmem:[#allocation9 + $0x328] sm:$0xff]
    %v176 = vld [vmem:[#allocation9 + $0x330] sm:$0xff]
    %v177 = vld [vmem:[#allocation9 + $0x338] sm:$0xff]
    %v178 = vld [vmem:[#allocation9 + $0x340] sm:$0xff]
    %v179 = vld [vmem:[#allocation9 + $0x348] sm:$0xff]
    %v180 = vld [vmem:[#allocation9 + $0x350] sm:$0xff]
    %v181 = vld [vmem:[#allocation9 + $0x358] sm:$0xff]
    %v182 = vld [vmem:[#allocation9 + $0x360] sm:$0xff]
    %v183 = vld [vmem:[#allocation9 + $0x368] sm:$0xff]
    %v184 = vld [vmem:[#allocation9 + $0x370] sm:$0xff]
    %v185 = vld [vmem:[#allocation9 + $0x378] sm:$0xff]
    %v186 = vld [vmem:[#allocation9 + $0x380] sm:$0xff]
    %v187 = vld [vmem:[#allocation9 + $0x388] sm:$0xff]
    %v188 = vld [vmem:[#allocation9 + $0x390] sm:$0xff]
    %v189 = vld [vmem:[#allocation9 + $0x398] sm:$0xff]
    %v190 = vld [vmem:[#allocation9 + $0x3a0] sm:$0xff]
    %v191 = vld [vmem:[#allocation9 + $0x3a8] sm:$0xff]
    %v192 = vld [vmem:[#allocation9 + $0x3b0] sm:$0xff]
    %v193 = vld [vmem:[#allocation9 + $0x3b8] sm:$0xff]
    %v194 = vld [vmem:[#allocation9 + $0x3c0] sm:$0xff]
    %v195 = vld [vmem:[#allocation9 + $0x3c8] sm:$0xff]
    %v196 = vld [vmem:[#allocation9 + $0x3d0] sm:$0xff]
    %v197 = vld [vmem:[#allocation9 + $0x3d8] sm:$0xff]
    %v198 = vld [vmem:[#allocation9 + $0x3e0] sm:$0xff]
    %v199 = vld [vmem:[#allocation9 + $0x3e8] sm:$0xff]
    %v200 = vld [vmem:[#allocation9 + $0x3f0] sm:$0xff]
    %v201 = vld [vmem:[#allocation9 + $0x3f8] sm:$0xff]
    %v202 = vld [vmem:[#allocation9 + $0x400] sm:$0xff]
    %v203 = vld [vmem:[#allocation9 + $0x408] sm:$0xff]
    %v204 = vld [vmem:[#allocation9 + $0x410] sm:$0xff]
    %v205 = vld [vmem:[#allocation9 + $0x418] sm:$0xff]
    %v206 = vld [vmem:[#allocation9 + $0x420] sm:$0xff]
    %v207 = vld [vmem:[#allocation9 + $0x428] sm:$0xff]
    %v208 = vld [vmem:[#allocation9 + $0x430] sm:$0xff]
    %v209 = vld [vmem:[#allocation9 + $0x438] sm:$0xff]
    %v210 = vld [vmem:[#allocation9 + $0x440] sm:$0xff]
    %v211 = vld [vmem:[#allocation9 + $0x448] sm:$0xff]
    %v212 = vld [vmem:[#allocation9 + $0x450] sm:$0xff]
    %v213 = vld [vmem:[#allocation9 + $0x458] sm:$0xff]
    %v214 = vld [vmem:[#allocation9 + $0x460] sm:$0xff]
    %v215 = vld [vmem:[#allocation9 + $0x468] sm:$0xff]
    %v216 = vld [vmem:[#allocation9 + $0x470] sm:$0xff]
    %v217 = vld [vmem:[#allocation9 + $0x478] sm:$0xff]
    %v218 = vld [vmem:[#allocation9 + $0x480] sm:$0xff]
    %v219 = vld [vmem:[#allocation9 + $0x488] sm:$0xff]
    %v220 = vld [vmem:[#allocation9 + $0x490] sm:$0xff]
    %v221 = vld [vmem:[#allocation9 + $0x498] sm:$0xff]
    %v222 = vld [vmem:[#allocation9 + $0x4a0] sm:$0xff]
    %v223 = vld [vmem:[#allocation9 + $0x4a8] sm:$0xff]
    %v224 = vld [vmem:[#allocation9 + $0x4b0] sm:$0xff]
    %v225 = vld [vmem:[#allocation9 + $0x4b8] sm:$0xff]
    %v226 = vld [vmem:[#allocation9 + $0x4c0] sm:$0xff]
    %v227 = vld [vmem:[#allocation9 + $0x4c8] sm:$0xff]
    %v228 = vld [vmem:[#allocation9 + $0x4d0] sm:$0xff]
    %v229 = vld [vmem:[#allocation9 + $0x4d8] sm:$0xff]
    %v230 = vld [vmem:[#allocation9 + $0x4e0] sm:$0xff]
    %v231 = vld [vmem:[#allocation9 + $0x4e8] sm:$0xff]
    %v232 = vld [vmem:[#allocation9 + $0x4f0] sm:$0xff]
    %v233 = vld [vmem:[#allocation9 + $0x4f8] sm:$0xff]
    %v234 = vld [vmem:[#allocation9 + $0x500] sm:$0xff]
    %v235 = vld [vmem:[#allocation9 + $0x508] sm:$0xff]
    %v236 = vld [vmem:[#allocation9 + $0x510] sm:$0xff]
    %v237 = vld [vmem:[#allocation9 + $0x518] sm:$0xff]
    %v238 = vld [vmem:[#allocation9 + $0x520] sm:$0xff]
    %v239 = vld [vmem:[#allocation9 + $0x528] sm:$0xff]
    %v240 = vld [vmem:[#allocation9 + $0x530] sm:$0xff]
    %v241 = vld [vmem:[#allocation9 + $0x538] sm:$0xff]
    %v242 = vld [vmem:[#allocation9 + $0x540] sm:$0xff]
    %v243 = vld [vmem:[#allocation9 + $0x548] sm:$0xff]
    %v244 = vld [vmem:[#allocation9 + $0x550] sm:$0xff]
    %v245 = vld [vmem:[#allocation9 + $0x558] sm:$0xff]
    %v246 = vld [vmem:[#allocation9 + $0x560] sm:$0xff]
    %v247 = vld [vmem:[#allocation9 + $0x568] sm:$0xff]
    %v248 = vld [vmem:[#allocation9 + $0x570] sm:$0xff]
    %v249 = vld [vmem:[#allocation9 + $0x578] sm:$0xff]
    %v250 = vld [vmem:[#allocation9 + $0x580] sm:$0xff]
    %v251 = vld [vmem:[#allocation9 + $0x588] sm:$0xff]
    %v252 = vld [vmem:[#allocation9 + $0x590] sm:$0xff]
    %v253 = vld [vmem:[#allocation9 + $0x598] sm:$0xff]
    %v254 = vld [vmem:[#allocation9 + $0x5a0] sm:$0xff]
    %v255 = vld [vmem:[#allocation9 + $0x5a8] sm:$0xff]
    %v256 = vld [vmem:[#allocation9 + $0x5b0] sm:$0xff]
    %v257 = vld [vmem:[#allocation9 + $0x5b8] sm:$0xff]
    %v258 = vld [vmem:[#allocation9 + $0x5c0] sm:$0xff]
    %v259 = vld [vmem:[#allocation9 + $0x5c8] sm:$0xff]
    %v260 = vld [vmem:[#allocation9 + $0x5d0] sm:$0xff]
    %v261 = vld [vmem:[#allocation9 + $0x5d8] sm:$0xff]
    %v262 = vld [vmem:[#allocation9 + $0x5e0] sm:$0xff]
    %v263 = vld [vmem:[#allocation9 + $0x5e8] sm:$0xff]
    %v264 = vld [vmem:[#allocation9 + $0x5f0] sm:$0xff]
    %v265 = vld [vmem:[#allocation9 + $0x5f8] sm:$0xff]
    %v266 = vld [vmem:[#allocation9 + $0x600] sm:$0xff]
    %v267 = vld [vmem:[#allocation9 + $0x608] sm:$0xff]
    %v268 = vld [vmem:[#allocation9 + $0x610] sm:$0xff]
    %v269 = vld [vmem:[#allocation9 + $0x618] sm:$0xff]
    %v270 = vld [vmem:[#allocation9 + $0x620] sm:$0xff]
    %v271 = vld [vmem:[#allocation9 + $0x628] sm:$0xff]
    %v272 = vld [vmem:[#allocation9 + $0x630] sm:$0xff]
    %v273 = vld [vmem:[#allocation9 + $0x638] sm:$0xff]
    %v274 = vld [vmem:[#allocation9 + $0x640] sm:$0xff]
    %v275 = vld [vmem:[#allocation9 + $0x648] sm:$0xff]
    %v276 = vld [vmem:[#allocation9 + $0x650] sm:$0xff]
    %v277 = vld [vmem:[#allocation9 + $0x658] sm:$0xff]
    %v278 = vld [vmem:[#allocation9 + $0x660] sm:$0xff]
    %v279 = vld [vmem:[#allocation9 + $0x668] sm:$0xff]
    %v280 = vld [vmem:[#allocation9 + $0x670] sm:$0xff]
    %v281 = vld [vmem:[#allocation9 + $0x678] sm:$0xff]
    %v282 = vld [vmem:[#allocation9 + $0x680] sm:$0xff]
    %v283 = vld [vmem:[#allocation9 + $0x688] sm:$0xff]
    %v284 = vld [vmem:[#allocation9 + $0x690] sm:$0xff]
    %v285 = vld [vmem:[#allocation9 + $0x698] sm:$0xff]
    %v286 = vld [vmem:[#allocation9 + $0x6a0] sm:$0xff]
    %v287 = vld [vmem:[#allocation9 + $0x6a8] sm:$0xff]
    %v288 = vld [vmem:[#allocation9 + $0x6b0] sm:$0xff]
    %v289 = vld [vmem:[#allocation9 + $0x6b8] sm:$0xff]
    %v290 = vld [vmem:[#allocation9 + $0x6c0] sm:$0xff]
    %v291 = vld [vmem:[#allocation9 + $0x6c8] sm:$0xff]
    %v292 = vld [vmem:[#allocation9 + $0x6d0] sm:$0xff]
    %v293 = vld [vmem:[#allocation9 + $0x6d8] sm:$0xff]
    %v294 = vld [vmem:[#allocation9 + $0x6e0] sm:$0xff]
    %v295 = vld [vmem:[#allocation9 + $0x6e8] sm:$0xff]
    %v296 = vld [vmem:[#allocation9 + $0x6f0] sm:$0xff]
    %v297 = vld [vmem:[#allocation9 + $0x6f8] sm:$0xff]
    %v298 = vld [vmem:[#allocation9 + $0x700] sm:$0xff]
    %v299 = vld [vmem:[#allocation9 + $0x708] sm:$0xff]
    %v300 = vld [vmem:[#allocation9 + $0x710] sm:$0xff]
    %v301 = vld [vmem:[#allocation9 + $0x718] sm:$0xff]
    %v302 = vld [vmem:[#allocation9 + $0x720] sm:$0xff]
    %v303 = vld [vmem:[#allocation9 + $0x728] sm:$0xff]
    %v304 = vld [vmem:[#allocation9 + $0x730] sm:$0xff]
    %v305 = vld [vmem:[#allocation9 + $0x738] sm:$0xff]
    %v306 = vld [vmem:[#allocation9 + $0x740] sm:$0xff]
    %v307 = vld [vmem:[#allocation9 + $0x748] sm:$0xff]
    %v308 = vld [vmem:[#allocation9 + $0x750] sm:$0xff]
    %v309 = vld [vmem:[#allocation9 + $0x758] sm:$0xff]
    %v310 = vld [vmem:[#allocation9 + $0x760] sm:$0xff]
    %v311 = vld [vmem:[#allocation9 + $0x768] sm:$0xff]
    %v312 = vld [vmem:[#allocation9 + $0x770] sm:$0xff]
    %v313 = vld [vmem:[#allocation9 + $0x778] sm:$0xff]
    %v314 = vld [vmem:[#allocation9 + $0x780] sm:$0xff]
    %v315 = vld [vmem:[#allocation9 + $0x788] sm:$0xff]
    %v316 = vld [vmem:[#allocation9 + $0x790] sm:$0xff]
    %v317 = vld [vmem:[#allocation9 + $0x798] sm:$0xff]
    %v318 = vld [vmem:[#allocation9 + $0x7a0] sm:$0xff]
    %v319 = vld [vmem:[#allocation9 + $0x7a8] sm:$0xff]
    %v320 = vld [vmem:[#allocation9 + $0x7b0] sm:$0xff]
    %v321 = vld [vmem:[#allocation9 + $0x7b8] sm:$0xff]
    %v322 = vld [vmem:[#allocation9 + $0x7c0] sm:$0xff]
    %v323 = vld [vmem:[#allocation9 + $0x7c8] sm:$0xff]
    %v324 = vld [vmem:[#allocation9 + $0x7d0] sm:$0xff]
    %v325 = vld [vmem:[#allocation9 + $0x7d8] sm:$0xff]
    %v326 = vld [vmem:[#allocation9 + $0x7e0] sm:$0xff]
    %v327 = vld [vmem:[#allocation9 + $0x7e8] sm:$0xff]
    %v328 = vld [vmem:[#allocation9 + $0x7f0] sm:$0xff]
    %v329 = vld [vmem:[#allocation9 + $0x7f8] sm:$0xff]
    %v330 = vld [vmem:[#allocation7] sm:$0xff]
    %v331 = vld [vmem:[%s0] sm:$0xff]
    %v332 = vld [vmem:[%s0 + $0x8] sm:$0xff]
    %v333 = vld [vmem:[%s0 + $0x10] sm:$0xff]
    %v334 = vld [vmem:[%s0 + $0x18] sm:$0xff]
    %v335 = vld [vmem:[%s0 + $0x20] sm:$0xff]
    %v336 = vld [vmem:[%s0 + $0x28] sm:$0xff]
    %v337 = vld [vmem:[%s0 + $0x30] sm:$0xff]
    %v338 = vld [vmem:[%s0 + $0x38] sm:$0xff]
    %v339 = vld [vmem:[%s0 + $0x40] sm:$0xff]
    %v340 = vld [vmem:[%s0 + $0x48] sm:$0xff]
    %v341 = vld [vmem:[%s0 + $0x50] sm:$0xff]
    %v342 = vld [vmem:[%s0 + $0x58] sm:$0xff]
    %v343 = vld [vmem:[%s0 + $0x60] sm:$0xff]
    %v344 = vld [vmem:[%s0 + $0x68] sm:$0xff]
    %v345 = vld [vmem:[%s0 + $0x70] sm:$0xff]
    %v346 = vld [vmem:[%s0 + $0x78] sm:$0xff]
    %v348 = vlaneseq
    %v349 = vshrl.u32 %v348, 7
    %v350 = vsub.s32 0, %v349
    %v351 = vrot.slane %v330, %v350
    %v352 = vlaneseq
    %v353 = vshrl.u32 %v352, 7
    %v354 = vsub.s32 1, %v353
    %v355 = vrot.slane %v330, %v354
    %v356 = vlaneseq
    %v357 = vshrl.u32 %v356, 7
    %v358 = vsub.s32 2, %v357
    %v359 = vrot.slane %v330, %v358
    %v360 = vlaneseq
    %v361 = vshrl.u32 %v360, 7
    %v362 = vsub.s32 3, %v361
    %v363 = vrot.slane %v330, %v362
    %v364 = vlaneseq
    %v365 = vshrl.u32 %v364, 7
    %v366 = vsub.s32 4, %v365
    %v367 = vrot.slane %v330, %v366
    %v368 = vlaneseq
    %v369 = vshrl.u32 %v368, 7
    %v370 = vsub.s32 5, %v369
    %v371 = vrot.slane %v330, %v370
    %v372 = vlaneseq
    %v373 = vshrl.u32 %v372, 7
    %v374 = vsub.s32 6, %v373
    %v375 = vrot.slane %v330, %v374
    %v376 = vlaneseq
    %v377 = vshrl.u32 %v376, 7
    %v378 = vsub.s32 7, %v377
    %v379 = vrot.slane %v330, %v378
    %vm388 = vcmask 64512
    %v390 = vsel %vm388, %v331, 0
    %v393 = vsel %vm388, %v332, 0
    %v396 = vsel %vm388, %v333, 0
    %v399 = vsel %vm388, %v334, 0
    %v402 = vsel %vm388, %v335, 0
    %v405 = vsel %vm388, %v336, 0
    %v408 = vsel %vm388, %v337, 0
    %v411 = vsel %vm388, %v338, 0
    %v414 = vsel %vm388, %v339, 0
    %v417 = vsel %vm388, %v340, 0
    %v420 = vsel %vm388, %v341, 0
    %v423 = vsel %vm388, %v342, 0
    %v426 = vsel %vm388, %v343, 0
    %v429 = vsel %vm388, %v344, 0
    %v432 = vsel %vm388, %v345, 0
    %v435 = vsel %vm388, %v346, 0
    %437 = vmatprep.subr.mxu0 0.0
    %438 = vmatpush1.msra.mxu0 0.0
    %439 = vmatprep.subr.mxu0 0.0
    %440 = vmatpush1.msra.mxu0 0.0
    %441 = vmatprep.subr.mxu0 0.0
    %442 = vmatpush1.msra.mxu0 0.0
    %443 = vmatprep.subr.mxu0 0.0
    %444 = vmatpush1.msra.mxu0 0.0
    %445 = vmatprep.subr.mxu0 0.0
    %446 = vmatpush1.msra.mxu0 0.0
    %447 = vmatprep.subr.mxu0 0.0
    %448 = vmatpush1.msra.mxu0 0.0
    %449 = vmatprep.subr.mxu0 0.0
    %450 = vmatpush1.msra.mxu0 0.0
    %451 = vmatprep.subr.mxu0 0.0
    %452 = vmatpush1.msra.mxu0 0.0
    %453 = vmatprep.subr.mxu0 0.0
    %454 = vmatpush1.msra.mxu0 0.0
    %455 = vmatprep.subr.mxu0 0.0
    %456 = vmatpush1.msra.mxu0 0.0
    %457 = vmatprep.subr.mxu0 0.0
    %458 = vmatpush1.msra.mxu0 0.0
    %459 = vmatprep.subr.mxu0 0.0
    %460 = vmatpush1.msra.mxu0 0.0
    %461 = vmatprep.subr.mxu0 0.0
    %462 = vmatpush1.msra.mxu0 0.0
    %463 = vmatprep.subr.mxu0 0.0
    %464 = vmatpush1.msra.mxu0 0.0
    %465 = vmatprep.subr.mxu0 0.0
    %466 = vmatpush1.msra.mxu0 0.0
    %467 = vmatprep.subr.mxu0 %v67
    %468 = vmatpush1.msra.mxu0 %v66
    %469 = vmatprep.subr.mxu0 0.0
    %470 = vmatpush2.msra.mxu0 0.0
    %471 = vmatprep.subr.mxu0 0.0
    %472 = vmatpush2.msra.mxu0 0.0
    %473 = vmatprep.subr.mxu0 0.0
    %474 = vmatpush2.msra.mxu0 0.0
    %475 = vmatprep.subr.mxu0 0.0
    %476 = vmatpush2.msra.mxu0 0.0
    %477 = vmatprep.subr.mxu0 0.0
    %478 = vmatpush2.msra.mxu0 0.0
    %479 = vmatprep.subr.mxu0 0.0
    %480 = vmatpush2.msra.mxu0 0.0
    %481 = vmatprep.subr.mxu0 0.0
    %482 = vmatpush2.msra.mxu0 0.0
    %483 = vmatprep.subr.mxu0 0.0
    %484 = vmatpush2.msra.mxu0 0.0
    %485 = vmatprep.subr.mxu0 0.0
    %486 = vmatpush2.msra.mxu0 0.0
    %487 = vmatprep.subr.mxu0 0.0
    %488 = vmatpush2.msra.mxu0 0.0
    %489 = vmatprep.subr.mxu0 0.0
    %490 = vmatpush2.msra.mxu0 0.0
    %491 = vmatprep.subr.mxu0 0.0
    %492 = vmatpush2.msra.mxu0 0.0
    %493 = vmatprep.subr.mxu0 0.0
    %494 = vmatpush2.msra.mxu0 0.0
    %495 = vmatprep.subr.mxu0 0.0
    %496 = vmatpush2.msra.mxu0 0.0
    %497 = vmatprep.subr.mxu0 0.0
    %498 = vmatpush2.msra.mxu0 0.0
    %499 = vmatprep.subr.mxu0 0.0
    %500 = vmatpush2.msra.mxu0 0.0
    %501 = vmatprep.mubr.f32.mxu0 0.0
    %502 = vmatmul.mubr.f32.gmra.mxu0 %v390
    %v503 = vpop.f32.mrf.mxu0
    %v504 = vadd.f32 %v351, %v503
    %v505 = vpop.f32.mrf.mxu0
    %v506 = vadd.f32 %v355, %v505
    %507 = vmatprep.mubr.f32.mxu0 0.0
    %508 = vmatmul.mubr.f32.gmra.mxu0 %v393
    %v509 = vpop.f32.mrf.mxu0
    %v510 = vadd.f32 %v351, %v509
    %v511 = vpop.f32.mrf.mxu0
    %v512 = vadd.f32 %v355, %v511
    %513 = vmatprep.mubr.f32.mxu0 0.0
    %514 = vmatmul.mubr.f32.gmra.mxu0 %v396
    %v515 = vpop.f32.mrf.mxu0
    %v516 = vadd.f32 %v351, %v515
    %v517 = vpop.f32.mrf.mxu0
    %v518 = vadd.f32 %v355, %v517
    %519 = vmatprep.mubr.f32.mxu0 0.0
    %520 = vmatmul.mubr.f32.gmra.mxu0 %v399
    %v521 = vpop.f32.mrf.mxu0
    %v522 = vadd.f32 %v351, %v521
    %v523 = vpop.f32.mrf.mxu0
    %v524 = vadd.f32 %v355, %v523
    %525 = vmatprep.mubr.f32.mxu0 0.0
    %526 = vmatmul.mubr.f32.gmra.mxu0 %v402
    %v527 = vpop.f32.mrf.mxu0
    %v528 = vadd.f32 %v351, %v527
    %v529 = vpop.f32.mrf.mxu0
    %v530 = vadd.f32 %v355, %v529
    %531 = vmatprep.mubr.f32.mxu0 0.0
    %532 = vmatmul.mubr.f32.gmra.mxu0 %v405
    %v533 = vpop.f32.mrf.mxu0
    %v534 = vadd.f32 %v351, %v533
    %v535 = vpop.f32.mrf.mxu0
    %v536 = vadd.f32 %v355, %v535
    %537 = vmatprep.mubr.f32.mxu0 0.0
    %538 = vmatmul.mubr.f32.gmra.mxu0 %v408
    %v539 = vpop.f32.mrf.mxu0
    %v540 = vadd.f32 %v351, %v539
    %v541 = vpop.f32.mrf.mxu0
    %v542 = vadd.f32 %v355, %v541
    %543 = vmatprep.mubr.f32.mxu0 0.0
    %544 = vmatmul.mubr.f32.gmra.mxu0 %v411
    %v545 = vpop.f32.mrf.mxu0
    %v546 = vadd.f32 %v351, %v545
    %v547 = vpop.f32.mrf.mxu0
    %v548 = vadd.f32 %v355, %v547
    %549 = vmatprep.mubr.f32.mxu0 0.0
    %550 = vmatmul.mubr.f32.gmra.mxu0 %v414
    %v551 = vpop.f32.mrf.mxu0
    %v552 = vadd.f32 %v351, %v551
    %v553 = vpop.f32.mrf.mxu0
    %v554 = vadd.f32 %v355, %v553
    %555 = vmatprep.mubr.f32.mxu0 0.0
    %556 = vmatmul.mubr.f32.gmra.mxu0 %v417
    %v557 = vpop.f32.mrf.mxu0
    %v558 = vadd.f32 %v351, %v557
    %v559 = vpop.f32.mrf.mxu0
    %v560 = vadd.f32 %v355, %v559
    %561 = vmatprep.mubr.f32.mxu0 0.0
    %562 = vmatmul.mubr.f32.gmra.mxu0 %v420
    %v563 = vpop.f32.mrf.mxu0
    %v564 = vadd.f32 %v351, %v563
    %v565 = vpop.f32.mrf.mxu0
    %v566 = vadd.f32 %v355, %v565
    %567 = vmatprep.mubr.f32.mxu0 0.0
    %568 = vmatmul.mubr.f32.gmra.mxu0 %v423
    %v569 = vpop.f32.mrf.mxu0
    %v570 = vadd.f32 %v351, %v569
    %v571 = vpop.f32.mrf.mxu0
    %v572 = vadd.f32 %v355, %v571
    %573 = vmatprep.mubr.f32.mxu0 0.0
    %574 = vmatmul.mubr.f32.gmra.mxu0 %v426
    %v575 = vpop.f32.mrf.mxu0
    %v576 = vadd.f32 %v351, %v575
    %v577 = vpop.f32.mrf.mxu0
    %v578 = vadd.f32 %v355, %v577
    %579 = vmatprep.mubr.f32.mxu0 0.0
    %580 = vmatmul.mubr.f32.gmra.mxu0 %v429
    %v581 = vpop.f32.mrf.mxu0
    %v582 = vadd.f32 %v351, %v581
    %v583 = vpop.f32.mrf.mxu0
    %v584 = vadd.f32 %v355, %v583
    %585 = vmatprep.mubr.f32.mxu0 0.0
    %586 = vmatmul.mubr.f32.gmra.mxu0 %v432
    %v587 = vpop.f32.mrf.mxu0
    %v588 = vadd.f32 %v351, %v587
    %v589 = vpop.f32.mrf.mxu0
    %v590 = vadd.f32 %v355, %v589
    %591 = vmatprep.mubr.f32.mxu0 0.0
    %592 = vmatmul.mubr.f32.gmra.mxu0 %v435
    %v593 = vpop.f32.mrf.mxu0
    %v594 = vadd.f32 %v351, %v593
    %v595 = vpop.f32.mrf.mxu0
    %v596 = vadd.f32 %v355, %v595
    %597 = vdwg.mxu0
    %598 = vmatprep.subr.mxu0 0.0
    %599 = vmatpush1.msra.mxu0 0.0
    %600 = vmatprep.subr.mxu0 0.0
    %601 = vmatpush1.msra.mxu0 0.0
    %602 = vmatprep.subr.mxu0 0.0
    %603 = vmatpush1.msra.mxu0 0.0
    %604 = vmatprep.subr.mxu0 0.0
    %605 = vmatpush1.msra.mxu0 0.0
    %606 = vmatprep.subr.mxu0 0.0
    %607 = vmatpush1.msra.mxu0 0.0
    %608 = vmatprep.subr.mxu0 0.0
    %609 = vmatpush1.msra.mxu0 0.0
    %610 = vmatprep.subr.mxu0 0.0
    %611 = vmatpush1.msra.mxu0 0.0
    %612 = vmatprep.subr.mxu0 0.0
    %613 = vmatpush1.msra.mxu0 0.0
    %614 = vmatprep.subr.mxu0 0.0
    %615 = vmatpush1.msra.mxu0 0.0
    %616 = vmatprep.subr.mxu0 0.0
    %617 = vmatpush1.msra.mxu0 0.0
    %618 = vmatprep.subr.mxu0 0.0
    %619 = vmatpush1.msra.mxu0 0.0
    %620 = vmatprep.subr.mxu0 0.0
    %621 = vmatpush1.msra.mxu0 0.0
    %622 = vmatprep.subr.mxu0 0.0
    %623 = vmatpush1.msra.mxu0 0.0
    %624 = vmatprep.subr.mxu0 0.0
    %625 = vmatpush1.msra.mxu0 0.0
    %626 = vmatprep.subr.mxu0 0.0
    %627 = vmatpush1.msra.mxu0 0.0
    %628 = vmatprep.subr.mxu0 %v69
    %629 = vmatpush1.msra.mxu0 %v68
    %630 = vmatprep.subr.mxu0 0.0
    %631 = vmatpush2.msra.mxu0 0.0
    %632 = vmatprep.subr.mxu0 0.0
    %633 = vmatpush2.msra.mxu0 0.0
    %634 = vmatprep.subr.mxu0 0.0
    %635 = vmatpush2.msra.mxu0 0.0
    %636 = vmatprep.subr.mxu0 0.0
    %637 = vmatpush2.msra.mxu0 0.0
    %638 = vmatprep.subr.mxu0 0.0
    %639 = vmatpush2.msra.mxu0 0.0
    %640 = vmatprep.subr.mxu0 0.0
    %641 = vmatpush2.msra.mxu0 0.0
    %642 = vmatprep.subr.mxu0 0.0
    %643 = vmatpush2.msra.mxu0 0.0
    %644 = vmatprep.subr.mxu0 0.0
    %645 = vmatpush2.msra.mxu0 0.0
    %646 = vmatprep.subr.mxu0 0.0
    %647 = vmatpush2.msra.mxu0 0.0
    %648 = vmatprep.subr.mxu0 0.0
    %649 = vmatpush2.msra.mxu0 0.0
    %650 = vmatprep.subr.mxu0 0.0
    %651 = vmatpush2.msra.mxu0 0.0
    %652 = vmatprep.subr.mxu0 0.0
    %653 = vmatpush2.msra.mxu0 0.0
    %654 = vmatprep.subr.mxu0 0.0
    %655 = vmatpush2.msra.mxu0 0.0
    %656 = vmatprep.subr.mxu0 0.0
    %657 = vmatpush2.msra.mxu0 0.0
    %658 = vmatprep.subr.mxu0 0.0
    %659 = vmatpush2.msra.mxu0 0.0
    %660 = vmatprep.subr.mxu0 0.0
    %661 = vmatpush2.msra.mxu0 0.0
    %662 = vmatprep.mubr.f32.mxu0 0.0
    %663 = vmatmul.mubr.f32.gmra.mxu0 %v390
    %v664 = vpop.f32.mrf.mxu0
    %v665 = vadd.f32 %v359, %v664
    %v666 = vpop.f32.mrf.mxu0
    %v667 = vadd.f32 %v363, %v666
    %668 = vmatprep.mubr.f32.mxu0 0.0
    %669 = vmatmul.mubr.f32.gmra.mxu0 %v393
    %v670 = vpop.f32.mrf.mxu0
    %v671 = vadd.f32 %v359, %v670
    %v672 = vpop.f32.mrf.mxu0
    %v673 = vadd.f32 %v363, %v672
    %674 = vmatprep.mubr.f32.mxu0 0.0
    %675 = vmatmul.mubr.f32.gmra.mxu0 %v396
    %v676 = vpop.f32.mrf.mxu0
    %v677 = vadd.f32 %v359, %v676
    %v678 = vpop.f32.mrf.mxu0
    %v679 = vadd.f32 %v363, %v678
    %680 = vmatprep.mubr.f32.mxu0 0.0
    %681 = vmatmul.mubr.f32.gmra.mxu0 %v399
    %v682 = vpop.f32.mrf.mxu0
    %v683 = vadd.f32 %v359, %v682
    %v684 = vpop.f32.mrf.mxu0
    %v685 = vadd.f32 %v363, %v684
    %686 = vmatprep.mubr.f32.mxu0 0.0
    %687 = vmatmul.mubr.f32.gmra.mxu0 %v402
    %v688 = vpop.f32.mrf.mxu0
    %v689 = vadd.f32 %v359, %v688
    %v690 = vpop.f32.mrf.mxu0
    %v691 = vadd.f32 %v363, %v690
    %692 = vmatprep.mubr.f32.mxu0 0.0
    %693 = vmatmul.mubr.f32.gmra.mxu0 %v405
    %v694 = vpop.f32.mrf.mxu0
    %v695 = vadd.f32 %v359, %v694
    %v696 = vpop.f32.mrf.mxu0
    %v697 = vadd.f32 %v363, %v696
    %698 = vmatprep.mubr.f32.mxu0 0.0
    %699 = vmatmul.mubr.f32.gmra.mxu0 %v408
    %v700 = vpop.f32.mrf.mxu0
    %v701 = vadd.f32 %v359, %v700
    %v702 = vpop.f32.mrf.mxu0
    %v703 = vadd.f32 %v363, %v702
    %704 = vmatprep.mubr.f32.mxu0 0.0
    %705 = vmatmul.mubr.f32.gmra.mxu0 %v411
    %v706 = vpop.f32.mrf.mxu0
    %v707 = vadd.f32 %v359, %v706
    %v708 = vpop.f32.mrf.mxu0
    %v709 = vadd.f32 %v363, %v708
    %710 = vmatprep.mubr.f32.mxu0 0.0
    %711 = vmatmul.mubr.f32.gmra.mxu0 %v414
    %v712 = vpop.f32.mrf.mxu0
    %v713 = vadd.f32 %v359, %v712
    %v714 = vpop.f32.mrf.mxu0
    %v715 = vadd.f32 %v363, %v714
    %716 = vmatprep.mubr.f32.mxu0 0.0
    %717 = vmatmul.mubr.f32.gmra.mxu0 %v417
    %v718 = vpop.f32.mrf.mxu0
    %v719 = vadd.f32 %v359, %v718
    %v720 = vpop.f32.mrf.mxu0
    %v721 = vadd.f32 %v363, %v720
    %722 = vmatprep.mubr.f32.mxu0 0.0
    %723 = vmatmul.mubr.f32.gmra.mxu0 %v420
    %v724 = vpop.f32.mrf.mxu0
    %v725 = vadd.f32 %v359, %v724
    %v726 = vpop.f32.mrf.mxu0
    %v727 = vadd.f32 %v363, %v726
    %728 = vmatprep.mubr.f32.mxu0 0.0
    %729 = vmatmul.mubr.f32.gmra.mxu0 %v423
    %v730 = vpop.f32.mrf.mxu0
    %v731 = vadd.f32 %v359, %v730
    %v732 = vpop.f32.mrf.mxu0
    %v733 = vadd.f32 %v363, %v732
    %734 = vmatprep.mubr.f32.mxu0 0.0
    %735 = vmatmul.mubr.f32.gmra.mxu0 %v426
    %v736 = vpop.f32.mrf.mxu0
    %v737 = vadd.f32 %v359, %v736
    %v738 = vpop.f32.mrf.mxu0
    %v739 = vadd.f32 %v363, %v738
    %740 = vmatprep.mubr.f32.mxu0 0.0
    %741 = vmatmul.mubr.f32.gmra.mxu0 %v429
    %v742 = vpop.f32.mrf.mxu0
    %v743 = vadd.f32 %v359, %v742
    %v744 = vpop.f32.mrf.mxu0
    %v745 = vadd.f32 %v363, %v744
    %746 = vmatprep.mubr.f32.mxu0 0.0
    %747 = vmatmul.mubr.f32.gmra.mxu0 %v432
    %v748 = vpop.f32.mrf.mxu0
    %v749 = vadd.f32 %v359, %v748
    %v750 = vpop.f32.mrf.mxu0
    %v751 = vadd.f32 %v363, %v750
    %752 = vmatprep.mubr.f32.mxu0 0.0
    %753 = vmatmul.mubr.f32.gmra.mxu0 %v435
    %v754 = vpop.f32.mrf.mxu0
    %v755 = vadd.f32 %v359, %v754
    %v756 = vpop.f32.mrf.mxu0
    %v757 = vadd.f32 %v363, %v756
    %758 = vdwg.mxu0
    %759 = vmatprep.subr.mxu0 0.0
    %760 = vmatpush1.msra.mxu0 0.0
    %761 = vmatprep.subr.mxu0 0.0
    %762 = vmatpush1.msra.mxu0 0.0
    %763 = vmatprep.subr.mxu0 0.0
    %764 = vmatpush1.msra.mxu0 0.0
    %765 = vmatprep.subr.mxu0 0.0
    %766 = vmatpush1.msra.mxu0 0.0
    %767 = vmatprep.subr.mxu0 0.0
    %768 = vmatpush1.msra.mxu0 0.0
    %769 = vmatprep.subr.mxu0 0.0
    %770 = vmatpush1.msra.mxu0 0.0
    %771 = vmatprep.subr.mxu0 0.0
    %772 = vmatpush1.msra.mxu0 0.0
    %773 = vmatprep.subr.mxu0 0.0
    %774 = vmatpush1.msra.mxu0 0.0
    %775 = vmatprep.subr.mxu0 0.0
    %776 = vmatpush1.msra.mxu0 0.0
    %777 = vmatprep.subr.mxu0 0.0
    %778 = vmatpush1.msra.mxu0 0.0
    %779 = vmatprep.subr.mxu0 0.0
    %780 = vmatpush1.msra.mxu0 0.0
    %781 = vmatprep.subr.mxu0 0.0
    %782 = vmatpush1.msra.mxu0 0.0
    %783 = vmatprep.subr.mxu0 0.0
    %784 = vmatpush1.msra.mxu0 0.0
    %785 = vmatprep.subr.mxu0 0.0
    %786 = vmatpush1.msra.mxu0 0.0
    %787 = vmatprep.subr.mxu0 0.0
    %788 = vmatpush1.msra.mxu0 0.0
    %789 = vmatprep.subr.mxu0 %v71
    %790 = vmatpush1.msra.mxu0 %v70
    %791 = vmatprep.subr.mxu0 0.0
    %792 = vmatpush2.msra.mxu0 0.0
    %793 = vmatprep.subr.mxu0 0.0
    %794 = vmatpush2.msra.mxu0 0.0
    %795 = vmatprep.subr.mxu0 0.0
    %796 = vmatpush2.msra.mxu0 0.0
    %797 = vmatprep.subr.mxu0 0.0
    %798 = vmatpush2.msra.mxu0 0.0
    %799 = vmatprep.subr.mxu0 0.0
    %800 = vmatpush2.msra.mxu0 0.0
    %801 = vmatprep.subr.mxu0 0.0
    %802 = vmatpush2.msra.mxu0 0.0
    %803 = vmatprep.subr.mxu0 0.0
    %804 = vmatpush2.msra.mxu0 0.0
    %805 = vmatprep.subr.mxu0 0.0
    %806 = vmatpush2.msra.mxu0 0.0
    %807 = vmatprep.subr.mxu0 0.0
    %808 = vmatpush2.msra.mxu0 0.0
    %809 = vmatprep.subr.mxu0 0.0
    %810 = vmatpush2.msra.mxu0 0.0
    %811 = vmatprep.subr.mxu0 0.0
    %812 = vmatpush2.msra.mxu0 0.0
    %813 = vmatprep.subr.mxu0 0.0
    %814 = vmatpush2.msra.mxu0 0.0
    %815 = vmatprep.subr.mxu0 0.0
    %816 = vmatpush2.msra.mxu0 0.0
    %817 = vmatprep.subr.mxu0 0.0
    %818 = vmatpush2.msra.mxu0 0.0
    %819 = vmatprep.subr.mxu0 0.0
    %820 = vmatpush2.msra.mxu0 0.0
    %821 = vmatprep.subr.mxu0 0.0
    %822 = vmatpush2.msra.mxu0 0.0
    %823 = vmatprep.mubr.f32.mxu0 0.0
    %824 = vmatmul.mubr.f32.gmra.mxu0 %v390
    %v825 = vpop.f32.mrf.mxu0
    %v826 = vadd.f32 %v367, %v825
    %v827 = vpop.f32.mrf.mxu0
    %v828 = vadd.f32 %v371, %v827
    %829 = vmatprep.mubr.f32.mxu0 0.0
    %830 = vmatmul.mubr.f32.gmra.mxu0 %v393
    %v831 = vpop.f32.mrf.mxu0
    %v832 = vadd.f32 %v367, %v831
    %v833 = vpop.f32.mrf.mxu0
    %v834 = vadd.f32 %v371, %v833
    %835 = vmatprep.mubr.f32.mxu0 0.0
    %836 = vmatmul.mubr.f32.gmra.mxu0 %v396
    %v837 = vpop.f32.mrf.mxu0
    %v838 = vadd.f32 %v367, %v837
    %v839 = vpop.f32.mrf.mxu0
    %v840 = vadd.f32 %v371, %v839
    %841 = vmatprep.mubr.f32.mxu0 0.0
    %842 = vmatmul.mubr.f32.gmra.mxu0 %v399
    %v843 = vpop.f32.mrf.mxu0
    %v844 = vadd.f32 %v367, %v843
    %v845 = vpop.f32.mrf.mxu0
    %v846 = vadd.f32 %v371, %v845
    %847 = vmatprep.mubr.f32.mxu0 0.0
    %848 = vmatmul.mubr.f32.gmra.mxu0 %v402
    %v849 = vpop.f32.mrf.mxu0
    %v850 = vadd.f32 %v367, %v849
    %v851 = vpop.f32.mrf.mxu0
    %v852 = vadd.f32 %v371, %v851
    %853 = vmatprep.mubr.f32.mxu0 0.0
    %854 = vmatmul.mubr.f32.gmra.mxu0 %v405
    %v855 = vpop.f32.mrf.mxu0
    %v856 = vadd.f32 %v367, %v855
    %v857 = vpop.f32.mrf.mxu0
    %v858 = vadd.f32 %v371, %v857
    %859 = vmatprep.mubr.f32.mxu0 0.0
    %860 = vmatmul.mubr.f32.gmra.mxu0 %v408
    %v861 = vpop.f32.mrf.mxu0
    %v862 = vadd.f32 %v367, %v861
    %v863 = vpop.f32.mrf.mxu0
    %v864 = vadd.f32 %v371, %v863
    %865 = vmatprep.mubr.f32.mxu0 0.0
    %866 = vmatmul.mubr.f32.gmra.mxu0 %v411
    %v867 = vpop.f32.mrf.mxu0
    %v868 = vadd.f32 %v367, %v867
    %v869 = vpop.f32.mrf.mxu0
    %v870 = vadd.f32 %v371, %v869
    %871 = vmatprep.mubr.f32.mxu0 0.0
    %872 = vmatmul.mubr.f32.gmra.mxu0 %v414
    %v873 = vpop.f32.mrf.mxu0
    %v874 = vadd.f32 %v367, %v873
    %v875 = vpop.f32.mrf.mxu0
    %v876 = vadd.f32 %v371, %v875
    %877 = vmatprep.mubr.f32.mxu0 0.0
    %878 = vmatmul.mubr.f32.gmra.mxu0 %v417
    %v879 = vpop.f32.mrf.mxu0
    %v880 = vadd.f32 %v367, %v879
    %v881 = vpop.f32.mrf.mxu0
    %v882 = vadd.f32 %v371, %v881
    %883 = vmatprep.mubr.f32.mxu0 0.0
    %884 = vmatmul.mubr.f32.gmra.mxu0 %v420
    %v885 = vpop.f32.mrf.mxu0
    %v886 = vadd.f32 %v367, %v885
    %v887 = vpop.f32.mrf.mxu0
    %v888 = vadd.f32 %v371, %v887
    %889 = vmatprep.mubr.f32.mxu0 0.0
    %890 = vmatmul.mubr.f32.gmra.mxu0 %v423
    %v891 = vpop.f32.mrf.mxu0
    %v892 = vadd.f32 %v367, %v891
    %v893 = vpop.f32.mrf.mxu0
    %v894 = vadd.f32 %v371, %v893
    %895 = vmatprep.mubr.f32.mxu0 0.0
    %896 = vmatmul.mubr.f32.gmra.mxu0 %v426
    %v897 = vpop.f32.mrf.mxu0
    %v898 = vadd.f32 %v367, %v897
    %v899 = vpop.f32.mrf.mxu0
    %v900 = vadd.f32 %v371, %v899
    %901 = vmatprep.mubr.f32.mxu0 0.0
    %902 = vmatmul.mubr.f32.gmra.mxu0 %v429
    %v903 = vpop.f32.mrf.mxu0
    %v904 = vadd.f32 %v367, %v903
    %v905 = vpop.f32.mrf.mxu0
    %v906 = vadd.f32 %v371, %v905
    %907 = vmatprep.mubr.f32.mxu0 0.0
    %908 = vmatmul.mubr.f32.gmra.mxu0 %v432
    %v909 = vpop.f32.mrf.mxu0
    %v910 = vadd.f32 %v367, %v909
    %v911 = vpop.f32.mrf.mxu0
    %v912 = vadd.f32 %v371, %v911
    %913 = vmatprep.mubr.f32.mxu0 0.0
    %914 = vmatmul.mubr.f32.gmra.mxu0 %v435
    %v915 = vpop.f32.mrf.mxu0
    %v916 = vadd.f32 %v367, %v915
    %v917 = vpop.f32.mrf.mxu0
    %v918 = vadd.f32 %v371, %v917
    %919 = vdwg.mxu0
    %920 = vmatprep.subr.mxu0 0.0
    %921 = vmatpush1.msra.mxu0 0.0
    %922 = vmatprep.subr.mxu0 0.0
    %923 = vmatpush1.msra.mxu0 0.0
    %924 = vmatprep.subr.mxu0 0.0
    %925 = vmatpush1.msra.mxu0 0.0
    %926 = vmatprep.subr.mxu0 0.0
    %927 = vmatpush1.msra.mxu0 0.0
    %928 = vmatprep.subr.mxu0 0.0
    %929 = vmatpush1.msra.mxu0 0.0
    %930 = vmatprep.subr.mxu0 0.0
    %931 = vmatpush1.msra.mxu0 0.0
    %932 = vmatprep.subr.mxu0 0.0
    %933 = vmatpush1.msra.mxu0 0.0
    %934 = vmatprep.subr.mxu0 0.0
    %935 = vmatpush1.msra.mxu0 0.0
    %936 = vmatprep.subr.mxu0 0.0
    %937 = vmatpush1.msra.mxu0 0.0
    %938 = vmatprep.subr.mxu0 0.0
    %939 = vmatpush1.msra.mxu0 0.0
    %940 = vmatprep.subr.mxu0 0.0
    %941 = vmatpush1.msra.mxu0 0.0
    %942 = vmatprep.subr.mxu0 0.0
    %943 = vmatpush1.msra.mxu0 0.0
    %944 = vmatprep.subr.mxu0 0.0
    %945 = vmatpush1.msra.mxu0 0.0
    %946 = vmatprep.subr.mxu0 0.0
    %947 = vmatpush1.msra.mxu0 0.0
    %948 = vmatprep.subr.mxu0 0.0
    %949 = vmatpush1.msra.mxu0 0.0
    %950 = vmatprep.subr.mxu0 %v73
    %951 = vmatpush1.msra.mxu0 %v72
    %952 = vmatprep.subr.mxu0 0.0
    %953 = vmatpush2.msra.mxu0 0.0
    %954 = vmatprep.subr.mxu0 0.0
    %955 = vmatpush2.msra.mxu0 0.0
    %956 = vmatprep.subr.mxu0 0.0
    %957 = vmatpush2.msra.mxu0 0.0
    %958 = vmatprep.subr.mxu0 0.0
    %959 = vmatpush2.msra.mxu0 0.0
    %960 = vmatprep.subr.mxu0 0.0
    %961 = vmatpush2.msra.mxu0 0.0
    %962 = vmatprep.subr.mxu0 0.0
    %963 = vmatpush2.msra.mxu0 0.0
    %964 = vmatprep.subr.mxu0 0.0
    %965 = vmatpush2.msra.mxu0 0.0
    %966 = vmatprep.subr.mxu0 0.0
    %967 = vmatpush2.msra.mxu0 0.0
    %968 = vmatprep.subr.mxu0 0.0
    %969 = vmatpush2.msra.mxu0 0.0
    %970 = vmatprep.subr.mxu0 0.0
    %971 = vmatpush2.msra.mxu0 0.0
    %972 = vmatprep.subr.mxu0 0.0
    %973 = vmatpush2.msra.mxu0 0.0
    %974 = vmatprep.subr.mxu0 0.0
    %975 = vmatpush2.msra.mxu0 0.0
    %976 = vmatprep.subr.mxu0 0.0
    %977 = vmatpush2.msra.mxu0 0.0
    %978 = vmatprep.subr.mxu0 0.0
    %979 = vmatpush2.msra.mxu0 0.0
    %980 = vmatprep.subr.mxu0 0.0
    %981 = vmatpush2.msra.mxu0 0.0
    %982 = vmatprep.subr.mxu0 0.0
    %983 = vmatpush2.msra.mxu0 0.0
    %984 = vmatprep.mubr.f32.mxu0 0.0
    %985 = vmatmul.mubr.f32.gmra.mxu0 %v390
    %v986 = vpop.f32.mrf.mxu0
    %v987 = vadd.f32 %v375, %v986
    %v988 = vpop.f32.mrf.mxu0
    %v989 = vadd.f32 %v379, %v988
    %990 = vmatprep.mubr.f32.mxu0 0.0
    %991 = vmatmul.mubr.f32.gmra.mxu0 %v393
    %v992 = vpop.f32.mrf.mxu0
    %v993 = vadd.f32 %v375, %v992
    %v994 = vpop.f32.mrf.mxu0
    %v995 = vadd.f32 %v379, %v994
    %996 = vmatprep.mubr.f32.mxu0 0.0
    %997 = vmatmul.mubr.f32.gmra.mxu0 %v396
    %v998 = vpop.f32.mrf.mxu0
    %v999 = vadd.f32 %v375, %v998
    %v1000 = vpop.f32.mrf.mxu0
    %v1001 = vadd.f32 %v379, %v1000
    %1002 = vmatprep.mubr.f32.mxu0 0.0
    %1003 = vmatmul.mubr.f32.gmra.mxu0 %v399
    %v1004 = vpop.f32.mrf.mxu0
    %v1005 = vadd.f32 %v375, %v1004
    %v1006 = vpop.f32.mrf.mxu0
    %v1007 = vadd.f32 %v379, %v1006
    %1008 = vmatprep.mubr.f32.mxu0 0.0
    %1009 = vmatmul.mubr.f32.gmra.mxu0 %v402
    %v1010 = vpop.f32.mrf.mxu0
    %v1011 = vadd.f32 %v375, %v1010
    %v1012 = vpop.f32.mrf.mxu0
    %v1013 = vadd.f32 %v379, %v1012
    %1014 = vmatprep.mubr.f32.mxu0 0.0
    %1015 = vmatmul.mubr.f32.gmra.mxu0 %v405
    %v1016 = vpop.f32.mrf.mxu0
    %v1017 = vadd.f32 %v375, %v1016
    %v1018 = vpop.f32.mrf.mxu0
    %v1019 = vadd.f32 %v379, %v1018
    %1020 = vmatprep.mubr.f32.mxu0 0.0
    %1021 = vmatmul.mubr.f32.gmra.mxu0 %v408
    %v1022 = vpop.f32.mrf.mxu0
    %v1023 = vadd.f32 %v375, %v1022
    %v1024 = vpop.f32.mrf.mxu0
    %v1025 = vadd.f32 %v379, %v1024
    %1026 = vmatprep.mubr.f32.mxu0 0.0
    %1027 = vmatmul.mubr.f32.gmra.mxu0 %v411
    %v1028 = vpop.f32.mrf.mxu0
    %v1029 = vadd.f32 %v375, %v1028
    %v1030 = vpop.f32.mrf.mxu0
    %v1031 = vadd.f32 %v379, %v1030
    %1032 = vmatprep.mubr.f32.mxu0 0.0
    %1033 = vmatmul.mubr.f32.gmra.mxu0 %v414
    %v1034 = vpop.f32.mrf.mxu0
    %v1035 = vadd.f32 %v375, %v1034
    %v1036 = vpop.f32.mrf.mxu0
    %v1037 = vadd.f32 %v379, %v1036
    %1038 = vmatprep.mubr.f32.mxu0 0.0
    %1039 = vmatmul.mubr.f32.gmra.mxu0 %v417
    %v1040 = vpop.f32.mrf.mxu0
    %v1041 = vadd.f32 %v375, %v1040
    %v1042 = vpop.f32.mrf.mxu0
    %v1043 = vadd.f32 %v379, %v1042
    %1044 = vmatprep.mubr.f32.mxu0 0.0
    %1045 = vmatmul.mubr.f32.gmra.mxu0 %v420
    %v1046 = vpop.f32.mrf.mxu0
    %v1047 = vadd.f32 %v375, %v1046
    %v1048 = vpop.f32.mrf.mxu0
    %v1049 = vadd.f32 %v379, %v1048
    %1050 = vmatprep.mubr.f32.mxu0 0.0
    %1051 = vmatmul.mubr.f32.gmra.mxu0 %v423
    %v1052 = vpop.f32.mrf.mxu0
    %v1053 = vadd.f32 %v375, %v1052
    %v1054 = vpop.f32.mrf.mxu0
    %v1055 = vadd.f32 %v379, %v1054
    %1056 = vmatprep.mubr.f32.mxu0 0.0
    %1057 = vmatmul.mubr.f32.gmra.mxu0 %v426
    %v1058 = vpop.f32.mrf.mxu0
    %v1059 = vadd.f32 %v375, %v1058
    %v1060 = vpop.f32.mrf.mxu0
    %v1061 = vadd.f32 %v379, %v1060
    %1062 = vmatprep.mubr.f32.mxu0 0.0
    %1063 = vmatmul.mubr.f32.gmra.mxu0 %v429
    %v1064 = vpop.f32.mrf.mxu0
    %v1065 = vadd.f32 %v375, %v1064
    %v1066 = vpop.f32.mrf.mxu0
    %v1067 = vadd.f32 %v379, %v1066
    %1068 = vmatprep.mubr.f32.mxu0 0.0
    %1069 = vmatmul.mubr.f32.gmra.mxu0 %v432
    %v1070 = vpop.f32.mrf.mxu0
    %v1071 = vadd.f32 %v375, %v1070
    %v1072 = vpop.f32.mrf.mxu0
    %v1073 = vadd.f32 %v379, %v1072
    %1074 = vmatprep.mubr.f32.mxu0 0.0
    %1075 = vmatmul.mubr.f32.gmra.mxu0 %v435
    %v1076 = vpop.f32.mrf.mxu0
    %v1077 = vadd.f32 %v375, %v1076
    %v1078 = vpop.f32.mrf.mxu0
    %v1079 = vadd.f32 %v379, %v1078
    %1080 = vdwg.mxu0
    %1081 = vst [vmem:[#allocation4] sm:$0xff] %v504
    %1082 = vst [vmem:[#allocation4 + $0x8] sm:$0xff] %v506
    %1083 = vst [vmem:[#allocation4 + $0x10] sm:$0xff] %v665
    %1084 = vst [vmem:[#allocation4 + $0x18] sm:$0xff] %v667
    %1085 = vst [vmem:[#allocation4 + $0x20] sm:$0xff] %v826
    %1086 = vst [vmem:[#allocation4 + $0x28] sm:$0xff] %v828
    %1087 = vst [vmem:[#allocation4 + $0x30] sm:$0xff] %v987
    %1088 = vst [vmem:[#allocation4 + $0x38] sm:$0xff] %v989
    %1089 = vst [vmem:[#allocation4 + $0x40] sm:$0xff] %v510
    %1090 = vst [vmem:[#allocation4 + $0x48] sm:$0xff] %v512
    %1091 = vst [vmem:[#allocation4 + $0x50] sm:$0xff] %v671
    %1092 = vst [vmem:[#allocation4 + $0x58] sm:$0xff] %v673
    %1093 = vst [vmem:[#allocation4 + $0x60] sm:$0xff] %v832
    %1094 = vst [vmem:[#allocation4 + $0x68] sm:$0xff] %v834
    %1095 = vst [vmem:[#allocation4 + $0x70] sm:$0xff] %v993
    %1096 = vst [vmem:[#allocation4 + $0x78] sm:$0xff] %v995
    %1097 = vst [vmem:[#allocation4 + $0x80] sm:$0xff] %v516
    %1098 = vst [vmem:[#allocation4 + $0x88] sm:$0xff] %v518
    %1099 = vst [vmem:[#allocation4 + $0x90] sm:$0xff] %v677
    %1100 = vst [vmem:[#allocation4 + $0x98] sm:$0xff] %v679
    %1101 = vst [vmem:[#allocation4 + $0xa0] sm:$0xff] %v838
    %1102 = vst [vmem:[#allocation4 + $0xa8] sm:$0xff] %v840
    %1103 = vst [vmem:[#allocation4 + $0xb0] sm:$0xff] %v999
    %1104 = vst [vmem:[#allocation4 + $0xb8] sm:$0xff] %v1001
    %1105 = vst [vmem:[#allocation4 + $0xc0] sm:$0xff] %v522
    %1106 = vst [vmem:[#allocation4 + $0xc8] sm:$0xff] %v524
    %1107 = vst [vmem:[#allocation4 + $0xd0] sm:$0xff] %v683
    %1108 = vst [vmem:[#allocation4 + $0xd8] sm:$0xff] %v685
    %1109 = vst [vmem:[#allocation4 + $0xe0] sm:$0xff] %v844
    %1110 = vst [vmem:[#allocation4 + $0xe8] sm:$0xff] %v846
    %1111 = vst [vmem:[#allocation4 + $0xf0] sm:$0xff] %v1005
    %1112 = vst [vmem:[#allocation4 + $0xf8] sm:$0xff] %v1007
    %1113 = vst [vmem:[#allocation4 + $0x100] sm:$0xff] %v528
    %1114 = vst [vmem:[#allocation4 + $0x108] sm:$0xff] %v530
    %1115 = vst [vmem:[#allocation4 + $0x110] sm:$0xff] %v689
    %1116 = vst [vmem:[#allocation4 + $0x118] sm:$0xff] %v691
    %1117 = vst [vmem:[#allocation4 + $0x120] sm:$0xff] %v850
    %1118 = vst [vmem:[#allocation4 + $0x128] sm:$0xff] %v852
    %1119 = vst [vmem:[#allocation4 + $0x130] sm:$0xff] %v1011
    %1120 = vst [vmem:[#allocation4 + $0x138] sm:$0xff] %v1013
    %1121 = vst [vmem:[#allocation4 + $0x140] sm:$0xff] %v534
    %1122 = vst [vmem:[#allocation4 + $0x148] sm:$0xff] %v536
    %1123 = vst [vmem:[#allocation4 + $0x150] sm:$0xff] %v695
    %1124 = vst [vmem:[#allocation4 + $0x158] sm:$0xff] %v697
    %1125 = vst [vmem:[#allocation4 + $0x160] sm:$0xff] %v856
    %1126 = vst [vmem:[#allocation4 + $0x168] sm:$0xff] %v858
    %1127 = vst [vmem:[#allocation4 + $0x170] sm:$0xff] %v1017
    %1128 = vst [vmem:[#allocation4 + $0x178] sm:$0xff] %v1019
    %1129 = vst [vmem:[#allocation4 + $0x180] sm:$0xff] %v540
    %1130 = vst [vmem:[#allocation4 + $0x188] sm:$0xff] %v542
    %1131 = vst [vmem:[#allocation4 + $0x190] sm:$0xff] %v701
    %1132 = vst [vmem:[#allocation4 + $0x198] sm:$0xff] %v703
    %1133 = vst [vmem:[#allocation4 + $0x1a0] sm:$0xff] %v862
    %1134 = vst [vmem:[#allocation4 + $0x1a8] sm:$0xff] %v864
    %1135 = vst [vmem:[#allocation4 + $0x1b0] sm:$0xff] %v1023
    %1136 = vst [vmem:[#allocation4 + $0x1b8] sm:$0xff] %v1025
    %1137 = vst [vmem:[#allocation4 + $0x1c0] sm:$0xff] %v546
    %1138 = vst [vmem:[#allocation4 + $0x1c8] sm:$0xff] %v548
    %1139 = vst [vmem:[#allocation4 + $0x1d0] sm:$0xff] %v707
    %1140 = vst [vmem:[#allocation4 + $0x1d8] sm:$0xff] %v709
    %1141 = vst [vmem:[#allocation4 + $0x1e0] sm:$0xff] %v868
    %1142 = vst [vmem:[#allocation4 + $0x1e8] sm:$0xff] %v870
    %1143 = vst [vmem:[#allocation4 + $0x1f0] sm:$0xff] %v1029
    %1144 = vst [vmem:[#allocation4 + $0x1f8] sm:$0xff] %v1031
    %1145 = vst [vmem:[#allocation4 + $0x200] sm:$0xff] %v552
    %1146 = vst [vmem:[#allocation4 + $0x208] sm:$0xff] %v554
    %1147 = vst [vmem:[#allocation4 + $0x210] sm:$0xff] %v713
    %1148 = vst [vmem:[#allocation4 + $0x218] sm:$0xff] %v715
    %1149 = vst [vmem:[#allocation4 + $0x220] sm:$0xff] %v874
    %1150 = vst [vmem:[#allocation4 + $0x228] sm:$0xff] %v876
    %1151 = vst [vmem:[#allocation4 + $0x230] sm:$0xff] %v1035
    %1152 = vst [vmem:[#allocation4 + $0x238] sm:$0xff] %v1037
    %1153 = vst [vmem:[#allocation4 + $0x240] sm:$0xff] %v558
    %1154 = vst [vmem:[#allocation4 + $0x248] sm:$0xff] %v560
    %1155 = vst [vmem:[#allocation4 + $0x250] sm:$0xff] %v719
    %1156 = vst [vmem:[#allocation4 + $0x258] sm:$0xff] %v721
    %1157 = vst [vmem:[#allocation4 + $0x260] sm:$0xff] %v880
    %1158 = vst [vmem:[#allocation4 + $0x268] sm:$0xff] %v882
    %1159 = vst [vmem:[#allocation4 + $0x270] sm:$0xff] %v1041
    %1160 = vst [vmem:[#allocation4 + $0x278] sm:$0xff] %v1043
    %1161 = vst [vmem:[#allocation4 + $0x280] sm:$0xff] %v564
    %1162 = vst [vmem:[#allocation4 + $0x288] sm:$0xff] %v566
    %1163 = vst [vmem:[#allocation4 + $0x290] sm:$0xff] %v725
    %1164 = vst [vmem:[#allocation4 + $0x298] sm:$0xff] %v727
    %1165 = vst [vmem:[#allocation4 + $0x2a0] sm:$0xff] %v886
    %1166 = vst [vmem:[#allocation4 + $0x2a8] sm:$0xff] %v888
    %1167 = vst [vmem:[#allocation4 + $0x2b0] sm:$0xff] %v1047
    %1168 = vst [vmem:[#allocation4 + $0x2b8] sm:$0xff] %v1049
    %1169 = vst [vmem:[#allocation4 + $0x2c0] sm:$0xff] %v570
    %1170 = vst [vmem:[#allocation4 + $0x2c8] sm:$0xff] %v572
    %1171 = vst [vmem:[#allocation4 + $0x2d0] sm:$0xff] %v731
    %1172 = vst [vmem:[#allocation4 + $0x2d8] sm:$0xff] %v733
    %1173 = vst [vmem:[#allocation4 + $0x2e0] sm:$0xff] %v892
    %1174 = vst [vmem:[#allocation4 + $0x2e8] sm:$0xff] %v894
    %1175 = vst [vmem:[#allocation4 + $0x2f0] sm:$0xff] %v1053
    %1176 = vst [vmem:[#allocation4 + $0x2f8] sm:$0xff] %v1055
    %1177 = vst [vmem:[#allocation4 + $0x300] sm:$0xff] %v576
    %1178 = vst [vmem:[#allocation4 + $0x308] sm:$0xff] %v578
    %1179 = vst [vmem:[#allocation4 + $0x310] sm:$0xff] %v737
    %1180 = vst [vmem:[#allocation4 + $0x318] sm:$0xff] %v739
    %1181 = vst [vmem:[#allocation4 + $0x320] sm:$0xff] %v898
    %1182 = vst [vmem:[#allocation4 + $0x328] sm:$0xff] %v900
    %1183 = vst [vmem:[#allocation4 + $0x330] sm:$0xff] %v1059
    %1184 = vst [vmem:[#allocation4 + $0x338] sm:$0xff] %v1061
    %1185 = vst [vmem:[#allocation4 + $0x340] sm:$0xff] %v582
    %1186 = vst [vmem:[#allocation4 + $0x348] sm:$0xff] %v584
    %1187 = vst [vmem:[#allocation4 + $0x350] sm:$0xff] %v743
    %1188 = vst [vmem:[#allocation4 + $0x358] sm:$0xff] %v745
    %1189 = vst [vmem:[#allocation4 + $0x360] sm:$0xff] %v904
    %1190 = vst [vmem:[#allocation4 + $0x368] sm:$0xff] %v906
    %1191 = vst [vmem:[#allocation4 + $0x370] sm:$0xff] %v1065
    %1192 = vst [vmem:[#allocation4 + $0x378] sm:$0xff] %v1067
    %1193 = vst [vmem:[#allocation4 + $0x380] sm:$0xff] %v588
    %1194 = vst [vmem:[#allocation4 + $0x388] sm:$0xff] %v590
    %1195 = vst [vmem:[#allocation4 + $0x390] sm:$0xff] %v749
    %1196 = vst [vmem:[#allocation4 + $0x398] sm:$0xff] %v751
    %1197 = vst [vmem:[#allocation4 + $0x3a0] sm:$0xff] %v910
    %1198 = vst [vmem:[#allocation4 + $0x3a8] sm:$0xff] %v912
    %1199 = vst [vmem:[#allocation4 + $0x3b0] sm:$0xff] %v1071
    %1200 = vst [vmem:[#allocation4 + $0x3b8] sm:$0xff] %v1073
    %1201 = vst [vmem:[#allocation4 + $0x3c0] sm:$0xff] %v594
    %1202 = vst [vmem:[#allocation4 + $0x3c8] sm:$0xff] %v596
    %1203 = vst [vmem:[#allocation4 + $0x3d0] sm:$0xff] %v755
    %1204 = vst [vmem:[#allocation4 + $0x3d8] sm:$0xff] %v757
    %1205 = vst [vmem:[#allocation4 + $0x3e0] sm:$0xff] %v916
    %1206 = vst [vmem:[#allocation4 + $0x3e8] sm:$0xff] %v918
    %1207 = vst [vmem:[#allocation4 + $0x3f0] sm:$0xff] %v1077
    %1208 = vst [vmem:[#allocation4 + $0x3f8] sm:$0xff] %v1079
    %v1209 = vld [vmem:[#allocation2] sm:$0xff]
    %v1210 = vld [vmem:[#allocation2 + $0x8] sm:$0xff]
    %v1211 = vld [vmem:[#allocation2 + $0x10] sm:$0xff]
    %v1212 = vld [vmem:[#allocation2 + $0x18] sm:$0xff]
    %v1213 = vld [vmem:[#allocation3] sm:$0xff]
    %v1214 = vld [vmem:[#allocation3 + $0x8] sm:$0xff]
    %v1215 = vld [vmem:[#allocation3 + $0x10] sm:$0xff]
    %v1216 = vld [vmem:[#allocation3 + $0x18] sm:$0xff]
    %v1217 = vld [vmem:[#allocation4] sm:$0xff]
    %v1218 = vld [vmem:[#allocation4 + $0x8] sm:$0xff]
    %v1219 = vld [vmem:[#allocation4 + $0x10] sm:$0xff]
    %v1220 = vld [vmem:[#allocation4 + $0x18] sm:$0xff]
    %v1221 = vld [vmem:[#allocation4 + $0x20] sm:$0xff]
    %v1222 = vld [vmem:[#allocation4 + $0x28] sm:$0xff]
    %v1223 = vld [vmem:[#allocation4 + $0x30] sm:$0xff]
    %v1224 = vld [vmem:[#allocation4 + $0x38] sm:$0xff]
    %v1225 = vld [vmem:[#allocation4 + $0x40] sm:$0xff]
    %v1226 = vld [vmem:[#allocation4 + $0x48] sm:$0xff]
    %v1227 = vld [vmem:[#allocation4 + $0x50] sm:$0xff]
    %v1228 = vld [vmem:[#allocation4 + $0x58] sm:$0xff]
    %v1229 = vld [vmem:[#allocation4 + $0x60] sm:$0xff]
    %v1230 = vld [vmem:[#allocation4 + $0x68] sm:$0xff]
    %v1231 = vld [vmem:[#allocation4 + $0x70] sm:$0xff]
    %v1232 = vld [vmem:[#allocation4 + $0x78] sm:$0xff]
    %1233 = vmatprep.subr.mxu0 %v195
    %1234 = vmatpush1.msra.mxu0 %v194
    %1235 = vmatprep.subr.mxu0 %v187
    %1236 = vmatpush1.msra.mxu0 %v186
    %1237 = vmatprep.subr.mxu0 %v179
    %1238 = vmatpush1.msra.mxu0 %v178
    %1239 = vmatprep.subr.mxu0 %v171
    %1240 = vmatpush1.msra.mxu0 %v170
    %1241 = vmatprep.subr.mxu0 %v163
    %1242 = vmatpush1.msra.mxu0 %v162
    %1243 = vmatprep.subr.mxu0 %v155
    %1244 = vmatpush1.msra.mxu0 %v154
    %1245 = vmatprep.subr.mxu0 %v147
    %1246 = vmatpush1.msra.mxu0 %v146
    %1247 = vmatprep.subr.mxu0 %v139
    %1248 = vmatpush1.msra.mxu0 %v138
    %1249 = vmatprep.subr.mxu0 %v131
    %1250 = vmatpush1.msra.mxu0 %v130
    %1251 = vmatprep.subr.mxu0 %v123
    %1252 = vmatpush1.msra.mxu0 %v122
    %1253 = vmatprep.subr.mxu0 %v115
    %1254 = vmatpush1.msra.mxu0 %v114
    %1255 = vmatprep.subr.mxu0 %v107
    %1256 = vmatpush1.msra.mxu0 %v106
    %1257 = vmatprep.subr.mxu0 %v99
    %1258 = vmatpush1.msra.mxu0 %v98
    %1259 = vmatprep.subr.mxu0 %v91
    %1260 = vmatpush1.msra.mxu0 %v90
    %1261 = vmatprep.subr.mxu0 %v83
    %1262 = vmatpush1.msra.mxu0 %v82
    %1263 = vmatprep.subr.mxu0 %v75
    %1264 = vmatpush1.msra.mxu0 %v74
    %1265 = vmatprep.subr.mxu0 %v323
    %1266 = vmatpush2.msra.mxu0 %v322
    %1267 = vmatprep.subr.mxu0 %v315
    %1268 = vmatpush2.msra.mxu0 %v314
    %1269 = vmatprep.subr.mxu0 %v307
    %1270 = vmatpush2.msra.mxu0 %v306
    %1271 = vmatprep.subr.mxu0 %v299
    %1272 = vmatpush2.msra.mxu0 %v298
    %1273 = vmatprep.subr.mxu0 %v291
    %1274 = vmatpush2.msra.mxu0 %v290
    %1275 = vmatprep.subr.mxu0 %v283
    %1276 = vmatpush2.msra.mxu0 %v282
    %1277 = vmatprep.subr.mxu0 %v275
    %1278 = vmatpush2.msra.mxu0 %v274
    %1279 = vmatprep.subr.mxu0 %v267
    %1280 = vmatpush2.msra.mxu0 %v266
    %1281 = vmatprep.subr.mxu0 %v259
    %1282 = vmatpush2.msra.mxu0 %v258
    %1283 = vmatprep.subr.mxu0 %v251
    %1284 = vmatpush2.msra.mxu0 %v250
    %1285 = vmatprep.subr.mxu0 %v243
    %1286 = vmatpush2.msra.mxu0 %v242
    %1287 = vmatprep.subr.mxu0 %v235
    %1288 = vmatpush2.msra.mxu0 %v234
    %1289 = vmatprep.subr.mxu0 %v227
    %1290 = vmatpush2.msra.mxu0 %v226
    %1291 = vmatprep.subr.mxu0 %v219
    %1292 = vmatpush2.msra.mxu0 %v218
    %1293 = vmatprep.subr.mxu0 %v211
    %1294 = vmatpush2.msra.mxu0 %v210
    %1295 = vmatprep.subr.mxu0 %v203
    %1296 = vmatpush2.msra.mxu0 %v202
    %1297 = vmatprep.mubr.f32.mxu0 %v1210
    %1298 = vmatmul.mubr.f32.gmra.mxu0 %v1209
    %v1299 = vpop.f32.mrf.mxu0
    %v1300 = vadd.f32 0.0, %v1299
    %v1301 = vpop.f32.mrf.mxu0
    %v1302 = vadd.f32 0.0, %v1301
    %1303 = vmatprep.mubr.f32.mxu0 %v1212
    %1304 = vmatmul.mubr.f32.gmra.mxu0 %v1211
    %v1305 = vpop.f32.mrf.mxu0
    %v1306 = vadd.f32 0.0, %v1305
    %v1307 = vpop.f32.mrf.mxu0
    %v1308 = vadd.f32 0.0, %v1307
    %1309 = vdwg.mxu0
    %1310 = vmatprep.subr.mxu0 %v197
    %1311 = vmatpush1.msra.mxu0 %v196
    %1312 = vmatprep.subr.mxu0 %v189
    %1313 = vmatpush1.msra.mxu0 %v188
    %1314 = vmatprep.subr.mxu0 %v181
    %1315 = vmatpush1.msra.mxu0 %v180
    %1316 = vmatprep.subr.mxu0 %v173
    %1317 = vmatpush1.msra.mxu0 %v172
    %1318 = vmatprep.subr.mxu0 %v165
    %1319 = vmatpush1.msra.mxu0 %v164
    %1320 = vmatprep.subr.mxu0 %v157
    %1321 = vmatpush1.msra.mxu0 %v156
    %1322 = vmatprep.subr.mxu0 %v149
    %1323 = vmatpush1.msra.mxu0 %v148
    %1324 = vmatprep.subr.mxu0 %v141
    %1325 = vmatpush1.msra.mxu0 %v140
    %1326 = vmatprep.subr.mxu0 %v133
    %1327 = vmatpush1.msra.mxu0 %v132
    %1328 = vmatprep.subr.mxu0 %v125
    %1329 = vmatpush1.msra.mxu0 %v124
    %1330 = vmatprep.subr.mxu0 %v117
    %1331 = vmatpush1.msra.mxu0 %v116
    %1332 = vmatprep.subr.mxu0 %v109
    %1333 = vmatpush1.msra.mxu0 %v108
    %1334 = vmatprep.subr.mxu0 %v101
    %1335 = vmatpush1.msra.mxu0 %v100
    %1336 = vmatprep.subr.mxu0 %v93
    %1337 = vmatpush1.msra.mxu0 %v92
    %1338 = vmatprep.subr.mxu0 %v85
    %1339 = vmatpush1.msra.mxu0 %v84
    %1340 = vmatprep.subr.mxu0 %v77
    %1341 = vmatpush1.msra.mxu0 %v76
    %1342 = vmatprep.subr.mxu0 %v325
    %1343 = vmatpush2.msra.mxu0 %v324
    %1344 = vmatprep.subr.mxu0 %v317
    %1345 = vmatpush2.msra.mxu0 %v316
    %1346 = vmatprep.subr.mxu0 %v309
    %1347 = vmatpush2.msra.mxu0 %v308
    %1348 = vmatprep.subr.mxu0 %v301
    %1349 = vmatpush2.msra.mxu0 %v300
    %1350 = vmatprep.subr.mxu0 %v293
    %1351 = vmatpush2.msra.mxu0 %v292
    %1352 = vmatprep.subr.mxu0 %v285
    %1353 = vmatpush2.msra.mxu0 %v284
    %1354 = vmatprep.subr.mxu0 %v277
    %1355 = vmatpush2.msra.mxu0 %v276
    %1356 = vmatprep.subr.mxu0 %v269
    %1357 = vmatpush2.msra.mxu0 %v268
    %1358 = vmatprep.subr.mxu0 %v261
    %1359 = vmatpush2.msra.mxu0 %v260
    %1360 = vmatprep.subr.mxu0 %v253
    %1361 = vmatpush2.msra.mxu0 %v252
    %1362 = vmatprep.subr.mxu0 %v245
    %1363 = vmatpush2.msra.mxu0 %v244
    %1364 = vmatprep.subr.mxu0 %v237
    %1365 = vmatpush2.msra.mxu0 %v236
    %1366 = vmatprep.subr.mxu0 %v229
    %1367 = vmatpush2.msra.mxu0 %v228
    %1368 = vmatprep.subr.mxu0 %v221
    %1369 = vmatpush2.msra.mxu0 %v220
    %1370 = vmatprep.subr.mxu0 %v213
    %1371 = vmatpush2.msra.mxu0 %v212
    %1372 = vmatprep.subr.mxu0 %v205
    %1373 = vmatpush2.msra.mxu0 %v204
    %1374 = vmatprep.mubr.f32.mxu0 %v1210
    %1375 = vmatmul.mubr.f32.gmra.mxu0 %v1209
    %v1376 = vpop.f32.mrf.mxu0
    %v1377 = vadd.f32 0.0, %v1376
    %v1378 = vpop.f32.mrf.mxu0
    %v1379 = vadd.f32 0.0, %v1378
    %1380 = vmatprep.mubr.f32.mxu0 %v1212
    %1381 = vmatmul.mubr.f32.gmra.mxu0 %v1211
    %v1382 = vpop.f32.mrf.mxu0
    %v1383 = vadd.f32 0.0, %v1382
    %v1384 = vpop.f32.mrf.mxu0
    %v1385 = vadd.f32 0.0, %v1384
    %1386 = vdwg.mxu0
    %1387 = vmatprep.subr.mxu0 %v199
    %1388 = vmatpush1.msra.mxu0 %v198
    %1389 = vmatprep.subr.mxu0 %v191
    %1390 = vmatpush1.msra.mxu0 %v190
    %1391 = vmatprep.subr.mxu0 %v183
    %1392 = vmatpush1.msra.mxu0 %v182
    %1393 = vmatprep.subr.mxu0 %v175
    %1394 = vmatpush1.msra.mxu0 %v174
    %1395 = vmatprep.subr.mxu0 %v167
    %1396 = vmatpush1.msra.mxu0 %v166
    %1397 = vmatprep.subr.mxu0 %v159
    %1398 = vmatpush1.msra.mxu0 %v158
    %1399 = vmatprep.subr.mxu0 %v151
    %1400 = vmatpush1.msra.mxu0 %v150
    %1401 = vmatprep.subr.mxu0 %v143
    %1402 = vmatpush1.msra.mxu0 %v142
    %1403 = vmatprep.subr.mxu0 %v135
    %1404 = vmatpush1.msra.mxu0 %v134
    %1405 = vmatprep.subr.mxu0 %v127
    %1406 = vmatpush1.msra.mxu0 %v126
    %1407 = vmatprep.subr.mxu0 %v119
    %1408 = vmatpush1.msra.mxu0 %v118
    %1409 = vmatprep.subr.mxu0 %v111
    %1410 = vmatpush1.msra.mxu0 %v110
    %1411 = vmatprep.subr.mxu0 %v103
    %1412 = vmatpush1.msra.mxu0 %v102
    %1413 = vmatprep.subr.mxu0 %v95
    %1414 = vmatpush1.msra.mxu0 %v94
    %1415 = vmatprep.subr.mxu0 %v87
    %1416 = vmatpush1.msra.mxu0 %v86
    %1417 = vmatprep.subr.mxu0 %v79
    %1418 = vmatpush1.msra.mxu0 %v78
    %1419 = vmatprep.subr.mxu0 %v327
    %1420 = vmatpush2.msra.mxu0 %v326
    %1421 = vmatprep.subr.mxu0 %v319
    %1422 = vmatpush2.msra.mxu0 %v318
    %1423 = vmatprep.subr.mxu0 %v311
    %1424 = vmatpush2.msra.mxu0 %v310
    %1425 = vmatprep.subr.mxu0 %v303
    %1426 = vmatpush2.msra.mxu0 %v302
    %1427 = vmatprep.subr.mxu0 %v295
    %1428 = vmatpush2.msra.mxu0 %v294
    %1429 = vmatprep.subr.mxu0 %v287
    %1430 = vmatpush2.msra.mxu0 %v286
    %1431 = vmatprep.subr.mxu0 %v279
    %1432 = vmatpush2.msra.mxu0 %v278
    %1433 = vmatprep.subr.mxu0 %v271
    %1434 = vmatpush2.msra.mxu0 %v270
    %1435 = vmatprep.subr.mxu0 %v263
    %1436 = vmatpush2.msra.mxu0 %v262
    %1437 = vmatprep.subr.mxu0 %v255
    %1438 = vmatpush2.msra.mxu0 %v254
    %1439 = vmatprep.subr.mxu0 %v247
    %1440 = vmatpush2.msra.mxu0 %v246
    %1441 = vmatprep.subr.mxu0 %v239
    %1442 = vmatpush2.msra.mxu0 %v238
    %1443 = vmatprep.subr.mxu0 %v231
    %1444 = vmatpush2.msra.mxu0 %v230
    %1445 = vmatprep.subr.mxu0 %v223
    %1446 = vmatpush2.msra.mxu0 %v222
    %1447 = vmatprep.subr.mxu0 %v215
    %1448 = vmatpush2.msra.mxu0 %v214
    %1449 = vmatprep.subr.mxu0 %v207
    %1450 = vmatpush2.msra.mxu0 %v206
    %1451 = vmatprep.mubr.f32.mxu0 %v1210
    %1452 = vmatmul.mubr.f32.gmra.mxu0 %v1209
    %v1453 = vpop.f32.mrf.mxu0
    %v1454 = vadd.f32 0.0, %v1453
    %v1455 = vpop.f32.mrf.mxu0
    %v1456 = vadd.f32 0.0, %v1455
    %1457 = vmatprep.mubr.f32.mxu0 %v1212
    %1458 = vmatmul.mubr.f32.gmra.mxu0 %v1211
    %v1459 = vpop.f32.mrf.mxu0
    %v1460 = vadd.f32 0.0, %v1459
    %v1461 = vpop.f32.mrf.mxu0
    %v1462 = vadd.f32 0.0, %v1461
    %1463 = vdwg.mxu0
    %1464 = vmatprep.subr.mxu0 %v201
    %1465 = vmatpush1.msra.mxu0 %v200
    %1466 = vmatprep.subr.mxu0 %v193
    %1467 = vmatpush1.msra.mxu0 %v192
    %1468 = vmatprep.subr.mxu0 %v185
    %1469 = vmatpush1.msra.mxu0 %v184
    %1470 = vmatprep.subr.mxu0 %v177
    %1471 = vmatpush1.msra.mxu0 %v176
    %1472 = vmatprep.subr.mxu0 %v169
    %1473 = vmatpush1.msra.mxu0 %v168
    %1474 = vmatprep.subr.mxu0 %v161
    %1475 = vmatpush1.msra.mxu0 %v160
    %1476 = vmatprep.subr.mxu0 %v153
    %1477 = vmatpush1.msra.mxu0 %v152
    %1478 = vmatprep.subr.mxu0 %v145
    %1479 = vmatpush1.msra.mxu0 %v144
    %1480 = vmatprep.subr.mxu0 %v137
    %1481 = vmatpush1.msra.mxu0 %v136
    %1482 = vmatprep.subr.mxu0 %v129
    %1483 = vmatpush1.msra.mxu0 %v128
    %1484 = vmatprep.subr.mxu0 %v121
    %1485 = vmatpush1.msra.mxu0 %v120
    %1486 = vmatprep.subr.mxu0 %v113
    %1487 = vmatpush1.msra.mxu0 %v112
    %1488 = vmatprep.subr.mxu0 %v105
    %1489 = vmatpush1.msra.mxu0 %v104
    %1490 = vmatprep.subr.mxu0 %v97
    %1491 = vmatpush1.msra.mxu0 %v96
    %1492 = vmatprep.subr.mxu0 %v89
    %1493 = vmatpush1.msra.mxu0 %v88
    %1494 = vmatprep.subr.mxu0 %v81
    %1495 = vmatpush1.msra.mxu0 %v80
    %1496 = vmatprep.subr.mxu0 %v329
    %1497 = vmatpush2.msra.mxu0 %v328
    %1498 = vmatprep.subr.mxu0 %v321
    %1499 = vmatpush2.msra.mxu0 %v320
    %1500 = vmatprep.subr.mxu0 %v313
    %1501 = vmatpush2.msra.mxu0 %v312
    %1502 = vmatprep.subr.mxu0 %v305
    %1503 = vmatpush2.msra.mxu0 %v304
    %1504 = vmatprep.subr.mxu0 %v297
    %1505 = vmatpush2.msra.mxu0 %v296
    %1506 = vmatprep.subr.mxu0 %v289
    %1507 = vmatpush2.msra.mxu0 %v288
    %1508 = vmatprep.subr.mxu0 %v281
    %1509 = vmatpush2.msra.mxu0 %v280
    %1510 = vmatprep.subr.mxu0 %v273
    %1511 = vmatpush2.msra.mxu0 %v272
    %1512 = vmatprep.subr.mxu0 %v265
    %1513 = vmatpush2.msra.mxu0 %v264
    %1514 = vmatprep.subr.mxu0 %v257
    %1515 = vmatpush2.msra.mxu0 %v256
    %1516 = vmatprep.subr.mxu0 %v249
    %1517 = vmatpush2.msra.mxu0 %v248
    %1518 = vmatprep.subr.mxu0 %v241
    %1519 = vmatpush2.msra.mxu0 %v240
    %1520 = vmatprep.subr.mxu0 %v233
    %1521 = vmatpush2.msra.mxu0 %v232
    %1522 = vmatprep.subr.mxu0 %v225
    %1523 = vmatpush2.msra.mxu0 %v224
    %1524 = vmatprep.subr.mxu0 %v217
    %1525 = vmatpush2.msra.mxu0 %v216
    %1526 = vmatprep.subr.mxu0 %v209
    %1527 = vmatpush2.msra.mxu0 %v208
    %1528 = vmatprep.mubr.f32.mxu0 %v1210
    %1529 = vmatmul.mubr.f32.gmra.mxu0 %v1209
    %v1530 = vpop.f32.mrf.mxu0
    %v1531 = vadd.f32 0.0, %v1530
    %v1532 = vpop.f32.mrf.mxu0
    %v1533 = vadd.f32 0.0, %v1532
    %1534 = vmatprep.mubr.f32.mxu0 %v1212
    %1535 = vmatmul.mubr.f32.gmra.mxu0 %v1211
    %v1536 = vpop.f32.mrf.mxu0
    %v1537 = vadd.f32 0.0, %v1536
    %v1538 = vpop.f32.mrf.mxu0
    %v1539 = vadd.f32 0.0, %v1538
    %1540 = vdwg.mxu0
    %v1541 = vadd.f32 %v1217, %v1300
    %v1542 = vadd.f32 %v1218, %v1302
    %v1543 = vadd.f32 %v1219, %v1377
    %v1544 = vadd.f32 %v1220, %v1379
    %v1545 = vadd.f32 %v1221, %v1454
    %v1546 = vadd.f32 %v1222, %v1456
    %v1547 = vadd.f32 %v1223, %v1531
    %v1548 = vadd.f32 %v1224, %v1533
    %v1549 = vadd.f32 %v1225, %v1306
    %v1550 = vadd.f32 %v1226, %v1308
    %v1551 = vadd.f32 %v1227, %v1383
    %v1552 = vadd.f32 %v1228, %v1385
    %v1553 = vadd.f32 %v1229, %v1460
    %v1554 = vadd.f32 %v1230, %v1462
    %v1555 = vadd.f32 %v1231, %v1537
    %v1556 = vadd.f32 %v1232, %v1539
    %v1557 = vxor.u32 %v1541, 2147483648
    %v1558 = vxor.u32 %v1542, 2147483648
    %v1559 = vxor.u32 %v1549, 2147483648
    %v1560 = vxor.u32 %v1550, 2147483648
    %v1561 = vmul.f32 %v1557, 1.442695
    %v1562 = vpow.pop %v1561
    %v1563 = vmul.f32 %v1558, 1.442695
    %v1564 = vpow.pop %v1563
    %v1565 = vmul.f32 %v1559, 1.442695
    %v1566 = vpow.pop %v1565
    %v1567 = vmul.f32 %v1560, 1.442695
    %v1568 = vpow.pop %v1567
    %v1569 = vadd.f32 %v1562, 1.0
    %v1570 = vadd.f32 %v1564, 1.0
    %v1571 = vadd.f32 %v1566, 1.0
    %v1572 = vadd.f32 %v1568, 1.0
    %v1573 = vrcp.pop %v1569
    %v1574 = vmul.f32 1.0, %v1573
    %v1575 = vrcp.pop %v1570
    %v1576 = vmul.f32 1.0, %v1575
    %v1577 = vrcp.pop %v1571
    %v1578 = vmul.f32 1.0, %v1577
    %v1579 = vrcp.pop %v1572
    %v1580 = vmul.f32 1.0, %v1579
    %v1581 = vxor.u32 %v1543, 2147483648
    %v1582 = vxor.u32 %v1544, 2147483648
    %v1583 = vxor.u32 %v1551, 2147483648
    %v1584 = vxor.u32 %v1552, 2147483648
    %v1585 = vmul.f32 %v1581, 1.442695
    %v1586 = vpow.pop %v1585
    %v1587 = vmul.f32 %v1582, 1.442695
    %v1588 = vpow.pop %v1587
    %v1589 = vmul.f32 %v1583, 1.442695
    %v1590 = vpow.pop %v1589
    %v1591 = vmul.f32 %v1584, 1.442695
    %v1592 = vpow.pop %v1591
    %v1593 = vadd.f32 %v1586, 1.0
    %v1594 = vadd.f32 %v1588, 1.0
    %v1595 = vadd.f32 %v1590, 1.0
    %v1596 = vadd.f32 %v1592, 1.0
    %v1597 = vrcp.pop %v1593
    %v1598 = vmul.f32 1.0, %v1597
    %v1599 = vrcp.pop %v1594
    %v1600 = vmul.f32 1.0, %v1599
    %v1601 = vrcp.pop %v1595
    %v1602 = vmul.f32 1.0, %v1601
    %v1603 = vrcp.pop %v1596
    %v1604 = vmul.f32 1.0, %v1603
    %v1605 = vtanh.pop %v1545
    %v1606 = vtanh.pop %v1546
    %v1607 = vtanh.pop %v1553
    %v1608 = vtanh.pop %v1554
    %v1609 = vxor.u32 %v1547, 2147483648
    %v1610 = vxor.u32 %v1548, 2147483648
    %v1611 = vxor.u32 %v1555, 2147483648
    %v1612 = vxor.u32 %v1556, 2147483648
    %v1613 = vmul.f32 %v1609, 1.442695
    %v1614 = vpow.pop %v1613
    %v1615 = vmul.f32 %v1610, 1.442695
    %v1616 = vpow.pop %v1615
    %v1617 = vmul.f32 %v1611, 1.442695
    %v1618 = vpow.pop %v1617
    %v1619 = vmul.f32 %v1612, 1.442695
    %v1620 = vpow.pop %v1619
    %v1621 = vadd.f32 %v1614, 1.0
    %v1622 = vadd.f32 %v1616, 1.0
    %v1623 = vadd.f32 %v1618, 1.0
    %v1624 = vadd.f32 %v1620, 1.0
    %v1625 = vrcp.pop %v1621
    %v1626 = vmul.f32 1.0, %v1625
    %v1627 = vrcp.pop %v1622
    %v1628 = vmul.f32 1.0, %v1627
    %v1629 = vrcp.pop %v1623
    %v1630 = vmul.f32 1.0, %v1629
    %v1631 = vrcp.pop %v1624
    %v1632 = vmul.f32 1.0, %v1631
    %v1633 = vmul.f32 %v1598, %v1213
    %v1634 = vmul.f32 %v1600, %v1214
    %v1635 = vmul.f32 %v1602, %v1215
    %v1636 = vmul.f32 %v1604, %v1216
    %v1637 = vmul.f32 %v1574, %v1605
    %v1638 = vmul.f32 %v1576, %v1606
    %v1639 = vmul.f32 %v1578, %v1607
    %v1640 = vmul.f32 %v1580, %v1608
    %v1641 = vadd.f32 %v1633, %v1637
    %v1642 = vadd.f32 %v1634, %v1638
    %v1643 = vadd.f32 %v1635, %v1639
    %v1644 = vadd.f32 %v1636, %v1640
    %v1645 = vtanh.pop %v1641
    %v1646 = vtanh.pop %v1642
    %v1647 = vtanh.pop %v1643
    %v1648 = vtanh.pop %v1644
    %v1649 = vmul.f32 %v1626, %v1645
    %v1650 = vmul.f32 %v1628, %v1646
    %v1651 = vmul.f32 %v1630, %v1647
    %v1652 = vmul.f32 %v1632, %v1648
    %1653 = vst [vmem:[%s4] sm:$0xff] %v1649
    %1654 = vst [vmem:[%s4 + $0x8] sm:$0xff] %v1650
    %1655 = vst [vmem:[%s4 + $0x10] sm:$0xff] %v1651
    %1656 = vst [vmem:[%s4 + $0x18] sm:$0xff] %v1652
    %s1657 = scalar_lea.vmem [#allocation4], 128
    %v1658 = vld [vmem:[%s1657] sm:$0xff]
    %v1659 = vld [vmem:[%s1657 + $0x8] sm:$0xff]
    %v1660 = vld [vmem:[%s1657 + $0x10] sm:$0xff]
    %v1661 = vld [vmem:[%s1657 + $0x18] sm:$0xff]
    %v1662 = vld [vmem:[%s1657 + $0x20] sm:$0xff]
    %v1663 = vld [vmem:[%s1657 + $0x28] sm:$0xff]
    %v1664 = vld [vmem:[%s1657 + $0x30] sm:$0xff]
    %v1665 = vld [vmem:[%s1657 + $0x38] sm:$0xff]
    %v1666 = vld [vmem:[%s1657 + $0x40] sm:$0xff]
    %v1667 = vld [vmem:[%s1657 + $0x48] sm:$0xff]
    %v1668 = vld [vmem:[%s1657 + $0x50] sm:$0xff]
    %v1669 = vld [vmem:[%s1657 + $0x58] sm:$0xff]
    %v1670 = vld [vmem:[%s1657 + $0x60] sm:$0xff]
    %v1671 = vld [vmem:[%s1657 + $0x68] sm:$0xff]
    %v1672 = vld [vmem:[%s1657 + $0x70] sm:$0xff]
    %v1673 = vld [vmem:[%s1657 + $0x78] sm:$0xff]
    %1674 = vmatprep.subr.mxu0 %v195
    %1675 = vmatpush1.msra.mxu0 %v194
    %1676 = vmatprep.subr.mxu0 %v187
    %1677 = vmatpush1.msra.mxu0 %v186
    %1678 = vmatprep.subr.mxu0 %v179
    %1679 = vmatpush1.msra.mxu0 %v178
    %1680 = vmatprep.subr.mxu0 %v171
    %1681 = vmatpush1.msra.mxu0 %v170
    %1682 = vmatprep.subr.mxu0 %v163
    %1683 = vmatpush1.msra.mxu0 %v162
    %1684 = vmatprep.subr.mxu0 %v155
    %1685 = vmatpush1.msra.mxu0 %v154
    %1686 = vmatprep.subr.mxu0 %v147
    %1687 = vmatpush1.msra.mxu0 %v146
    %1688 = vmatprep.subr.mxu0 %v139
    %1689 = vmatpush1.msra.mxu0 %v138
    %1690 = vmatprep.subr.mxu0 %v131
    %1691 = vmatpush1.msra.mxu0 %v130
    %1692 = vmatprep.subr.mxu0 %v123
    %1693 = vmatpush1.msra.mxu0 %v122
    %1694 = vmatprep.subr.mxu0 %v115
    %1695 = vmatpush1.msra.mxu0 %v114
    %1696 = vmatprep.subr.mxu0 %v107
    %1697 = vmatpush1.msra.mxu0 %v106
    %1698 = vmatprep.subr.mxu0 %v99
    %1699 = vmatpush1.msra.mxu0 %v98
    %1700 = vmatprep.subr.mxu0 %v91
    %1701 = vmatpush1.msra.mxu0 %v90
    %1702 = vmatprep.subr.mxu0 %v83
    %1703 = vmatpush1.msra.mxu0 %v82
    %1704 = vmatprep.subr.mxu0 %v75
    %1705 = vmatpush1.msra.mxu0 %v74
    %1706 = vmatprep.subr.mxu0 %v323
    %1707 = vmatpush2.msra.mxu0 %v322
    %1708 = vmatprep.subr.mxu0 %v315
    %1709 = vmatpush2.msra.mxu0 %v314
    %1710 = vmatprep.subr.mxu0 %v307
    %1711 = vmatpush2.msra.mxu0 %v306
    %1712 = vmatprep.subr.mxu0 %v299
    %1713 = vmatpush2.msra.mxu0 %v298
    %1714 = vmatprep.subr.mxu0 %v291
    %1715 = vmatpush2.msra.mxu0 %v290
    %1716 = vmatprep.subr.mxu0 %v283
    %1717 = vmatpush2.msra.mxu0 %v282
    %1718 = vmatprep.subr.mxu0 %v275
    %1719 = vmatpush2.msra.mxu0 %v274
    %1720 = vmatprep.subr.mxu0 %v267
    %1721 = vmatpush2.msra.mxu0 %v266
    %1722 = vmatprep.subr.mxu0 %v259
    %1723 = vmatpush2.msra.mxu0 %v258
    %1724 = vmatprep.subr.mxu0 %v251
    %1725 = vmatpush2.msra.mxu0 %v250
    %1726 = vmatprep.subr.mxu0 %v243
    %1727 = vmatpush2.msra.mxu0 %v242
    %1728 = vmatprep.subr.mxu0 %v235
    %1729 = vmatpush2.msra.mxu0 %v234
    %1730 = vmatprep.subr.mxu0 %v227
    %1731 = vmatpush2.msra.mxu0 %v226
    %1732 = vmatprep.subr.mxu0 %v219
    %1733 = vmatpush2.msra.mxu0 %v218
    %1734 = vmatprep.subr.mxu0 %v211
    %1735 = vmatpush2.msra.mxu0 %v210
    %1736 = vmatprep.subr.mxu0 %v203
    %1737 = vmatpush2.msra.mxu0 %v202
    %1738 = vmatprep.mubr.f32.mxu0 %v1650
    %1739 = vmatmul.mubr.f32.gmra.mxu0 %v1649
    %v1740 = vpop.f32.mrf.mxu0
    %v1741 = vadd.f32 0.0, %v1740
    %v1742 = vpop.f32.mrf.mxu0
    %v1743 = vadd.f32 0.0, %v1742
    %1744 = vmatprep.mubr.f32.mxu0 %v1652
    %1745 = vmatmul.mubr.f32.gmra.mxu0 %v1651
    %v1746 = vpop.f32.mrf.mxu0
    %v1747 = vadd.f32 0.0, %v1746
    %v1748 = vpop.f32.mrf.mxu0
    %v1749 = vadd.f32 0.0, %v1748
    %1750 = vdwg.mxu0
    %1751 = vmatprep.subr.mxu0 %v197
    %1752 = vmatpush1.msra.mxu0 %v196
    %1753 = vmatprep.subr.mxu0 %v189
    %1754 = vmatpush1.msra.mxu0 %v188
    %1755 = vmatprep.subr.mxu0 %v181
    %1756 = vmatpush1.msra.mxu0 %v180
    %1757 = vmatprep.subr.mxu0 %v173
    %1758 = vmatpush1.msra.mxu0 %v172
    %1759 = vmatprep.subr.mxu0 %v165
    %1760 = vmatpush1.msra.mxu0 %v164
    %1761 = vmatprep.subr.mxu0 %v157
    %1762 = vmatpush1.msra.mxu0 %v156
    %1763 = vmatprep.subr.mxu0 %v149
    %1764 = vmatpush1.msra.mxu0 %v148
    %1765 = vmatprep.subr.mxu0 %v141
    %1766 = vmatpush1.msra.mxu0 %v140
    %1767 = vmatprep.subr.mxu0 %v133
    %1768 = vmatpush1.msra.mxu0 %v132
    %1769 = vmatprep.subr.mxu0 %v125
    %1770 = vmatpush1.msra.mxu0 %v124
    %1771 = vmatprep.subr.mxu0 %v117
    %1772 = vmatpush1.msra.mxu0 %v116
    %1773 = vmatprep.subr.mxu0 %v109
    %1774 = vmatpush1.msra.mxu0 %v108
    %1775 = vmatprep.subr.mxu0 %v101
    %1776 = vmatpush1.msra.mxu0 %v100
    %1777 = vmatprep.subr.mxu0 %v93
    %1778 = vmatpush1.msra.mxu0 %v92
    %1779 = vmatprep.subr.mxu0 %v85
    %1780 = vmatpush1.msra.mxu0 %v84
    %1781 = vmatprep.subr.mxu0 %v77
    %1782 = vmatpush1.msra.mxu0 %v76
    %1783 = vmatprep.subr.mxu0 %v325
    %1784 = vmatpush2.msra.mxu0 %v324
    %1785 = vmatprep.subr.mxu0 %v317
    %1786 = vmatpush2.msra.mxu0 %v316
    %1787 = vmatprep.subr.mxu0 %v309
    %1788 = vmatpush2.msra.mxu0 %v308
    %1789 = vmatprep.subr.mxu0 %v301
    %1790 = vmatpush2.msra.mxu0 %v300
    %1791 = vmatprep.subr.mxu0 %v293
    %1792 = vmatpush2.msra.mxu0 %v292
    %1793 = vmatprep.subr.mxu0 %v285
    %1794 = vmatpush2.msra.mxu0 %v284
    %1795 = vmatprep.subr.mxu0 %v277
    %1796 = vmatpush2.msra.mxu0 %v276
    %1797 = vmatprep.subr.mxu0 %v269
    %1798 = vmatpush2.msra.mxu0 %v268
    %1799 = vmatprep.subr.mxu0 %v261
    %1800 = vmatpush2.msra.mxu0 %v260
    %1801 = vmatprep.subr.mxu0 %v253
    %1802 = vmatpush2.msra.mxu0 %v252
    %1803 = vmatprep.subr.mxu0 %v245
    %1804 = vmatpush2.msra.mxu0 %v244
    %1805 = vmatprep.subr.mxu0 %v237
    %1806 = vmatpush2.msra.mxu0 %v236
    %1807 = vmatprep.subr.mxu0 %v229
    %1808 = vmatpush2.msra.mxu0 %v228
    %1809 = vmatprep.subr.mxu0 %v221
    %1810 = vmatpush2.msra.mxu0 %v220
    %1811 = vmatprep.subr.mxu0 %v213
    %1812 = vmatpush2.msra.mxu0 %v212
    %1813 = vmatprep.subr.mxu0 %v205
    %1814 = vmatpush2.msra.mxu0 %v204
    %1815 = vmatprep.mubr.f32.mxu0 %v1650
    %1816 = vmatmul.mubr.f32.gmra.mxu0 %v1649
    %v1817 = vpop.f32.mrf.mxu0
    %v1818 = vadd.f32 0.0, %v1817
    %v1819 = vpop.f32.mrf.mxu0
    %v1820 = vadd.f32 0.0, %v1819
    %1821 = vmatprep.mubr.f32.mxu0 %v1652
    %1822 = vmatmul.mubr.f32.gmra.mxu0 %v1651
    %v1823 = vpop.f32.mrf.mxu0
    %v1824 = vadd.f32 0.0, %v1823
    %v1825 = vpop.f32.mrf.mxu0
    %v1826 = vadd.f32 0.0, %v1825
    %1827 = vdwg.mxu0
    %1828 = vmatprep.subr.mxu0 %v199
    %1829 = vmatpush1.msra.mxu0 %v198
    %1830 = vmatprep.subr.mxu0 %v191
    %1831 = vmatpush1.msra.mxu0 %v190
    %1832 = vmatprep.subr.mxu0 %v183
    %1833 = vmatpush1.msra.mxu0 %v182
    %1834 = vmatprep.subr.mxu0 %v175
    %1835 = vmatpush1.msra.mxu0 %v174
    %1836 = vmatprep.subr.mxu0 %v167
    %1837 = vmatpush1.msra.mxu0 %v166
    %1838 = vmatprep.subr.mxu0 %v159
    %1839 = vmatpush1.msra.mxu0 %v158
    %1840 = vmatprep.subr.mxu0 %v151
    %1841 = vmatpush1.msra.mxu0 %v150
    %1842 = vmatprep.subr.mxu0 %v143
    %1843 = vmatpush1.msra.mxu0 %v142
    %1844 = vmatprep.subr.mxu0 %v135
    %1845 = vmatpush1.msra.mxu0 %v134
    %1846 = vmatprep.subr.mxu0 %v127
    %1847 = vmatpush1.msra.mxu0 %v126
    %1848 = vmatprep.subr.mxu0 %v119
    %1849 = vmatpush1.msra.mxu0 %v118
    %1850 = vmatprep.subr.mxu0 %v111
    %1851 = vmatpush1.msra.mxu0 %v110
    %1852 = vmatprep.subr.mxu0 %v103
    %1853 = vmatpush1.msra.mxu0 %v102
    %1854 = vmatprep.subr.mxu0 %v95
    %1855 = vmatpush1.msra.mxu0 %v94
    %1856 = vmatprep.subr.mxu0 %v87
    %1857 = vmatpush1.msra.mxu0 %v86
    %1858 = vmatprep.subr.mxu0 %v79
    %1859 = vmatpush1.msra.mxu0 %v78
    %1860 = vmatprep.subr.mxu0 %v327
    %1861 = vmatpush2.msra.mxu0 %v326
    %1862 = vmatprep.subr.mxu0 %v319
    %1863 = vmatpush2.msra.mxu0 %v318
    %1864 = vmatprep.subr.mxu0 %v311
    %1865 = vmatpush2.msra.mxu0 %v310
    %1866 = vmatprep.subr.mxu0 %v303
    %1867 = vmatpush2.msra.mxu0 %v302
    %1868 = vmatprep.subr.mxu0 %v295
    %1869 = vmatpush2.msra.mxu0 %v294
    %1870 = vmatprep.subr.mxu0 %v287
    %1871 = vmatpush2.msra.mxu0 %v286
    %1872 = vmatprep.subr.mxu0 %v279
    %1873 = vmatpush2.msra.mxu0 %v278
    %1874 = vmatprep.subr.mxu0 %v271
    %1875 = vmatpush2.msra.mxu0 %v270
    %1876 = vmatprep.subr.mxu0 %v263
    %1877 = vmatpush2.msra.mxu0 %v262
    %1878 = vmatprep.subr.mxu0 %v255
    %1879 = vmatpush2.msra.mxu0 %v254
    %1880 = vmatprep.subr.mxu0 %v247
    %1881 = vmatpush2.msra.mxu0 %v246
    %1882 = vmatprep.subr.mxu0 %v239
    %1883 = vmatpush2.msra.mxu0 %v238
    %1884 = vmatprep.subr.mxu0 %v231
    %1885 = vmatpush2.msra.mxu0 %v230
    %1886 = vmatprep.subr.mxu0 %v223
    %1887 = vmatpush2.msra.mxu0 %v222
    %1888 = vmatprep.subr.mxu0 %v215
    %1889 = vmatpush2.msra.mxu0 %v214
    %1890 = vmatprep.subr.mxu0 %v207
    %1891 = vmatpush2.msra.mxu0 %v206
    %1892 = vmatprep.mubr.f32.mxu0 %v1650
    %1893 = vmatmul.mubr.f32.gmra.mxu0 %v1649
    %v1894 = vpop.f32.mrf.mxu0
    %v1895 = vadd.f32 0.0, %v1894
    %v1896 = vpop.f32.mrf.mxu0
    %v1897 = vadd.f32 0.0, %v1896
    %1898 = vmatprep.mubr.f32.mxu0 %v1652
    %1899 = vmatmul.mubr.f32.gmra.mxu0 %v1651
    %v1900 = vpop.f32.mrf.mxu0
    %v1901 = vadd.f32 0.0, %v1900
    %v1902 = vpop.f32.mrf.mxu0
    %v1903 = vadd.f32 0.0, %v1902
    %1904 = vdwg.mxu0
    %1905 = vmatprep.subr.mxu0 %v201
    %1906 = vmatpush1.msra.mxu0 %v200
    %1907 = vmatprep.subr.mxu0 %v193
    %1908 = vmatpush1.msra.mxu0 %v192
    %1909 = vmatprep.subr.mxu0 %v185
    %1910 = vmatpush1.msra.mxu0 %v184
    %1911 = vmatprep.subr.mxu0 %v177
    %1912 = vmatpush1.msra.mxu0 %v176
    %1913 = vmatprep.subr.mxu0 %v169
    %1914 = vmatpush1.msra.mxu0 %v168
    %1915 = vmatprep.subr.mxu0 %v161
    %1916 = vmatpush1.msra.mxu0 %v160
    %1917 = vmatprep.subr.mxu0 %v153
    %1918 = vmatpush1.msra.mxu0 %v152
    %1919 = vmatprep.subr.mxu0 %v145
    %1920 = vmatpush1.msra.mxu0 %v144
    %1921 = vmatprep.subr.mxu0 %v137
    %1922 = vmatpush1.msra.mxu0 %v136
    %1923 = vmatprep.subr.mxu0 %v129
    %1924 = vmatpush1.msra.mxu0 %v128
    %1925 = vmatprep.subr.mxu0 %v121
    %1926 = vmatpush1.msra.mxu0 %v120
    %1927 = vmatprep.subr.mxu0 %v113
    %1928 = vmatpush1.msra.mxu0 %v112
    %1929 = vmatprep.subr.mxu0 %v105
    %1930 = vmatpush1.msra.mxu0 %v104
    %1931 = vmatprep.subr.mxu0 %v97
    %1932 = vmatpush1.msra.mxu0 %v96
    %1933 = vmatprep.subr.mxu0 %v89
    %1934 = vmatpush1.msra.mxu0 %v88
    %1935 = vmatprep.subr.mxu0 %v81
    %1936 = vmatpush1.msra.mxu0 %v80
    %1937 = vmatprep.subr.mxu0 %v329
    %1938 = vmatpush2.msra.mxu0 %v328
    %1939 = vmatprep.subr.mxu0 %v321
    %1940 = vmatpush2.msra.mxu0 %v320
    %1941 = vmatprep.subr.mxu0 %v313
    %1942 = vmatpush2.msra.mxu0 %v312
    %1943 = vmatprep.subr.mxu0 %v305
    %1944 = vmatpush2.msra.mxu0 %v304
    %1945 = vmatprep.subr.mxu0 %v297
    %1946 = vmatpush2.msra.mxu0 %v296
    %1947 = vmatprep.subr.mxu0 %v289
    %1948 = vmatpush2.msra.mxu0 %v288
    %1949 = vmatprep.subr.mxu0 %v281
    %1950 = vmatpush2.msra.mxu0 %v280
    %1951 = vmatprep.subr.mxu0 %v273
    %1952 = vmatpush2.msra.mxu0 %v272
    %1953 = vmatprep.subr.mxu0 %v265
    %1954 = vmatpush2.msra.mxu0 %v264
    %1955 = vmatprep.subr.mxu0 %v257
    %1956 = vmatpush2.msra.mxu0 %v256
    %1957 = vmatprep.subr.mxu0 %v249
    %1958 = vmatpush2.msra.mxu0 %v248
    %1959 = vmatprep.subr.mxu0 %v241
    %1960 = vmatpush2.msra.mxu0 %v240
    %1961 = vmatprep.subr.mxu0 %v233
    %1962 = vmatpush2.msra.mxu0 %v232
    %1963 = vmatprep.subr.mxu0 %v225
    %1964 = vmatpush2.msra.mxu0 %v224
    %1965 = vmatprep.subr.mxu0 %v217
    %1966 = vmatpush2.msra.mxu0 %v216
    %1967 = vmatprep.subr.mxu0 %v209
    %1968 = vmatpush2.msra.mxu0 %v208
    %1969 = vmatprep.mubr.f32.mxu0 %v1650
    %1970 = vmatmul.mubr.f32.gmra.mxu0 %v1649
    %v1971 = vpop.f32.mrf.mxu0
    %v1972 = vadd.f32 0.0, %v1971
    %v1973 = vpop.f32.mrf.mxu0
    %v1974 = vadd.f32 0.0, %v1973
    %1975 = vmatprep.mubr.f32.mxu0 %v1652
    %1976 = vmatmul.mubr.f32.gmra.mxu0 %v1651
    %v1977 = vpop.f32.mrf.mxu0
    %v1978 = vadd.f32 0.0, %v1977
    %v1979 = vpop.f32.mrf.mxu0
    %v1980 = vadd.f32 0.0, %v1979
    %1981 = vdwg.mxu0
    %v1982 = vadd.f32 %v1658, %v1741
    %v1983 = vadd.f32 %v1659, %v1743
    %v1984 = vadd.f32 %v1660, %v1818
    %v1985 = vadd.f32 %v1661, %v1820
    %v1986 = vadd.f32 %v1662, %v1895
    %v1987 = vadd.f32 %v1663, %v1897
    %v1988 = vadd.f32 %v1664, %v1972
    %v1989 = vadd.f32 %v1665, %v1974
    %v1990 = vadd.f32 %v1666, %v1747
    %v1991 = vadd.f32 %v1667, %v1749
    %v1992 = vadd.f32 %v1668, %v1824
    %v1993 = vadd.f32 %v1669, %v1826
    %v1994 = vadd.f32 %v1670, %v1901
    %v1995 = vadd.f32 %v1671, %v1903
    %v1996 = vadd.f32 %v1672, %v1978
    %v1997 = vadd.f32 %v1673, %v1980
    %v1998 = vxor.u32 %v1982, 2147483648
    %v1999 = vxor.u32 %v1983, 2147483648
    %v2000 = vxor.u32 %v1990, 2147483648
    %v2001 = vxor.u32 %v1991, 2147483648
    %v2002 = vmul.f32 %v1998, 1.442695
    %v2003 = vpow.pop %v2002
    %v2004 = vmul.f32 %v1999, 1.442695
    %v2005 = vpow.pop %v2004
    %v2006 = vmul.f32 %v2000, 1.442695
    %v2007 = vpow.pop %v2006
    %v2008 = vmul.f32 %v2001, 1.442695
    %v2009 = vpow.pop %v2008
    %v2010 = vadd.f32 %v2003, 1.0
    %v2011 = vadd.f32 %v2005, 1.0
    %v2012 = vadd.f32 %v2007, 1.0
    %v2013 = vadd.f32 %v2009, 1.0
    %v2014 = vrcp.pop %v2010
    %v2015 = vmul.f32 1.0, %v2014
    %v2016 = vrcp.pop %v2011
    %v2017 = vmul.f32 1.0, %v2016
    %v2018 = vrcp.pop %v2012
    %v2019 = vmul.f32 1.0, %v2018
    %v2020 = vrcp.pop %v2013
    %v2021 = vmul.f32 1.0, %v2020
    %v2022 = vxor.u32 %v1984, 2147483648
    %v2023 = vxor.u32 %v1985, 2147483648
    %v2024 = vxor.u32 %v1992, 2147483648
    %v2025 = vxor.u32 %v1993, 2147483648
    %v2026 = vmul.f32 %v2022, 1.442695
    %v2027 = vpow.pop %v2026
    %v2028 = vmul.f32 %v2023, 1.442695
    %v2029 = vpow.pop %v2028
    %v2030 = vmul.f32 %v2024, 1.442695
    %v2031 = vpow.pop %v2030
    %v2032 = vmul.f32 %v2025, 1.442695
    %v2033 = vpow.pop %v2032
    %v2034 = vadd.f32 %v2027, 1.0
    %v2035 = vadd.f32 %v2029, 1.0
    %v2036 = vadd.f32 %v2031, 1.0
    %v2037 = vadd.f32 %v2033, 1.0
    %v2038 = vrcp.pop %v2034
    %v2039 = vmul.f32 1.0, %v2038
    %v2040 = vrcp.pop %v2035
    %v2041 = vmul.f32 1.0, %v2040
    %v2042 = vrcp.pop %v2036
    %v2043 = vmul.f32 1.0, %v2042
    %v2044 = vrcp.pop %v2037
    %v2045 = vmul.f32 1.0, %v2044
    %v2046 = vtanh.pop %v1986
    %v2047 = vtanh.pop %v1987
    %v2048 = vtanh.pop %v1994
    %v2049 = vtanh.pop %v1995
    %v2050 = vxor.u32 %v1988, 2147483648
    %v2051 = vxor.u32 %v1989, 2147483648
    %v2052 = vxor.u32 %v1996, 2147483648
    %v2053 = vxor.u32 %v1997, 2147483648
    %v2054 = vmul.f32 %v2050, 1.442695
    %v2055 = vpow.pop %v2054
    %v2056 = vmul.f32 %v2051, 1.442695
    %v2057 = vpow.pop %v2056
    %v2058 = vmul.f32 %v2052, 1.442695
    %v2059 = vpow.pop %v2058
    %v2060 = vmul.f32 %v2053, 1.442695
    %v2061 = vpow.pop %v2060
    %v2062 = vadd.f32 %v2055, 1.0
    %v2063 = vadd.f32 %v2057, 1.0
    %v2064 = vadd.f32 %v2059, 1.0
    %v2065 = vadd.f32 %v2061, 1.0
    %v2066 = vrcp.pop %v2062
    %v2067 = vmul.f32 1.0, %v2066
    %v2068 = vrcp.pop %v2063
    %v2069 = vmul.f32 1.0, %v2068
    %v2070 = vrcp.pop %v2064
    %v2071 = vmul.f32 1.0, %v2070
    %v2072 = vrcp.pop %v2065
    %v2073 = vmul.f32 1.0, %v2072
    %v2074 = vmul.f32 %v2039, %v1641
    %v2075 = vmul.f32 %v2041, %v1642
    %v2076 = vmul.f32 %v2043, %v1643
    %v2077 = vmul.f32 %v2045, %v1644
    %v2078 = vmul.f32 %v2015, %v2046
    %v2079 = vmul.f32 %v2017, %v2047
    %v2080 = vmul.f32 %v2019, %v2048
    %v2081 = vmul.f32 %v2021, %v2049
    %v2082 = vadd.f32 %v2074, %v2078
    %v2083 = vadd.f32 %v2075, %v2079
    %v2084 = vadd.f32 %v2076, %v2080
    %v2085 = vadd.f32 %v2077, %v2081
    %v2086 = vtanh.pop %v2082
    %v2087 = vtanh.pop %v2083
    %v2088 = vtanh.pop %v2084
    %v2089 = vtanh.pop %v2085
    %v2090 = vmul.f32 %v2067, %v2086
    %v2091 = vmul.f32 %v2069, %v2087
    %v2092 = vmul.f32 %v2071, %v2088
    %v2093 = vmul.f32 %v2073, %v2089
    %s2094 = scalar_lea.vmem %s4, 32
    %2095 = vst [vmem:[%s2094] sm:$0xff] %v2090
    %2096 = vst [vmem:[%s2094 + $0x8] sm:$0xff] %v2091
    %2097 = vst [vmem:[%s2094 + $0x10] sm:$0xff] %v2092
    %2098 = vst [vmem:[%s2094 + $0x18] sm:$0xff] %v2093
    %s2099 = scalar_lea.vmem [#allocation4], 256
    %v2100 = vld [vmem:[%s2099] sm:$0xff]
    %v2101 = vld [vmem:[%s2099 + $0x8] sm:$0xff]
    %v2102 = vld [vmem:[%s2099 + $0x10] sm:$0xff]
    %v2103 = vld [vmem:[%s2099 + $0x18] sm:$0xff]
    %v2104 = vld [vmem:[%s2099 + $0x20] sm:$0xff]
    %v2105 = vld [vmem:[%s2099 + $0x28] sm:$0xff]
    %v2106 = vld [vmem:[%s2099 + $0x30] sm:$0xff]
    %v2107 = vld [vmem:[%s2099 + $0x38] sm:$0xff]
    %v2108 = vld [vmem:[%s2099 + $0x40] sm:$0xff]
    %v2109 = vld [vmem:[%s2099 + $0x48] sm:$0xff]
    %v2110 = vld [vmem:[%s2099 + $0x50] sm:$0xff]
    %v2111 = vld [vmem:[%s2099 + $0x58] sm:$0xff]
    %v2112 = vld [vmem:[%s2099 + $0x60] sm:$0xff]
    %v2113 = vld [vmem:[%s2099 + $0x68] sm:$0xff]
    %v2114 = vld [vmem:[%s2099 + $0x70] sm:$0xff]
    %v2115 = vld [vmem:[%s2099 + $0x78] sm:$0xff]
    %2116 = vmatprep.subr.mxu0 %v195
    %2117 = vmatpush1.msra.mxu0 %v194
    %2118 = vmatprep.subr.mxu0 %v187
    %2119 = vmatpush1.msra.mxu0 %v186
    %2120 = vmatprep.subr.mxu0 %v179
    %2121 = vmatpush1.msra.mxu0 %v178
    %2122 = vmatprep.subr.mxu0 %v171
    %2123 = vmatpush1.msra.mxu0 %v170
    %2124 = vmatprep.subr.mxu0 %v163
    %2125 = vmatpush1.msra.mxu0 %v162
    %2126 = vmatprep.subr.mxu0 %v155
    %2127 = vmatpush1.msra.mxu0 %v154
    %2128 = vmatprep.subr.mxu0 %v147
    %2129 = vmatpush1.msra.mxu0 %v146
    %2130 = vmatprep.subr.mxu0 %v139
    %2131 = vmatpush1.msra.mxu0 %v138
    %2132 = vmatprep.subr.mxu0 %v131
    %2133 = vmatpush1.msra.mxu0 %v130
    %2134 = vmatprep.subr.mxu0 %v123
    %2135 = vmatpush1.msra.mxu0 %v122
    %2136 = vmatprep.subr.mxu0 %v115
    %2137 = vmatpush1.msra.mxu0 %v114
    %2138 = vmatprep.subr.mxu0 %v107
    %2139 = vmatpush1.msra.mxu0 %v106
    %2140 = vmatprep.subr.mxu0 %v99
    %2141 = vmatpush1.msra.mxu0 %v98
    %2142 = vmatprep.subr.mxu0 %v91
    %2143 = vmatpush1.msra.mxu0 %v90
    %2144 = vmatprep.subr.mxu0 %v83
    %2145 = vmatpush1.msra.mxu0 %v82
    %2146 = vmatprep.subr.mxu0 %v75
    %2147 = vmatpush1.msra.mxu0 %v74
    %2148 = vmatprep.subr.mxu0 %v323
    %2149 = vmatpush2.msra.mxu0 %v322
    %2150 = vmatprep.subr.mxu0 %v315
    %2151 = vmatpush2.msra.mxu0 %v314
    %2152 = vmatprep.subr.mxu0 %v307
    %2153 = vmatpush2.msra.mxu0 %v306
    %2154 = vmatprep.subr.mxu0 %v299
    %2155 = vmatpush2.msra.mxu0 %v298
    %2156 = vmatprep.subr.mxu0 %v291
    %2157 = vmatpush2.msra.mxu0 %v290
    %2158 = vmatprep.subr.mxu0 %v283
    %2159 = vmatpush2.msra.mxu0 %v282
    %2160 = vmatprep.subr.mxu0 %v275
    %2161 = vmatpush2.msra.mxu0 %v274
    %2162 = vmatprep.subr.mxu0 %v267
    %2163 = vmatpush2.msra.mxu0 %v266
    %2164 = vmatprep.subr.mxu0 %v259
    %2165 = vmatpush2.msra.mxu0 %v258
    %2166 = vmatprep.subr.mxu0 %v251
    %2167 = vmatpush2.msra.mxu0 %v250
    %2168 = vmatprep.subr.mxu0 %v243
    %2169 = vmatpush2.msra.mxu0 %v242
    %2170 = vmatprep.subr.mxu0 %v235
    %2171 = vmatpush2.msra.mxu0 %v234
    %2172 = vmatprep.subr.mxu0 %v227
    %2173 = vmatpush2.msra.mxu0 %v226
    %2174 = vmatprep.subr.mxu0 %v219
    %2175 = vmatpush2.msra.mxu0 %v218
    %2176 = vmatprep.subr.mxu0 %v211
    %2177 = vmatpush2.msra.mxu0 %v210
    %2178 = vmatprep.subr.mxu0 %v203
    %2179 = vmatpush2.msra.mxu0 %v202
    %2180 = vmatprep.mubr.f32.mxu0 %v2091
    %2181 = vmatmul.mubr.f32.gmra.mxu0 %v2090
    %v2182 = vpop.f32.mrf.mxu0
    %v2183 = vadd.f32 0.0, %v2182
    %v2184 = vpop.f32.mrf.mxu0
    %v2185 = vadd.f32 0.0, %v2184
    %2186 = vmatprep.mubr.f32.mxu0 %v2093
    %2187 = vmatmul.mubr.f32.gmra.mxu0 %v2092
    %v2188 = vpop.f32.mrf.mxu0
    %v2189 = vadd.f32 0.0, %v2188
    %v2190 = vpop.f32.mrf.mxu0
    %v2191 = vadd.f32 0.0, %v2190
    %2192 = vdwg.mxu0
    %2193 = vmatprep.subr.mxu0 %v197
    %2194 = vmatpush1.msra.mxu0 %v196
    %2195 = vmatprep.subr.mxu0 %v189
    %2196 = vmatpush1.msra.mxu0 %v188
    %2197 = vmatprep.subr.mxu0 %v181
    %2198 = vmatpush1.msra.mxu0 %v180
    %2199 = vmatprep.subr.mxu0 %v173
    %2200 = vmatpush1.msra.mxu0 %v172
    %2201 = vmatprep.subr.mxu0 %v165
    %2202 = vmatpush1.msra.mxu0 %v164
    %2203 = vmatprep.subr.mxu0 %v157
    %2204 = vmatpush1.msra.mxu0 %v156
    %2205 = vmatprep.subr.mxu0 %v149
    %2206 = vmatpush1.msra.mxu0 %v148
    %2207 = vmatprep.subr.mxu0 %v141
    %2208 = vmatpush1.msra.mxu0 %v140
    %2209 = vmatprep.subr.mxu0 %v133
    %2210 = vmatpush1.msra.mxu0 %v132
    %2211 = vmatprep.subr.mxu0 %v125
    %2212 = vmatpush1.msra.mxu0 %v124
    %2213 = vmatprep.subr.mxu0 %v117
    %2214 = vmatpush1.msra.mxu0 %v116
    %2215 = vmatprep.subr.mxu0 %v109
    %2216 = vmatpush1.msra.mxu0 %v108
    %2217 = vmatprep.subr.mxu0 %v101
    %2218 = vmatpush1.msra.mxu0 %v100
    %2219 = vmatprep.subr.mxu0 %v93
    %2220 = vmatpush1.msra.mxu0 %v92
    %2221 = vmatprep.subr.mxu0 %v85
    %2222 = vmatpush1.msra.mxu0 %v84
    %2223 = vmatprep.subr.mxu0 %v77
    %2224 = vmatpush1.msra.mxu0 %v76
    %2225 = vmatprep.subr.mxu0 %v325
    %2226 = vmatpush2.msra.mxu0 %v324
    %2227 = vmatprep.subr.mxu0 %v317
    %2228 = vmatpush2.msra.mxu0 %v316
    %2229 = vmatprep.subr.mxu0 %v309
    %2230 = vmatpush2.msra.mxu0 %v308
    %2231 = vmatprep.subr.mxu0 %v301
    %2232 = vmatpush2.msra.mxu0 %v300
    %2233 = vmatprep.subr.mxu0 %v293
    %2234 = vmatpush2.msra.mxu0 %v292
    %2235 = vmatprep.subr.mxu0 %v285
    %2236 = vmatpush2.msra.mxu0 %v284
    %2237 = vmatprep.subr.mxu0 %v277
    %2238 = vmatpush2.msra.mxu0 %v276
    %2239 = vmatprep.subr.mxu0 %v269
    %2240 = vmatpush2.msra.mxu0 %v268
    %2241 = vmatprep.subr.mxu0 %v261
    %2242 = vmatpush2.msra.mxu0 %v260
    %2243 = vmatprep.subr.mxu0 %v253
    %2244 = vmatpush2.msra.mxu0 %v252
    %2245 = vmatprep.subr.mxu0 %v245
    %2246 = vmatpush2.msra.mxu0 %v244
    %2247 = vmatprep.subr.mxu0 %v237
    %2248 = vmatpush2.msra.mxu0 %v236
    %2249 = vmatprep.subr.mxu0 %v229
    %2250 = vmatpush2.msra.mxu0 %v228
    %2251 = vmatprep.subr.mxu0 %v221
    %2252 = vmatpush2.msra.mxu0 %v220
    %2253 = vmatprep.subr.mxu0 %v213
    %2254 = vmatpush2.msra.mxu0 %v212
    %2255 = vmatprep.subr.mxu0 %v205
    %2256 = vmatpush2.msra.mxu0 %v204
    %2257 = vmatprep.mubr.f32.mxu0 %v2091
    %2258 = vmatmul.mubr.f32.gmra.mxu0 %v2090
    %v2259 = vpop.f32.mrf.mxu0
    %v2260 = vadd.f32 0.0, %v2259
    %v2261 = vpop.f32.mrf.mxu0
    %v2262 = vadd.f32 0.0, %v2261
    %2263 = vmatprep.mubr.f32.mxu0 %v2093
    %2264 = vmatmul.mubr.f32.gmra.mxu0 %v2092
    %v2265 = vpop.f32.mrf.mxu0
    %v2266 = vadd.f32 0.0, %v2265
    %v2267 = vpop.f32.mrf.mxu0
    %v2268 = vadd.f32 0.0, %v2267
    %2269 = vdwg.mxu0
    %2270 = vmatprep.subr.mxu0 %v199
    %2271 = vmatpush1.msra.mxu0 %v198
    %2272 = vmatprep.subr.mxu0 %v191
    %2273 = vmatpush1.msra.mxu0 %v190
    %2274 = vmatprep.subr.mxu0 %v183
    %2275 = vmatpush1.msra.mxu0 %v182
    %2276 = vmatprep.subr.mxu0 %v175
    %2277 = vmatpush1.msra.mxu0 %v174
    %2278 = vmatprep.subr.mxu0 %v167
    %2279 = vmatpush1.msra.mxu0 %v166
    %2280 = vmatprep.subr.mxu0 %v159
    %2281 = vmatpush1.msra.mxu0 %v158
    %2282 = vmatprep.subr.mxu0 %v151
    %2283 = vmatpush1.msra.mxu0 %v150
    %2284 = vmatprep.subr.mxu0 %v143
    %2285 = vmatpush1.msra.mxu0 %v142
    %2286 = vmatprep.subr.mxu0 %v135
    %2287 = vmatpush1.msra.mxu0 %v134
    %2288 = vmatprep.subr.mxu0 %v127
    %2289 = vmatpush1.msra.mxu0 %v126
    %2290 = vmatprep.subr.mxu0 %v119
    %2291 = vmatpush1.msra.mxu0 %v118
    %2292 = vmatprep.subr.mxu0 %v111
    %2293 = vmatpush1.msra.mxu0 %v110
    %2294 = vmatprep.subr.mxu0 %v103
    %2295 = vmatpush1.msra.mxu0 %v102
    %2296 = vmatprep.subr.mxu0 %v95
    %2297 = vmatpush1.msra.mxu0 %v94
    %2298 = vmatprep.subr.mxu0 %v87
    %2299 = vmatpush1.msra.mxu0 %v86
    %2300 = vmatprep.subr.mxu0 %v79
    %2301 = vmatpush1.msra.mxu0 %v78
    %2302 = vmatprep.subr.mxu0 %v327
    %2303 = vmatpush2.msra.mxu0 %v326
    %2304 = vmatprep.subr.mxu0 %v319
    %2305 = vmatpush2.msra.mxu0 %v318
    %2306 = vmatprep.subr.mxu0 %v311
    %2307 = vmatpush2.msra.mxu0 %v310
    %2308 = vmatprep.subr.mxu0 %v303
    %2309 = vmatpush2.msra.mxu0 %v302
    %2310 = vmatprep.subr.mxu0 %v295
    %2311 = vmatpush2.msra.mxu0 %v294
    %2312 = vmatprep.subr.mxu0 %v287
    %2313 = vmatpush2.msra.mxu0 %v286
    %2314 = vmatprep.subr.mxu0 %v279
    %2315 = vmatpush2.msra.mxu0 %v278
    %2316 = vmatprep.subr.mxu0 %v271
    %2317 = vmatpush2.msra.mxu0 %v270
    %2318 = vmatprep.subr.mxu0 %v263
    %2319 = vmatpush2.msra.mxu0 %v262
    %2320 = vmatprep.subr.mxu0 %v255
    %2321 = vmatpush2.msra.mxu0 %v254
    %2322 = vmatprep.subr.mxu0 %v247
    %2323 = vmatpush2.msra.mxu0 %v246
    %2324 = vmatprep.subr.mxu0 %v239
    %2325 = vmatpush2.msra.mxu0 %v238
    %2326 = vmatprep.subr.mxu0 %v231
    %2327 = vmatpush2.msra.mxu0 %v230
    %2328 = vmatprep.subr.mxu0 %v223
    %2329 = vmatpush2.msra.mxu0 %v222
    %2330 = vmatprep.subr.mxu0 %v215
    %2331 = vmatpush2.msra.mxu0 %v214
    %2332 = vmatprep.subr.mxu0 %v207
    %2333 = vmatpush2.msra.mxu0 %v206
    %2334 = vmatprep.mubr.f32.mxu0 %v2091
    %2335 = vmatmul.mubr.f32.gmra.mxu0 %v2090
    %v2336 = vpop.f32.mrf.mxu0
    %v2337 = vadd.f32 0.0, %v2336
    %v2338 = vpop.f32.mrf.mxu0
    %v2339 = vadd.f32 0.0, %v2338
    %2340 = vmatprep.mubr.f32.mxu0 %v2093
    %2341 = vmatmul.mubr.f32.gmra.mxu0 %v2092
    %v2342 = vpop.f32.mrf.mxu0
    %v2343 = vadd.f32 0.0, %v2342
    %v2344 = vpop.f32.mrf.mxu0
    %v2345 = vadd.f32 0.0, %v2344
    %2346 = vdwg.mxu0
    %2347 = vmatprep.subr.mxu0 %v201
    %2348 = vmatpush1.msra.mxu0 %v200
    %2349 = vmatprep.subr.mxu0 %v193
    %2350 = vmatpush1.msra.mxu0 %v192
    %2351 = vmatprep.subr.mxu0 %v185
    %2352 = vmatpush1.msra.mxu0 %v184
    %2353 = vmatprep.subr.mxu0 %v177
    %2354 = vmatpush1.msra.mxu0 %v176
    %2355 = vmatprep.subr.mxu0 %v169
    %2356 = vmatpush1.msra.mxu0 %v168
    %2357 = vmatprep.subr.mxu0 %v161
    %2358 = vmatpush1.msra.mxu0 %v160
    %2359 = vmatprep.subr.mxu0 %v153
    %2360 = vmatpush1.msra.mxu0 %v152
    %2361 = vmatprep.subr.mxu0 %v145
    %2362 = vmatpush1.msra.mxu0 %v144
    %2363 = vmatprep.subr.mxu0 %v137
    %2364 = vmatpush1.msra.mxu0 %v136
    %2365 = vmatprep.subr.mxu0 %v129
    %2366 = vmatpush1.msra.mxu0 %v128
    %2367 = vmatprep.subr.mxu0 %v121
    %2368 = vmatpush1.msra.mxu0 %v120
    %2369 = vmatprep.subr.mxu0 %v113
    %2370 = vmatpush1.msra.mxu0 %v112
    %2371 = vmatprep.subr.mxu0 %v105
    %2372 = vmatpush1.msra.mxu0 %v104
    %2373 = vmatprep.subr.mxu0 %v97
    %2374 = vmatpush1.msra.mxu0 %v96
    %2375 = vmatprep.subr.mxu0 %v89
    %2376 = vmatpush1.msra.mxu0 %v88
    %2377 = vmatprep.subr.mxu0 %v81
    %2378 = vmatpush1.msra.mxu0 %v80
    %2379 = vmatprep.subr.mxu0 %v329
    %2380 = vmatpush2.msra.mxu0 %v328
    %2381 = vmatprep.subr.mxu0 %v321
    %2382 = vmatpush2.msra.mxu0 %v320
    %2383 = vmatprep.subr.mxu0 %v313
    %2384 = vmatpush2.msra.mxu0 %v312
    %2385 = vmatprep.subr.mxu0 %v305
    %2386 = vmatpush2.msra.mxu0 %v304
    %2387 = vmatprep.subr.mxu0 %v297
    %2388 = vmatpush2.msra.mxu0 %v296
    %2389 = vmatprep.subr.mxu0 %v289
    %2390 = vmatpush2.msra.mxu0 %v288
    %2391 = vmatprep.subr.mxu0 %v281
    %2392 = vmatpush2.msra.mxu0 %v280
    %2393 = vmatprep.subr.mxu0 %v273
    %2394 = vmatpush2.msra.mxu0 %v272
    %2395 = vmatprep.subr.mxu0 %v265
    %2396 = vmatpush2.msra.mxu0 %v264
    %2397 = vmatprep.subr.mxu0 %v257
    %2398 = vmatpush2.msra.mxu0 %v256
    %2399 = vmatprep.subr.mxu0 %v249
    %2400 = vmatpush2.msra.mxu0 %v248
    %2401 = vmatprep.subr.mxu0 %v241
    %2402 = vmatpush2.msra.mxu0 %v240
    %2403 = vmatprep.subr.mxu0 %v233
    %2404 = vmatpush2.msra.mxu0 %v232
    %2405 = vmatprep.subr.mxu0 %v225
    %2406 = vmatpush2.msra.mxu0 %v224
    %2407 = vmatprep.subr.mxu0 %v217
    %2408 = vmatpush2.msra.mxu0 %v216
    %2409 = vmatprep.subr.mxu0 %v209
    %2410 = vmatpush2.msra.mxu0 %v208
    %2411 = vmatprep.mubr.f32.mxu0 %v2091
    %2412 = vmatmul.mubr.f32.gmra.mxu0 %v2090
    %v2413 = vpop.f32.mrf.mxu0
    %v2414 = vadd.f32 0.0, %v2413
    %v2415 = vpop.f32.mrf.mxu0
    %v2416 = vadd.f32 0.0, %v2415
    %2417 = vmatprep.mubr.f32.mxu0 %v2093
    %2418 = vmatmul.mubr.f32.gmra.mxu0 %v2092
    %v2419 = vpop.f32.mrf.mxu0
    %v2420 = vadd.f32 0.0, %v2419
    %v2421 = vpop.f32.mrf.mxu0
    %v2422 = vadd.f32 0.0, %v2421
    %2423 = vdwg.mxu0
    %v2424 = vadd.f32 %v2100, %v2183
    %v2425 = vadd.f32 %v2101, %v2185
    %v2426 = vadd.f32 %v2102, %v2260
    %v2427 = vadd.f32 %v2103, %v2262
    %v2428 = vadd.f32 %v2104, %v2337
    %v2429 = vadd.f32 %v2105, %v2339
    %v2430 = vadd.f32 %v2106, %v2414
    %v2431 = vadd.f32 %v2107, %v2416
    %v2432 = vadd.f32 %v2108, %v2189
    %v2433 = vadd.f32 %v2109, %v2191
    %v2434 = vadd.f32 %v2110, %v2266
    %v2435 = vadd.f32 %v2111, %v2268
    %v2436 = vadd.f32 %v2112, %v2343
    %v2437 = vadd.f32 %v2113, %v2345
    %v2438 = vadd.f32 %v2114, %v2420
    %v2439 = vadd.f32 %v2115, %v2422
    %v2440 = vxor.u32 %v2424, 2147483648
    %v2441 = vxor.u32 %v2425, 2147483648
    %v2442 = vxor.u32 %v2432, 2147483648
    %v2443 = vxor.u32 %v2433, 2147483648
    %v2444 = vmul.f32 %v2440, 1.442695
    %v2445 = vpow.pop %v2444
    %v2446 = vmul.f32 %v2441, 1.442695
    %v2447 = vpow.pop %v2446
    %v2448 = vmul.f32 %v2442, 1.442695
    %v2449 = vpow.pop %v2448
    %v2450 = vmul.f32 %v2443, 1.442695
    %v2451 = vpow.pop %v2450
    %v2452 = vadd.f32 %v2445, 1.0
    %v2453 = vadd.f32 %v2447, 1.0
    %v2454 = vadd.f32 %v2449, 1.0
    %v2455 = vadd.f32 %v2451, 1.0
    %v2456 = vrcp.pop %v2452
    %v2457 = vmul.f32 1.0, %v2456
    %v2458 = vrcp.pop %v2453
    %v2459 = vmul.f32 1.0, %v2458
    %v2460 = vrcp.pop %v2454
    %v2461 = vmul.f32 1.0, %v2460
    %v2462 = vrcp.pop %v2455
    %v2463 = vmul.f32 1.0, %v2462
    %v2464 = vxor.u32 %v2426, 2147483648
    %v2465 = vxor.u32 %v2427, 2147483648
    %v2466 = vxor.u32 %v2434, 2147483648
    %v2467 = vxor.u32 %v2435, 2147483648
    %v2468 = vmul.f32 %v2464, 1.442695
    %v2469 = vpow.pop %v2468
    %v2470 = vmul.f32 %v2465, 1.442695
    %v2471 = vpow.pop %v2470
    %v2472 = vmul.f32 %v2466, 1.442695
    %v2473 = vpow.pop %v2472
    %v2474 = vmul.f32 %v2467, 1.442695
    %v2475 = vpow.pop %v2474
    %v2476 = vadd.f32 %v2469, 1.0
    %v2477 = vadd.f32 %v2471, 1.0
    %v2478 = vadd.f32 %v2473, 1.0
    %v2479 = vadd.f32 %v2475, 1.0
    %v2480 = vrcp.pop %v2476
    %v2481 = vmul.f32 1.0, %v2480
    %v2482 = vrcp.pop %v2477
    %v2483 = vmul.f32 1.0, %v2482
    %v2484 = vrcp.pop %v2478
    %v2485 = vmul.f32 1.0, %v2484
    %v2486 = vrcp.pop %v2479
    %v2487 = vmul.f32 1.0, %v2486
    %v2488 = vtanh.pop %v2428
    %v2489 = vtanh.pop %v2429
    %v2490 = vtanh.pop %v2436
    %v2491 = vtanh.pop %v2437
    %v2492 = vxor.u32 %v2430, 2147483648
    %v2493 = vxor.u32 %v2431, 2147483648
    %v2494 = vxor.u32 %v2438, 2147483648
    %v2495 = vxor.u32 %v2439, 2147483648
    %v2496 = vmul.f32 %v2492, 1.442695
    %v2497 = vpow.pop %v2496
    %v2498 = vmul.f32 %v2493, 1.442695
    %v2499 = vpow.pop %v2498
    %v2500 = vmul.f32 %v2494, 1.442695
    %v2501 = vpow.pop %v2500
    %v2502 = vmul.f32 %v2495, 1.442695
    %v2503 = vpow.pop %v2502
    %v2504 = vadd.f32 %v2497, 1.0
    %v2505 = vadd.f32 %v2499, 1.0
    %v2506 = vadd.f32 %v2501, 1.0
    %v2507 = vadd.f32 %v2503, 1.0
    %v2508 = vrcp.pop %v2504
    %v2509 = vmul.f32 1.0, %v2508
    %v2510 = vrcp.pop %v2505
    %v2511 = vmul.f32 1.0, %v2510
    %v2512 = vrcp.pop %v2506
    %v2513 = vmul.f32 1.0, %v2512
    %v2514 = vrcp.pop %v2507
    %v2515 = vmul.f32 1.0, %v2514
    %v2516 = vmul.f32 %v2481, %v2082
    %v2517 = vmul.f32 %v2483, %v2083
    %v2518 = vmul.f32 %v2485, %v2084
    %v2519 = vmul.f32 %v2487, %v2085
    %v2520 = vmul.f32 %v2457, %v2488
    %v2521 = vmul.f32 %v2459, %v2489
    %v2522 = vmul.f32 %v2461, %v2490
    %v2523 = vmul.f32 %v2463, %v2491
    %v2524 = vadd.f32 %v2516, %v2520
    %v2525 = vadd.f32 %v2517, %v2521
    %v2526 = vadd.f32 %v2518, %v2522
    %v2527 = vadd.f32 %v2519, %v2523
    %v2528 = vtanh.pop %v2524
    %v2529 = vtanh.pop %v2525
    %v2530 = vtanh.pop %v2526
    %v2531 = vtanh.pop %v2527
    %v2532 = vmul.f32 %v2509, %v2528
    %v2533 = vmul.f32 %v2511, %v2529
    %v2534 = vmul.f32 %v2513, %v2530
    %v2535 = vmul.f32 %v2515, %v2531
    %s2536 = scalar_lea.vmem %s4, 64
    %2537 = vst [vmem:[%s2536] sm:$0xff] %v2532
    %2538 = vst [vmem:[%s2536 + $0x8] sm:$0xff] %v2533
    %2539 = vst [vmem:[%s2536 + $0x10] sm:$0xff] %v2534
    %2540 = vst [vmem:[%s2536 + $0x18] sm:$0xff] %v2535
    %s2541 = scalar_lea.vmem [#allocation4], 384
    %v2542 = vld [vmem:[%s2541] sm:$0xff]
    %v2543 = vld [vmem:[%s2541 + $0x8] sm:$0xff]
    %v2544 = vld [vmem:[%s2541 + $0x10] sm:$0xff]
    %v2545 = vld [vmem:[%s2541 + $0x18] sm:$0xff]
    %v2546 = vld [vmem:[%s2541 + $0x20] sm:$0xff]
    %v2547 = vld [vmem:[%s2541 + $0x28] sm:$0xff]
    %v2548 = vld [vmem:[%s2541 + $0x30] sm:$0xff]
    %v2549 = vld [vmem:[%s2541 + $0x38] sm:$0xff]
    %v2550 = vld [vmem:[%s2541 + $0x40] sm:$0xff]
    %v2551 = vld [vmem:[%s2541 + $0x48] sm:$0xff]
    %v2552 = vld [vmem:[%s2541 + $0x50] sm:$0xff]
    %v2553 = vld [vmem:[%s2541 + $0x58] sm:$0xff]
    %v2554 = vld [vmem:[%s2541 + $0x60] sm:$0xff]
    %v2555 = vld [vmem:[%s2541 + $0x68] sm:$0xff]
    %v2556 = vld [vmem:[%s2541 + $0x70] sm:$0xff]
    %v2557 = vld [vmem:[%s2541 + $0x78] sm:$0xff]
    %2558 = vmatprep.subr.mxu0 %v195
    %2559 = vmatpush1.msra.mxu0 %v194
    %2560 = vmatprep.subr.mxu0 %v187
    %2561 = vmatpush1.msra.mxu0 %v186
    %2562 = vmatprep.subr.mxu0 %v179
    %2563 = vmatpush1.msra.mxu0 %v178
    %2564 = vmatprep.subr.mxu0 %v171
    %2565 = vmatpush1.msra.mxu0 %v170
    %2566 = vmatprep.subr.mxu0 %v163
    %2567 = vmatpush1.msra.mxu0 %v162
    %2568 = vmatprep.subr.mxu0 %v155
    %2569 = vmatpush1.msra.mxu0 %v154
    %2570 = vmatprep.subr.mxu0 %v147
    %2571 = vmatpush1.msra.mxu0 %v146
    %2572 = vmatprep.subr.mxu0 %v139
    %2573 = vmatpush1.msra.mxu0 %v138
    %2574 = vmatprep.subr.mxu0 %v131
    %2575 = vmatpush1.msra.mxu0 %v130
    %2576 = vmatprep.subr.mxu0 %v123
    %2577 = vmatpush1.msra.mxu0 %v122
    %2578 = vmatprep.subr.mxu0 %v115
    %2579 = vmatpush1.msra.mxu0 %v114
    %2580 = vmatprep.subr.mxu0 %v107
    %2581 = vmatpush1.msra.mxu0 %v106
    %2582 = vmatprep.subr.mxu0 %v99
    %2583 = vmatpush1.msra.mxu0 %v98
    %2584 = vmatprep.subr.mxu0 %v91
    %2585 = vmatpush1.msra.mxu0 %v90
    %2586 = vmatprep.subr.mxu0 %v83
    %2587 = vmatpush1.msra.mxu0 %v82
    %2588 = vmatprep.subr.mxu0 %v75
    %2589 = vmatpush1.msra.mxu0 %v74
    %2590 = vmatprep.subr.mxu0 %v323
    %2591 = vmatpush2.msra.mxu0 %v322
    %2592 = vmatprep.subr.mxu0 %v315
    %2593 = vmatpush2.msra.mxu0 %v314
    %2594 = vmatprep.subr.mxu0 %v307
    %2595 = vmatpush2.msra.mxu0 %v306
    %2596 = vmatprep.subr.mxu0 %v299
    %2597 = vmatpush2.msra.mxu0 %v298
    %2598 = vmatprep.subr.mxu0 %v291
    %2599 = vmatpush2.msra.mxu0 %v290
    %2600 = vmatprep.subr.mxu0 %v283
    %2601 = vmatpush2.msra.mxu0 %v282
    %2602 = vmatprep.subr.mxu0 %v275
    %2603 = vmatpush2.msra.mxu0 %v274
    %2604 = vmatprep.subr.mxu0 %v267
    %2605 = vmatpush2.msra.mxu0 %v266
    %2606 = vmatprep.subr.mxu0 %v259
    %2607 = vmatpush2.msra.mxu0 %v258
    %2608 = vmatprep.subr.mxu0 %v251
    %2609 = vmatpush2.msra.mxu0 %v250
    %2610 = vmatprep.subr.mxu0 %v243
    %2611 = vmatpush2.msra.mxu0 %v242
    %2612 = vmatprep.subr.mxu0 %v235
    %2613 = vmatpush2.msra.mxu0 %v234
    %2614 = vmatprep.subr.mxu0 %v227
    %2615 = vmatpush2.msra.mxu0 %v226
    %2616 = vmatprep.subr.mxu0 %v219
    %2617 = vmatpush2.msra.mxu0 %v218
    %2618 = vmatprep.subr.mxu0 %v211
    %2619 = vmatpush2.msra.mxu0 %v210
    %2620 = vmatprep.subr.mxu0 %v203
    %2621 = vmatpush2.msra.mxu0 %v202
    %2622 = vmatprep.mubr.f32.mxu0 %v2533
    %2623 = vmatmul.mubr.f32.gmra.mxu0 %v2532
    %v2624 = vpop.f32.mrf.mxu0
    %v2625 = vadd.f32 0.0, %v2624
    %v2626 = vpop.f32.mrf.mxu0
    %v2627 = vadd.f32 0.0, %v2626
    %2628 = vmatprep.mubr.f32.mxu0 %v2535
    %2629 = vmatmul.mubr.f32.gmra.mxu0 %v2534
    %v2630 = vpop.f32.mrf.mxu0
    %v2631 = vadd.f32 0.0, %v2630
    %v2632 = vpop.f32.mrf.mxu0
    %v2633 = vadd.f32 0.0, %v2632
    %2634 = vdwg.mxu0
    %2635 = vmatprep.subr.mxu0 %v197
    %2636 = vmatpush1.msra.mxu0 %v196
    %2637 = vmatprep.subr.mxu0 %v189
    %2638 = vmatpush1.msra.mxu0 %v188
    %2639 = vmatprep.subr.mxu0 %v181
    %2640 = vmatpush1.msra.mxu0 %v180
    %2641 = vmatprep.subr.mxu0 %v173
    %2642 = vmatpush1.msra.mxu0 %v172
    %2643 = vmatprep.subr.mxu0 %v165
    %2644 = vmatpush1.msra.mxu0 %v164
    %2645 = vmatprep.subr.mxu0 %v157
    %2646 = vmatpush1.msra.mxu0 %v156
    %2647 = vmatprep.subr.mxu0 %v149
    %2648 = vmatpush1.msra.mxu0 %v148
    %2649 = vmatprep.subr.mxu0 %v141
    %2650 = vmatpush1.msra.mxu0 %v140
    %2651 = vmatprep.subr.mxu0 %v133
    %2652 = vmatpush1.msra.mxu0 %v132
    %2653 = vmatprep.subr.mxu0 %v125
    %2654 = vmatpush1.msra.mxu0 %v124
    %2655 = vmatprep.subr.mxu0 %v117
    %2656 = vmatpush1.msra.mxu0 %v116
    %2657 = vmatprep.subr.mxu0 %v109
    %2658 = vmatpush1.msra.mxu0 %v108
    %2659 = vmatprep.subr.mxu0 %v101
    %2660 = vmatpush1.msra.mxu0 %v100
    %2661 = vmatprep.subr.mxu0 %v93
    %2662 = vmatpush1.msra.mxu0 %v92
    %2663 = vmatprep.subr.mxu0 %v85
    %2664 = vmatpush1.msra.mxu0 %v84
    %2665 = vmatprep.subr.mxu0 %v77
    %2666 = vmatpush1.msra.mxu0 %v76
    %2667 = vmatprep.subr.mxu0 %v325
    %2668 = vmatpush2.msra.mxu0 %v324
    %2669 = vmatprep.subr.mxu0 %v317
    %2670 = vmatpush2.msra.mxu0 %v316
    %2671 = vmatprep.subr.mxu0 %v309
    %2672 = vmatpush2.msra.mxu0 %v308
    %2673 = vmatprep.subr.mxu0 %v301
    %2674 = vmatpush2.msra.mxu0 %v300
    %2675 = vmatprep.subr.mxu0 %v293
    %2676 = vmatpush2.msra.mxu0 %v292
    %2677 = vmatprep.subr.mxu0 %v285
    %2678 = vmatpush2.msra.mxu0 %v284
    %2679 = vmatprep.subr.mxu0 %v277
    %2680 = vmatpush2.msra.mxu0 %v276
    %2681 = vmatprep.subr.mxu0 %v269
    %2682 = vmatpush2.msra.mxu0 %v268
    %2683 = vmatprep.subr.mxu0 %v261
    %2684 = vmatpush2.msra.mxu0 %v260
    %2685 = vmatprep.subr.mxu0 %v253
    %2686 = vmatpush2.msra.mxu0 %v252
    %2687 = vmatprep.subr.mxu0 %v245
    %2688 = vmatpush2.msra.mxu0 %v244
    %2689 = vmatprep.subr.mxu0 %v237
    %2690 = vmatpush2.msra.mxu0 %v236
    %2691 = vmatprep.subr.mxu0 %v229
    %2692 = vmatpush2.msra.mxu0 %v228
    %2693 = vmatprep.subr.mxu0 %v221
    %2694 = vmatpush2.msra.mxu0 %v220
    %2695 = vmatprep.subr.mxu0 %v213
    %2696 = vmatpush2.msra.mxu0 %v212
    %2697 = vmatprep.subr.mxu0 %v205
    %2698 = vmatpush2.msra.mxu0 %v204
    %2699 = vmatprep.mubr.f32.mxu0 %v2533
    %2700 = vmatmul.mubr.f32.gmra.mxu0 %v2532
    %v2701 = vpop.f32.mrf.mxu0
    %v2702 = vadd.f32 0.0, %v2701
    %v2703 = vpop.f32.mrf.mxu0
    %v2704 = vadd.f32 0.0, %v2703
    %2705 = vmatprep.mubr.f32.mxu0 %v2535
    %2706 = vmatmul.mubr.f32.gmra.mxu0 %v2534
    %v2707 = vpop.f32.mrf.mxu0
    %v2708 = vadd.f32 0.0, %v2707
    %v2709 = vpop.f32.mrf.mxu0
    %v2710 = vadd.f32 0.0, %v2709
    %2711 = vdwg.mxu0
    %2712 = vmatprep.subr.mxu0 %v199
    %2713 = vmatpush1.msra.mxu0 %v198
    %2714 = vmatprep.subr.mxu0 %v191
    %2715 = vmatpush1.msra.mxu0 %v190
    %2716 = vmatprep.subr.mxu0 %v183
    %2717 = vmatpush1.msra.mxu0 %v182
    %2718 = vmatprep.subr.mxu0 %v175
    %2719 = vmatpush1.msra.mxu0 %v174
    %2720 = vmatprep.subr.mxu0 %v167
    %2721 = vmatpush1.msra.mxu0 %v166
    %2722 = vmatprep.subr.mxu0 %v159
    %2723 = vmatpush1.msra.mxu0 %v158
    %2724 = vmatprep.subr.mxu0 %v151
    %2725 = vmatpush1.msra.mxu0 %v150
    %2726 = vmatprep.subr.mxu0 %v143
    %2727 = vmatpush1.msra.mxu0 %v142
    %2728 = vmatprep.subr.mxu0 %v135
    %2729 = vmatpush1.msra.mxu0 %v134
    %2730 = vmatprep.subr.mxu0 %v127
    %2731 = vmatpush1.msra.mxu0 %v126
    %2732 = vmatprep.subr.mxu0 %v119
    %2733 = vmatpush1.msra.mxu0 %v118
    %2734 = vmatprep.subr.mxu0 %v111
    %2735 = vmatpush1.msra.mxu0 %v110
    %2736 = vmatprep.subr.mxu0 %v103
    %2737 = vmatpush1.msra.mxu0 %v102
    %2738 = vmatprep.subr.mxu0 %v95
    %2739 = vmatpush1.msra.mxu0 %v94
    %2740 = vmatprep.subr.mxu0 %v87
    %2741 = vmatpush1.msra.mxu0 %v86
    %2742 = vmatprep.subr.mxu0 %v79
    %2743 = vmatpush1.msra.mxu0 %v78
    %2744 = vmatprep.subr.mxu0 %v327
    %2745 = vmatpush2.msra.mxu0 %v326
    %2746 = vmatprep.subr.mxu0 %v319
    %2747 = vmatpush2.msra.mxu0 %v318
    %2748 = vmatprep.subr.mxu0 %v311
    %2749 = vmatpush2.msra.mxu0 %v310
    %2750 = vmatprep.subr.mxu0 %v303
    %2751 = vmatpush2.msra.mxu0 %v302
    %2752 = vmatprep.subr.mxu0 %v295
    %2753 = vmatpush2.msra.mxu0 %v294
    %2754 = vmatprep.subr.mxu0 %v287
    %2755 = vmatpush2.msra.mxu0 %v286
    %2756 = vmatprep.subr.mxu0 %v279
    %2757 = vmatpush2.msra.mxu0 %v278
    %2758 = vmatprep.subr.mxu0 %v271
    %2759 = vmatpush2.msra.mxu0 %v270
    %2760 = vmatprep.subr.mxu0 %v263
    %2761 = vmatpush2.msra.mxu0 %v262
    %2762 = vmatprep.subr.mxu0 %v255
    %2763 = vmatpush2.msra.mxu0 %v254
    %2764 = vmatprep.subr.mxu0 %v247
    %2765 = vmatpush2.msra.mxu0 %v246
    %2766 = vmatprep.subr.mxu0 %v239
    %2767 = vmatpush2.msra.mxu0 %v238
    %2768 = vmatprep.subr.mxu0 %v231
    %2769 = vmatpush2.msra.mxu0 %v230
    %2770 = vmatprep.subr.mxu0 %v223
    %2771 = vmatpush2.msra.mxu0 %v222
    %2772 = vmatprep.subr.mxu0 %v215
    %2773 = vmatpush2.msra.mxu0 %v214
    %2774 = vmatprep.subr.mxu0 %v207
    %2775 = vmatpush2.msra.mxu0 %v206
    %2776 = vmatprep.mubr.f32.mxu0 %v2533
    %2777 = vmatmul.mubr.f32.gmra.mxu0 %v2532
    %v2778 = vpop.f32.mrf.mxu0
    %v2779 = vadd.f32 0.0, %v2778
    %v2780 = vpop.f32.mrf.mxu0
    %v2781 = vadd.f32 0.0, %v2780
    %2782 = vmatprep.mubr.f32.mxu0 %v2535
    %2783 = vmatmul.mubr.f32.gmra.mxu0 %v2534
    %v2784 = vpop.f32.mrf.mxu0
    %v2785 = vadd.f32 0.0, %v2784
    %v2786 = vpop.f32.mrf.mxu0
    %v2787 = vadd.f32 0.0, %v2786
    %2788 = vdwg.mxu0
    %2789 = vmatprep.subr.mxu0 %v201
    %2790 = vmatpush1.msra.mxu0 %v200
    %2791 = vmatprep.subr.mxu0 %v193
    %2792 = vmatpush1.msra.mxu0 %v192
    %2793 = vmatprep.subr.mxu0 %v185
    %2794 = vmatpush1.msra.mxu0 %v184
    %2795 = vmatprep.subr.mxu0 %v177
    %2796 = vmatpush1.msra.mxu0 %v176
    %2797 = vmatprep.subr.mxu0 %v169
    %2798 = vmatpush1.msra.mxu0 %v168
    %2799 = vmatprep.subr.mxu0 %v161
    %2800 = vmatpush1.msra.mxu0 %v160
    %2801 = vmatprep.subr.mxu0 %v153
    %2802 = vmatpush1.msra.mxu0 %v152
    %2803 = vmatprep.subr.mxu0 %v145
    %2804 = vmatpush1.msra.mxu0 %v144
    %2805 = vmatprep.subr.mxu0 %v137
    %2806 = vmatpush1.msra.mxu0 %v136
    %2807 = vmatprep.subr.mxu0 %v129
    %2808 = vmatpush1.msra.mxu0 %v128
    %2809 = vmatprep.subr.mxu0 %v121
    %2810 = vmatpush1.msra.mxu0 %v120
    %2811 = vmatprep.subr.mxu0 %v113
    %2812 = vmatpush1.msra.mxu0 %v112
    %2813 = vmatprep.subr.mxu0 %v105
    %2814 = vmatpush1.msra.mxu0 %v104
    %2815 = vmatprep.subr.mxu0 %v97
    %2816 = vmatpush1.msra.mxu0 %v96
    %2817 = vmatprep.subr.mxu0 %v89
    %2818 = vmatpush1.msra.mxu0 %v88
    %2819 = vmatprep.subr.mxu0 %v81
    %2820 = vmatpush1.msra.mxu0 %v80
    %2821 = vmatprep.subr.mxu0 %v329
    %2822 = vmatpush2.msra.mxu0 %v328
    %2823 = vmatprep.subr.mxu0 %v321
    %2824 = vmatpush2.msra.mxu0 %v320
    %2825 = vmatprep.subr.mxu0 %v313
    %2826 = vmatpush2.msra.mxu0 %v312
    %2827 = vmatprep.subr.mxu0 %v305
    %2828 = vmatpush2.msra.mxu0 %v304
    %2829 = vmatprep.subr.mxu0 %v297
    %2830 = vmatpush2.msra.mxu0 %v296
    %2831 = vmatprep.subr.mxu0 %v289
    %2832 = vmatpush2.msra.mxu0 %v288
    %2833 = vmatprep.subr.mxu0 %v281
    %2834 = vmatpush2.msra.mxu0 %v280
    %2835 = vmatprep.subr.mxu0 %v273
    %2836 = vmatpush2.msra.mxu0 %v272
    %2837 = vmatprep.subr.mxu0 %v265
    %2838 = vmatpush2.msra.mxu0 %v264
    %2839 = vmatprep.subr.mxu0 %v257
    %2840 = vmatpush2.msra.mxu0 %v256
    %2841 = vmatprep.subr.mxu0 %v249
    %2842 = vmatpush2.msra.mxu0 %v248
    %2843 = vmatprep.subr.mxu0 %v241
    %2844 = vmatpush2.msra.mxu0 %v240
    %2845 = vmatprep.subr.mxu0 %v233
    %2846 = vmatpush2.msra.mxu0 %v232
    %2847 = vmatprep.subr.mxu0 %v225
    %2848 = vmatpush2.msra.mxu0 %v224
    %2849 = vmatprep.subr.mxu0 %v217
    %2850 = vmatpush2.msra.mxu0 %v216
    %2851 = vmatprep.subr.mxu0 %v209
    %2852 = vmatpush2.msra.mxu0 %v208
    %2853 = vmatprep.mubr.f32.mxu0 %v2533
    %2854 = vmatmul.mubr.f32.gmra.mxu0 %v2532
    %v2855 = vpop.f32.mrf.mxu0
    %v2856 = vadd.f32 0.0, %v2855
    %v2857 = vpop.f32.mrf.mxu0
    %v2858 = vadd.f32 0.0, %v2857
    %2859 = vmatprep.mubr.f32.mxu0 %v2535
    %2860 = vmatmul.mubr.f32.gmra.mxu0 %v2534
    %v2861 = vpop.f32.mrf.mxu0
    %v2862 = vadd.f32 0.0, %v2861
    %v2863 = vpop.f32.mrf.mxu0
    %v2864 = vadd.f32 0.0, %v2863
    %2865 = vdwg.mxu0
    %v2866 = vadd.f32 %v2542, %v2625
    %v2867 = vadd.f32 %v2543, %v2627
    %v2868 = vadd.f32 %v2544, %v2702
    %v2869 = vadd.f32 %v2545, %v2704
    %v2870 = vadd.f32 %v2546, %v2779
    %v2871 = vadd.f32 %v2547, %v2781
    %v2872 = vadd.f32 %v2548, %v2856
    %v2873 = vadd.f32 %v2549, %v2858
    %v2874 = vadd.f32 %v2550, %v2631
    %v2875 = vadd.f32 %v2551, %v2633
    %v2876 = vadd.f32 %v2552, %v2708
    %v2877 = vadd.f32 %v2553, %v2710
    %v2878 = vadd.f32 %v2554, %v2785
    %v2879 = vadd.f32 %v2555, %v2787
    %v2880 = vadd.f32 %v2556, %v2862
    %v2881 = vadd.f32 %v2557, %v2864
    %v2882 = vxor.u32 %v2866, 2147483648
    %v2883 = vxor.u32 %v2867, 2147483648
    %v2884 = vxor.u32 %v2874, 2147483648
    %v2885 = vxor.u32 %v2875, 2147483648
    %v2886 = vmul.f32 %v2882, 1.442695
    %v2887 = vpow.pop %v2886
    %v2888 = vmul.f32 %v2883, 1.442695
    %v2889 = vpow.pop %v2888
    %v2890 = vmul.f32 %v2884, 1.442695
    %v2891 = vpow.pop %v2890
    %v2892 = vmul.f32 %v2885, 1.442695
    %v2893 = vpow.pop %v2892
    %v2894 = vadd.f32 %v2887, 1.0
    %v2895 = vadd.f32 %v2889, 1.0
    %v2896 = vadd.f32 %v2891, 1.0
    %v2897 = vadd.f32 %v2893, 1.0
    %v2898 = vrcp.pop %v2894
    %v2899 = vmul.f32 1.0, %v2898
    %v2900 = vrcp.pop %v2895
    %v2901 = vmul.f32 1.0, %v2900
    %v2902 = vrcp.pop %v2896
    %v2903 = vmul.f32 1.0, %v2902
    %v2904 = vrcp.pop %v2897
    %v2905 = vmul.f32 1.0, %v2904
    %v2906 = vxor.u32 %v2868, 2147483648
    %v2907 = vxor.u32 %v2869, 2147483648
    %v2908 = vxor.u32 %v2876, 2147483648
    %v2909 = vxor.u32 %v2877, 2147483648
    %v2910 = vmul.f32 %v2906, 1.442695
    %v2911 = vpow.pop %v2910
    %v2912 = vmul.f32 %v2907, 1.442695
    %v2913 = vpow.pop %v2912
    %v2914 = vmul.f32 %v2908, 1.442695
    %v2915 = vpow.pop %v2914
    %v2916 = vmul.f32 %v2909, 1.442695
    %v2917 = vpow.pop %v2916
    %v2918 = vadd.f32 %v2911, 1.0
    %v2919 = vadd.f32 %v2913, 1.0
    %v2920 = vadd.f32 %v2915, 1.0
    %v2921 = vadd.f32 %v2917, 1.0
    %v2922 = vrcp.pop %v2918
    %v2923 = vmul.f32 1.0, %v2922
    %v2924 = vrcp.pop %v2919
    %v2925 = vmul.f32 1.0, %v2924
    %v2926 = vrcp.pop %v2920
    %v2927 = vmul.f32 1.0, %v2926
    %v2928 = vrcp.pop %v2921
    %v2929 = vmul.f32 1.0, %v2928
    %v2930 = vtanh.pop %v2870
    %v2931 = vtanh.pop %v2871
    %v2932 = vtanh.pop %v2878
    %v2933 = vtanh.pop %v2879
    %v2934 = vxor.u32 %v2872, 2147483648
    %v2935 = vxor.u32 %v2873, 2147483648
    %v2936 = vxor.u32 %v2880, 2147483648
    %v2937 = vxor.u32 %v2881, 2147483648
    %v2938 = vmul.f32 %v2934, 1.442695
    %v2939 = vpow.pop %v2938
    %v2940 = vmul.f32 %v2935, 1.442695
    %v2941 = vpow.pop %v2940
    %v2942 = vmul.f32 %v2936, 1.442695
    %v2943 = vpow.pop %v2942
    %v2944 = vmul.f32 %v2937, 1.442695
    %v2945 = vpow.pop %v2944
    %v2946 = vadd.f32 %v2939, 1.0
    %v2947 = vadd.f32 %v2941, 1.0
    %v2948 = vadd.f32 %v2943, 1.0
    %v2949 = vadd.f32 %v2945, 1.0
    %v2950 = vrcp.pop %v2946
    %v2951 = vmul.f32 1.0, %v2950
    %v2952 = vrcp.pop %v2947
    %v2953 = vmul.f32 1.0, %v2952
    %v2954 = vrcp.pop %v2948
    %v2955 = vmul.f32 1.0, %v2954
    %v2956 = vrcp.pop %v2949
    %v2957 = vmul.f32 1.0, %v2956
    %v2958 = vmul.f32 %v2923, %v2524
    %v2959 = vmul.f32 %v2925, %v2525
    %v2960 = vmul.f32 %v2927, %v2526
    %v2961 = vmul.f32 %v2929, %v2527
    %v2962 = vmul.f32 %v2899, %v2930
    %v2963 = vmul.f32 %v2901, %v2931
    %v2964 = vmul.f32 %v2903, %v2932
    %v2965 = vmul.f32 %v2905, %v2933
    %v2966 = vadd.f32 %v2958, %v2962
    %v2967 = vadd.f32 %v2959, %v2963
    %v2968 = vadd.f32 %v2960, %v2964
    %v2969 = vadd.f32 %v2961, %v2965
    %v2970 = vtanh.pop %v2966
    %v2971 = vtanh.pop %v2967
    %v2972 = vtanh.pop %v2968
    %v2973 = vtanh.pop %v2969
    %v2974 = vmul.f32 %v2951, %v2970
    %v2975 = vmul.f32 %v2953, %v2971
    %v2976 = vmul.f32 %v2955, %v2972
    %v2977 = vmul.f32 %v2957, %v2973
    %s2978 = scalar_lea.vmem %s4, 96
    %2979 = vst [vmem:[%s2978] sm:$0xff] %v2974
    %2980 = vst [vmem:[%s2978 + $0x8] sm:$0xff] %v2975
    %2981 = vst [vmem:[%s2978 + $0x10] sm:$0xff] %v2976
    %2982 = vst [vmem:[%s2978 + $0x18] sm:$0xff] %v2977
    %s2983 = scalar_lea.vmem [#allocation4], 512
    %v2984 = vld [vmem:[%s2983] sm:$0xff]
    %v2985 = vld [vmem:[%s2983 + $0x8] sm:$0xff]
    %v2986 = vld [vmem:[%s2983 + $0x10] sm:$0xff]
    %v2987 = vld [vmem:[%s2983 + $0x18] sm:$0xff]
    %v2988 = vld [vmem:[%s2983 + $0x20] sm:$0xff]
    %v2989 = vld [vmem:[%s2983 + $0x28] sm:$0xff]
    %v2990 = vld [vmem:[%s2983 + $0x30] sm:$0xff]
    %v2991 = vld [vmem:[%s2983 + $0x38] sm:$0xff]
    %v2992 = vld [vmem:[%s2983 + $0x40] sm:$0xff]
    %v2993 = vld [vmem:[%s2983 + $0x48] sm:$0xff]
    %v2994 = vld [vmem:[%s2983 + $0x50] sm:$0xff]
    %v2995 = vld [vmem:[%s2983 + $0x58] sm:$0xff]
    %v2996 = vld [vmem:[%s2983 + $0x60] sm:$0xff]
    %v2997 = vld [vmem:[%s2983 + $0x68] sm:$0xff]
    %v2998 = vld [vmem:[%s2983 + $0x70] sm:$0xff]
    %v2999 = vld [vmem:[%s2983 + $0x78] sm:$0xff]
    %3000 = vmatprep.subr.mxu0 %v195
    %3001 = vmatpush1.msra.mxu0 %v194
    %3002 = vmatprep.subr.mxu0 %v187
    %3003 = vmatpush1.msra.mxu0 %v186
    %3004 = vmatprep.subr.mxu0 %v179
    %3005 = vmatpush1.msra.mxu0 %v178
    %3006 = vmatprep.subr.mxu0 %v171
    %3007 = vmatpush1.msra.mxu0 %v170
    %3008 = vmatprep.subr.mxu0 %v163
    %3009 = vmatpush1.msra.mxu0 %v162
    %3010 = vmatprep.subr.mxu0 %v155
    %3011 = vmatpush1.msra.mxu0 %v154
    %3012 = vmatprep.subr.mxu0 %v147
    %3013 = vmatpush1.msra.mxu0 %v146
    %3014 = vmatprep.subr.mxu0 %v139
    %3015 = vmatpush1.msra.mxu0 %v138
    %3016 = vmatprep.subr.mxu0 %v131
    %3017 = vmatpush1.msra.mxu0 %v130
    %3018 = vmatprep.subr.mxu0 %v123
    %3019 = vmatpush1.msra.mxu0 %v122
    %3020 = vmatprep.subr.mxu0 %v115
    %3021 = vmatpush1.msra.mxu0 %v114
    %3022 = vmatprep.subr.mxu0 %v107
    %3023 = vmatpush1.msra.mxu0 %v106
    %3024 = vmatprep.subr.mxu0 %v99
    %3025 = vmatpush1.msra.mxu0 %v98
    %3026 = vmatprep.subr.mxu0 %v91
    %3027 = vmatpush1.msra.mxu0 %v90
    %3028 = vmatprep.subr.mxu0 %v83
    %3029 = vmatpush1.msra.mxu0 %v82
    %3030 = vmatprep.subr.mxu0 %v75
    %3031 = vmatpush1.msra.mxu0 %v74
    %3032 = vmatprep.subr.mxu0 %v323
    %3033 = vmatpush2.msra.mxu0 %v322
    %3034 = vmatprep.subr.mxu0 %v315
    %3035 = vmatpush2.msra.mxu0 %v314
    %3036 = vmatprep.subr.mxu0 %v307
    %3037 = vmatpush2.msra.mxu0 %v306
    %3038 = vmatprep.subr.mxu0 %v299
    %3039 = vmatpush2.msra.mxu0 %v298
    %3040 = vmatprep.subr.mxu0 %v291
    %3041 = vmatpush2.msra.mxu0 %v290
    %3042 = vmatprep.subr.mxu0 %v283
    %3043 = vmatpush2.msra.mxu0 %v282
    %3044 = vmatprep.subr.mxu0 %v275
    %3045 = vmatpush2.msra.mxu0 %v274
    %3046 = vmatprep.subr.mxu0 %v267
    %3047 = vmatpush2.msra.mxu0 %v266
    %3048 = vmatprep.subr.mxu0 %v259
    %3049 = vmatpush2.msra.mxu0 %v258
    %3050 = vmatprep.subr.mxu0 %v251
    %3051 = vmatpush2.msra.mxu0 %v250
    %3052 = vmatprep.subr.mxu0 %v243
    %3053 = vmatpush2.msra.mxu0 %v242
    %3054 = vmatprep.subr.mxu0 %v235
    %3055 = vmatpush2.msra.mxu0 %v234
    %3056 = vmatprep.subr.mxu0 %v227
    %3057 = vmatpush2.msra.mxu0 %v226
    %3058 = vmatprep.subr.mxu0 %v219
    %3059 = vmatpush2.msra.mxu0 %v218
    %3060 = vmatprep.subr.mxu0 %v211
    %3061 = vmatpush2.msra.mxu0 %v210
    %3062 = vmatprep.subr.mxu0 %v203
    %3063 = vmatpush2.msra.mxu0 %v202
    %3064 = vmatprep.mubr.f32.mxu0 %v2975
    %3065 = vmatmul.mubr.f32.gmra.mxu0 %v2974
    %v3066 = vpop.f32.mrf.mxu0
    %v3067 = vadd.f32 0.0, %v3066
    %v3068 = vpop.f32.mrf.mxu0
    %v3069 = vadd.f32 0.0, %v3068
    %3070 = vmatprep.mubr.f32.mxu0 %v2977
    %3071 = vmatmul.mubr.f32.gmra.mxu0 %v2976
    %v3072 = vpop.f32.mrf.mxu0
    %v3073 = vadd.f32 0.0, %v3072
    %v3074 = vpop.f32.mrf.mxu0
    %v3075 = vadd.f32 0.0, %v3074
    %3076 = vdwg.mxu0
    %3077 = vmatprep.subr.mxu0 %v197
    %3078 = vmatpush1.msra.mxu0 %v196
    %3079 = vmatprep.subr.mxu0 %v189
    %3080 = vmatpush1.msra.mxu0 %v188
    %3081 = vmatprep.subr.mxu0 %v181
    %3082 = vmatpush1.msra.mxu0 %v180
    %3083 = vmatprep.subr.mxu0 %v173
    %3084 = vmatpush1.msra.mxu0 %v172
    %3085 = vmatprep.subr.mxu0 %v165
    %3086 = vmatpush1.msra.mxu0 %v164
    %3087 = vmatprep.subr.mxu0 %v157
    %3088 = vmatpush1.msra.mxu0 %v156
    %3089 = vmatprep.subr.mxu0 %v149
    %3090 = vmatpush1.msra.mxu0 %v148
    %3091 = vmatprep.subr.mxu0 %v141
    %3092 = vmatpush1.msra.mxu0 %v140
    %3093 = vmatprep.subr.mxu0 %v133
    %3094 = vmatpush1.msra.mxu0 %v132
    %3095 = vmatprep.subr.mxu0 %v125
    %3096 = vmatpush1.msra.mxu0 %v124
    %3097 = vmatprep.subr.mxu0 %v117
    %3098 = vmatpush1.msra.mxu0 %v116
    %3099 = vmatprep.subr.mxu0 %v109
    %3100 = vmatpush1.msra.mxu0 %v108
    %3101 = vmatprep.subr.mxu0 %v101
    %3102 = vmatpush1.msra.mxu0 %v100
    %3103 = vmatprep.subr.mxu0 %v93
    %3104 = vmatpush1.msra.mxu0 %v92
    %3105 = vmatprep.subr.mxu0 %v85
    %3106 = vmatpush1.msra.mxu0 %v84
    %3107 = vmatprep.subr.mxu0 %v77
    %3108 = vmatpush1.msra.mxu0 %v76
    %3109 = vmatprep.subr.mxu0 %v325
    %3110 = vmatpush2.msra.mxu0 %v324
    %3111 = vmatprep.subr.mxu0 %v317
    %3112 = vmatpush2.msra.mxu0 %v316
    %3113 = vmatprep.subr.mxu0 %v309
    %3114 = vmatpush2.msra.mxu0 %v308
    %3115 = vmatprep.subr.mxu0 %v301
    %3116 = vmatpush2.msra.mxu0 %v300
    %3117 = vmatprep.subr.mxu0 %v293
    %3118 = vmatpush2.msra.mxu0 %v292
    %3119 = vmatprep.subr.mxu0 %v285
    %3120 = vmatpush2.msra.mxu0 %v284
    %3121 = vmatprep.subr.mxu0 %v277
    %3122 = vmatpush2.msra.mxu0 %v276
    %3123 = vmatprep.subr.mxu0 %v269
    %3124 = vmatpush2.msra.mxu0 %v268
    %3125 = vmatprep.subr.mxu0 %v261
    %3126 = vmatpush2.msra.mxu0 %v260
    %3127 = vmatprep.subr.mxu0 %v253
    %3128 = vmatpush2.msra.mxu0 %v252
    %3129 = vmatprep.subr.mxu0 %v245
    %3130 = vmatpush2.msra.mxu0 %v244
    %3131 = vmatprep.subr.mxu0 %v237
    %3132 = vmatpush2.msra.mxu0 %v236
    %3133 = vmatprep.subr.mxu0 %v229
    %3134 = vmatpush2.msra.mxu0 %v228
    %3135 = vmatprep.subr.mxu0 %v221
    %3136 = vmatpush2.msra.mxu0 %v220
    %3137 = vmatprep.subr.mxu0 %v213
    %3138 = vmatpush2.msra.mxu0 %v212
    %3139 = vmatprep.subr.mxu0 %v205
    %3140 = vmatpush2.msra.mxu0 %v204
    %3141 = vmatprep.mubr.f32.mxu0 %v2975
    %3142 = vmatmul.mubr.f32.gmra.mxu0 %v2974
    %v3143 = vpop.f32.mrf.mxu0
    %v3144 = vadd.f32 0.0, %v3143
    %v3145 = vpop.f32.mrf.mxu0
    %v3146 = vadd.f32 0.0, %v3145
    %3147 = vmatprep.mubr.f32.mxu0 %v2977
    %3148 = vmatmul.mubr.f32.gmra.mxu0 %v2976
    %v3149 = vpop.f32.mrf.mxu0
    %v3150 = vadd.f32 0.0, %v3149
    %v3151 = vpop.f32.mrf.mxu0
    %v3152 = vadd.f32 0.0, %v3151
    %3153 = vdwg.mxu0
    %3154 = vmatprep.subr.mxu0 %v199
    %3155 = vmatpush1.msra.mxu0 %v198
    %3156 = vmatprep.subr.mxu0 %v191
    %3157 = vmatpush1.msra.mxu0 %v190
    %3158 = vmatprep.subr.mxu0 %v183
    %3159 = vmatpush1.msra.mxu0 %v182
    %3160 = vmatprep.subr.mxu0 %v175
    %3161 = vmatpush1.msra.mxu0 %v174
    %3162 = vmatprep.subr.mxu0 %v167
    %3163 = vmatpush1.msra.mxu0 %v166
    %3164 = vmatprep.subr.mxu0 %v159
    %3165 = vmatpush1.msra.mxu0 %v158
    %3166 = vmatprep.subr.mxu0 %v151
    %3167 = vmatpush1.msra.mxu0 %v150
    %3168 = vmatprep.subr.mxu0 %v143
    %3169 = vmatpush1.msra.mxu0 %v142
    %3170 = vmatprep.subr.mxu0 %v135
    %3171 = vmatpush1.msra.mxu0 %v134
    %3172 = vmatprep.subr.mxu0 %v127
    %3173 = vmatpush1.msra.mxu0 %v126
    %3174 = vmatprep.subr.mxu0 %v119
    %3175 = vmatpush1.msra.mxu0 %v118
    %3176 = vmatprep.subr.mxu0 %v111
    %3177 = vmatpush1.msra.mxu0 %v110
    %3178 = vmatprep.subr.mxu0 %v103
    %3179 = vmatpush1.msra.mxu0 %v102
    %3180 = vmatprep.subr.mxu0 %v95
    %3181 = vmatpush1.msra.mxu0 %v94
    %3182 = vmatprep.subr.mxu0 %v87
    %3183 = vmatpush1.msra.mxu0 %v86
    %3184 = vmatprep.subr.mxu0 %v79
    %3185 = vmatpush1.msra.mxu0 %v78
    %3186 = vmatprep.subr.mxu0 %v327
    %3187 = vmatpush2.msra.mxu0 %v326
    %3188 = vmatprep.subr.mxu0 %v319
    %3189 = vmatpush2.msra.mxu0 %v318
    %3190 = vmatprep.subr.mxu0 %v311
    %3191 = vmatpush2.msra.mxu0 %v310
    %3192 = vmatprep.subr.mxu0 %v303
    %3193 = vmatpush2.msra.mxu0 %v302
    %3194 = vmatprep.subr.mxu0 %v295
    %3195 = vmatpush2.msra.mxu0 %v294
    %3196 = vmatprep.subr.mxu0 %v287
    %3197 = vmatpush2.msra.mxu0 %v286
    %3198 = vmatprep.subr.mxu0 %v279
    %3199 = vmatpush2.msra.mxu0 %v278
    %3200 = vmatprep.subr.mxu0 %v271
    %3201 = vmatpush2.msra.mxu0 %v270
    %3202 = vmatprep.subr.mxu0 %v263
    %3203 = vmatpush2.msra.mxu0 %v262
    %3204 = vmatprep.subr.mxu0 %v255
    %3205 = vmatpush2.msra.mxu0 %v254
    %3206 = vmatprep.subr.mxu0 %v247
    %3207 = vmatpush2.msra.mxu0 %v246
    %3208 = vmatprep.subr.mxu0 %v239
    %3209 = vmatpush2.msra.mxu0 %v238
    %3210 = vmatprep.subr.mxu0 %v231
    %3211 = vmatpush2.msra.mxu0 %v230
    %3212 = vmatprep.subr.mxu0 %v223
    %3213 = vmatpush2.msra.mxu0 %v222
    %3214 = vmatprep.subr.mxu0 %v215
    %3215 = vmatpush2.msra.mxu0 %v214
    %3216 = vmatprep.subr.mxu0 %v207
    %3217 = vmatpush2.msra.mxu0 %v206
    %3218 = vmatprep.mubr.f32.mxu0 %v2975
    %3219 = vmatmul.mubr.f32.gmra.mxu0 %v2974
    %v3220 = vpop.f32.mrf.mxu0
    %v3221 = vadd.f32 0.0, %v3220
    %v3222 = vpop.f32.mrf.mxu0
    %v3223 = vadd.f32 0.0, %v3222
    %3224 = vmatprep.mubr.f32.mxu0 %v2977
    %3225 = vmatmul.mubr.f32.gmra.mxu0 %v2976
    %v3226 = vpop.f32.mrf.mxu0
    %v3227 = vadd.f32 0.0, %v3226
    %v3228 = vpop.f32.mrf.mxu0
    %v3229 = vadd.f32 0.0, %v3228
    %3230 = vdwg.mxu0
    %3231 = vmatprep.subr.mxu0 %v201
    %3232 = vmatpush1.msra.mxu0 %v200
    %3233 = vmatprep.subr.mxu0 %v193
    %3234 = vmatpush1.msra.mxu0 %v192
    %3235 = vmatprep.subr.mxu0 %v185
    %3236 = vmatpush1.msra.mxu0 %v184
    %3237 = vmatprep.subr.mxu0 %v177
    %3238 = vmatpush1.msra.mxu0 %v176
    %3239 = vmatprep.subr.mxu0 %v169
    %3240 = vmatpush1.msra.mxu0 %v168
    %3241 = vmatprep.subr.mxu0 %v161
    %3242 = vmatpush1.msra.mxu0 %v160
    %3243 = vmatprep.subr.mxu0 %v153
    %3244 = vmatpush1.msra.mxu0 %v152
    %3245 = vmatprep.subr.mxu0 %v145
    %3246 = vmatpush1.msra.mxu0 %v144
    %3247 = vmatprep.subr.mxu0 %v137
    %3248 = vmatpush1.msra.mxu0 %v136
    %3249 = vmatprep.subr.mxu0 %v129
    %3250 = vmatpush1.msra.mxu0 %v128
    %3251 = vmatprep.subr.mxu0 %v121
    %3252 = vmatpush1.msra.mxu0 %v120
    %3253 = vmatprep.subr.mxu0 %v113
    %3254 = vmatpush1.msra.mxu0 %v112
    %3255 = vmatprep.subr.mxu0 %v105
    %3256 = vmatpush1.msra.mxu0 %v104
    %3257 = vmatprep.subr.mxu0 %v97
    %3258 = vmatpush1.msra.mxu0 %v96
    %3259 = vmatprep.subr.mxu0 %v89
    %3260 = vmatpush1.msra.mxu0 %v88
    %3261 = vmatprep.subr.mxu0 %v81
    %3262 = vmatpush1.msra.mxu0 %v80
    %3263 = vmatprep.subr.mxu0 %v329
    %3264 = vmatpush2.msra.mxu0 %v328
    %3265 = vmatprep.subr.mxu0 %v321
    %3266 = vmatpush2.msra.mxu0 %v320
    %3267 = vmatprep.subr.mxu0 %v313
    %3268 = vmatpush2.msra.mxu0 %v312
    %3269 = vmatprep.subr.mxu0 %v305
    %3270 = vmatpush2.msra.mxu0 %v304
    %3271 = vmatprep.subr.mxu0 %v297
    %3272 = vmatpush2.msra.mxu0 %v296
    %3273 = vmatprep.subr.mxu0 %v289
    %3274 = vmatpush2.msra.mxu0 %v288
    %3275 = vmatprep.subr.mxu0 %v281
    %3276 = vmatpush2.msra.mxu0 %v280
    %3277 = vmatprep.subr.mxu0 %v273
    %3278 = vmatpush2.msra.mxu0 %v272
    %3279 = vmatprep.subr.mxu0 %v265
    %3280 = vmatpush2.msra.mxu0 %v264
    %3281 = vmatprep.subr.mxu0 %v257
    %3282 = vmatpush2.msra.mxu0 %v256
    %3283 = vmatprep.subr.mxu0 %v249
    %3284 = vmatpush2.msra.mxu0 %v248
    %3285 = vmatprep.subr.mxu0 %v241
    %3286 = vmatpush2.msra.mxu0 %v240
    %3287 = vmatprep.subr.mxu0 %v233
    %3288 = vmatpush2.msra.mxu0 %v232
    %3289 = vmatprep.subr.mxu0 %v225
    %3290 = vmatpush2.msra.mxu0 %v224
    %3291 = vmatprep.subr.mxu0 %v217
    %3292 = vmatpush2.msra.mxu0 %v216
    %3293 = vmatprep.subr.mxu0 %v209
    %3294 = vmatpush2.msra.mxu0 %v208
    %3295 = vmatprep.mubr.f32.mxu0 %v2975
    %3296 = vmatmul.mubr.f32.gmra.mxu0 %v2974
    %v3297 = vpop.f32.mrf.mxu0
    %v3298 = vadd.f32 0.0, %v3297
    %v3299 = vpop.f32.mrf.mxu0
    %v3300 = vadd.f32 0.0, %v3299
    %3301 = vmatprep.mubr.f32.mxu0 %v2977
    %3302 = vmatmul.mubr.f32.gmra.mxu0 %v2976
    %v3303 = vpop.f32.mrf.mxu0
    %v3304 = vadd.f32 0.0, %v3303
    %v3305 = vpop.f32.mrf.mxu0
    %v3306 = vadd.f32 0.0, %v3305
    %3307 = vdwg.mxu0
    %v3308 = vadd.f32 %v2984, %v3067
    %v3309 = vadd.f32 %v2985, %v3069
    %v3310 = vadd.f32 %v2986, %v3144
    %v3311 = vadd.f32 %v2987, %v3146
    %v3312 = vadd.f32 %v2988, %v3221
    %v3313 = vadd.f32 %v2989, %v3223
    %v3314 = vadd.f32 %v2990, %v3298
    %v3315 = vadd.f32 %v2991, %v3300
    %v3316 = vadd.f32 %v2992, %v3073
    %v3317 = vadd.f32 %v2993, %v3075
    %v3318 = vadd.f32 %v2994, %v3150
    %v3319 = vadd.f32 %v2995, %v3152
    %v3320 = vadd.f32 %v2996, %v3227
    %v3321 = vadd.f32 %v2997, %v3229
    %v3322 = vadd.f32 %v2998, %v3304
    %v3323 = vadd.f32 %v2999, %v3306
    %v3324 = vxor.u32 %v3308, 2147483648
    %v3325 = vxor.u32 %v3309, 2147483648
    %v3326 = vxor.u32 %v3316, 2147483648
    %v3327 = vxor.u32 %v3317, 2147483648
    %v3328 = vmul.f32 %v3324, 1.442695
    %v3329 = vpow.pop %v3328
    %v3330 = vmul.f32 %v3325, 1.442695
    %v3331 = vpow.pop %v3330
    %v3332 = vmul.f32 %v3326, 1.442695
    %v3333 = vpow.pop %v3332
    %v3334 = vmul.f32 %v3327, 1.442695
    %v3335 = vpow.pop %v3334
    %v3336 = vadd.f32 %v3329, 1.0
    %v3337 = vadd.f32 %v3331, 1.0
    %v3338 = vadd.f32 %v3333, 1.0
    %v3339 = vadd.f32 %v3335, 1.0
    %v3340 = vrcp.pop %v3336
    %v3341 = vmul.f32 1.0, %v3340
    %v3342 = vrcp.pop %v3337
    %v3343 = vmul.f32 1.0, %v3342
    %v3344 = vrcp.pop %v3338
    %v3345 = vmul.f32 1.0, %v3344
    %v3346 = vrcp.pop %v3339
    %v3347 = vmul.f32 1.0, %v3346
    %v3348 = vxor.u32 %v3310, 2147483648
    %v3349 = vxor.u32 %v3311, 2147483648
    %v3350 = vxor.u32 %v3318, 2147483648
    %v3351 = vxor.u32 %v3319, 2147483648
    %v3352 = vmul.f32 %v3348, 1.442695
    %v3353 = vpow.pop %v3352
    %v3354 = vmul.f32 %v3349, 1.442695
    %v3355 = vpow.pop %v3354
    %v3356 = vmul.f32 %v3350, 1.442695
    %v3357 = vpow.pop %v3356
    %v3358 = vmul.f32 %v3351, 1.442695
    %v3359 = vpow.pop %v3358
    %v3360 = vadd.f32 %v3353, 1.0
    %v3361 = vadd.f32 %v3355, 1.0
    %v3362 = vadd.f32 %v3357, 1.0
    %v3363 = vadd.f32 %v3359, 1.0
    %v3364 = vrcp.pop %v3360
    %v3365 = vmul.f32 1.0, %v3364
    %v3366 = vrcp.pop %v3361
    %v3367 = vmul.f32 1.0, %v3366
    %v3368 = vrcp.pop %v3362
    %v3369 = vmul.f32 1.0, %v3368
    %v3370 = vrcp.pop %v3363
    %v3371 = vmul.f32 1.0, %v3370
    %v3372 = vtanh.pop %v3312
    %v3373 = vtanh.pop %v3313
    %v3374 = vtanh.pop %v3320
    %v3375 = vtanh.pop %v3321
    %v3376 = vxor.u32 %v3314, 2147483648
    %v3377 = vxor.u32 %v3315, 2147483648
    %v3378 = vxor.u32 %v3322, 2147483648
    %v3379 = vxor.u32 %v3323, 2147483648
    %v3380 = vmul.f32 %v3376, 1.442695
    %v3381 = vpow.pop %v3380
    %v3382 = vmul.f32 %v3377, 1.442695
    %v3383 = vpow.pop %v3382
    %v3384 = vmul.f32 %v3378, 1.442695
    %v3385 = vpow.pop %v3384
    %v3386 = vmul.f32 %v3379, 1.442695
    %v3387 = vpow.pop %v3386
    %v3388 = vadd.f32 %v3381, 1.0
    %v3389 = vadd.f32 %v3383, 1.0
    %v3390 = vadd.f32 %v3385, 1.0
    %v3391 = vadd.f32 %v3387, 1.0
    %v3392 = vrcp.pop %v3388
    %v3393 = vmul.f32 1.0, %v3392
    %v3394 = vrcp.pop %v3389
    %v3395 = vmul.f32 1.0, %v3394
    %v3396 = vrcp.pop %v3390
    %v3397 = vmul.f32 1.0, %v3396
    %v3398 = vrcp.pop %v3391
    %v3399 = vmul.f32 1.0, %v3398
    %v3400 = vmul.f32 %v3365, %v2966
    %v3401 = vmul.f32 %v3367, %v2967
    %v3402 = vmul.f32 %v3369, %v2968
    %v3403 = vmul.f32 %v3371, %v2969
    %v3404 = vmul.f32 %v3341, %v3372
    %v3405 = vmul.f32 %v3343, %v3373
    %v3406 = vmul.f32 %v3345, %v3374
    %v3407 = vmul.f32 %v3347, %v3375
    %v3408 = vadd.f32 %v3400, %v3404
    %v3409 = vadd.f32 %v3401, %v3405
    %v3410 = vadd.f32 %v3402, %v3406
    %v3411 = vadd.f32 %v3403, %v3407
    %v3412 = vtanh.pop %v3408
    %v3413 = vtanh.pop %v3409
    %v3414 = vtanh.pop %v3410
    %v3415 = vtanh.pop %v3411
    %v3416 = vmul.f32 %v3393, %v3412
    %v3417 = vmul.f32 %v3395, %v3413
    %v3418 = vmul.f32 %v3397, %v3414
    %v3419 = vmul.f32 %v3399, %v3415
    %s3420 = scalar_lea.vmem %s4, 128
    %3421 = vst [vmem:[%s3420] sm:$0xff] %v3416
    %3422 = vst [vmem:[%s3420 + $0x8] sm:$0xff] %v3417
    %3423 = vst [vmem:[%s3420 + $0x10] sm:$0xff] %v3418
    %3424 = vst [vmem:[%s3420 + $0x18] sm:$0xff] %v3419
    %s3425 = scalar_lea.vmem [#allocation4], 640
    %v3426 = vld [vmem:[%s3425] sm:$0xff]
    %v3427 = vld [vmem:[%s3425 + $0x8] sm:$0xff]
    %v3428 = vld [vmem:[%s3425 + $0x10] sm:$0xff]
    %v3429 = vld [vmem:[%s3425 + $0x18] sm:$0xff]
    %v3430 = vld [vmem:[%s3425 + $0x20] sm:$0xff]
    %v3431 = vld [vmem:[%s3425 + $0x28] sm:$0xff]
    %v3432 = vld [vmem:[%s3425 + $0x30] sm:$0xff]
    %v3433 = vld [vmem:[%s3425 + $0x38] sm:$0xff]
    %v3434 = vld [vmem:[%s3425 + $0x40] sm:$0xff]
    %v3435 = vld [vmem:[%s3425 + $0x48] sm:$0xff]
    %v3436 = vld [vmem:[%s3425 + $0x50] sm:$0xff]
    %v3437 = vld [vmem:[%s3425 + $0x58] sm:$0xff]
    %v3438 = vld [vmem:[%s3425 + $0x60] sm:$0xff]
    %v3439 = vld [vmem:[%s3425 + $0x68] sm:$0xff]
    %v3440 = vld [vmem:[%s3425 + $0x70] sm:$0xff]
    %v3441 = vld [vmem:[%s3425 + $0x78] sm:$0xff]
    %3442 = vmatprep.subr.mxu0 %v195
    %3443 = vmatpush1.msra.mxu0 %v194
    %3444 = vmatprep.subr.mxu0 %v187
    %3445 = vmatpush1.msra.mxu0 %v186
    %3446 = vmatprep.subr.mxu0 %v179
    %3447 = vmatpush1.msra.mxu0 %v178
    %3448 = vmatprep.subr.mxu0 %v171
    %3449 = vmatpush1.msra.mxu0 %v170
    %3450 = vmatprep.subr.mxu0 %v163
    %3451 = vmatpush1.msra.mxu0 %v162
    %3452 = vmatprep.subr.mxu0 %v155
    %3453 = vmatpush1.msra.mxu0 %v154
    %3454 = vmatprep.subr.mxu0 %v147
    %3455 = vmatpush1.msra.mxu0 %v146
    %3456 = vmatprep.subr.mxu0 %v139
    %3457 = vmatpush1.msra.mxu0 %v138
    %3458 = vmatprep.subr.mxu0 %v131
    %3459 = vmatpush1.msra.mxu0 %v130
    %3460 = vmatprep.subr.mxu0 %v123
    %3461 = vmatpush1.msra.mxu0 %v122
    %3462 = vmatprep.subr.mxu0 %v115
    %3463 = vmatpush1.msra.mxu0 %v114
    %3464 = vmatprep.subr.mxu0 %v107
    %3465 = vmatpush1.msra.mxu0 %v106
    %3466 = vmatprep.subr.mxu0 %v99
    %3467 = vmatpush1.msra.mxu0 %v98
    %3468 = vmatprep.subr.mxu0 %v91
    %3469 = vmatpush1.msra.mxu0 %v90
    %3470 = vmatprep.subr.mxu0 %v83
    %3471 = vmatpush1.msra.mxu0 %v82
    %3472 = vmatprep.subr.mxu0 %v75
    %3473 = vmatpush1.msra.mxu0 %v74
    %3474 = vmatprep.subr.mxu0 %v323
    %3475 = vmatpush2.msra.mxu0 %v322
    %3476 = vmatprep.subr.mxu0 %v315
    %3477 = vmatpush2.msra.mxu0 %v314
    %3478 = vmatprep.subr.mxu0 %v307
    %3479 = vmatpush2.msra.mxu0 %v306
    %3480 = vmatprep.subr.mxu0 %v299
    %3481 = vmatpush2.msra.mxu0 %v298
    %3482 = vmatprep.subr.mxu0 %v291
    %3483 = vmatpush2.msra.mxu0 %v290
    %3484 = vmatprep.subr.mxu0 %v283
    %3485 = vmatpush2.msra.mxu0 %v282
    %3486 = vmatprep.subr.mxu0 %v275
    %3487 = vmatpush2.msra.mxu0 %v274
    %3488 = vmatprep.subr.mxu0 %v267
    %3489 = vmatpush2.msra.mxu0 %v266
    %3490 = vmatprep.subr.mxu0 %v259
    %3491 = vmatpush2.msra.mxu0 %v258
    %3492 = vmatprep.subr.mxu0 %v251
    %3493 = vmatpush2.msra.mxu0 %v250
    %3494 = vmatprep.subr.mxu0 %v243
    %3495 = vmatpush2.msra.mxu0 %v242
    %3496 = vmatprep.subr.mxu0 %v235
    %3497 = vmatpush2.msra.mxu0 %v234
    %3498 = vmatprep.subr.mxu0 %v227
    %3499 = vmatpush2.msra.mxu0 %v226
    %3500 = vmatprep.subr.mxu0 %v219
    %3501 = vmatpush2.msra.mxu0 %v218
    %3502 = vmatprep.subr.mxu0 %v211
    %3503 = vmatpush2.msra.mxu0 %v210
    %3504 = vmatprep.subr.mxu0 %v203
    %3505 = vmatpush2.msra.mxu0 %v202
    %3506 = vmatprep.mubr.f32.mxu0 %v3417
    %3507 = vmatmul.mubr.f32.gmra.mxu0 %v3416
    %v3508 = vpop.f32.mrf.mxu0
    %v3509 = vadd.f32 0.0, %v3508
    %v3510 = vpop.f32.mrf.mxu0
    %v3511 = vadd.f32 0.0, %v3510
    %3512 = vmatprep.mubr.f32.mxu0 %v3419
    %3513 = vmatmul.mubr.f32.gmra.mxu0 %v3418
    %v3514 = vpop.f32.mrf.mxu0
    %v3515 = vadd.f32 0.0, %v3514
    %v3516 = vpop.f32.mrf.mxu0
    %v3517 = vadd.f32 0.0, %v3516
    %3518 = vdwg.mxu0
    %3519 = vmatprep.subr.mxu0 %v197
    %3520 = vmatpush1.msra.mxu0 %v196
    %3521 = vmatprep.subr.mxu0 %v189
    %3522 = vmatpush1.msra.mxu0 %v188
    %3523 = vmatprep.subr.mxu0 %v181
    %3524 = vmatpush1.msra.mxu0 %v180
    %3525 = vmatprep.subr.mxu0 %v173
    %3526 = vmatpush1.msra.mxu0 %v172
    %3527 = vmatprep.subr.mxu0 %v165
    %3528 = vmatpush1.msra.mxu0 %v164
    %3529 = vmatprep.subr.mxu0 %v157
    %3530 = vmatpush1.msra.mxu0 %v156
    %3531 = vmatprep.subr.mxu0 %v149
    %3532 = vmatpush1.msra.mxu0 %v148
    %3533 = vmatprep.subr.mxu0 %v141
    %3534 = vmatpush1.msra.mxu0 %v140
    %3535 = vmatprep.subr.mxu0 %v133
    %3536 = vmatpush1.msra.mxu0 %v132
    %3537 = vmatprep.subr.mxu0 %v125
    %3538 = vmatpush1.msra.mxu0 %v124
    %3539 = vmatprep.subr.mxu0 %v117
    %3540 = vmatpush1.msra.mxu0 %v116
    %3541 = vmatprep.subr.mxu0 %v109
    %3542 = vmatpush1.msra.mxu0 %v108
    %3543 = vmatprep.subr.mxu0 %v101
    %3544 = vmatpush1.msra.mxu0 %v100
    %3545 = vmatprep.subr.mxu0 %v93
    %3546 = vmatpush1.msra.mxu0 %v92
    %3547 = vmatprep.subr.mxu0 %v85
    %3548 = vmatpush1.msra.mxu0 %v84
    %3549 = vmatprep.subr.mxu0 %v77
    %3550 = vmatpush1.msra.mxu0 %v76
    %3551 = vmatprep.subr.mxu0 %v325
    %3552 = vmatpush2.msra.mxu0 %v324
    %3553 = vmatprep.subr.mxu0 %v317
    %3554 = vmatpush2.msra.mxu0 %v316
    %3555 = vmatprep.subr.mxu0 %v309
    %3556 = vmatpush2.msra.mxu0 %v308
    %3557 = vmatprep.subr.mxu0 %v301
    %3558 = vmatpush2.msra.mxu0 %v300
    %3559 = vmatprep.subr.mxu0 %v293
    %3560 = vmatpush2.msra.mxu0 %v292
    %3561 = vmatprep.subr.mxu0 %v285
    %3562 = vmatpush2.msra.mxu0 %v284
    %3563 = vmatprep.subr.mxu0 %v277
    %3564 = vmatpush2.msra.mxu0 %v276
    %3565 = vmatprep.subr.mxu0 %v269
    %3566 = vmatpush2.msra.mxu0 %v268
    %3567 = vmatprep.subr.mxu0 %v261
    %3568 = vmatpush2.msra.mxu0 %v260
    %3569 = vmatprep.subr.mxu0 %v253
    %3570 = vmatpush2.msra.mxu0 %v252
    %3571 = vmatprep.subr.mxu0 %v245
    %3572 = vmatpush2.msra.mxu0 %v244
    %3573 = vmatprep.subr.mxu0 %v237
    %3574 = vmatpush2.msra.mxu0 %v236
    %3575 = vmatprep.subr.mxu0 %v229
    %3576 = vmatpush2.msra.mxu0 %v228
    %3577 = vmatprep.subr.mxu0 %v221
    %3578 = vmatpush2.msra.mxu0 %v220
    %3579 = vmatprep.subr.mxu0 %v213
    %3580 = vmatpush2.msra.mxu0 %v212
    %3581 = vmatprep.subr.mxu0 %v205
    %3582 = vmatpush2.msra.mxu0 %v204
    %3583 = vmatprep.mubr.f32.mxu0 %v3417
    %3584 = vmatmul.mubr.f32.gmra.mxu0 %v3416
    %v3585 = vpop.f32.mrf.mxu0
    %v3586 = vadd.f32 0.0, %v3585
    %v3587 = vpop.f32.mrf.mxu0
    %v3588 = vadd.f32 0.0, %v3587
    %3589 = vmatprep.mubr.f32.mxu0 %v3419
    %3590 = vmatmul.mubr.f32.gmra.mxu0 %v3418
    %v3591 = vpop.f32.mrf.mxu0
    %v3592 = vadd.f32 0.0, %v3591
    %v3593 = vpop.f32.mrf.mxu0
    %v3594 = vadd.f32 0.0, %v3593
    %3595 = vdwg.mxu0
    %3596 = vmatprep.subr.mxu0 %v199
    %3597 = vmatpush1.msra.mxu0 %v198
    %3598 = vmatprep.subr.mxu0 %v191
    %3599 = vmatpush1.msra.mxu0 %v190
    %3600 = vmatprep.subr.mxu0 %v183
    %3601 = vmatpush1.msra.mxu0 %v182
    %3602 = vmatprep.subr.mxu0 %v175
    %3603 = vmatpush1.msra.mxu0 %v174
    %3604 = vmatprep.subr.mxu0 %v167
    %3605 = vmatpush1.msra.mxu0 %v166
    %3606 = vmatprep.subr.mxu0 %v159
    %3607 = vmatpush1.msra.mxu0 %v158
    %3608 = vmatprep.subr.mxu0 %v151
    %3609 = vmatpush1.msra.mxu0 %v150
    %3610 = vmatprep.subr.mxu0 %v143
    %3611 = vmatpush1.msra.mxu0 %v142
    %3612 = vmatprep.subr.mxu0 %v135
    %3613 = vmatpush1.msra.mxu0 %v134
    %3614 = vmatprep.subr.mxu0 %v127
    %3615 = vmatpush1.msra.mxu0 %v126
    %3616 = vmatprep.subr.mxu0 %v119
    %3617 = vmatpush1.msra.mxu0 %v118
    %3618 = vmatprep.subr.mxu0 %v111
    %3619 = vmatpush1.msra.mxu0 %v110
    %3620 = vmatprep.subr.mxu0 %v103
    %3621 = vmatpush1.msra.mxu0 %v102
    %3622 = vmatprep.subr.mxu0 %v95
    %3623 = vmatpush1.msra.mxu0 %v94
    %3624 = vmatprep.subr.mxu0 %v87
    %3625 = vmatpush1.msra.mxu0 %v86
    %3626 = vmatprep.subr.mxu0 %v79
    %3627 = vmatpush1.msra.mxu0 %v78
    %3628 = vmatprep.subr.mxu0 %v327
    %3629 = vmatpush2.msra.mxu0 %v326
    %3630 = vmatprep.subr.mxu0 %v319
    %3631 = vmatpush2.msra.mxu0 %v318
    %3632 = vmatprep.subr.mxu0 %v311
    %3633 = vmatpush2.msra.mxu0 %v310
    %3634 = vmatprep.subr.mxu0 %v303
    %3635 = vmatpush2.msra.mxu0 %v302
    %3636 = vmatprep.subr.mxu0 %v295
    %3637 = vmatpush2.msra.mxu0 %v294
    %3638 = vmatprep.subr.mxu0 %v287
    %3639 = vmatpush2.msra.mxu0 %v286
    %3640 = vmatprep.subr.mxu0 %v279
    %3641 = vmatpush2.msra.mxu0 %v278
    %3642 = vmatprep.subr.mxu0 %v271
    %3643 = vmatpush2.msra.mxu0 %v270
    %3644 = vmatprep.subr.mxu0 %v263
    %3645 = vmatpush2.msra.mxu0 %v262
    %3646 = vmatprep.subr.mxu0 %v255
    %3647 = vmatpush2.msra.mxu0 %v254
    %3648 = vmatprep.subr.mxu0 %v247
    %3649 = vmatpush2.msra.mxu0 %v246
    %3650 = vmatprep.subr.mxu0 %v239
    %3651 = vmatpush2.msra.mxu0 %v238
    %3652 = vmatprep.subr.mxu0 %v231
    %3653 = vmatpush2.msra.mxu0 %v230
    %3654 = vmatprep.subr.mxu0 %v223
    %3655 = vmatpush2.msra.mxu0 %v222
    %3656 = vmatprep.subr.mxu0 %v215
    %3657 = vmatpush2.msra.mxu0 %v214
    %3658 = vmatprep.subr.mxu0 %v207
    %3659 = vmatpush2.msra.mxu0 %v206
    %3660 = vmatprep.mubr.f32.mxu0 %v3417
    %3661 = vmatmul.mubr.f32.gmra.mxu0 %v3416
    %v3662 = vpop.f32.mrf.mxu0
    %v3663 = vadd.f32 0.0, %v3662
    %v3664 = vpop.f32.mrf.mxu0
    %v3665 = vadd.f32 0.0, %v3664
    %3666 = vmatprep.mubr.f32.mxu0 %v3419
    %3667 = vmatmul.mubr.f32.gmra.mxu0 %v3418
    %v3668 = vpop.f32.mrf.mxu0
    %v3669 = vadd.f32 0.0, %v3668
    %v3670 = vpop.f32.mrf.mxu0
    %v3671 = vadd.f32 0.0, %v3670
    %3672 = vdwg.mxu0
    %3673 = vmatprep.subr.mxu0 %v201
    %3674 = vmatpush1.msra.mxu0 %v200
    %3675 = vmatprep.subr.mxu0 %v193
    %3676 = vmatpush1.msra.mxu0 %v192
    %3677 = vmatprep.subr.mxu0 %v185
    %3678 = vmatpush1.msra.mxu0 %v184
    %3679 = vmatprep.subr.mxu0 %v177
    %3680 = vmatpush1.msra.mxu0 %v176
    %3681 = vmatprep.subr.mxu0 %v169
    %3682 = vmatpush1.msra.mxu0 %v168
    %3683 = vmatprep.subr.mxu0 %v161
    %3684 = vmatpush1.msra.mxu0 %v160
    %3685 = vmatprep.subr.mxu0 %v153
    %3686 = vmatpush1.msra.mxu0 %v152
    %3687 = vmatprep.subr.mxu0 %v145
    %3688 = vmatpush1.msra.mxu0 %v144
    %3689 = vmatprep.subr.mxu0 %v137
    %3690 = vmatpush1.msra.mxu0 %v136
    %3691 = vmatprep.subr.mxu0 %v129
    %3692 = vmatpush1.msra.mxu0 %v128
    %3693 = vmatprep.subr.mxu0 %v121
    %3694 = vmatpush1.msra.mxu0 %v120
    %3695 = vmatprep.subr.mxu0 %v113
    %3696 = vmatpush1.msra.mxu0 %v112
    %3697 = vmatprep.subr.mxu0 %v105
    %3698 = vmatpush1.msra.mxu0 %v104
    %3699 = vmatprep.subr.mxu0 %v97
    %3700 = vmatpush1.msra.mxu0 %v96
    %3701 = vmatprep.subr.mxu0 %v89
    %3702 = vmatpush1.msra.mxu0 %v88
    %3703 = vmatprep.subr.mxu0 %v81
    %3704 = vmatpush1.msra.mxu0 %v80
    %3705 = vmatprep.subr.mxu0 %v329
    %3706 = vmatpush2.msra.mxu0 %v328
    %3707 = vmatprep.subr.mxu0 %v321
    %3708 = vmatpush2.msra.mxu0 %v320
    %3709 = vmatprep.subr.mxu0 %v313
    %3710 = vmatpush2.msra.mxu0 %v312
    %3711 = vmatprep.subr.mxu0 %v305
    %3712 = vmatpush2.msra.mxu0 %v304
    %3713 = vmatprep.subr.mxu0 %v297
    %3714 = vmatpush2.msra.mxu0 %v296
    %3715 = vmatprep.subr.mxu0 %v289
    %3716 = vmatpush2.msra.mxu0 %v288
    %3717 = vmatprep.subr.mxu0 %v281
    %3718 = vmatpush2.msra.mxu0 %v280
    %3719 = vmatprep.subr.mxu0 %v273
    %3720 = vmatpush2.msra.mxu0 %v272
    %3721 = vmatprep.subr.mxu0 %v265
    %3722 = vmatpush2.msra.mxu0 %v264
    %3723 = vmatprep.subr.mxu0 %v257
    %3724 = vmatpush2.msra.mxu0 %v256
    %3725 = vmatprep.subr.mxu0 %v249
    %3726 = vmatpush2.msra.mxu0 %v248
    %3727 = vmatprep.subr.mxu0 %v241
    %3728 = vmatpush2.msra.mxu0 %v240
    %3729 = vmatprep.subr.mxu0 %v233
    %3730 = vmatpush2.msra.mxu0 %v232
    %3731 = vmatprep.subr.mxu0 %v225
    %3732 = vmatpush2.msra.mxu0 %v224
    %3733 = vmatprep.subr.mxu0 %v217
    %3734 = vmatpush2.msra.mxu0 %v216
    %3735 = vmatprep.subr.mxu0 %v209
    %3736 = vmatpush2.msra.mxu0 %v208
    %3737 = vmatprep.mubr.f32.mxu0 %v3417
    %3738 = vmatmul.mubr.f32.gmra.mxu0 %v3416
    %v3739 = vpop.f32.mrf.mxu0
    %v3740 = vadd.f32 0.0, %v3739
    %v3741 = vpop.f32.mrf.mxu0
    %v3742 = vadd.f32 0.0, %v3741
    %3743 = vmatprep.mubr.f32.mxu0 %v3419
    %3744 = vmatmul.mubr.f32.gmra.mxu0 %v3418
    %v3745 = vpop.f32.mrf.mxu0
    %v3746 = vadd.f32 0.0, %v3745
    %v3747 = vpop.f32.mrf.mxu0
    %v3748 = vadd.f32 0.0, %v3747
    %3749 = vdwg.mxu0
    %v3750 = vadd.f32 %v3426, %v3509
    %v3751 = vadd.f32 %v3427, %v3511
    %v3752 = vadd.f32 %v3428, %v3586
    %v3753 = vadd.f32 %v3429, %v3588
    %v3754 = vadd.f32 %v3430, %v3663
    %v3755 = vadd.f32 %v3431, %v3665
    %v3756 = vadd.f32 %v3432, %v3740
    %v3757 = vadd.f32 %v3433, %v3742
    %v3758 = vadd.f32 %v3434, %v3515
    %v3759 = vadd.f32 %v3435, %v3517
    %v3760 = vadd.f32 %v3436, %v3592
    %v3761 = vadd.f32 %v3437, %v3594
    %v3762 = vadd.f32 %v3438, %v3669
    %v3763 = vadd.f32 %v3439, %v3671
    %v3764 = vadd.f32 %v3440, %v3746
    %v3765 = vadd.f32 %v3441, %v3748
    %v3766 = vxor.u32 %v3750, 2147483648
    %v3767 = vxor.u32 %v3751, 2147483648
    %v3768 = vxor.u32 %v3758, 2147483648
    %v3769 = vxor.u32 %v3759, 2147483648
    %v3770 = vmul.f32 %v3766, 1.442695
    %v3771 = vpow.pop %v3770
    %v3772 = vmul.f32 %v3767, 1.442695
    %v3773 = vpow.pop %v3772
    %v3774 = vmul.f32 %v3768, 1.442695
    %v3775 = vpow.pop %v3774
    %v3776 = vmul.f32 %v3769, 1.442695
    %v3777 = vpow.pop %v3776
    %v3778 = vadd.f32 %v3771, 1.0
    %v3779 = vadd.f32 %v3773, 1.0
    %v3780 = vadd.f32 %v3775, 1.0
    %v3781 = vadd.f32 %v3777, 1.0
    %v3782 = vrcp.pop %v3778
    %v3783 = vmul.f32 1.0, %v3782
    %v3784 = vrcp.pop %v3779
    %v3785 = vmul.f32 1.0, %v3784
    %v3786 = vrcp.pop %v3780
    %v3787 = vmul.f32 1.0, %v3786
    %v3788 = vrcp.pop %v3781
    %v3789 = vmul.f32 1.0, %v3788
    %v3790 = vxor.u32 %v3752, 2147483648
    %v3791 = vxor.u32 %v3753, 2147483648
    %v3792 = vxor.u32 %v3760, 2147483648
    %v3793 = vxor.u32 %v3761, 2147483648
    %v3794 = vmul.f32 %v3790, 1.442695
    %v3795 = vpow.pop %v3794
    %v3796 = vmul.f32 %v3791, 1.442695
    %v3797 = vpow.pop %v3796
    %v3798 = vmul.f32 %v3792, 1.442695
    %v3799 = vpow.pop %v3798
    %v3800 = vmul.f32 %v3793, 1.442695
    %v3801 = vpow.pop %v3800
    %v3802 = vadd.f32 %v3795, 1.0
    %v3803 = vadd.f32 %v3797, 1.0
    %v3804 = vadd.f32 %v3799, 1.0
    %v3805 = vadd.f32 %v3801, 1.0
    %v3806 = vrcp.pop %v3802
    %v3807 = vmul.f32 1.0, %v3806
    %v3808 = vrcp.pop %v3803
    %v3809 = vmul.f32 1.0, %v3808
    %v3810 = vrcp.pop %v3804
    %v3811 = vmul.f32 1.0, %v3810
    %v3812 = vrcp.pop %v3805
    %v3813 = vmul.f32 1.0, %v3812
    %v3814 = vtanh.pop %v3754
    %v3815 = vtanh.pop %v3755
    %v3816 = vtanh.pop %v3762
    %v3817 = vtanh.pop %v3763
    %v3818 = vxor.u32 %v3756, 2147483648
    %v3819 = vxor.u32 %v3757, 2147483648
    %v3820 = vxor.u32 %v3764, 2147483648
    %v3821 = vxor.u32 %v3765, 2147483648
    %v3822 = vmul.f32 %v3818, 1.442695
    %v3823 = vpow.pop %v3822
    %v3824 = vmul.f32 %v3819, 1.442695
    %v3825 = vpow.pop %v3824
    %v3826 = vmul.f32 %v3820, 1.442695
    %v3827 = vpow.pop %v3826
    %v3828 = vmul.f32 %v3821, 1.442695
    %v3829 = vpow.pop %v3828
    %v3830 = vadd.f32 %v3823, 1.0
    %v3831 = vadd.f32 %v3825, 1.0
    %v3832 = vadd.f32 %v3827, 1.0
    %v3833 = vadd.f32 %v3829, 1.0
    %v3834 = vrcp.pop %v3830
    %v3835 = vmul.f32 1.0, %v3834
    %v3836 = vrcp.pop %v3831
    %v3837 = vmul.f32 1.0, %v3836
    %v3838 = vrcp.pop %v3832
    %v3839 = vmul.f32 1.0, %v3838
    %v3840 = vrcp.pop %v3833
    %v3841 = vmul.f32 1.0, %v3840
    %v3842 = vmul.f32 %v3807, %v3408
    %v3843 = vmul.f32 %v3809, %v3409
    %v3844 = vmul.f32 %v3811, %v3410
    %v3845 = vmul.f32 %v3813, %v3411
    %v3846 = vmul.f32 %v3783, %v3814
    %v3847 = vmul.f32 %v3785, %v3815
    %v3848 = vmul.f32 %v3787, %v3816
    %v3849 = vmul.f32 %v3789, %v3817
    %v3850 = vadd.f32 %v3842, %v3846
    %v3851 = vadd.f32 %v3843, %v3847
    %v3852 = vadd.f32 %v3844, %v3848
    %v3853 = vadd.f32 %v3845, %v3849
    %v3854 = vtanh.pop %v3850
    %v3855 = vtanh.pop %v3851
    %v3856 = vtanh.pop %v3852
    %v3857 = vtanh.pop %v3853
    %v3858 = vmul.f32 %v3835, %v3854
    %v3859 = vmul.f32 %v3837, %v3855
    %v3860 = vmul.f32 %v3839, %v3856
    %v3861 = vmul.f32 %v3841, %v3857
    %s3862 = scalar_lea.vmem %s4, 160
    %3863 = vst [vmem:[%s3862] sm:$0xff] %v3858
    %3864 = vst [vmem:[%s3862 + $0x8] sm:$0xff] %v3859
    %3865 = vst [vmem:[%s3862 + $0x10] sm:$0xff] %v3860
    %3866 = vst [vmem:[%s3862 + $0x18] sm:$0xff] %v3861
    %s3867 = scalar_lea.vmem [#allocation4], 768
    %v3868 = vld [vmem:[%s3867] sm:$0xff]
    %v3869 = vld [vmem:[%s3867 + $0x8] sm:$0xff]
    %v3870 = vld [vmem:[%s3867 + $0x10] sm:$0xff]
    %v3871 = vld [vmem:[%s3867 + $0x18] sm:$0xff]
    %v3872 = vld [vmem:[%s3867 + $0x20] sm:$0xff]
    %v3873 = vld [vmem:[%s3867 + $0x28] sm:$0xff]
    %v3874 = vld [vmem:[%s3867 + $0x30] sm:$0xff]
    %v3875 = vld [vmem:[%s3867 + $0x38] sm:$0xff]
    %v3876 = vld [vmem:[%s3867 + $0x40] sm:$0xff]
    %v3877 = vld [vmem:[%s3867 + $0x48] sm:$0xff]
    %v3878 = vld [vmem:[%s3867 + $0x50] sm:$0xff]
    %v3879 = vld [vmem:[%s3867 + $0x58] sm:$0xff]
    %v3880 = vld [vmem:[%s3867 + $0x60] sm:$0xff]
    %v3881 = vld [vmem:[%s3867 + $0x68] sm:$0xff]
    %v3882 = vld [vmem:[%s3867 + $0x70] sm:$0xff]
    %v3883 = vld [vmem:[%s3867 + $0x78] sm:$0xff]
    %3884 = vmatprep.subr.mxu0 %v195
    %3885 = vmatpush1.msra.mxu0 %v194
    %3886 = vmatprep.subr.mxu0 %v187
    %3887 = vmatpush1.msra.mxu0 %v186
    %3888 = vmatprep.subr.mxu0 %v179
    %3889 = vmatpush1.msra.mxu0 %v178
    %3890 = vmatprep.subr.mxu0 %v171
    %3891 = vmatpush1.msra.mxu0 %v170
    %3892 = vmatprep.subr.mxu0 %v163
    %3893 = vmatpush1.msra.mxu0 %v162
    %3894 = vmatprep.subr.mxu0 %v155
    %3895 = vmatpush1.msra.mxu0 %v154
    %3896 = vmatprep.subr.mxu0 %v147
    %3897 = vmatpush1.msra.mxu0 %v146
    %3898 = vmatprep.subr.mxu0 %v139
    %3899 = vmatpush1.msra.mxu0 %v138
    %3900 = vmatprep.subr.mxu0 %v131
    %3901 = vmatpush1.msra.mxu0 %v130
    %3902 = vmatprep.subr.mxu0 %v123
    %3903 = vmatpush1.msra.mxu0 %v122
    %3904 = vmatprep.subr.mxu0 %v115
    %3905 = vmatpush1.msra.mxu0 %v114
    %3906 = vmatprep.subr.mxu0 %v107
    %3907 = vmatpush1.msra.mxu0 %v106
    %3908 = vmatprep.subr.mxu0 %v99
    %3909 = vmatpush1.msra.mxu0 %v98
    %3910 = vmatprep.subr.mxu0 %v91
    %3911 = vmatpush1.msra.mxu0 %v90
    %3912 = vmatprep.subr.mxu0 %v83
    %3913 = vmatpush1.msra.mxu0 %v82
    %3914 = vmatprep.subr.mxu0 %v75
    %3915 = vmatpush1.msra.mxu0 %v74
    %3916 = vmatprep.subr.mxu0 %v323
    %3917 = vmatpush2.msra.mxu0 %v322
    %3918 = vmatprep.subr.mxu0 %v315
    %3919 = vmatpush2.msra.mxu0 %v314
    %3920 = vmatprep.subr.mxu0 %v307
    %3921 = vmatpush2.msra.mxu0 %v306
    %3922 = vmatprep.subr.mxu0 %v299
    %3923 = vmatpush2.msra.mxu0 %v298
    %3924 = vmatprep.subr.mxu0 %v291
    %3925 = vmatpush2.msra.mxu0 %v290
    %3926 = vmatprep.subr.mxu0 %v283
    %3927 = vmatpush2.msra.mxu0 %v282
    %3928 = vmatprep.subr.mxu0 %v275
    %3929 = vmatpush2.msra.mxu0 %v274
    %3930 = vmatprep.subr.mxu0 %v267
    %3931 = vmatpush2.msra.mxu0 %v266
    %3932 = vmatprep.subr.mxu0 %v259
    %3933 = vmatpush2.msra.mxu0 %v258
    %3934 = vmatprep.subr.mxu0 %v251
    %3935 = vmatpush2.msra.mxu0 %v250
    %3936 = vmatprep.subr.mxu0 %v243
    %3937 = vmatpush2.msra.mxu0 %v242
    %3938 = vmatprep.subr.mxu0 %v235
    %3939 = vmatpush2.msra.mxu0 %v234
    %3940 = vmatprep.subr.mxu0 %v227
    %3941 = vmatpush2.msra.mxu0 %v226
    %3942 = vmatprep.subr.mxu0 %v219
    %3943 = vmatpush2.msra.mxu0 %v218
    %3944 = vmatprep.subr.mxu0 %v211
    %3945 = vmatpush2.msra.mxu0 %v210
    %3946 = vmatprep.subr.mxu0 %v203
    %3947 = vmatpush2.msra.mxu0 %v202
    %3948 = vmatprep.mubr.f32.mxu0 %v3859
    %3949 = vmatmul.mubr.f32.gmra.mxu0 %v3858
    %v3950 = vpop.f32.mrf.mxu0
    %v3951 = vadd.f32 0.0, %v3950
    %v3952 = vpop.f32.mrf.mxu0
    %v3953 = vadd.f32 0.0, %v3952
    %3954 = vmatprep.mubr.f32.mxu0 %v3861
    %3955 = vmatmul.mubr.f32.gmra.mxu0 %v3860
    %v3956 = vpop.f32.mrf.mxu0
    %v3957 = vadd.f32 0.0, %v3956
    %v3958 = vpop.f32.mrf.mxu0
    %v3959 = vadd.f32 0.0, %v3958
    %3960 = vdwg.mxu0
    %3961 = vmatprep.subr.mxu0 %v197
    %3962 = vmatpush1.msra.mxu0 %v196
    %3963 = vmatprep.subr.mxu0 %v189
    %3964 = vmatpush1.msra.mxu0 %v188
    %3965 = vmatprep.subr.mxu0 %v181
    %3966 = vmatpush1.msra.mxu0 %v180
    %3967 = vmatprep.subr.mxu0 %v173
    %3968 = vmatpush1.msra.mxu0 %v172
    %3969 = vmatprep.subr.mxu0 %v165
    %3970 = vmatpush1.msra.mxu0 %v164
    %3971 = vmatprep.subr.mxu0 %v157
    %3972 = vmatpush1.msra.mxu0 %v156
    %3973 = vmatprep.subr.mxu0 %v149
    %3974 = vmatpush1.msra.mxu0 %v148
    %3975 = vmatprep.subr.mxu0 %v141
    %3976 = vmatpush1.msra.mxu0 %v140
    %3977 = vmatprep.subr.mxu0 %v133
    %3978 = vmatpush1.msra.mxu0 %v132
    %3979 = vmatprep.subr.mxu0 %v125
    %3980 = vmatpush1.msra.mxu0 %v124
    %3981 = vmatprep.subr.mxu0 %v117
    %3982 = vmatpush1.msra.mxu0 %v116
    %3983 = vmatprep.subr.mxu0 %v109
    %3984 = vmatpush1.msra.mxu0 %v108
    %3985 = vmatprep.subr.mxu0 %v101
    %3986 = vmatpush1.msra.mxu0 %v100
    %3987 = vmatprep.subr.mxu0 %v93
    %3988 = vmatpush1.msra.mxu0 %v92
    %3989 = vmatprep.subr.mxu0 %v85
    %3990 = vmatpush1.msra.mxu0 %v84
    %3991 = vmatprep.subr.mxu0 %v77
    %3992 = vmatpush1.msra.mxu0 %v76
    %3993 = vmatprep.subr.mxu0 %v325
    %3994 = vmatpush2.msra.mxu0 %v324
    %3995 = vmatprep.subr.mxu0 %v317
    %3996 = vmatpush2.msra.mxu0 %v316
    %3997 = vmatprep.subr.mxu0 %v309
    %3998 = vmatpush2.msra.mxu0 %v308
    %3999 = vmatprep.subr.mxu0 %v301
    %4000 = vmatpush2.msra.mxu0 %v300
    %4001 = vmatprep.subr.mxu0 %v293
    %4002 = vmatpush2.msra.mxu0 %v292
    %4003 = vmatprep.subr.mxu0 %v285
    %4004 = vmatpush2.msra.mxu0 %v284
    %4005 = vmatprep.subr.mxu0 %v277
    %4006 = vmatpush2.msra.mxu0 %v276
    %4007 = vmatprep.subr.mxu0 %v269
    %4008 = vmatpush2.msra.mxu0 %v268
    %4009 = vmatprep.subr.mxu0 %v261
    %4010 = vmatpush2.msra.mxu0 %v260
    %4011 = vmatprep.subr.mxu0 %v253
    %4012 = vmatpush2.msra.mxu0 %v252
    %4013 = vmatprep.subr.mxu0 %v245
    %4014 = vmatpush2.msra.mxu0 %v244
    %4015 = vmatprep.subr.mxu0 %v237
    %4016 = vmatpush2.msra.mxu0 %v236
    %4017 = vmatprep.subr.mxu0 %v229
    %4018 = vmatpush2.msra.mxu0 %v228
    %4019 = vmatprep.subr.mxu0 %v221
    %4020 = vmatpush2.msra.mxu0 %v220
    %4021 = vmatprep.subr.mxu0 %v213
    %4022 = vmatpush2.msra.mxu0 %v212
    %4023 = vmatprep.subr.mxu0 %v205
    %4024 = vmatpush2.msra.mxu0 %v204
    %4025 = vmatprep.mubr.f32.mxu0 %v3859
    %4026 = vmatmul.mubr.f32.gmra.mxu0 %v3858
    %v4027 = vpop.f32.mrf.mxu0
    %v4028 = vadd.f32 0.0, %v4027
    %v4029 = vpop.f32.mrf.mxu0
    %v4030 = vadd.f32 0.0, %v4029
    %4031 = vmatprep.mubr.f32.mxu0 %v3861
    %4032 = vmatmul.mubr.f32.gmra.mxu0 %v3860
    %v4033 = vpop.f32.mrf.mxu0
    %v4034 = vadd.f32 0.0, %v4033
    %v4035 = vpop.f32.mrf.mxu0
    %v4036 = vadd.f32 0.0, %v4035
    %4037 = vdwg.mxu0
    %4038 = vmatprep.subr.mxu0 %v199
    %4039 = vmatpush1.msra.mxu0 %v198
    %4040 = vmatprep.subr.mxu0 %v191
    %4041 = vmatpush1.msra.mxu0 %v190
    %4042 = vmatprep.subr.mxu0 %v183
    %4043 = vmatpush1.msra.mxu0 %v182
    %4044 = vmatprep.subr.mxu0 %v175
    %4045 = vmatpush1.msra.mxu0 %v174
    %4046 = vmatprep.subr.mxu0 %v167
    %4047 = vmatpush1.msra.mxu0 %v166
    %4048 = vmatprep.subr.mxu0 %v159
    %4049 = vmatpush1.msra.mxu0 %v158
    %4050 = vmatprep.subr.mxu0 %v151
    %4051 = vmatpush1.msra.mxu0 %v150
    %4052 = vmatprep.subr.mxu0 %v143
    %4053 = vmatpush1.msra.mxu0 %v142
    %4054 = vmatprep.subr.mxu0 %v135
    %4055 = vmatpush1.msra.mxu0 %v134
    %4056 = vmatprep.subr.mxu0 %v127
    %4057 = vmatpush1.msra.mxu0 %v126
    %4058 = vmatprep.subr.mxu0 %v119
    %4059 = vmatpush1.msra.mxu0 %v118
    %4060 = vmatprep.subr.mxu0 %v111
    %4061 = vmatpush1.msra.mxu0 %v110
    %4062 = vmatprep.subr.mxu0 %v103
    %4063 = vmatpush1.msra.mxu0 %v102
    %4064 = vmatprep.subr.mxu0 %v95
    %4065 = vmatpush1.msra.mxu0 %v94
    %4066 = vmatprep.subr.mxu0 %v87
    %4067 = vmatpush1.msra.mxu0 %v86
    %4068 = vmatprep.subr.mxu0 %v79
    %4069 = vmatpush1.msra.mxu0 %v78
    %4070 = vmatprep.subr.mxu0 %v327
    %4071 = vmatpush2.msra.mxu0 %v326
    %4072 = vmatprep.subr.mxu0 %v319
    %4073 = vmatpush2.msra.mxu0 %v318
    %4074 = vmatprep.subr.mxu0 %v311
    %4075 = vmatpush2.msra.mxu0 %v310
    %4076 = vmatprep.subr.mxu0 %v303
    %4077 = vmatpush2.msra.mxu0 %v302
    %4078 = vmatprep.subr.mxu0 %v295
    %4079 = vmatpush2.msra.mxu0 %v294
    %4080 = vmatprep.subr.mxu0 %v287
    %4081 = vmatpush2.msra.mxu0 %v286
    %4082 = vmatprep.subr.mxu0 %v279
    %4083 = vmatpush2.msra.mxu0 %v278
    %4084 = vmatprep.subr.mxu0 %v271
    %4085 = vmatpush2.msra.mxu0 %v270
    %4086 = vmatprep.subr.mxu0 %v263
    %4087 = vmatpush2.msra.mxu0 %v262
    %4088 = vmatprep.subr.mxu0 %v255
    %4089 = vmatpush2.msra.mxu0 %v254
    %4090 = vmatprep.subr.mxu0 %v247
    %4091 = vmatpush2.msra.mxu0 %v246
    %4092 = vmatprep.subr.mxu0 %v239
    %4093 = vmatpush2.msra.mxu0 %v238
    %4094 = vmatprep.subr.mxu0 %v231
    %4095 = vmatpush2.msra.mxu0 %v230
    %4096 = vmatprep.subr.mxu0 %v223
    %4097 = vmatpush2.msra.mxu0 %v222
    %4098 = vmatprep.subr.mxu0 %v215
    %4099 = vmatpush2.msra.mxu0 %v214
    %4100 = vmatprep.subr.mxu0 %v207
    %4101 = vmatpush2.msra.mxu0 %v206
    %4102 = vmatprep.mubr.f32.mxu0 %v3859
    %4103 = vmatmul.mubr.f32.gmra.mxu0 %v3858
    %v4104 = vpop.f32.mrf.mxu0
    %v4105 = vadd.f32 0.0, %v4104
    %v4106 = vpop.f32.mrf.mxu0
    %v4107 = vadd.f32 0.0, %v4106
    %4108 = vmatprep.mubr.f32.mxu0 %v3861
    %4109 = vmatmul.mubr.f32.gmra.mxu0 %v3860
    %v4110 = vpop.f32.mrf.mxu0
    %v4111 = vadd.f32 0.0, %v4110
    %v4112 = vpop.f32.mrf.mxu0
    %v4113 = vadd.f32 0.0, %v4112
    %4114 = vdwg.mxu0
    %4115 = vmatprep.subr.mxu0 %v201
    %4116 = vmatpush1.msra.mxu0 %v200
    %4117 = vmatprep.subr.mxu0 %v193
    %4118 = vmatpush1.msra.mxu0 %v192
    %4119 = vmatprep.subr.mxu0 %v185
    %4120 = vmatpush1.msra.mxu0 %v184
    %4121 = vmatprep.subr.mxu0 %v177
    %4122 = vmatpush1.msra.mxu0 %v176
    %4123 = vmatprep.subr.mxu0 %v169
    %4124 = vmatpush1.msra.mxu0 %v168
    %4125 = vmatprep.subr.mxu0 %v161
    %4126 = vmatpush1.msra.mxu0 %v160
    %4127 = vmatprep.subr.mxu0 %v153
    %4128 = vmatpush1.msra.mxu0 %v152
    %4129 = vmatprep.subr.mxu0 %v145
    %4130 = vmatpush1.msra.mxu0 %v144
    %4131 = vmatprep.subr.mxu0 %v137
    %4132 = vmatpush1.msra.mxu0 %v136
    %4133 = vmatprep.subr.mxu0 %v129
    %4134 = vmatpush1.msra.mxu0 %v128
    %4135 = vmatprep.subr.mxu0 %v121
    %4136 = vmatpush1.msra.mxu0 %v120
    %4137 = vmatprep.subr.mxu0 %v113
    %4138 = vmatpush1.msra.mxu0 %v112
    %4139 = vmatprep.subr.mxu0 %v105
    %4140 = vmatpush1.msra.mxu0 %v104
    %4141 = vmatprep.subr.mxu0 %v97
    %4142 = vmatpush1.msra.mxu0 %v96
    %4143 = vmatprep.subr.mxu0 %v89
    %4144 = vmatpush1.msra.mxu0 %v88
    %4145 = vmatprep.subr.mxu0 %v81
    %4146 = vmatpush1.msra.mxu0 %v80
    %4147 = vmatprep.subr.mxu0 %v329
    %4148 = vmatpush2.msra.mxu0 %v328
    %4149 = vmatprep.subr.mxu0 %v321
    %4150 = vmatpush2.msra.mxu0 %v320
    %4151 = vmatprep.subr.mxu0 %v313
    %4152 = vmatpush2.msra.mxu0 %v312
    %4153 = vmatprep.subr.mxu0 %v305
    %4154 = vmatpush2.msra.mxu0 %v304
    %4155 = vmatprep.subr.mxu0 %v297
    %4156 = vmatpush2.msra.mxu0 %v296
    %4157 = vmatprep.subr.mxu0 %v289
    %4158 = vmatpush2.msra.mxu0 %v288
    %4159 = vmatprep.subr.mxu0 %v281
    %4160 = vmatpush2.msra.mxu0 %v280
    %4161 = vmatprep.subr.mxu0 %v273
    %4162 = vmatpush2.msra.mxu0 %v272
    %4163 = vmatprep.subr.mxu0 %v265
    %4164 = vmatpush2.msra.mxu0 %v264
    %4165 = vmatprep.subr.mxu0 %v257
    %4166 = vmatpush2.msra.mxu0 %v256
    %4167 = vmatprep.subr.mxu0 %v249
    %4168 = vmatpush2.msra.mxu0 %v248
    %4169 = vmatprep.subr.mxu0 %v241
    %4170 = vmatpush2.msra.mxu0 %v240
    %4171 = vmatprep.subr.mxu0 %v233
    %4172 = vmatpush2.msra.mxu0 %v232
    %4173 = vmatprep.subr.mxu0 %v225
    %4174 = vmatpush2.msra.mxu0 %v224
    %4175 = vmatprep.subr.mxu0 %v217
    %4176 = vmatpush2.msra.mxu0 %v216
    %4177 = vmatprep.subr.mxu0 %v209
    %4178 = vmatpush2.msra.mxu0 %v208
    %4179 = vmatprep.mubr.f32.mxu0 %v3859
    %4180 = vmatmul.mubr.f32.gmra.mxu0 %v3858
    %v4181 = vpop.f32.mrf.mxu0
    %v4182 = vadd.f32 0.0, %v4181
    %v4183 = vpop.f32.mrf.mxu0
    %v4184 = vadd.f32 0.0, %v4183
    %4185 = vmatprep.mubr.f32.mxu0 %v3861
    %4186 = vmatmul.mubr.f32.gmra.mxu0 %v3860
    %v4187 = vpop.f32.mrf.mxu0
    %v4188 = vadd.f32 0.0, %v4187
    %v4189 = vpop.f32.mrf.mxu0
    %v4190 = vadd.f32 0.0, %v4189
    %4191 = vdwg.mxu0
    %v4192 = vadd.f32 %v3868, %v3951
    %v4193 = vadd.f32 %v3869, %v3953
    %v4194 = vadd.f32 %v3870, %v4028
    %v4195 = vadd.f32 %v3871, %v4030
    %v4196 = vadd.f32 %v3872, %v4105
    %v4197 = vadd.f32 %v3873, %v4107
    %v4198 = vadd.f32 %v3874, %v4182
    %v4199 = vadd.f32 %v3875, %v4184
    %v4200 = vadd.f32 %v3876, %v3957
    %v4201 = vadd.f32 %v3877, %v3959
    %v4202 = vadd.f32 %v3878, %v4034
    %v4203 = vadd.f32 %v3879, %v4036
    %v4204 = vadd.f32 %v3880, %v4111
    %v4205 = vadd.f32 %v3881, %v4113
    %v4206 = vadd.f32 %v3882, %v4188
    %v4207 = vadd.f32 %v3883, %v4190
    %v4208 = vxor.u32 %v4192, 2147483648
    %v4209 = vxor.u32 %v4193, 2147483648
    %v4210 = vxor.u32 %v4200, 2147483648
    %v4211 = vxor.u32 %v4201, 2147483648
    %v4212 = vmul.f32 %v4208, 1.442695
    %v4213 = vpow.pop %v4212
    %v4214 = vmul.f32 %v4209, 1.442695
    %v4215 = vpow.pop %v4214
    %v4216 = vmul.f32 %v4210, 1.442695
    %v4217 = vpow.pop %v4216
    %v4218 = vmul.f32 %v4211, 1.442695
    %v4219 = vpow.pop %v4218
    %v4220 = vadd.f32 %v4213, 1.0
    %v4221 = vadd.f32 %v4215, 1.0
    %v4222 = vadd.f32 %v4217, 1.0
    %v4223 = vadd.f32 %v4219, 1.0
    %v4224 = vrcp.pop %v4220
    %v4225 = vmul.f32 1.0, %v4224
    %v4226 = vrcp.pop %v4221
    %v4227 = vmul.f32 1.0, %v4226
    %v4228 = vrcp.pop %v4222
    %v4229 = vmul.f32 1.0, %v4228
    %v4230 = vrcp.pop %v4223
    %v4231 = vmul.f32 1.0, %v4230
    %v4232 = vxor.u32 %v4194, 2147483648
    %v4233 = vxor.u32 %v4195, 2147483648
    %v4234 = vxor.u32 %v4202, 2147483648
    %v4235 = vxor.u32 %v4203, 2147483648
    %v4236 = vmul.f32 %v4232, 1.442695
    %v4237 = vpow.pop %v4236
    %v4238 = vmul.f32 %v4233, 1.442695
    %v4239 = vpow.pop %v4238
    %v4240 = vmul.f32 %v4234, 1.442695
    %v4241 = vpow.pop %v4240
    %v4242 = vmul.f32 %v4235, 1.442695
    %v4243 = vpow.pop %v4242
    %v4244 = vadd.f32 %v4237, 1.0
    %v4245 = vadd.f32 %v4239, 1.0
    %v4246 = vadd.f32 %v4241, 1.0
    %v4247 = vadd.f32 %v4243, 1.0
    %v4248 = vrcp.pop %v4244
    %v4249 = vmul.f32 1.0, %v4248
    %v4250 = vrcp.pop %v4245
    %v4251 = vmul.f32 1.0, %v4250
    %v4252 = vrcp.pop %v4246
    %v4253 = vmul.f32 1.0, %v4252
    %v4254 = vrcp.pop %v4247
    %v4255 = vmul.f32 1.0, %v4254
    %v4256 = vtanh.pop %v4196
    %v4257 = vtanh.pop %v4197
    %v4258 = vtanh.pop %v4204
    %v4259 = vtanh.pop %v4205
    %v4260 = vxor.u32 %v4198, 2147483648
    %v4261 = vxor.u32 %v4199, 2147483648
    %v4262 = vxor.u32 %v4206, 2147483648
    %v4263 = vxor.u32 %v4207, 2147483648
    %v4264 = vmul.f32 %v4260, 1.442695
    %v4265 = vpow.pop %v4264
    %v4266 = vmul.f32 %v4261, 1.442695
    %v4267 = vpow.pop %v4266
    %v4268 = vmul.f32 %v4262, 1.442695
    %v4269 = vpow.pop %v4268
    %v4270 = vmul.f32 %v4263, 1.442695
    %v4271 = vpow.pop %v4270
    %v4272 = vadd.f32 %v4265, 1.0
    %v4273 = vadd.f32 %v4267, 1.0
    %v4274 = vadd.f32 %v4269, 1.0
    %v4275 = vadd.f32 %v4271, 1.0
    %v4276 = vrcp.pop %v4272
    %v4277 = vmul.f32 1.0, %v4276
    %v4278 = vrcp.pop %v4273
    %v4279 = vmul.f32 1.0, %v4278
    %v4280 = vrcp.pop %v4274
    %v4281 = vmul.f32 1.0, %v4280
    %v4282 = vrcp.pop %v4275
    %v4283 = vmul.f32 1.0, %v4282
    %v4284 = vmul.f32 %v4249, %v3850
    %v4285 = vmul.f32 %v4251, %v3851
    %v4286 = vmul.f32 %v4253, %v3852
    %v4287 = vmul.f32 %v4255, %v3853
    %v4288 = vmul.f32 %v4225, %v4256
    %v4289 = vmul.f32 %v4227, %v4257
    %v4290 = vmul.f32 %v4229, %v4258
    %v4291 = vmul.f32 %v4231, %v4259
    %v4292 = vadd.f32 %v4284, %v4288
    %v4293 = vadd.f32 %v4285, %v4289
    %v4294 = vadd.f32 %v4286, %v4290
    %v4295 = vadd.f32 %v4287, %v4291
    %v4296 = vtanh.pop %v4292
    %v4297 = vtanh.pop %v4293
    %v4298 = vtanh.pop %v4294
    %v4299 = vtanh.pop %v4295
    %v4300 = vmul.f32 %v4277, %v4296
    %v4301 = vmul.f32 %v4279, %v4297
    %v4302 = vmul.f32 %v4281, %v4298
    %v4303 = vmul.f32 %v4283, %v4299
    %s4304 = scalar_lea.vmem %s4, 192
    %4305 = vst [vmem:[%s4304] sm:$0xff] %v4300
    %4306 = vst [vmem:[%s4304 + $0x8] sm:$0xff] %v4301
    %4307 = vst [vmem:[%s4304 + $0x10] sm:$0xff] %v4302
    %4308 = vst [vmem:[%s4304 + $0x18] sm:$0xff] %v4303
    %s4309 = scalar_lea.vmem [#allocation4], 896
    %v4310 = vld [vmem:[%s4309] sm:$0xff]
    %v4311 = vld [vmem:[%s4309 + $0x8] sm:$0xff]
    %v4312 = vld [vmem:[%s4309 + $0x10] sm:$0xff]
    %v4313 = vld [vmem:[%s4309 + $0x18] sm:$0xff]
    %v4314 = vld [vmem:[%s4309 + $0x20] sm:$0xff]
    %v4315 = vld [vmem:[%s4309 + $0x28] sm:$0xff]
    %v4316 = vld [vmem:[%s4309 + $0x30] sm:$0xff]
    %v4317 = vld [vmem:[%s4309 + $0x38] sm:$0xff]
    %v4318 = vld [vmem:[%s4309 + $0x40] sm:$0xff]
    %v4319 = vld [vmem:[%s4309 + $0x48] sm:$0xff]
    %v4320 = vld [vmem:[%s4309 + $0x50] sm:$0xff]
    %v4321 = vld [vmem:[%s4309 + $0x58] sm:$0xff]
    %v4322 = vld [vmem:[%s4309 + $0x60] sm:$0xff]
    %v4323 = vld [vmem:[%s4309 + $0x68] sm:$0xff]
    %v4324 = vld [vmem:[%s4309 + $0x70] sm:$0xff]
    %v4325 = vld [vmem:[%s4309 + $0x78] sm:$0xff]
    %4326 = vmatprep.subr.mxu0 %v195
    %4327 = vmatpush1.msra.mxu0 %v194
    %4328 = vmatprep.subr.mxu0 %v187
    %4329 = vmatpush1.msra.mxu0 %v186
    %4330 = vmatprep.subr.mxu0 %v179
    %4331 = vmatpush1.msra.mxu0 %v178
    %4332 = vmatprep.subr.mxu0 %v171
    %4333 = vmatpush1.msra.mxu0 %v170
    %4334 = vmatprep.subr.mxu0 %v163
    %4335 = vmatpush1.msra.mxu0 %v162
    %4336 = vmatprep.subr.mxu0 %v155
    %4337 = vmatpush1.msra.mxu0 %v154
    %4338 = vmatprep.subr.mxu0 %v147
    %4339 = vmatpush1.msra.mxu0 %v146
    %4340 = vmatprep.subr.mxu0 %v139
    %4341 = vmatpush1.msra.mxu0 %v138
    %4342 = vmatprep.subr.mxu0 %v131
    %4343 = vmatpush1.msra.mxu0 %v130
    %4344 = vmatprep.subr.mxu0 %v123
    %4345 = vmatpush1.msra.mxu0 %v122
    %4346 = vmatprep.subr.mxu0 %v115
    %4347 = vmatpush1.msra.mxu0 %v114
    %4348 = vmatprep.subr.mxu0 %v107
    %4349 = vmatpush1.msra.mxu0 %v106
    %4350 = vmatprep.subr.mxu0 %v99
    %4351 = vmatpush1.msra.mxu0 %v98
    %4352 = vmatprep.subr.mxu0 %v91
    %4353 = vmatpush1.msra.mxu0 %v90
    %4354 = vmatprep.subr.mxu0 %v83
    %4355 = vmatpush1.msra.mxu0 %v82
    %4356 = vmatprep.subr.mxu0 %v75
    %4357 = vmatpush1.msra.mxu0 %v74
    %4358 = vmatprep.subr.mxu0 %v323
    %4359 = vmatpush2.msra.mxu0 %v322
    %4360 = vmatprep.subr.mxu0 %v315
    %4361 = vmatpush2.msra.mxu0 %v314
    %4362 = vmatprep.subr.mxu0 %v307
    %4363 = vmatpush2.msra.mxu0 %v306
    %4364 = vmatprep.subr.mxu0 %v299
    %4365 = vmatpush2.msra.mxu0 %v298
    %4366 = vmatprep.subr.mxu0 %v291
    %4367 = vmatpush2.msra.mxu0 %v290
    %4368 = vmatprep.subr.mxu0 %v283
    %4369 = vmatpush2.msra.mxu0 %v282
    %4370 = vmatprep.subr.mxu0 %v275
    %4371 = vmatpush2.msra.mxu0 %v274
    %4372 = vmatprep.subr.mxu0 %v267
    %4373 = vmatpush2.msra.mxu0 %v266
    %4374 = vmatprep.subr.mxu0 %v259
    %4375 = vmatpush2.msra.mxu0 %v258
    %4376 = vmatprep.subr.mxu0 %v251
    %4377 = vmatpush2.msra.mxu0 %v250
    %4378 = vmatprep.subr.mxu0 %v243
    %4379 = vmatpush2.msra.mxu0 %v242
    %4380 = vmatprep.subr.mxu0 %v235
    %4381 = vmatpush2.msra.mxu0 %v234
    %4382 = vmatprep.subr.mxu0 %v227
    %4383 = vmatpush2.msra.mxu0 %v226
    %4384 = vmatprep.subr.mxu0 %v219
    %4385 = vmatpush2.msra.mxu0 %v218
    %4386 = vmatprep.subr.mxu0 %v211
    %4387 = vmatpush2.msra.mxu0 %v210
    %4388 = vmatprep.subr.mxu0 %v203
    %4389 = vmatpush2.msra.mxu0 %v202
    %4390 = vmatprep.mubr.f32.mxu0 %v4301
    %4391 = vmatmul.mubr.f32.gmra.mxu0 %v4300
    %v4392 = vpop.f32.mrf.mxu0
    %v4393 = vadd.f32 0.0, %v4392
    %v4394 = vpop.f32.mrf.mxu0
    %v4395 = vadd.f32 0.0, %v4394
    %4396 = vmatprep.mubr.f32.mxu0 %v4303
    %4397 = vmatmul.mubr.f32.gmra.mxu0 %v4302
    %v4398 = vpop.f32.mrf.mxu0
    %v4399 = vadd.f32 0.0, %v4398
    %v4400 = vpop.f32.mrf.mxu0
    %v4401 = vadd.f32 0.0, %v4400
    %4402 = vdwg.mxu0
    %4403 = vmatprep.subr.mxu0 %v197
    %4404 = vmatpush1.msra.mxu0 %v196
    %4405 = vmatprep.subr.mxu0 %v189
    %4406 = vmatpush1.msra.mxu0 %v188
    %4407 = vmatprep.subr.mxu0 %v181
    %4408 = vmatpush1.msra.mxu0 %v180
    %4409 = vmatprep.subr.mxu0 %v173
    %4410 = vmatpush1.msra.mxu0 %v172
    %4411 = vmatprep.subr.mxu0 %v165
    %4412 = vmatpush1.msra.mxu0 %v164
    %4413 = vmatprep.subr.mxu0 %v157
    %4414 = vmatpush1.msra.mxu0 %v156
    %4415 = vmatprep.subr.mxu0 %v149
    %4416 = vmatpush1.msra.mxu0 %v148
    %4417 = vmatprep.subr.mxu0 %v141
    %4418 = vmatpush1.msra.mxu0 %v140
    %4419 = vmatprep.subr.mxu0 %v133
    %4420 = vmatpush1.msra.mxu0 %v132
    %4421 = vmatprep.subr.mxu0 %v125
    %4422 = vmatpush1.msra.mxu0 %v124
    %4423 = vmatprep.subr.mxu0 %v117
    %4424 = vmatpush1.msra.mxu0 %v116
    %4425 = vmatprep.subr.mxu0 %v109
    %4426 = vmatpush1.msra.mxu0 %v108
    %4427 = vmatprep.subr.mxu0 %v101
    %4428 = vmatpush1.msra.mxu0 %v100
    %4429 = vmatprep.subr.mxu0 %v93
    %4430 = vmatpush1.msra.mxu0 %v92
    %4431 = vmatprep.subr.mxu0 %v85
    %4432 = vmatpush1.msra.mxu0 %v84
    %4433 = vmatprep.subr.mxu0 %v77
    %4434 = vmatpush1.msra.mxu0 %v76
    %4435 = vmatprep.subr.mxu0 %v325
    %4436 = vmatpush2.msra.mxu0 %v324
    %4437 = vmatprep.subr.mxu0 %v317
    %4438 = vmatpush2.msra.mxu0 %v316
    %4439 = vmatprep.subr.mxu0 %v309
    %4440 = vmatpush2.msra.mxu0 %v308
    %4441 = vmatprep.subr.mxu0 %v301
    %4442 = vmatpush2.msra.mxu0 %v300
    %4443 = vmatprep.subr.mxu0 %v293
    %4444 = vmatpush2.msra.mxu0 %v292
    %4445 = vmatprep.subr.mxu0 %v285
    %4446 = vmatpush2.msra.mxu0 %v284
    %4447 = vmatprep.subr.mxu0 %v277
    %4448 = vmatpush2.msra.mxu0 %v276
    %4449 = vmatprep.subr.mxu0 %v269
    %4450 = vmatpush2.msra.mxu0 %v268
    %4451 = vmatprep.subr.mxu0 %v261
    %4452 = vmatpush2.msra.mxu0 %v260
    %4453 = vmatprep.subr.mxu0 %v253
    %4454 = vmatpush2.msra.mxu0 %v252
    %4455 = vmatprep.subr.mxu0 %v245
    %4456 = vmatpush2.msra.mxu0 %v244
    %4457 = vmatprep.subr.mxu0 %v237
    %4458 = vmatpush2.msra.mxu0 %v236
    %4459 = vmatprep.subr.mxu0 %v229
    %4460 = vmatpush2.msra.mxu0 %v228
    %4461 = vmatprep.subr.mxu0 %v221
    %4462 = vmatpush2.msra.mxu0 %v220
    %4463 = vmatprep.subr.mxu0 %v213
    %4464 = vmatpush2.msra.mxu0 %v212
    %4465 = vmatprep.subr.mxu0 %v205
    %4466 = vmatpush2.msra.mxu0 %v204
    %4467 = vmatprep.mubr.f32.mxu0 %v4301
    %4468 = vmatmul.mubr.f32.gmra.mxu0 %v4300
    %v4469 = vpop.f32.mrf.mxu0
    %v4470 = vadd.f32 0.0, %v4469
    %v4471 = vpop.f32.mrf.mxu0
    %v4472 = vadd.f32 0.0, %v4471
    %4473 = vmatprep.mubr.f32.mxu0 %v4303
    %4474 = vmatmul.mubr.f32.gmra.mxu0 %v4302
    %v4475 = vpop.f32.mrf.mxu0
    %v4476 = vadd.f32 0.0, %v4475
    %v4477 = vpop.f32.mrf.mxu0
    %v4478 = vadd.f32 0.0, %v4477
    %4479 = vdwg.mxu0
    %4480 = vmatprep.subr.mxu0 %v199
    %4481 = vmatpush1.msra.mxu0 %v198
    %4482 = vmatprep.subr.mxu0 %v191
    %4483 = vmatpush1.msra.mxu0 %v190
    %4484 = vmatprep.subr.mxu0 %v183
    %4485 = vmatpush1.msra.mxu0 %v182
    %4486 = vmatprep.subr.mxu0 %v175
    %4487 = vmatpush1.msra.mxu0 %v174
    %4488 = vmatprep.subr.mxu0 %v167
    %4489 = vmatpush1.msra.mxu0 %v166
    %4490 = vmatprep.subr.mxu0 %v159
    %4491 = vmatpush1.msra.mxu0 %v158
    %4492 = vmatprep.subr.mxu0 %v151
    %4493 = vmatpush1.msra.mxu0 %v150
    %4494 = vmatprep.subr.mxu0 %v143
    %4495 = vmatpush1.msra.mxu0 %v142
    %4496 = vmatprep.subr.mxu0 %v135
    %4497 = vmatpush1.msra.mxu0 %v134
    %4498 = vmatprep.subr.mxu0 %v127
    %4499 = vmatpush1.msra.mxu0 %v126
    %4500 = vmatprep.subr.mxu0 %v119
    %4501 = vmatpush1.msra.mxu0 %v118
    %4502 = vmatprep.subr.mxu0 %v111
    %4503 = vmatpush1.msra.mxu0 %v110
    %4504 = vmatprep.subr.mxu0 %v103
    %4505 = vmatpush1.msra.mxu0 %v102
    %4506 = vmatprep.subr.mxu0 %v95
    %4507 = vmatpush1.msra.mxu0 %v94
    %4508 = vmatprep.subr.mxu0 %v87
    %4509 = vmatpush1.msra.mxu0 %v86
    %4510 = vmatprep.subr.mxu0 %v79
    %4511 = vmatpush1.msra.mxu0 %v78
    %4512 = vmatprep.subr.mxu0 %v327
    %4513 = vmatpush2.msra.mxu0 %v326
    %4514 = vmatprep.subr.mxu0 %v319
    %4515 = vmatpush2.msra.mxu0 %v318
    %4516 = vmatprep.subr.mxu0 %v311
    %4517 = vmatpush2.msra.mxu0 %v310
    %4518 = vmatprep.subr.mxu0 %v303
    %4519 = vmatpush2.msra.mxu0 %v302
    %4520 = vmatprep.subr.mxu0 %v295
    %4521 = vmatpush2.msra.mxu0 %v294
    %4522 = vmatprep.subr.mxu0 %v287
    %4523 = vmatpush2.msra.mxu0 %v286
    %4524 = vmatprep.subr.mxu0 %v279
    %4525 = vmatpush2.msra.mxu0 %v278
    %4526 = vmatprep.subr.mxu0 %v271
    %4527 = vmatpush2.msra.mxu0 %v270
    %4528 = vmatprep.subr.mxu0 %v263
    %4529 = vmatpush2.msra.mxu0 %v262
    %4530 = vmatprep.subr.mxu0 %v255
    %4531 = vmatpush2.msra.mxu0 %v254
    %4532 = vmatprep.subr.mxu0 %v247
    %4533 = vmatpush2.msra.mxu0 %v246
    %4534 = vmatprep.subr.mxu0 %v239
    %4535 = vmatpush2.msra.mxu0 %v238
    %4536 = vmatprep.subr.mxu0 %v231
    %4537 = vmatpush2.msra.mxu0 %v230
    %4538 = vmatprep.subr.mxu0 %v223
    %4539 = vmatpush2.msra.mxu0 %v222
    %4540 = vmatprep.subr.mxu0 %v215
    %4541 = vmatpush2.msra.mxu0 %v214
    %4542 = vmatprep.subr.mxu0 %v207
    %4543 = vmatpush2.msra.mxu0 %v206
    %4544 = vmatprep.mubr.f32.mxu0 %v4301
    %4545 = vmatmul.mubr.f32.gmra.mxu0 %v4300
    %v4546 = vpop.f32.mrf.mxu0
    %v4547 = vadd.f32 0.0, %v4546
    %v4548 = vpop.f32.mrf.mxu0
    %v4549 = vadd.f32 0.0, %v4548
    %4550 = vmatprep.mubr.f32.mxu0 %v4303
    %4551 = vmatmul.mubr.f32.gmra.mxu0 %v4302
    %v4552 = vpop.f32.mrf.mxu0
    %v4553 = vadd.f32 0.0, %v4552
    %v4554 = vpop.f32.mrf.mxu0
    %v4555 = vadd.f32 0.0, %v4554
    %4556 = vdwg.mxu0
    %4557 = vmatprep.subr.mxu0 %v201
    %4558 = vmatpush1.msra.mxu0 %v200
    %4559 = vmatprep.subr.mxu0 %v193
    %4560 = vmatpush1.msra.mxu0 %v192
    %4561 = vmatprep.subr.mxu0 %v185
    %4562 = vmatpush1.msra.mxu0 %v184
    %4563 = vmatprep.subr.mxu0 %v177
    %4564 = vmatpush1.msra.mxu0 %v176
    %4565 = vmatprep.subr.mxu0 %v169
    %4566 = vmatpush1.msra.mxu0 %v168
    %4567 = vmatprep.subr.mxu0 %v161
    %4568 = vmatpush1.msra.mxu0 %v160
    %4569 = vmatprep.subr.mxu0 %v153
    %4570 = vmatpush1.msra.mxu0 %v152
    %4571 = vmatprep.subr.mxu0 %v145
    %4572 = vmatpush1.msra.mxu0 %v144
    %4573 = vmatprep.subr.mxu0 %v137
    %4574 = vmatpush1.msra.mxu0 %v136
    %4575 = vmatprep.subr.mxu0 %v129
    %4576 = vmatpush1.msra.mxu0 %v128
    %4577 = vmatprep.subr.mxu0 %v121
    %4578 = vmatpush1.msra.mxu0 %v120
    %4579 = vmatprep.subr.mxu0 %v113
    %4580 = vmatpush1.msra.mxu0 %v112
    %4581 = vmatprep.subr.mxu0 %v105
    %4582 = vmatpush1.msra.mxu0 %v104
    %4583 = vmatprep.subr.mxu0 %v97
    %4584 = vmatpush1.msra.mxu0 %v96
    %4585 = vmatprep.subr.mxu0 %v89
    %4586 = vmatpush1.msra.mxu0 %v88
    %4587 = vmatprep.subr.mxu0 %v81
    %4588 = vmatpush1.msra.mxu0 %v80
    %4589 = vmatprep.subr.mxu0 %v329
    %4590 = vmatpush2.msra.mxu0 %v328
    %4591 = vmatprep.subr.mxu0 %v321
    %4592 = vmatpush2.msra.mxu0 %v320
    %4593 = vmatprep.subr.mxu0 %v313
    %4594 = vmatpush2.msra.mxu0 %v312
    %4595 = vmatprep.subr.mxu0 %v305
    %4596 = vmatpush2.msra.mxu0 %v304
    %4597 = vmatprep.subr.mxu0 %v297
    %4598 = vmatpush2.msra.mxu0 %v296
    %4599 = vmatprep.subr.mxu0 %v289
    %4600 = vmatpush2.msra.mxu0 %v288
    %4601 = vmatprep.subr.mxu0 %v281
    %4602 = vmatpush2.msra.mxu0 %v280
    %4603 = vmatprep.subr.mxu0 %v273
    %4604 = vmatpush2.msra.mxu0 %v272
    %4605 = vmatprep.subr.mxu0 %v265
    %4606 = vmatpush2.msra.mxu0 %v264
    %4607 = vmatprep.subr.mxu0 %v257
    %4608 = vmatpush2.msra.mxu0 %v256
    %4609 = vmatprep.subr.mxu0 %v249
    %4610 = vmatpush2.msra.mxu0 %v248
    %4611 = vmatprep.subr.mxu0 %v241
    %4612 = vmatpush2.msra.mxu0 %v240
    %4613 = vmatprep.subr.mxu0 %v233
    %4614 = vmatpush2.msra.mxu0 %v232
    %4615 = vmatprep.subr.mxu0 %v225
    %4616 = vmatpush2.msra.mxu0 %v224
    %4617 = vmatprep.subr.mxu0 %v217
    %4618 = vmatpush2.msra.mxu0 %v216
    %4619 = vmatprep.subr.mxu0 %v209
    %4620 = vmatpush2.msra.mxu0 %v208
    %4621 = vmatprep.mubr.f32.mxu0 %v4301
    %4622 = vmatmul.mubr.f32.gmra.mxu0 %v4300
    %v4623 = vpop.f32.mrf.mxu0
    %v4624 = vadd.f32 0.0, %v4623
    %v4625 = vpop.f32.mrf.mxu0
    %v4626 = vadd.f32 0.0, %v4625
    %4627 = vmatprep.mubr.f32.mxu0 %v4303
    %4628 = vmatmul.mubr.f32.gmra.mxu0 %v4302
    %v4629 = vpop.f32.mrf.mxu0
    %v4630 = vadd.f32 0.0, %v4629
    %v4631 = vpop.f32.mrf.mxu0
    %v4632 = vadd.f32 0.0, %v4631
    %4633 = vdwg.mxu0
    %v4634 = vadd.f32 %v4310, %v4393
    %v4635 = vadd.f32 %v4311, %v4395
    %v4636 = vadd.f32 %v4312, %v4470
    %v4637 = vadd.f32 %v4313, %v4472
    %v4638 = vadd.f32 %v4314, %v4547
    %v4639 = vadd.f32 %v4315, %v4549
    %v4640 = vadd.f32 %v4316, %v4624
    %v4641 = vadd.f32 %v4317, %v4626
    %v4642 = vadd.f32 %v4318, %v4399
    %v4643 = vadd.f32 %v4319, %v4401
    %v4644 = vadd.f32 %v4320, %v4476
    %v4645 = vadd.f32 %v4321, %v4478
    %v4646 = vadd.f32 %v4322, %v4553
    %v4647 = vadd.f32 %v4323, %v4555
    %v4648 = vadd.f32 %v4324, %v4630
    %v4649 = vadd.f32 %v4325, %v4632
    %v4650 = vxor.u32 %v4634, 2147483648
    %v4651 = vxor.u32 %v4635, 2147483648
    %v4652 = vxor.u32 %v4642, 2147483648
    %v4653 = vxor.u32 %v4643, 2147483648
    %v4654 = vmul.f32 %v4650, 1.442695
    %v4655 = vpow.pop %v4654
    %v4656 = vmul.f32 %v4651, 1.442695
    %v4657 = vpow.pop %v4656
    %v4658 = vmul.f32 %v4652, 1.442695
    %v4659 = vpow.pop %v4658
    %v4660 = vmul.f32 %v4653, 1.442695
    %v4661 = vpow.pop %v4660
    %v4662 = vadd.f32 %v4655, 1.0
    %v4663 = vadd.f32 %v4657, 1.0
    %v4664 = vadd.f32 %v4659, 1.0
    %v4665 = vadd.f32 %v4661, 1.0
    %v4666 = vrcp.pop %v4662
    %v4667 = vmul.f32 1.0, %v4666
    %v4668 = vrcp.pop %v4663
    %v4669 = vmul.f32 1.0, %v4668
    %v4670 = vrcp.pop %v4664
    %v4671 = vmul.f32 1.0, %v4670
    %v4672 = vrcp.pop %v4665
    %v4673 = vmul.f32 1.0, %v4672
    %v4674 = vxor.u32 %v4636, 2147483648
    %v4675 = vxor.u32 %v4637, 2147483648
    %v4676 = vxor.u32 %v4644, 2147483648
    %v4677 = vxor.u32 %v4645, 2147483648
    %v4678 = vmul.f32 %v4674, 1.442695
    %v4679 = vpow.pop %v4678
    %v4680 = vmul.f32 %v4675, 1.442695
    %v4681 = vpow.pop %v4680
    %v4682 = vmul.f32 %v4676, 1.442695
    %v4683 = vpow.pop %v4682
    %v4684 = vmul.f32 %v4677, 1.442695
    %v4685 = vpow.pop %v4684
    %v4686 = vadd.f32 %v4679, 1.0
    %v4687 = vadd.f32 %v4681, 1.0
    %v4688 = vadd.f32 %v4683, 1.0
    %v4689 = vadd.f32 %v4685, 1.0
    %v4690 = vrcp.pop %v4686
    %v4691 = vmul.f32 1.0, %v4690
    %v4692 = vrcp.pop %v4687
    %v4693 = vmul.f32 1.0, %v4692
    %v4694 = vrcp.pop %v4688
    %v4695 = vmul.f32 1.0, %v4694
    %v4696 = vrcp.pop %v4689
    %v4697 = vmul.f32 1.0, %v4696
    %v4698 = vtanh.pop %v4638
    %v4699 = vtanh.pop %v4639
    %v4700 = vtanh.pop %v4646
    %v4701 = vtanh.pop %v4647
    %v4702 = vxor.u32 %v4640, 2147483648
    %v4703 = vxor.u32 %v4641, 2147483648
    %v4704 = vxor.u32 %v4648, 2147483648
    %v4705 = vxor.u32 %v4649, 2147483648
    %v4706 = vmul.f32 %v4702, 1.442695
    %v4707 = vpow.pop %v4706
    %v4708 = vmul.f32 %v4703, 1.442695
    %v4709 = vpow.pop %v4708
    %v4710 = vmul.f32 %v4704, 1.442695
    %v4711 = vpow.pop %v4710
    %v4712 = vmul.f32 %v4705, 1.442695
    %v4713 = vpow.pop %v4712
    %v4714 = vadd.f32 %v4707, 1.0
    %v4715 = vadd.f32 %v4709, 1.0
    %v4716 = vadd.f32 %v4711, 1.0
    %v4717 = vadd.f32 %v4713, 1.0
    %v4718 = vrcp.pop %v4714
    %v4719 = vmul.f32 1.0, %v4718
    %v4720 = vrcp.pop %v4715
    %v4721 = vmul.f32 1.0, %v4720
    %v4722 = vrcp.pop %v4716
    %v4723 = vmul.f32 1.0, %v4722
    %v4724 = vrcp.pop %v4717
    %v4725 = vmul.f32 1.0, %v4724
    %v4726 = vmul.f32 %v4691, %v4292
    %v4727 = vmul.f32 %v4693, %v4293
    %v4728 = vmul.f32 %v4695, %v4294
    %v4729 = vmul.f32 %v4697, %v4295
    %v4730 = vmul.f32 %v4667, %v4698
    %v4731 = vmul.f32 %v4669, %v4699
    %v4732 = vmul.f32 %v4671, %v4700
    %v4733 = vmul.f32 %v4673, %v4701
    %v4734 = vadd.f32 %v4726, %v4730
    %v4735 = vadd.f32 %v4727, %v4731
    %v4736 = vadd.f32 %v4728, %v4732
    %v4737 = vadd.f32 %v4729, %v4733
    %v4738 = vtanh.pop %v4734
    %v4739 = vtanh.pop %v4735
    %v4740 = vtanh.pop %v4736
    %v4741 = vtanh.pop %v4737
    %v4742 = vmul.f32 %v4719, %v4738
    %v4743 = vmul.f32 %v4721, %v4739
    %v4744 = vmul.f32 %v4723, %v4740
    %v4745 = vmul.f32 %v4725, %v4741
    %s4746 = scalar_lea.vmem %s4, 224
    %4747 = vst [vmem:[%s4746] sm:$0xff] %v4742
    %4748 = vst [vmem:[%s4746 + $0x8] sm:$0xff] %v4743
    %4749 = vst [vmem:[%s4746 + $0x10] sm:$0xff] %v4744
    %4750 = vst [vmem:[%s4746 + $0x18] sm:$0xff] %v4745
    %4751 = vst [vmem:[#allocation2] sm:$0xff] %v4742
    %4752 = vst [vmem:[#allocation2 + $0x8] sm:$0xff] %v4743
    %4753 = vst [vmem:[#allocation2 + $0x10] sm:$0xff] %v4744
    %4754 = vst [vmem:[#allocation2 + $0x18] sm:$0xff] %v4745
    %4755 = vst [vmem:[#allocation3] sm:$0xff] %v4734
    %4756 = vst [vmem:[#allocation3 + $0x8] sm:$0xff] %v4735
    %4757 = vst [vmem:[#allocation3 + $0x10] sm:$0xff] %v4736
    %4758 = vst [vmem:[#allocation3 + $0x18] sm:$0xff] %v4737
    // Predicated region
    $region34: #{auto_encoder_forward.2} parent=1 // pred_check
      _
    $region35: #{auto_encoder_forward.2} parent=1 // pred_check_branch
      %4760 = sbr.rel (0) target = $region37
    $region36: #{auto_encoder_forward.2} parent=1 // pred_region
      _
    $region37: #{auto_encoder_forward.2} parent=1 // pred_fallthru
      _
    // Predicated region
    $region38: #{auto_encoder_forward.2} parent=1 // pred_check
      _
    $region39: #{auto_encoder_forward.2} parent=1 // pred_check_branch
      %4762 = sbr.rel (0) target = $region41
    $region40: #{auto_encoder_forward.2} parent=1 // pred_region
      _
    $region41: #{auto_encoder_forward.2} parent=1 // pred_fallthru
      _
    %4763 = vsyncpa [#allocation6], 1
    %4764 = vsyncpa [#allocation8], 1

// kernel: auto_encoder_forward.3
$region0: #{auto_encoder_forward.3}
  #allocation0 [shape = 'u32[]', space=smem, size = 0x4, offset = 0x4, fixed_abs, tag = 'smem constant byte address 0x4 - core index']
  #allocation1 [shape = 'u32[144,128]{1,0:T(1,128)}', space=vmem, size = 0x12000, scoped, tag = 'internal scratch']
  #allocation2 [shape = 'f32[16,256]{1,0:T(8,128)}', space=vmem, size = 0x4000, scoped, tag = 'scratch operand']
  #allocation3 [shape = 'f32[16,256]{1,0:T(8,128)}', space=vmem, size = 0x4000, scoped, tag = 'scratch operand']
  #allocation4 [shape = 'f32[8,16,1024]{2,1,0:T(8,128)}', space=vmem, size = 0x80000, scoped, tag = 'scratch operand']
  %s0 = inlined_call_operand.vmem [shape: f32[8,16,256], index: 0, kind: input, shape index: {}]
  %s1 = inlined_call_operand.vmem [shape: f32[256,1024], index: 1, kind: input, shape index: {}]
  %s2 = inlined_call_operand.vmem [shape: f32[1,1024], index: 2, kind: input, shape index: {}]
  %s3 = inlined_call_operand.hbm [shape: f32[256,1024], index: 3, kind: input, shape index: {}]
  %s4 = inlined_call_operand.vmem [shape: f32[256,128], index: 4, kind: input, shape index: {}]
  %s5 = inlined_call_operand.vmem [shape: f32[1,128], index: 5, kind: input, shape index: {}]
  %s6 = inlined_call_operand.vmem [shape: f32[8,16,128], index: 6, kind: output, shape index: {}]
  %s7 = sld [smem:[#allocation0]]
  $region42: #{auto_encoder_forward.3} parent=0
    _
  %s9 = ssub.s32 1, %s7
  %s10 = scalar_select 0, %s9, %s7
  $region1: #{auto_encoder_forward.3} parent=0
    #allocation5 [shape = 'u8[1048576]{0}', space=vmem, size = 0x100000, scoped, tag = 'input window, operand 3, single buffered']
    #allocation6 [shape = 's32[1]{0}', space=sflag, size = 0x4, scoped, tag = 'scoped memory for auto_encoder_forward.3']
    %11 = vsyncpa [#allocation6], 0
    // Predicated region
    $region2: #{auto_encoder_forward.3} parent=1 // pred_check
      _
    $region3: #{auto_encoder_forward.3} parent=1 // pred_check_branch
      %13 = sbr.rel (0) target = $region5
    $region4: #{auto_encoder_forward.3} parent=1 // pred_region
      _
    $region5: #{auto_encoder_forward.3} parent=1 // pred_fallthru
      _
    // Predicated region
    $region6: #{auto_encoder_forward.3} parent=1 // pred_check
      _
    $region7: #{auto_encoder_forward.3} parent=1 // pred_check_branch
      %15 = sbr.rel (0) target = $region9
    $region8: #{auto_encoder_forward.3} parent=1 // pred_region
      _
    $region9: #{auto_encoder_forward.3} parent=1 // pred_fallthru
      _
    // Predicated region
    $region10: #{auto_encoder_forward.3} parent=1 // pred_check
      _
    $region11: #{auto_encoder_forward.3} parent=1 // pred_check_branch
      %17 = sbr.rel (0) target = $region13
    $region12: #{auto_encoder_forward.3} parent=1 // pred_region
      _
    $region13: #{auto_encoder_forward.3} parent=1 // pred_fallthru
      _
    // Predicated region
    $region14: #{auto_encoder_forward.3} parent=1 // pred_check
      _
    $region15: #{auto_encoder_forward.3} parent=1 // pred_check_branch
      %19 = sbr.rel (0) target = $region17
    $region16: #{auto_encoder_forward.3} parent=1 // pred_region
      %s21 = ssub.s32 32768, 32768
      %22 = vsyncadd [#allocation6], %s21
      %s23 = sshll.u32 [#allocation5], 4
      %s24 = int_to_ptr.vmem [resolvable:$true] %s23
      %29 = dma.hbm_to_vmem [thread:$0]  %s3, 32768, %s24, [#allocation6], 1024, 1024, 64
    $region17: #{auto_encoder_forward.3} parent=1 // pred_fallthru
      _
    // Predicated region
    $region18: #{auto_encoder_forward.3} parent=1 // pred_check
      _
    $region19: #{auto_encoder_forward.3} parent=1 // pred_check_branch
      %31 = sbr.rel (0) target = $region21
    $region20: #{auto_encoder_forward.3} parent=1 // pred_region
      _
    $region21: #{auto_encoder_forward.3} parent=1 // pred_fallthru
      _
    // Predicated region
    $region22: #{auto_encoder_forward.3} parent=1 // pred_check
      _
    $region23: #{auto_encoder_forward.3} parent=1 // pred_check_branch
      %33 = sbr.rel (0) target = $region25
    $region24: #{auto_encoder_forward.3} parent=1 // pred_region
      _
    $region25: #{auto_encoder_forward.3} parent=1 // pred_fallthru
      _
    // Predicated region
    $region26: #{auto_encoder_forward.3} parent=1 // pred_check
      _
    $region27: #{auto_encoder_forward.3} parent=1 // pred_check_branch
      %35 = sbr.rel (0) target = $region29
    $region28: #{auto_encoder_forward.3} parent=1 // pred_region
      %36 = dma.done [#allocation6], 32768
    $region29: #{auto_encoder_forward.3} parent=1 // pred_fallthru
      _
    %p37 = scmp.eq.s32.totalorder 0, 0
    // Predicated region
    $region30: #{auto_encoder_forward.3} parent=1 // pred_check
      %p38 = pneg %p37
    $region31: #{auto_encoder_forward.3} parent=1 // pred_check_branch
      %40 = sbr.rel (%p38) target = $region33
    $region32: #{auto_encoder_forward.3} parent=1 // pred_region
      %41 = vst [vmem:[#allocation2] sm:$0xff] 0.0
      %42 = vst [vmem:[#allocation2 + $0x8] sm:$0xff] 0.0
      %43 = vst [vmem:[#allocation2 + $0x10] sm:$0xff] 0.0
      %44 = vst [vmem:[#allocation2 + $0x18] sm:$0xff] 0.0
      %45 = vst [vmem:[#allocation3] sm:$0xff] 0.0
      %46 = vst [vmem:[#allocation3 + $0x8] sm:$0xff] 0.0
      %47 = vst [vmem:[#allocation3 + $0x10] sm:$0xff] 0.0
      %48 = vst [vmem:[#allocation3 + $0x18] sm:$0xff] 0.0
    $region33: #{auto_encoder_forward.3} parent=1 // pred_fallthru
      _
    %v49 = vld [vmem:[%s1] sm:$0xff]
    %v50 = vld [vmem:[%s1 + $0x8] sm:$0xff]
    %v51 = vld [vmem:[%s1 + $0x10] sm:$0xff]
    %v52 = vld [vmem:[%s1 + $0x18] sm:$0xff]
    %v53 = vld [vmem:[%s1 + $0x20] sm:$0xff]
    %v54 = vld [vmem:[%s1 + $0x28] sm:$0xff]
    %v55 = vld [vmem:[%s1 + $0x30] sm:$0xff]
    %v56 = vld [vmem:[%s1 + $0x38] sm:$0xff]
    %v57 = vld [vmem:[%s1 + $0x40] sm:$0xff]
    %v58 = vld [vmem:[%s1 + $0x48] sm:$0xff]
    %v59 = vld [vmem:[%s1 + $0x50] sm:$0xff]
    %v60 = vld [vmem:[%s1 + $0x58] sm:$0xff]
    %v61 = vld [vmem:[%s1 + $0x60] sm:$0xff]
    %v62 = vld [vmem:[%s1 + $0x68] sm:$0xff]
    %v63 = vld [vmem:[%s1 + $0x70] sm:$0xff]
    %v64 = vld [vmem:[%s1 + $0x78] sm:$0xff]
    %v65 = vld [vmem:[%s1 + $0x80] sm:$0xff]
    %v66 = vld [vmem:[%s1 + $0x88] sm:$0xff]
    %v67 = vld [vmem:[%s1 + $0x90] sm:$0xff]
    %v68 = vld [vmem:[%s1 + $0x98] sm:$0xff]
    %v69 = vld [vmem:[%s1 + $0xa0] sm:$0xff]
    %v70 = vld [vmem:[%s1 + $0xa8] sm:$0xff]
    %v71 = vld [vmem:[%s1 + $0xb0] sm:$0xff]
    %v72 = vld [vmem:[%s1 + $0xb8] sm:$0xff]
    %v73 = vld [vmem:[%s1 + $0xc0] sm:$0xff]
    %v74 = vld [vmem:[%s1 + $0xc8] sm:$0xff]
    %v75 = vld [vmem:[%s1 + $0xd0] sm:$0xff]
    %v76 = vld [vmem:[%s1 + $0xd8] sm:$0xff]
    %v77 = vld [vmem:[%s1 + $0xe0] sm:$0xff]
    %v78 = vld [vmem:[%s1 + $0xe8] sm:$0xff]
    %v79 = vld [vmem:[%s1 + $0xf0] sm:$0xff]
    %v80 = vld [vmem:[%s1 + $0xf8] sm:$0xff]
    %v81 = vld [vmem:[%s1 + $0x100] sm:$0xff]
    %v82 = vld [vmem:[%s1 + $0x108] sm:$0xff]
    %v83 = vld [vmem:[%s1 + $0x110] sm:$0xff]
    %v84 = vld [vmem:[%s1 + $0x118] sm:$0xff]
    %v85 = vld [vmem:[%s1 + $0x120] sm:$0xff]
    %v86 = vld [vmem:[%s1 + $0x128] sm:$0xff]
    %v87 = vld [vmem:[%s1 + $0x130] sm:$0xff]
    %v88 = vld [vmem:[%s1 + $0x138] sm:$0xff]
    %v89 = vld [vmem:[%s1 + $0x140] sm:$0xff]
    %v90 = vld [vmem:[%s1 + $0x148] sm:$0xff]
    %v91 = vld [vmem:[%s1 + $0x150] sm:$0xff]
    %v92 = vld [vmem:[%s1 + $0x158] sm:$0xff]
    %v93 = vld [vmem:[%s1 + $0x160] sm:$0xff]
    %v94 = vld [vmem:[%s1 + $0x168] sm:$0xff]
    %v95 = vld [vmem:[%s1 + $0x170] sm:$0xff]
    %v96 = vld [vmem:[%s1 + $0x178] sm:$0xff]
    %v97 = vld [vmem:[%s1 + $0x180] sm:$0xff]
    %v98 = vld [vmem:[%s1 + $0x188] sm:$0xff]
    %v99 = vld [vmem:[%s1 + $0x190] sm:$0xff]
    %v100 = vld [vmem:[%s1 + $0x198] sm:$0xff]
    %v101 = vld [vmem:[%s1 + $0x1a0] sm:$0xff]
    %v102 = vld [vmem:[%s1 + $0x1a8] sm:$0xff]
    %v103 = vld [vmem:[%s1 + $0x1b0] sm:$0xff]
    %v104 = vld [vmem:[%s1 + $0x1b8] sm:$0xff]
    %v105 = vld [vmem:[%s1 + $0x1c0] sm:$0xff]
    %v106 = vld [vmem:[%s1 + $0x1c8] sm:$0xff]
    %v107 = vld [vmem:[%s1 + $0x1d0] sm:$0xff]
    %v108 = vld [vmem:[%s1 + $0x1d8] sm:$0xff]
    %v109 = vld [vmem:[%s1 + $0x1e0] sm:$0xff]
    %v110 = vld [vmem:[%s1 + $0x1e8] sm:$0xff]
    %v111 = vld [vmem:[%s1 + $0x1f0] sm:$0xff]
    %v112 = vld [vmem:[%s1 + $0x1f8] sm:$0xff]
    %v113 = vld [vmem:[%s1 + $0x200] sm:$0xff]
    %v114 = vld [vmem:[%s1 + $0x208] sm:$0xff]
    %v115 = vld [vmem:[%s1 + $0x210] sm:$0xff]
    %v116 = vld [vmem:[%s1 + $0x218] sm:$0xff]
    %v117 = vld [vmem:[%s1 + $0x220] sm:$0xff]
    %v118 = vld [vmem:[%s1 + $0x228] sm:$0xff]
    %v119 = vld [vmem:[%s1 + $0x230] sm:$0xff]
    %v120 = vld [vmem:[%s1 + $0x238] sm:$0xff]
    %v121 = vld [vmem:[%s1 + $0x240] sm:$0xff]
    %v122 = vld [vmem:[%s1 + $0x248] sm:$0xff]
    %v123 = vld [vmem:[%s1 + $0x250] sm:$0xff]
    %v124 = vld [vmem:[%s1 + $0x258] sm:$0xff]
    %v125 = vld [vmem:[%s1 + $0x260] sm:$0xff]
    %v126 = vld [vmem:[%s1 + $0x268] sm:$0xff]
    %v127 = vld [vmem:[%s1 + $0x270] sm:$0xff]
    %v128 = vld [vmem:[%s1 + $0x278] sm:$0xff]
    %v129 = vld [vmem:[%s1 + $0x280] sm:$0xff]
    %v130 = vld [vmem:[%s1 + $0x288] sm:$0xff]
    %v131 = vld [vmem:[%s1 + $0x290] sm:$0xff]
    %v132 = vld [vmem:[%s1 + $0x298] sm:$0xff]
    %v133 = vld [vmem:[%s1 + $0x2a0] sm:$0xff]
    %v134 = vld [vmem:[%s1 + $0x2a8] sm:$0xff]
    %v135 = vld [vmem:[%s1 + $0x2b0] sm:$0xff]
    %v136 = vld [vmem:[%s1 + $0x2b8] sm:$0xff]
    %v137 = vld [vmem:[%s1 + $0x2c0] sm:$0xff]
    %v138 = vld [vmem:[%s1 + $0x2c8] sm:$0xff]
    %v139 = vld [vmem:[%s1 + $0x2d0] sm:$0xff]
    %v140 = vld [vmem:[%s1 + $0x2d8] sm:$0xff]
    %v141 = vld [vmem:[%s1 + $0x2e0] sm:$0xff]
    %v142 = vld [vmem:[%s1 + $0x2e8] sm:$0xff]
    %v143 = vld [vmem:[%s1 + $0x2f0] sm:$0xff]
    %v144 = vld [vmem:[%s1 + $0x2f8] sm:$0xff]
    %v145 = vld [vmem:[%s1 + $0x300] sm:$0xff]
    %v146 = vld [vmem:[%s1 + $0x308] sm:$0xff]
    %v147 = vld [vmem:[%s1 + $0x310] sm:$0xff]
    %v148 = vld [vmem:[%s1 + $0x318] sm:$0xff]
    %v149 = vld [vmem:[%s1 + $0x320] sm:$0xff]
    %v150 = vld [vmem:[%s1 + $0x328] sm:$0xff]
    %v151 = vld [vmem:[%s1 + $0x330] sm:$0xff]
    %v152 = vld [vmem:[%s1 + $0x338] sm:$0xff]
    %v153 = vld [vmem:[%s1 + $0x340] sm:$0xff]
    %v154 = vld [vmem:[%s1 + $0x348] sm:$0xff]
    %v155 = vld [vmem:[%s1 + $0x350] sm:$0xff]
    %v156 = vld [vmem:[%s1 + $0x358] sm:$0xff]
    %v157 = vld [vmem:[%s1 + $0x360] sm:$0xff]
    %v158 = vld [vmem:[%s1 + $0x368] sm:$0xff]
    %v159 = vld [vmem:[%s1 + $0x370] sm:$0xff]
    %v160 = vld [vmem:[%s1 + $0x378] sm:$0xff]
    %v161 = vld [vmem:[%s1 + $0x380] sm:$0xff]
    %v162 = vld [vmem:[%s1 + $0x388] sm:$0xff]
    %v163 = vld [vmem:[%s1 + $0x390] sm:$0xff]
    %v164 = vld [vmem:[%s1 + $0x398] sm:$0xff]
    %v165 = vld [vmem:[%s1 + $0x3a0] sm:$0xff]
    %v166 = vld [vmem:[%s1 + $0x3a8] sm:$0xff]
    %v167 = vld [vmem:[%s1 + $0x3b0] sm:$0xff]
    %v168 = vld [vmem:[%s1 + $0x3b8] sm:$0xff]
    %v169 = vld [vmem:[%s1 + $0x3c0] sm:$0xff]
    %v170 = vld [vmem:[%s1 + $0x3c8] sm:$0xff]
    %v171 = vld [vmem:[%s1 + $0x3d0] sm:$0xff]
    %v172 = vld [vmem:[%s1 + $0x3d8] sm:$0xff]
    %v173 = vld [vmem:[%s1 + $0x3e0] sm:$0xff]
    %v174 = vld [vmem:[%s1 + $0x3e8] sm:$0xff]
    %v175 = vld [vmem:[%s1 + $0x3f0] sm:$0xff]
    %v176 = vld [vmem:[%s1 + $0x3f8] sm:$0xff]
    %v177 = vld [vmem:[%s1 + $0x400] sm:$0xff]
    %v178 = vld [vmem:[%s1 + $0x408] sm:$0xff]
    %v179 = vld [vmem:[%s1 + $0x410] sm:$0xff]
    %v180 = vld [vmem:[%s1 + $0x418] sm:$0xff]
    %v181 = vld [vmem:[%s1 + $0x420] sm:$0xff]
    %v182 = vld [vmem:[%s1 + $0x428] sm:$0xff]
    %v183 = vld [vmem:[%s1 + $0x430] sm:$0xff]
    %v184 = vld [vmem:[%s1 + $0x438] sm:$0xff]
    %v185 = vld [vmem:[%s1 + $0x440] sm:$0xff]
    %v186 = vld [vmem:[%s1 + $0x448] sm:$0xff]
    %v187 = vld [vmem:[%s1 + $0x450] sm:$0xff]
    %v188 = vld [vmem:[%s1 + $0x458] sm:$0xff]
    %v189 = vld [vmem:[%s1 + $0x460] sm:$0xff]
    %v190 = vld [vmem:[%s1 + $0x468] sm:$0xff]
    %v191 = vld [vmem:[%s1 + $0x470] sm:$0xff]
    %v192 = vld [vmem:[%s1 + $0x478] sm:$0xff]
    %v193 = vld [vmem:[%s1 + $0x480] sm:$0xff]
    %v194 = vld [vmem:[%s1 + $0x488] sm:$0xff]
    %v195 = vld [vmem:[%s1 + $0x490] sm:$0xff]
    %v196 = vld [vmem:[%s1 + $0x498] sm:$0xff]
    %v197 = vld [vmem:[%s1 + $0x4a0] sm:$0xff]
    %v198 = vld [vmem:[%s1 + $0x4a8] sm:$0xff]
    %v199 = vld [vmem:[%s1 + $0x4b0] sm:$0xff]
    %v200 = vld [vmem:[%s1 + $0x4b8] sm:$0xff]
    %v201 = vld [vmem:[%s1 + $0x4c0] sm:$0xff]
    %v202 = vld [vmem:[%s1 + $0x4c8] sm:$0xff]
    %v203 = vld [vmem:[%s1 + $0x4d0] sm:$0xff]
    %v204 = vld [vmem:[%s1 + $0x4d8] sm:$0xff]
    %v205 = vld [vmem:[%s1 + $0x4e0] sm:$0xff]
    %v206 = vld [vmem:[%s1 + $0x4e8] sm:$0xff]
    %v207 = vld [vmem:[%s1 + $0x4f0] sm:$0xff]
    %v208 = vld [vmem:[%s1 + $0x4f8] sm:$0xff]
    %v209 = vld [vmem:[%s1 + $0x500] sm:$0xff]
    %v210 = vld [vmem:[%s1 + $0x508] sm:$0xff]
    %v211 = vld [vmem:[%s1 + $0x510] sm:$0xff]
    %v212 = vld [vmem:[%s1 + $0x518] sm:$0xff]
    %v213 = vld [vmem:[%s1 + $0x520] sm:$0xff]
    %v214 = vld [vmem:[%s1 + $0x528] sm:$0xff]
    %v215 = vld [vmem:[%s1 + $0x530] sm:$0xff]
    %v216 = vld [vmem:[%s1 + $0x538] sm:$0xff]
    %v217 = vld [vmem:[%s1 + $0x540] sm:$0xff]
    %v218 = vld [vmem:[%s1 + $0x548] sm:$0xff]
    %v219 = vld [vmem:[%s1 + $0x550] sm:$0xff]
    %v220 = vld [vmem:[%s1 + $0x558] sm:$0xff]
    %v221 = vld [vmem:[%s1 + $0x560] sm:$0xff]
    %v222 = vld [vmem:[%s1 + $0x568] sm:$0xff]
    %v223 = vld [vmem:[%s1 + $0x570] sm:$0xff]
    %v224 = vld [vmem:[%s1 + $0x578] sm:$0xff]
    %v225 = vld [vmem:[%s1 + $0x580] sm:$0xff]
    %v226 = vld [vmem:[%s1 + $0x588] sm:$0xff]
    %v227 = vld [vmem:[%s1 + $0x590] sm:$0xff]
    %v228 = vld [vmem:[%s1 + $0x598] sm:$0xff]
    %v229 = vld [vmem:[%s1 + $0x5a0] sm:$0xff]
    %v230 = vld [vmem:[%s1 + $0x5a8] sm:$0xff]
    %v231 = vld [vmem:[%s1 + $0x5b0] sm:$0xff]
    %v232 = vld [vmem:[%s1 + $0x5b8] sm:$0xff]
    %v233 = vld [vmem:[%s1 + $0x5c0] sm:$0xff]
    %v234 = vld [vmem:[%s1 + $0x5c8] sm:$0xff]
    %v235 = vld [vmem:[%s1 + $0x5d0] sm:$0xff]
    %v236 = vld [vmem:[%s1 + $0x5d8] sm:$0xff]
    %v237 = vld [vmem:[%s1 + $0x5e0] sm:$0xff]
    %v238 = vld [vmem:[%s1 + $0x5e8] sm:$0xff]
    %v239 = vld [vmem:[%s1 + $0x5f0] sm:$0xff]
    %v240 = vld [vmem:[%s1 + $0x5f8] sm:$0xff]
    %v241 = vld [vmem:[%s1 + $0x600] sm:$0xff]
    %v242 = vld [vmem:[%s1 + $0x608] sm:$0xff]
    %v243 = vld [vmem:[%s1 + $0x610] sm:$0xff]
    %v244 = vld [vmem:[%s1 + $0x618] sm:$0xff]
    %v245 = vld [vmem:[%s1 + $0x620] sm:$0xff]
    %v246 = vld [vmem:[%s1 + $0x628] sm:$0xff]
    %v247 = vld [vmem:[%s1 + $0x630] sm:$0xff]
    %v248 = vld [vmem:[%s1 + $0x638] sm:$0xff]
    %v249 = vld [vmem:[%s1 + $0x640] sm:$0xff]
    %v250 = vld [vmem:[%s1 + $0x648] sm:$0xff]
    %v251 = vld [vmem:[%s1 + $0x650] sm:$0xff]
    %v252 = vld [vmem:[%s1 + $0x658] sm:$0xff]
    %v253 = vld [vmem:[%s1 + $0x660] sm:$0xff]
    %v254 = vld [vmem:[%s1 + $0x668] sm:$0xff]
    %v255 = vld [vmem:[%s1 + $0x670] sm:$0xff]
    %v256 = vld [vmem:[%s1 + $0x678] sm:$0xff]
    %v257 = vld [vmem:[%s1 + $0x680] sm:$0xff]
    %v258 = vld [vmem:[%s1 + $0x688] sm:$0xff]
    %v259 = vld [vmem:[%s1 + $0x690] sm:$0xff]
    %v260 = vld [vmem:[%s1 + $0x698] sm:$0xff]
    %v261 = vld [vmem:[%s1 + $0x6a0] sm:$0xff]
    %v262 = vld [vmem:[%s1 + $0x6a8] sm:$0xff]
    %v263 = vld [vmem:[%s1 + $0x6b0] sm:$0xff]
    %v264 = vld [vmem:[%s1 + $0x6b8] sm:$0xff]
    %v265 = vld [vmem:[%s1 + $0x6c0] sm:$0xff]
    %v266 = vld [vmem:[%s1 + $0x6c8] sm:$0xff]
    %v267 = vld [vmem:[%s1 + $0x6d0] sm:$0xff]
    %v268 = vld [vmem:[%s1 + $0x6d8] sm:$0xff]
    %v269 = vld [vmem:[%s1 + $0x6e0] sm:$0xff]
    %v270 = vld [vmem:[%s1 + $0x6e8] sm:$0xff]
    %v271 = vld [vmem:[%s1 + $0x6f0] sm:$0xff]
    %v272 = vld [vmem:[%s1 + $0x6f8] sm:$0xff]
    %v273 = vld [vmem:[%s1 + $0x700] sm:$0xff]
    %v274 = vld [vmem:[%s1 + $0x708] sm:$0xff]
    %v275 = vld [vmem:[%s1 + $0x710] sm:$0xff]
    %v276 = vld [vmem:[%s1 + $0x718] sm:$0xff]
    %v277 = vld [vmem:[%s1 + $0x720] sm:$0xff]
    %v278 = vld [vmem:[%s1 + $0x728] sm:$0xff]
    %v279 = vld [vmem:[%s1 + $0x730] sm:$0xff]
    %v280 = vld [vmem:[%s1 + $0x738] sm:$0xff]
    %v281 = vld [vmem:[%s1 + $0x740] sm:$0xff]
    %v282 = vld [vmem:[%s1 + $0x748] sm:$0xff]
    %v283 = vld [vmem:[%s1 + $0x750] sm:$0xff]
    %v284 = vld [vmem:[%s1 + $0x758] sm:$0xff]
    %v285 = vld [vmem:[%s1 + $0x760] sm:$0xff]
    %v286 = vld [vmem:[%s1 + $0x768] sm:$0xff]
    %v287 = vld [vmem:[%s1 + $0x770] sm:$0xff]
    %v288 = vld [vmem:[%s1 + $0x778] sm:$0xff]
    %v289 = vld [vmem:[%s1 + $0x780] sm:$0xff]
    %v290 = vld [vmem:[%s1 + $0x788] sm:$0xff]
    %v291 = vld [vmem:[%s1 + $0x790] sm:$0xff]
    %v292 = vld [vmem:[%s1 + $0x798] sm:$0xff]
    %v293 = vld [vmem:[%s1 + $0x7a0] sm:$0xff]
    %v294 = vld [vmem:[%s1 + $0x7a8] sm:$0xff]
    %v295 = vld [vmem:[%s1 + $0x7b0] sm:$0xff]
    %v296 = vld [vmem:[%s1 + $0x7b8] sm:$0xff]
    %v297 = vld [vmem:[%s1 + $0x7c0] sm:$0xff]
    %v298 = vld [vmem:[%s1 + $0x7c8] sm:$0xff]
    %v299 = vld [vmem:[%s1 + $0x7d0] sm:$0xff]
    %v300 = vld [vmem:[%s1 + $0x7d8] sm:$0xff]
    %v301 = vld [vmem:[%s1 + $0x7e0] sm:$0xff]
    %v302 = vld [vmem:[%s1 + $0x7e8] sm:$0xff]
    %v303 = vld [vmem:[%s1 + $0x7f0] sm:$0xff]
    %v304 = vld [vmem:[%s1 + $0x7f8] sm:$0xff]
    %v305 = vld [vmem:[#allocation5] sm:$0xff]
    %v306 = vld [vmem:[#allocation5 + $0x8] sm:$0xff]
    %v307 = vld [vmem:[#allocation5 + $0x10] sm:$0xff]
    %v308 = vld [vmem:[#allocation5 + $0x18] sm:$0xff]
    %v309 = vld [vmem:[#allocation5 + $0x20] sm:$0xff]
    %v310 = vld [vmem:[#allocation5 + $0x28] sm:$0xff]
    %v311 = vld [vmem:[#allocation5 + $0x30] sm:$0xff]
    %v312 = vld [vmem:[#allocation5 + $0x38] sm:$0xff]
    %v313 = vld [vmem:[#allocation5 + $0x40] sm:$0xff]
    %v314 = vld [vmem:[#allocation5 + $0x48] sm:$0xff]
    %v315 = vld [vmem:[#allocation5 + $0x50] sm:$0xff]
    %v316 = vld [vmem:[#allocation5 + $0x58] sm:$0xff]
    %v317 = vld [vmem:[#allocation5 + $0x60] sm:$0xff]
    %v318 = vld [vmem:[#allocation5 + $0x68] sm:$0xff]
    %v319 = vld [vmem:[#allocation5 + $0x70] sm:$0xff]
    %v320 = vld [vmem:[#allocation5 + $0x78] sm:$0xff]
    %v321 = vld [vmem:[#allocation5 + $0x80] sm:$0xff]
    %v322 = vld [vmem:[#allocation5 + $0x88] sm:$0xff]
    %v323 = vld [vmem:[#allocation5 + $0x90] sm:$0xff]
    %v324 = vld [vmem:[#allocation5 + $0x98] sm:$0xff]
    %v325 = vld [vmem:[#allocation5 + $0xa0] sm:$0xff]
    %v326 = vld [vmem:[#allocation5 + $0xa8] sm:$0xff]
    %v327 = vld [vmem:[#allocation5 + $0xb0] sm:$0xff]
    %v328 = vld [vmem:[#allocation5 + $0xb8] sm:$0xff]
    %v329 = vld [vmem:[#allocation5 + $0xc0] sm:$0xff]
    %v330 = vld [vmem:[#allocation5 + $0xc8] sm:$0xff]
    %v331 = vld [vmem:[#allocation5 + $0xd0] sm:$0xff]
    %v332 = vld [vmem:[#allocation5 + $0xd8] sm:$0xff]
    %v333 = vld [vmem:[#allocation5 + $0xe0] sm:$0xff]
    %v334 = vld [vmem:[#allocation5 + $0xe8] sm:$0xff]
    %v335 = vld [vmem:[#allocation5 + $0xf0] sm:$0xff]
    %v336 = vld [vmem:[#allocation5 + $0xf8] sm:$0xff]
    %v337 = vld [vmem:[#allocation5 + $0x100] sm:$0xff]
    %v338 = vld [vmem:[#allocation5 + $0x108] sm:$0xff]
    %v339 = vld [vmem:[#allocation5 + $0x110] sm:$0xff]
    %v340 = vld [vmem:[#allocation5 + $0x118] sm:$0xff]
    %v341 = vld [vmem:[#allocation5 + $0x120] sm:$0xff]
    %v342 = vld [vmem:[#allocation5 + $0x128] sm:$0xff]
    %v343 = vld [vmem:[#allocation5 + $0x130] sm:$0xff]
    %v344 = vld [vmem:[#allocation5 + $0x138] sm:$0xff]
    %v345 = vld [vmem:[#allocation5 + $0x140] sm:$0xff]
    %v346 = vld [vmem:[#allocation5 + $0x148] sm:$0xff]
    %v347 = vld [vmem:[#allocation5 + $0x150] sm:$0xff]
    %v348 = vld [vmem:[#allocation5 + $0x158] sm:$0xff]
    %v349 = vld [vmem:[#allocation5 + $0x160] sm:$0xff]
    %v350 = vld [vmem:[#allocation5 + $0x168] sm:$0xff]
    %v351 = vld [vmem:[#allocation5 + $0x170] sm:$0xff]
    %v352 = vld [vmem:[#allocation5 + $0x178] sm:$0xff]
    %v353 = vld [vmem:[#allocation5 + $0x180] sm:$0xff]
    %v354 = vld [vmem:[#allocation5 + $0x188] sm:$0xff]
    %v355 = vld [vmem:[#allocation5 + $0x190] sm:$0xff]
    %v356 = vld [vmem:[#allocation5 + $0x198] sm:$0xff]
    %v357 = vld [vmem:[#allocation5 + $0x1a0] sm:$0xff]
    %v358 = vld [vmem:[#allocation5 + $0x1a8] sm:$0xff]
    %v359 = vld [vmem:[#allocation5 + $0x1b0] sm:$0xff]
    %v360 = vld [vmem:[#allocation5 + $0x1b8] sm:$0xff]
    %v361 = vld [vmem:[#allocation5 + $0x1c0] sm:$0xff]
    %v362 = vld [vmem:[#allocation5 + $0x1c8] sm:$0xff]
    %v363 = vld [vmem:[#allocation5 + $0x1d0] sm:$0xff]
    %v364 = vld [vmem:[#allocation5 + $0x1d8] sm:$0xff]
    %v365 = vld [vmem:[#allocation5 + $0x1e0] sm:$0xff]
    %v366 = vld [vmem:[#allocation5 + $0x1e8] sm:$0xff]
    %v367 = vld [vmem:[#allocation5 + $0x1f0] sm:$0xff]
    %v368 = vld [vmem:[#allocation5 + $0x1f8] sm:$0xff]
    %v369 = vld [vmem:[#allocation5 + $0x200] sm:$0xff]
    %v370 = vld [vmem:[#allocation5 + $0x208] sm:$0xff]
    %v371 = vld [vmem:[#allocation5 + $0x210] sm:$0xff]
    %v372 = vld [vmem:[#allocation5 + $0x218] sm:$0xff]
    %v373 = vld [vmem:[#allocation5 + $0x220] sm:$0xff]
    %v374 = vld [vmem:[#allocation5 + $0x228] sm:$0xff]
    %v375 = vld [vmem:[#allocation5 + $0x230] sm:$0xff]
    %v376 = vld [vmem:[#allocation5 + $0x238] sm:$0xff]
    %v377 = vld [vmem:[#allocation5 + $0x240] sm:$0xff]
    %v378 = vld [vmem:[#allocation5 + $0x248] sm:$0xff]
    %v379 = vld [vmem:[#allocation5 + $0x250] sm:$0xff]
    %v380 = vld [vmem:[#allocation5 + $0x258] sm:$0xff]
    %v381 = vld [vmem:[#allocation5 + $0x260] sm:$0xff]
    %v382 = vld [vmem:[#allocation5 + $0x268] sm:$0xff]
    %v383 = vld [vmem:[#allocation5 + $0x270] sm:$0xff]
    %v384 = vld [vmem:[#allocation5 + $0x278] sm:$0xff]
    %v385 = vld [vmem:[#allocation5 + $0x280] sm:$0xff]
    %v386 = vld [vmem:[#allocation5 + $0x288] sm:$0xff]
    %v387 = vld [vmem:[#allocation5 + $0x290] sm:$0xff]
    %v388 = vld [vmem:[#allocation5 + $0x298] sm:$0xff]
    %v389 = vld [vmem:[#allocation5 + $0x2a0] sm:$0xff]
    %v390 = vld [vmem:[#allocation5 + $0x2a8] sm:$0xff]
    %v391 = vld [vmem:[#allocation5 + $0x2b0] sm:$0xff]
    %v392 = vld [vmem:[#allocation5 + $0x2b8] sm:$0xff]
    %v393 = vld [vmem:[#allocation5 + $0x2c0] sm:$0xff]
    %v394 = vld [vmem:[#allocation5 + $0x2c8] sm:$0xff]
    %v395 = vld [vmem:[#allocation5 + $0x2d0] sm:$0xff]
    %v396 = vld [vmem:[#allocation5 + $0x2d8] sm:$0xff]
    %v397 = vld [vmem:[#allocation5 + $0x2e0] sm:$0xff]
    %v398 = vld [vmem:[#allocation5 + $0x2e8] sm:$0xff]
    %v399 = vld [vmem:[#allocation5 + $0x2f0] sm:$0xff]
    %v400 = vld [vmem:[#allocation5 + $0x2f8] sm:$0xff]
    %v401 = vld [vmem:[#allocation5 + $0x300] sm:$0xff]
    %v402 = vld [vmem:[#allocation5 + $0x308] sm:$0xff]
    %v403 = vld [vmem:[#allocation5 + $0x310] sm:$0xff]
    %v404 = vld [vmem:[#allocation5 + $0x318] sm:$0xff]
    %v405 = vld [vmem:[#allocation5 + $0x320] sm:$0xff]
    %v406 = vld [vmem:[#allocation5 + $0x328] sm:$0xff]
    %v407 = vld [vmem:[#allocation5 + $0x330] sm:$0xff]
    %v408 = vld [vmem:[#allocation5 + $0x338] sm:$0xff]
    %v409 = vld [vmem:[#allocation5 + $0x340] sm:$0xff]
    %v410 = vld [vmem:[#allocation5 + $0x348] sm:$0xff]
    %v411 = vld [vmem:[#allocation5 + $0x350] sm:$0xff]
    %v412 = vld [vmem:[#allocation5 + $0x358] sm:$0xff]
    %v413 = vld [vmem:[#allocation5 + $0x360] sm:$0xff]
    %v414 = vld [vmem:[#allocation5 + $0x368] sm:$0xff]
    %v415 = vld [vmem:[#allocation5 + $0x370] sm:$0xff]
    %v416 = vld [vmem:[#allocation5 + $0x378] sm:$0xff]
    %v417 = vld [vmem:[#allocation5 + $0x380] sm:$0xff]
    %v418 = vld [vmem:[#allocation5 + $0x388] sm:$0xff]
    %v419 = vld [vmem:[#allocation5 + $0x390] sm:$0xff]
    %v420 = vld [vmem:[#allocation5 + $0x398] sm:$0xff]
    %v421 = vld [vmem:[#allocation5 + $0x3a0] sm:$0xff]
    %v422 = vld [vmem:[#allocation5 + $0x3a8] sm:$0xff]
    %v423 = vld [vmem:[#allocation5 + $0x3b0] sm:$0xff]
    %v424 = vld [vmem:[#allocation5 + $0x3b8] sm:$0xff]
    %v425 = vld [vmem:[#allocation5 + $0x3c0] sm:$0xff]
    %v426 = vld [vmem:[#allocation5 + $0x3c8] sm:$0xff]
    %v427 = vld [vmem:[#allocation5 + $0x3d0] sm:$0xff]
    %v428 = vld [vmem:[#allocation5 + $0x3d8] sm:$0xff]
    %v429 = vld [vmem:[#allocation5 + $0x3e0] sm:$0xff]
    %v430 = vld [vmem:[#allocation5 + $0x3e8] sm:$0xff]
    %v431 = vld [vmem:[#allocation5 + $0x3f0] sm:$0xff]
    %v432 = vld [vmem:[#allocation5 + $0x3f8] sm:$0xff]
    %v433 = vld [vmem:[#allocation5 + $0x400] sm:$0xff]
    %v434 = vld [vmem:[#allocation5 + $0x408] sm:$0xff]
    %v435 = vld [vmem:[#allocation5 + $0x410] sm:$0xff]
    %v436 = vld [vmem:[#allocation5 + $0x418] sm:$0xff]
    %v437 = vld [vmem:[#allocation5 + $0x420] sm:$0xff]
    %v438 = vld [vmem:[#allocation5 + $0x428] sm:$0xff]
    %v439 = vld [vmem:[#allocation5 + $0x430] sm:$0xff]
    %v440 = vld [vmem:[#allocation5 + $0x438] sm:$0xff]
    %v441 = vld [vmem:[#allocation5 + $0x440] sm:$0xff]
    %v442 = vld [vmem:[#allocation5 + $0x448] sm:$0xff]
    %v443 = vld [vmem:[#allocation5 + $0x450] sm:$0xff]
    %v444 = vld [vmem:[#allocation5 + $0x458] sm:$0xff]
    %v445 = vld [vmem:[#allocation5 + $0x460] sm:$0xff]
    %v446 = vld [vmem:[#allocation5 + $0x468] sm:$0xff]
    %v447 = vld [vmem:[#allocation5 + $0x470] sm:$0xff]
    %v448 = vld [vmem:[#allocation5 + $0x478] sm:$0xff]
    %v449 = vld [vmem:[#allocation5 + $0x480] sm:$0xff]
    %v450 = vld [vmem:[#allocation5 + $0x488] sm:$0xff]
    %v451 = vld [vmem:[#allocation5 + $0x490] sm:$0xff]
    %v452 = vld [vmem:[#allocation5 + $0x498] sm:$0xff]
    %v453 = vld [vmem:[#allocation5 + $0x4a0] sm:$0xff]
    %v454 = vld [vmem:[#allocation5 + $0x4a8] sm:$0xff]
    %v455 = vld [vmem:[#allocation5 + $0x4b0] sm:$0xff]
    %v456 = vld [vmem:[#allocation5 + $0x4b8] sm:$0xff]
    %v457 = vld [vmem:[#allocation5 + $0x4c0] sm:$0xff]
    %v458 = vld [vmem:[#allocation5 + $0x4c8] sm:$0xff]
    %v459 = vld [vmem:[#allocation5 + $0x4d0] sm:$0xff]
    %v460 = vld [vmem:[#allocation5 + $0x4d8] sm:$0xff]
    %v461 = vld [vmem:[#allocation5 + $0x4e0] sm:$0xff]
    %v462 = vld [vmem:[#allocation5 + $0x4e8] sm:$0xff]
    %v463 = vld [vmem:[#allocation5 + $0x4f0] sm:$0xff]
    %v464 = vld [vmem:[#allocation5 + $0x4f8] sm:$0xff]
    %v465 = vld [vmem:[#allocation5 + $0x500] sm:$0xff]
    %v466 = vld [vmem:[#allocation5 + $0x508] sm:$0xff]
    %v467 = vld [vmem:[#allocation5 + $0x510] sm:$0xff]
    %v468 = vld [vmem:[#allocation5 + $0x518] sm:$0xff]
    %v469 = vld [vmem:[#allocation5 + $0x520] sm:$0xff]
    %v470 = vld [vmem:[#allocation5 + $0x528] sm:$0xff]
    %v471 = vld [vmem:[#allocation5 + $0x530] sm:$0xff]
    %v472 = vld [vmem:[#allocation5 + $0x538] sm:$0xff]
    %v473 = vld [vmem:[#allocation5 + $0x540] sm:$0xff]
    %v474 = vld [vmem:[#allocation5 + $0x548] sm:$0xff]
    %v475 = vld [vmem:[#allocation5 + $0x550] sm:$0xff]
    %v476 = vld [vmem:[#allocation5 + $0x558] sm:$0xff]
    %v477 = vld [vmem:[#allocation5 + $0x560] sm:$0xff]
    %v478 = vld [vmem:[#allocation5 + $0x568] sm:$0xff]
    %v479 = vld [vmem:[#allocation5 + $0x570] sm:$0xff]
    %v480 = vld [vmem:[#allocation5 + $0x578] sm:$0xff]
    %v481 = vld [vmem:[#allocation5 + $0x580] sm:$0xff]
    %v482 = vld [vmem:[#allocation5 + $0x588] sm:$0xff]
    %v483 = vld [vmem:[#allocation5 + $0x590] sm:$0xff]
    %v484 = vld [vmem:[#allocation5 + $0x598] sm:$0xff]
    %v485 = vld [vmem:[#allocation5 + $0x5a0] sm:$0xff]
    %v486 = vld [vmem:[#allocation5 + $0x5a8] sm:$0xff]
    %v487 = vld [vmem:[#allocation5 + $0x5b0] sm:$0xff]
    %v488 = vld [vmem:[#allocation5 + $0x5b8] sm:$0xff]
    %v489 = vld [vmem:[#allocation5 + $0x5c0] sm:$0xff]
    %v490 = vld [vmem:[#allocation5 + $0x5c8] sm:$0xff]
    %v491 = vld [vmem:[#allocation5 + $0x5d0] sm:$0xff]
    %v492 = vld [vmem:[#allocation5 + $0x5d8] sm:$0xff]
    %v493 = vld [vmem:[#allocation5 + $0x5e0] sm:$0xff]
    %v494 = vld [vmem:[#allocation5 + $0x5e8] sm:$0xff]
    %v495 = vld [vmem:[#allocation5 + $0x5f0] sm:$0xff]
    %v496 = vld [vmem:[#allocation5 + $0x5f8] sm:$0xff]
    %v497 = vld [vmem:[#allocation5 + $0x600] sm:$0xff]
    %v498 = vld [vmem:[#allocation5 + $0x608] sm:$0xff]
    %v499 = vld [vmem:[#allocation5 + $0x610] sm:$0xff]
    %v500 = vld [vmem:[#allocation5 + $0x618] sm:$0xff]
    %v501 = vld [vmem:[#allocation5 + $0x620] sm:$0xff]
    %v502 = vld [vmem:[#allocation5 + $0x628] sm:$0xff]
    %v503 = vld [vmem:[#allocation5 + $0x630] sm:$0xff]
    %v504 = vld [vmem:[#allocation5 + $0x638] sm:$0xff]
    %v505 = vld [vmem:[#allocation5 + $0x640] sm:$0xff]
    %v506 = vld [vmem:[#allocation5 + $0x648] sm:$0xff]
    %v507 = vld [vmem:[#allocation5 + $0x650] sm:$0xff]
    %v508 = vld [vmem:[#allocation5 + $0x658] sm:$0xff]
    %v509 = vld [vmem:[#allocation5 + $0x660] sm:$0xff]
    %v510 = vld [vmem:[#allocation5 + $0x668] sm:$0xff]
    %v511 = vld [vmem:[#allocation5 + $0x670] sm:$0xff]
    %v512 = vld [vmem:[#allocation5 + $0x678] sm:$0xff]
    %v513 = vld [vmem:[#allocation5 + $0x680] sm:$0xff]
    %v514 = vld [vmem:[#allocation5 + $0x688] sm:$0xff]
    %v515 = vld [vmem:[#allocation5 + $0x690] sm:$0xff]
    %v516 = vld [vmem:[#allocation5 + $0x698] sm:$0xff]
    %v517 = vld [vmem:[#allocation5 + $0x6a0] sm:$0xff]
    %v518 = vld [vmem:[#allocation5 + $0x6a8] sm:$0xff]
    %v519 = vld [vmem:[#allocation5 + $0x6b0] sm:$0xff]
    %v520 = vld [vmem:[#allocation5 + $0x6b8] sm:$0xff]
    %v521 = vld [vmem:[#allocation5 + $0x6c0] sm:$0xff]
    %v522 = vld [vmem:[#allocation5 + $0x6c8] sm:$0xff]
    %v523 = vld [vmem:[#allocation5 + $0x6d0] sm:$0xff]
    %v524 = vld [vmem:[#allocation5 + $0x6d8] sm:$0xff]
    %v525 = vld [vmem:[#allocation5 + $0x6e0] sm:$0xff]
    %v526 = vld [vmem:[#allocation5 + $0x6e8] sm:$0xff]
    %v527 = vld [vmem:[#allocation5 + $0x6f0] sm:$0xff]
    %v528 = vld [vmem:[#allocation5 + $0x6f8] sm:$0xff]
    %v529 = vld [vmem:[#allocation5 + $0x700] sm:$0xff]
    %v530 = vld [vmem:[#allocation5 + $0x708] sm:$0xff]
    %v531 = vld [vmem:[#allocation5 + $0x710] sm:$0xff]
    %v532 = vld [vmem:[#allocation5 + $0x718] sm:$0xff]
    %v533 = vld [vmem:[#allocation5 + $0x720] sm:$0xff]
    %v534 = vld [vmem:[#allocation5 + $0x728] sm:$0xff]
    %v535 = vld [vmem:[#allocation5 + $0x730] sm:$0xff]
    %v536 = vld [vmem:[#allocation5 + $0x738] sm:$0xff]
    %v537 = vld [vmem:[#allocation5 + $0x740] sm:$0xff]
    %v538 = vld [vmem:[#allocation5 + $0x748] sm:$0xff]
    %v539 = vld [vmem:[#allocation5 + $0x750] sm:$0xff]
    %v540 = vld [vmem:[#allocation5 + $0x758] sm:$0xff]
    %v541 = vld [vmem:[#allocation5 + $0x760] sm:$0xff]
    %v542 = vld [vmem:[#allocation5 + $0x768] sm:$0xff]
    %v543 = vld [vmem:[#allocation5 + $0x770] sm:$0xff]
    %v544 = vld [vmem:[#allocation5 + $0x778] sm:$0xff]
    %v545 = vld [vmem:[#allocation5 + $0x780] sm:$0xff]
    %v546 = vld [vmem:[#allocation5 + $0x788] sm:$0xff]
    %v547 = vld [vmem:[#allocation5 + $0x790] sm:$0xff]
    %v548 = vld [vmem:[#allocation5 + $0x798] sm:$0xff]
    %v549 = vld [vmem:[#allocation5 + $0x7a0] sm:$0xff]
    %v550 = vld [vmem:[#allocation5 + $0x7a8] sm:$0xff]
    %v551 = vld [vmem:[#allocation5 + $0x7b0] sm:$0xff]
    %v552 = vld [vmem:[#allocation5 + $0x7b8] sm:$0xff]
    %v553 = vld [vmem:[#allocation5 + $0x7c0] sm:$0xff]
    %v554 = vld [vmem:[#allocation5 + $0x7c8] sm:$0xff]
    %v555 = vld [vmem:[#allocation5 + $0x7d0] sm:$0xff]
    %v556 = vld [vmem:[#allocation5 + $0x7d8] sm:$0xff]
    %v557 = vld [vmem:[#allocation5 + $0x7e0] sm:$0xff]
    %v558 = vld [vmem:[#allocation5 + $0x7e8] sm:$0xff]
    %v559 = vld [vmem:[#allocation5 + $0x7f0] sm:$0xff]
    %v560 = vld [vmem:[#allocation5 + $0x7f8] sm:$0xff]
    %v561 = vld [vmem:[%s2] sm:$0xff]
    %v562 = vld [vmem:[%s0] sm:$0xff]
    %v563 = vld [vmem:[%s0 + $0x8] sm:$0xff]
    %v564 = vld [vmem:[%s0 + $0x10] sm:$0xff]
    %v565 = vld [vmem:[%s0 + $0x18] sm:$0xff]
    %v566 = vld [vmem:[%s0 + $0x20] sm:$0xff]
    %v567 = vld [vmem:[%s0 + $0x28] sm:$0xff]
    %v568 = vld [vmem:[%s0 + $0x30] sm:$0xff]
    %v569 = vld [vmem:[%s0 + $0x38] sm:$0xff]
    %v570 = vld [vmem:[%s0 + $0x40] sm:$0xff]
    %v571 = vld [vmem:[%s0 + $0x48] sm:$0xff]
    %v572 = vld [vmem:[%s0 + $0x50] sm:$0xff]
    %v573 = vld [vmem:[%s0 + $0x58] sm:$0xff]
    %v574 = vld [vmem:[%s0 + $0x60] sm:$0xff]
    %v575 = vld [vmem:[%s0 + $0x68] sm:$0xff]
    %v576 = vld [vmem:[%s0 + $0x70] sm:$0xff]
    %v577 = vld [vmem:[%s0 + $0x78] sm:$0xff]
    %v578 = vld [vmem:[%s0 + $0x80] sm:$0xff]
    %v579 = vld [vmem:[%s0 + $0x88] sm:$0xff]
    %v580 = vld [vmem:[%s0 + $0x90] sm:$0xff]
    %v581 = vld [vmem:[%s0 + $0x98] sm:$0xff]
    %v582 = vld [vmem:[%s0 + $0xa0] sm:$0xff]
    %v583 = vld [vmem:[%s0 + $0xa8] sm:$0xff]
    %v584 = vld [vmem:[%s0 + $0xb0] sm:$0xff]
    %v585 = vld [vmem:[%s0 + $0xb8] sm:$0xff]
    %v586 = vld [vmem:[%s0 + $0xc0] sm:$0xff]
    %v587 = vld [vmem:[%s0 + $0xc8] sm:$0xff]
    %v588 = vld [vmem:[%s0 + $0xd0] sm:$0xff]
    %v589 = vld [vmem:[%s0 + $0xd8] sm:$0xff]
    %v590 = vld [vmem:[%s0 + $0xe0] sm:$0xff]
    %v591 = vld [vmem:[%s0 + $0xe8] sm:$0xff]
    %v592 = vld [vmem:[%s0 + $0xf0] sm:$0xff]
    %v593 = vld [vmem:[%s0 + $0xf8] sm:$0xff]
    %v595 = vlaneseq
    %v596 = vshrl.u32 %v595, 7
    %v597 = vsub.s32 0, %v596
    %v598 = vrot.slane %v561, %v597
    %v599 = vlaneseq
    %v600 = vshrl.u32 %v599, 7
    %v601 = vsub.s32 1, %v600
    %v602 = vrot.slane %v561, %v601
    %v603 = vlaneseq
    %v604 = vshrl.u32 %v603, 7
    %v605 = vsub.s32 2, %v604
    %v606 = vrot.slane %v561, %v605
    %v607 = vlaneseq
    %v608 = vshrl.u32 %v607, 7
    %v609 = vsub.s32 3, %v608
    %v610 = vrot.slane %v561, %v609
    %v611 = vlaneseq
    %v612 = vshrl.u32 %v611, 7
    %v613 = vsub.s32 4, %v612
    %v614 = vrot.slane %v561, %v613
    %v615 = vlaneseq
    %v616 = vshrl.u32 %v615, 7
    %v617 = vsub.s32 5, %v616
    %v618 = vrot.slane %v561, %v617
    %v619 = vlaneseq
    %v620 = vshrl.u32 %v619, 7
    %v621 = vsub.s32 6, %v620
    %v622 = vrot.slane %v561, %v621
    %v623 = vlaneseq
    %v624 = vshrl.u32 %v623, 7
    %v625 = vsub.s32 7, %v624
    %v626 = vrot.slane %v561, %v625
    %635 = vmatprep.subr.mxu0 %v170
    %636 = vmatpush1.msra.mxu0 %v169
    %637 = vmatprep.subr.mxu0 %v162
    %638 = vmatpush1.msra.mxu0 %v161
    %639 = vmatprep.subr.mxu0 %v154
    %640 = vmatpush1.msra.mxu0 %v153
    %641 = vmatprep.subr.mxu0 %v146
    %642 = vmatpush1.msra.mxu0 %v145
    %643 = vmatprep.subr.mxu0 %v138
    %644 = vmatpush1.msra.mxu0 %v137
    %645 = vmatprep.subr.mxu0 %v130
    %646 = vmatpush1.msra.mxu0 %v129
    %647 = vmatprep.subr.mxu0 %v122
    %648 = vmatpush1.msra.mxu0 %v121
    %649 = vmatprep.subr.mxu0 %v114
    %650 = vmatpush1.msra.mxu0 %v113
    %651 = vmatprep.subr.mxu0 %v106
    %652 = vmatpush1.msra.mxu0 %v105
    %653 = vmatprep.subr.mxu0 %v98
    %654 = vmatpush1.msra.mxu0 %v97
    %655 = vmatprep.subr.mxu0 %v90
    %656 = vmatpush1.msra.mxu0 %v89
    %657 = vmatprep.subr.mxu0 %v82
    %658 = vmatpush1.msra.mxu0 %v81
    %659 = vmatprep.subr.mxu0 %v74
    %660 = vmatpush1.msra.mxu0 %v73
    %661 = vmatprep.subr.mxu0 %v66
    %662 = vmatpush1.msra.mxu0 %v65
    %663 = vmatprep.subr.mxu0 %v58
    %664 = vmatpush1.msra.mxu0 %v57
    %665 = vmatprep.subr.mxu0 %v50
    %666 = vmatpush1.msra.mxu0 %v49
    %667 = vmatprep.subr.mxu0 %v298
    %668 = vmatpush2.msra.mxu0 %v297
    %669 = vmatprep.subr.mxu0 %v290
    %670 = vmatpush2.msra.mxu0 %v289
    %671 = vmatprep.subr.mxu0 %v282
    %672 = vmatpush2.msra.mxu0 %v281
    %673 = vmatprep.subr.mxu0 %v274
    %674 = vmatpush2.msra.mxu0 %v273
    %675 = vmatprep.subr.mxu0 %v266
    %676 = vmatpush2.msra.mxu0 %v265
    %677 = vmatprep.subr.mxu0 %v258
    %678 = vmatpush2.msra.mxu0 %v257
    %679 = vmatprep.subr.mxu0 %v250
    %680 = vmatpush2.msra.mxu0 %v249
    %681 = vmatprep.subr.mxu0 %v242
    %682 = vmatpush2.msra.mxu0 %v241
    %683 = vmatprep.subr.mxu0 %v234
    %684 = vmatpush2.msra.mxu0 %v233
    %685 = vmatprep.subr.mxu0 %v226
    %686 = vmatpush2.msra.mxu0 %v225
    %687 = vmatprep.subr.mxu0 %v218
    %688 = vmatpush2.msra.mxu0 %v217
    %689 = vmatprep.subr.mxu0 %v210
    %690 = vmatpush2.msra.mxu0 %v209
    %691 = vmatprep.subr.mxu0 %v202
    %692 = vmatpush2.msra.mxu0 %v201
    %693 = vmatprep.subr.mxu0 %v194
    %694 = vmatpush2.msra.mxu0 %v193
    %695 = vmatprep.subr.mxu0 %v186
    %696 = vmatpush2.msra.mxu0 %v185
    %697 = vmatprep.subr.mxu0 %v178
    %698 = vmatpush2.msra.mxu0 %v177
    %699 = vmatprep.mubr.f32.mxu0 %v563
    %700 = vmatmul.mubr.f32.gmra.mxu0 %v562
    %v701 = vpop.f32.mrf.mxu0
    %v702 = vadd.f32 %v598, %v701
    %v703 = vpop.f32.mrf.mxu0
    %v704 = vadd.f32 %v602, %v703
    %705 = vmatprep.mubr.f32.mxu0 %v565
    %706 = vmatmul.mubr.f32.gmra.mxu0 %v564
    %v707 = vpop.f32.mrf.mxu0
    %v708 = vadd.f32 %v598, %v707
    %v709 = vpop.f32.mrf.mxu0
    %v710 = vadd.f32 %v602, %v709
    %711 = vmatprep.mubr.f32.mxu0 %v567
    %712 = vmatmul.mubr.f32.gmra.mxu0 %v566
    %v713 = vpop.f32.mrf.mxu0
    %v714 = vadd.f32 %v598, %v713
    %v715 = vpop.f32.mrf.mxu0
    %v716 = vadd.f32 %v602, %v715
    %717 = vmatprep.mubr.f32.mxu0 %v569
    %718 = vmatmul.mubr.f32.gmra.mxu0 %v568
    %v719 = vpop.f32.mrf.mxu0
    %v720 = vadd.f32 %v598, %v719
    %v721 = vpop.f32.mrf.mxu0
    %v722 = vadd.f32 %v602, %v721
    %723 = vmatprep.mubr.f32.mxu0 %v571
    %724 = vmatmul.mubr.f32.gmra.mxu0 %v570
    %v725 = vpop.f32.mrf.mxu0
    %v726 = vadd.f32 %v598, %v725
    %v727 = vpop.f32.mrf.mxu0
    %v728 = vadd.f32 %v602, %v727
    %729 = vmatprep.mubr.f32.mxu0 %v573
    %730 = vmatmul.mubr.f32.gmra.mxu0 %v572
    %v731 = vpop.f32.mrf.mxu0
    %v732 = vadd.f32 %v598, %v731
    %v733 = vpop.f32.mrf.mxu0
    %v734 = vadd.f32 %v602, %v733
    %735 = vmatprep.mubr.f32.mxu0 %v575
    %736 = vmatmul.mubr.f32.gmra.mxu0 %v574
    %v737 = vpop.f32.mrf.mxu0
    %v738 = vadd.f32 %v598, %v737
    %v739 = vpop.f32.mrf.mxu0
    %v740 = vadd.f32 %v602, %v739
    %741 = vmatprep.mubr.f32.mxu0 %v577
    %742 = vmatmul.mubr.f32.gmra.mxu0 %v576
    %v743 = vpop.f32.mrf.mxu0
    %v744 = vadd.f32 %v598, %v743
    %v745 = vpop.f32.mrf.mxu0
    %v746 = vadd.f32 %v602, %v745
    %747 = vmatprep.mubr.f32.mxu0 %v579
    %748 = vmatmul.mubr.f32.gmra.mxu0 %v578
    %v749 = vpop.f32.mrf.mxu0
    %v750 = vadd.f32 %v598, %v749
    %v751 = vpop.f32.mrf.mxu0
    %v752 = vadd.f32 %v602, %v751
    %753 = vmatprep.mubr.f32.mxu0 %v581
    %754 = vmatmul.mubr.f32.gmra.mxu0 %v580
    %v755 = vpop.f32.mrf.mxu0
    %v756 = vadd.f32 %v598, %v755
    %v757 = vpop.f32.mrf.mxu0
    %v758 = vadd.f32 %v602, %v757
    %759 = vmatprep.mubr.f32.mxu0 %v583
    %760 = vmatmul.mubr.f32.gmra.mxu0 %v582
    %v761 = vpop.f32.mrf.mxu0
    %v762 = vadd.f32 %v598, %v761
    %v763 = vpop.f32.mrf.mxu0
    %v764 = vadd.f32 %v602, %v763
    %765 = vmatprep.mubr.f32.mxu0 %v585
    %766 = vmatmul.mubr.f32.gmra.mxu0 %v584
    %v767 = vpop.f32.mrf.mxu0
    %v768 = vadd.f32 %v598, %v767
    %v769 = vpop.f32.mrf.mxu0
    %v770 = vadd.f32 %v602, %v769
    %771 = vmatprep.mubr.f32.mxu0 %v587
    %772 = vmatmul.mubr.f32.gmra.mxu0 %v586
    %v773 = vpop.f32.mrf.mxu0
    %v774 = vadd.f32 %v598, %v773
    %v775 = vpop.f32.mrf.mxu0
    %v776 = vadd.f32 %v602, %v775
    %777 = vmatprep.mubr.f32.mxu0 %v589
    %778 = vmatmul.mubr.f32.gmra.mxu0 %v588
    %v779 = vpop.f32.mrf.mxu0
    %v780 = vadd.f32 %v598, %v779
    %v781 = vpop.f32.mrf.mxu0
    %v782 = vadd.f32 %v602, %v781
    %783 = vmatprep.mubr.f32.mxu0 %v591
    %784 = vmatmul.mubr.f32.gmra.mxu0 %v590
    %v785 = vpop.f32.mrf.mxu0
    %v786 = vadd.f32 %v598, %v785
    %v787 = vpop.f32.mrf.mxu0
    %v788 = vadd.f32 %v602, %v787
    %789 = vmatprep.mubr.f32.mxu0 %v593
    %790 = vmatmul.mubr.f32.gmra.mxu0 %v592
    %v791 = vpop.f32.mrf.mxu0
    %v792 = vadd.f32 %v598, %v791
    %v793 = vpop.f32.mrf.mxu0
    %v794 = vadd.f32 %v602, %v793
    %795 = vdwg.mxu0
    %796 = vmatprep.subr.mxu0 %v172
    %797 = vmatpush1.msra.mxu0 %v171
    %798 = vmatprep.subr.mxu0 %v164
    %799 = vmatpush1.msra.mxu0 %v163
    %800 = vmatprep.subr.mxu0 %v156
    %801 = vmatpush1.msra.mxu0 %v155
    %802 = vmatprep.subr.mxu0 %v148
    %803 = vmatpush1.msra.mxu0 %v147
    %804 = vmatprep.subr.mxu0 %v140
    %805 = vmatpush1.msra.mxu0 %v139
    %806 = vmatprep.subr.mxu0 %v132
    %807 = vmatpush1.msra.mxu0 %v131
    %808 = vmatprep.subr.mxu0 %v124
    %809 = vmatpush1.msra.mxu0 %v123
    %810 = vmatprep.subr.mxu0 %v116
    %811 = vmatpush1.msra.mxu0 %v115
    %812 = vmatprep.subr.mxu0 %v108
    %813 = vmatpush1.msra.mxu0 %v107
    %814 = vmatprep.subr.mxu0 %v100
    %815 = vmatpush1.msra.mxu0 %v99
    %816 = vmatprep.subr.mxu0 %v92
    %817 = vmatpush1.msra.mxu0 %v91
    %818 = vmatprep.subr.mxu0 %v84
    %819 = vmatpush1.msra.mxu0 %v83
    %820 = vmatprep.subr.mxu0 %v76
    %821 = vmatpush1.msra.mxu0 %v75
    %822 = vmatprep.subr.mxu0 %v68
    %823 = vmatpush1.msra.mxu0 %v67
    %824 = vmatprep.subr.mxu0 %v60
    %825 = vmatpush1.msra.mxu0 %v59
    %826 = vmatprep.subr.mxu0 %v52
    %827 = vmatpush1.msra.mxu0 %v51
    %828 = vmatprep.subr.mxu0 %v300
    %829 = vmatpush2.msra.mxu0 %v299
    %830 = vmatprep.subr.mxu0 %v292
    %831 = vmatpush2.msra.mxu0 %v291
    %832 = vmatprep.subr.mxu0 %v284
    %833 = vmatpush2.msra.mxu0 %v283
    %834 = vmatprep.subr.mxu0 %v276
    %835 = vmatpush2.msra.mxu0 %v275
    %836 = vmatprep.subr.mxu0 %v268
    %837 = vmatpush2.msra.mxu0 %v267
    %838 = vmatprep.subr.mxu0 %v260
    %839 = vmatpush2.msra.mxu0 %v259
    %840 = vmatprep.subr.mxu0 %v252
    %841 = vmatpush2.msra.mxu0 %v251
    %842 = vmatprep.subr.mxu0 %v244
    %843 = vmatpush2.msra.mxu0 %v243
    %844 = vmatprep.subr.mxu0 %v236
    %845 = vmatpush2.msra.mxu0 %v235
    %846 = vmatprep.subr.mxu0 %v228
    %847 = vmatpush2.msra.mxu0 %v227
    %848 = vmatprep.subr.mxu0 %v220
    %849 = vmatpush2.msra.mxu0 %v219
    %850 = vmatprep.subr.mxu0 %v212
    %851 = vmatpush2.msra.mxu0 %v211
    %852 = vmatprep.subr.mxu0 %v204
    %853 = vmatpush2.msra.mxu0 %v203
    %854 = vmatprep.subr.mxu0 %v196
    %855 = vmatpush2.msra.mxu0 %v195
    %856 = vmatprep.subr.mxu0 %v188
    %857 = vmatpush2.msra.mxu0 %v187
    %858 = vmatprep.subr.mxu0 %v180
    %859 = vmatpush2.msra.mxu0 %v179
    %860 = vmatprep.mubr.f32.mxu0 %v563
    %861 = vmatmul.mubr.f32.gmra.mxu0 %v562
    %v862 = vpop.f32.mrf.mxu0
    %v863 = vadd.f32 %v606, %v862
    %v864 = vpop.f32.mrf.mxu0
    %v865 = vadd.f32 %v610, %v864
    %866 = vmatprep.mubr.f32.mxu0 %v565
    %867 = vmatmul.mubr.f32.gmra.mxu0 %v564
    %v868 = vpop.f32.mrf.mxu0
    %v869 = vadd.f32 %v606, %v868
    %v870 = vpop.f32.mrf.mxu0
    %v871 = vadd.f32 %v610, %v870
    %872 = vmatprep.mubr.f32.mxu0 %v567
    %873 = vmatmul.mubr.f32.gmra.mxu0 %v566
    %v874 = vpop.f32.mrf.mxu0
    %v875 = vadd.f32 %v606, %v874
    %v876 = vpop.f32.mrf.mxu0
    %v877 = vadd.f32 %v610, %v876
    %878 = vmatprep.mubr.f32.mxu0 %v569
    %879 = vmatmul.mubr.f32.gmra.mxu0 %v568
    %v880 = vpop.f32.mrf.mxu0
    %v881 = vadd.f32 %v606, %v880
    %v882 = vpop.f32.mrf.mxu0
    %v883 = vadd.f32 %v610, %v882
    %884 = vmatprep.mubr.f32.mxu0 %v571
    %885 = vmatmul.mubr.f32.gmra.mxu0 %v570
    %v886 = vpop.f32.mrf.mxu0
    %v887 = vadd.f32 %v606, %v886
    %v888 = vpop.f32.mrf.mxu0
    %v889 = vadd.f32 %v610, %v888
    %890 = vmatprep.mubr.f32.mxu0 %v573
    %891 = vmatmul.mubr.f32.gmra.mxu0 %v572
    %v892 = vpop.f32.mrf.mxu0
    %v893 = vadd.f32 %v606, %v892
    %v894 = vpop.f32.mrf.mxu0
    %v895 = vadd.f32 %v610, %v894
    %896 = vmatprep.mubr.f32.mxu0 %v575
    %897 = vmatmul.mubr.f32.gmra.mxu0 %v574
    %v898 = vpop.f32.mrf.mxu0
    %v899 = vadd.f32 %v606, %v898
    %v900 = vpop.f32.mrf.mxu0
    %v901 = vadd.f32 %v610, %v900
    %902 = vmatprep.mubr.f32.mxu0 %v577
    %903 = vmatmul.mubr.f32.gmra.mxu0 %v576
    %v904 = vpop.f32.mrf.mxu0
    %v905 = vadd.f32 %v606, %v904
    %v906 = vpop.f32.mrf.mxu0
    %v907 = vadd.f32 %v610, %v906
    %908 = vmatprep.mubr.f32.mxu0 %v579
    %909 = vmatmul.mubr.f32.gmra.mxu0 %v578
    %v910 = vpop.f32.mrf.mxu0
    %v911 = vadd.f32 %v606, %v910
    %v912 = vpop.f32.mrf.mxu0
    %v913 = vadd.f32 %v610, %v912
    %914 = vmatprep.mubr.f32.mxu0 %v581
    %915 = vmatmul.mubr.f32.gmra.mxu0 %v580
    %v916 = vpop.f32.mrf.mxu0
    %v917 = vadd.f32 %v606, %v916
    %v918 = vpop.f32.mrf.mxu0
    %v919 = vadd.f32 %v610, %v918
    %920 = vmatprep.mubr.f32.mxu0 %v583
    %921 = vmatmul.mubr.f32.gmra.mxu0 %v582
    %v922 = vpop.f32.mrf.mxu0
    %v923 = vadd.f32 %v606, %v922
    %v924 = vpop.f32.mrf.mxu0
    %v925 = vadd.f32 %v610, %v924
    %926 = vmatprep.mubr.f32.mxu0 %v585
    %927 = vmatmul.mubr.f32.gmra.mxu0 %v584
    %v928 = vpop.f32.mrf.mxu0
    %v929 = vadd.f32 %v606, %v928
    %v930 = vpop.f32.mrf.mxu0
    %v931 = vadd.f32 %v610, %v930
    %932 = vmatprep.mubr.f32.mxu0 %v587
    %933 = vmatmul.mubr.f32.gmra.mxu0 %v586
    %v934 = vpop.f32.mrf.mxu0
    %v935 = vadd.f32 %v606, %v934
    %v936 = vpop.f32.mrf.mxu0
    %v937 = vadd.f32 %v610, %v936
    %938 = vmatprep.mubr.f32.mxu0 %v589
    %939 = vmatmul.mubr.f32.gmra.mxu0 %v588
    %v940 = vpop.f32.mrf.mxu0
    %v941 = vadd.f32 %v606, %v940
    %v942 = vpop.f32.mrf.mxu0
    %v943 = vadd.f32 %v610, %v942
    %944 = vmatprep.mubr.f32.mxu0 %v591
    %945 = vmatmul.mubr.f32.gmra.mxu0 %v590
    %v946 = vpop.f32.mrf.mxu0
    %v947 = vadd.f32 %v606, %v946
    %v948 = vpop.f32.mrf.mxu0
    %v949 = vadd.f32 %v610, %v948
    %950 = vmatprep.mubr.f32.mxu0 %v593
    %951 = vmatmul.mubr.f32.gmra.mxu0 %v592
    %v952 = vpop.f32.mrf.mxu0
    %v953 = vadd.f32 %v606, %v952
    %v954 = vpop.f32.mrf.mxu0
    %v955 = vadd.f32 %v610, %v954
    %956 = vdwg.mxu0
    %957 = vmatprep.subr.mxu0 %v174
    %958 = vmatpush1.msra.mxu0 %v173
    %959 = vmatprep.subr.mxu0 %v166
    %960 = vmatpush1.msra.mxu0 %v165
    %961 = vmatprep.subr.mxu0 %v158
    %962 = vmatpush1.msra.mxu0 %v157
    %963 = vmatprep.subr.mxu0 %v150
    %964 = vmatpush1.msra.mxu0 %v149
    %965 = vmatprep.subr.mxu0 %v142
    %966 = vmatpush1.msra.mxu0 %v141
    %967 = vmatprep.subr.mxu0 %v134
    %968 = vmatpush1.msra.mxu0 %v133
    %969 = vmatprep.subr.mxu0 %v126
    %970 = vmatpush1.msra.mxu0 %v125
    %971 = vmatprep.subr.mxu0 %v118
    %972 = vmatpush1.msra.mxu0 %v117
    %973 = vmatprep.subr.mxu0 %v110
    %974 = vmatpush1.msra.mxu0 %v109
    %975 = vmatprep.subr.mxu0 %v102
    %976 = vmatpush1.msra.mxu0 %v101
    %977 = vmatprep.subr.mxu0 %v94
    %978 = vmatpush1.msra.mxu0 %v93
    %979 = vmatprep.subr.mxu0 %v86
    %980 = vmatpush1.msra.mxu0 %v85
    %981 = vmatprep.subr.mxu0 %v78
    %982 = vmatpush1.msra.mxu0 %v77
    %983 = vmatprep.subr.mxu0 %v70
    %984 = vmatpush1.msra.mxu0 %v69
    %985 = vmatprep.subr.mxu0 %v62
    %986 = vmatpush1.msra.mxu0 %v61
    %987 = vmatprep.subr.mxu0 %v54
    %988 = vmatpush1.msra.mxu0 %v53
    %989 = vmatprep.subr.mxu0 %v302
    %990 = vmatpush2.msra.mxu0 %v301
    %991 = vmatprep.subr.mxu0 %v294
    %992 = vmatpush2.msra.mxu0 %v293
    %993 = vmatprep.subr.mxu0 %v286
    %994 = vmatpush2.msra.mxu0 %v285
    %995 = vmatprep.subr.mxu0 %v278
    %996 = vmatpush2.msra.mxu0 %v277
    %997 = vmatprep.subr.mxu0 %v270
    %998 = vmatpush2.msra.mxu0 %v269
    %999 = vmatprep.subr.mxu0 %v262
    %1000 = vmatpush2.msra.mxu0 %v261
    %1001 = vmatprep.subr.mxu0 %v254
    %1002 = vmatpush2.msra.mxu0 %v253
    %1003 = vmatprep.subr.mxu0 %v246
    %1004 = vmatpush2.msra.mxu0 %v245
    %1005 = vmatprep.subr.mxu0 %v238
    %1006 = vmatpush2.msra.mxu0 %v237
    %1007 = vmatprep.subr.mxu0 %v230
    %1008 = vmatpush2.msra.mxu0 %v229
    %1009 = vmatprep.subr.mxu0 %v222
    %1010 = vmatpush2.msra.mxu0 %v221
    %1011 = vmatprep.subr.mxu0 %v214
    %1012 = vmatpush2.msra.mxu0 %v213
    %1013 = vmatprep.subr.mxu0 %v206
    %1014 = vmatpush2.msra.mxu0 %v205
    %1015 = vmatprep.subr.mxu0 %v198
    %1016 = vmatpush2.msra.mxu0 %v197
    %1017 = vmatprep.subr.mxu0 %v190
    %1018 = vmatpush2.msra.mxu0 %v189
    %1019 = vmatprep.subr.mxu0 %v182
    %1020 = vmatpush2.msra.mxu0 %v181
    %1021 = vmatprep.mubr.f32.mxu0 %v563
    %1022 = vmatmul.mubr.f32.gmra.mxu0 %v562
    %v1023 = vpop.f32.mrf.mxu0
    %v1024 = vadd.f32 %v614, %v1023
    %v1025 = vpop.f32.mrf.mxu0
    %v1026 = vadd.f32 %v618, %v1025
    %1027 = vmatprep.mubr.f32.mxu0 %v565
    %1028 = vmatmul.mubr.f32.gmra.mxu0 %v564
    %v1029 = vpop.f32.mrf.mxu0
    %v1030 = vadd.f32 %v614, %v1029
    %v1031 = vpop.f32.mrf.mxu0
    %v1032 = vadd.f32 %v618, %v1031
    %1033 = vmatprep.mubr.f32.mxu0 %v567
    %1034 = vmatmul.mubr.f32.gmra.mxu0 %v566
    %v1035 = vpop.f32.mrf.mxu0
    %v1036 = vadd.f32 %v614, %v1035
    %v1037 = vpop.f32.mrf.mxu0
    %v1038 = vadd.f32 %v618, %v1037
    %1039 = vmatprep.mubr.f32.mxu0 %v569
    %1040 = vmatmul.mubr.f32.gmra.mxu0 %v568
    %v1041 = vpop.f32.mrf.mxu0
    %v1042 = vadd.f32 %v614, %v1041
    %v1043 = vpop.f32.mrf.mxu0
    %v1044 = vadd.f32 %v618, %v1043
    %1045 = vmatprep.mubr.f32.mxu0 %v571
    %1046 = vmatmul.mubr.f32.gmra.mxu0 %v570
    %v1047 = vpop.f32.mrf.mxu0
    %v1048 = vadd.f32 %v614, %v1047
    %v1049 = vpop.f32.mrf.mxu0
    %v1050 = vadd.f32 %v618, %v1049
    %1051 = vmatprep.mubr.f32.mxu0 %v573
    %1052 = vmatmul.mubr.f32.gmra.mxu0 %v572
    %v1053 = vpop.f32.mrf.mxu0
    %v1054 = vadd.f32 %v614, %v1053
    %v1055 = vpop.f32.mrf.mxu0
    %v1056 = vadd.f32 %v618, %v1055
    %1057 = vmatprep.mubr.f32.mxu0 %v575
    %1058 = vmatmul.mubr.f32.gmra.mxu0 %v574
    %v1059 = vpop.f32.mrf.mxu0
    %v1060 = vadd.f32 %v614, %v1059
    %v1061 = vpop.f32.mrf.mxu0
    %v1062 = vadd.f32 %v618, %v1061
    %1063 = vmatprep.mubr.f32.mxu0 %v577
    %1064 = vmatmul.mubr.f32.gmra.mxu0 %v576
    %v1065 = vpop.f32.mrf.mxu0
    %v1066 = vadd.f32 %v614, %v1065
    %v1067 = vpop.f32.mrf.mxu0
    %v1068 = vadd.f32 %v618, %v1067
    %1069 = vmatprep.mubr.f32.mxu0 %v579
    %1070 = vmatmul.mubr.f32.gmra.mxu0 %v578
    %v1071 = vpop.f32.mrf.mxu0
    %v1072 = vadd.f32 %v614, %v1071
    %v1073 = vpop.f32.mrf.mxu0
    %v1074 = vadd.f32 %v618, %v1073
    %1075 = vmatprep.mubr.f32.mxu0 %v581
    %1076 = vmatmul.mubr.f32.gmra.mxu0 %v580
    %v1077 = vpop.f32.mrf.mxu0
    %v1078 = vadd.f32 %v614, %v1077
    %v1079 = vpop.f32.mrf.mxu0
    %v1080 = vadd.f32 %v618, %v1079
    %1081 = vmatprep.mubr.f32.mxu0 %v583
    %1082 = vmatmul.mubr.f32.gmra.mxu0 %v582
    %v1083 = vpop.f32.mrf.mxu0
    %v1084 = vadd.f32 %v614, %v1083
    %v1085 = vpop.f32.mrf.mxu0
    %v1086 = vadd.f32 %v618, %v1085
    %1087 = vmatprep.mubr.f32.mxu0 %v585
    %1088 = vmatmul.mubr.f32.gmra.mxu0 %v584
    %v1089 = vpop.f32.mrf.mxu0
    %v1090 = vadd.f32 %v614, %v1089
    %v1091 = vpop.f32.mrf.mxu0
    %v1092 = vadd.f32 %v618, %v1091
    %1093 = vmatprep.mubr.f32.mxu0 %v587
    %1094 = vmatmul.mubr.f32.gmra.mxu0 %v586
    %v1095 = vpop.f32.mrf.mxu0
    %v1096 = vadd.f32 %v614, %v1095
    %v1097 = vpop.f32.mrf.mxu0
    %v1098 = vadd.f32 %v618, %v1097
    %1099 = vmatprep.mubr.f32.mxu0 %v589
    %1100 = vmatmul.mubr.f32.gmra.mxu0 %v588
    %v1101 = vpop.f32.mrf.mxu0
    %v1102 = vadd.f32 %v614, %v1101
    %v1103 = vpop.f32.mrf.mxu0
    %v1104 = vadd.f32 %v618, %v1103
    %1105 = vmatprep.mubr.f32.mxu0 %v591
    %1106 = vmatmul.mubr.f32.gmra.mxu0 %v590
    %v1107 = vpop.f32.mrf.mxu0
    %v1108 = vadd.f32 %v614, %v1107
    %v1109 = vpop.f32.mrf.mxu0
    %v1110 = vadd.f32 %v618, %v1109
    %1111 = vmatprep.mubr.f32.mxu0 %v593
    %1112 = vmatmul.mubr.f32.gmra.mxu0 %v592
    %v1113 = vpop.f32.mrf.mxu0
    %v1114 = vadd.f32 %v614, %v1113
    %v1115 = vpop.f32.mrf.mxu0
    %v1116 = vadd.f32 %v618, %v1115
    %1117 = vdwg.mxu0
    %1118 = vmatprep.subr.mxu0 %v176
    %1119 = vmatpush1.msra.mxu0 %v175
    %1120 = vmatprep.subr.mxu0 %v168
    %1121 = vmatpush1.msra.mxu0 %v167
    %1122 = vmatprep.subr.mxu0 %v160
    %1123 = vmatpush1.msra.mxu0 %v159
    %1124 = vmatprep.subr.mxu0 %v152
    %1125 = vmatpush1.msra.mxu0 %v151
    %1126 = vmatprep.subr.mxu0 %v144
    %1127 = vmatpush1.msra.mxu0 %v143
    %1128 = vmatprep.subr.mxu0 %v136
    %1129 = vmatpush1.msra.mxu0 %v135
    %1130 = vmatprep.subr.mxu0 %v128
    %1131 = vmatpush1.msra.mxu0 %v127
    %1132 = vmatprep.subr.mxu0 %v120
    %1133 = vmatpush1.msra.mxu0 %v119
    %1134 = vmatprep.subr.mxu0 %v112
    %1135 = vmatpush1.msra.mxu0 %v111
    %1136 = vmatprep.subr.mxu0 %v104
    %1137 = vmatpush1.msra.mxu0 %v103
    %1138 = vmatprep.subr.mxu0 %v96
    %1139 = vmatpush1.msra.mxu0 %v95
    %1140 = vmatprep.subr.mxu0 %v88
    %1141 = vmatpush1.msra.mxu0 %v87
    %1142 = vmatprep.subr.mxu0 %v80
    %1143 = vmatpush1.msra.mxu0 %v79
    %1144 = vmatprep.subr.mxu0 %v72
    %1145 = vmatpush1.msra.mxu0 %v71
    %1146 = vmatprep.subr.mxu0 %v64
    %1147 = vmatpush1.msra.mxu0 %v63
    %1148 = vmatprep.subr.mxu0 %v56
    %1149 = vmatpush1.msra.mxu0 %v55
    %1150 = vmatprep.subr.mxu0 %v304
    %1151 = vmatpush2.msra.mxu0 %v303
    %1152 = vmatprep.subr.mxu0 %v296
    %1153 = vmatpush2.msra.mxu0 %v295
    %1154 = vmatprep.subr.mxu0 %v288
    %1155 = vmatpush2.msra.mxu0 %v287
    %1156 = vmatprep.subr.mxu0 %v280
    %1157 = vmatpush2.msra.mxu0 %v279
    %1158 = vmatprep.subr.mxu0 %v272
    %1159 = vmatpush2.msra.mxu0 %v271
    %1160 = vmatprep.subr.mxu0 %v264
    %1161 = vmatpush2.msra.mxu0 %v263
    %1162 = vmatprep.subr.mxu0 %v256
    %1163 = vmatpush2.msra.mxu0 %v255
    %1164 = vmatprep.subr.mxu0 %v248
    %1165 = vmatpush2.msra.mxu0 %v247
    %1166 = vmatprep.subr.mxu0 %v240
    %1167 = vmatpush2.msra.mxu0 %v239
    %1168 = vmatprep.subr.mxu0 %v232
    %1169 = vmatpush2.msra.mxu0 %v231
    %1170 = vmatprep.subr.mxu0 %v224
    %1171 = vmatpush2.msra.mxu0 %v223
    %1172 = vmatprep.subr.mxu0 %v216
    %1173 = vmatpush2.msra.mxu0 %v215
    %1174 = vmatprep.subr.mxu0 %v208
    %1175 = vmatpush2.msra.mxu0 %v207
    %1176 = vmatprep.subr.mxu0 %v200
    %1177 = vmatpush2.msra.mxu0 %v199
    %1178 = vmatprep.subr.mxu0 %v192
    %1179 = vmatpush2.msra.mxu0 %v191
    %1180 = vmatprep.subr.mxu0 %v184
    %1181 = vmatpush2.msra.mxu0 %v183
    %1182 = vmatprep.mubr.f32.mxu0 %v563
    %1183 = vmatmul.mubr.f32.gmra.mxu0 %v562
    %v1184 = vpop.f32.mrf.mxu0
    %v1185 = vadd.f32 %v622, %v1184
    %v1186 = vpop.f32.mrf.mxu0
    %v1187 = vadd.f32 %v626, %v1186
    %1188 = vmatprep.mubr.f32.mxu0 %v565
    %1189 = vmatmul.mubr.f32.gmra.mxu0 %v564
    %v1190 = vpop.f32.mrf.mxu0
    %v1191 = vadd.f32 %v622, %v1190
    %v1192 = vpop.f32.mrf.mxu0
    %v1193 = vadd.f32 %v626, %v1192
    %1194 = vmatprep.mubr.f32.mxu0 %v567
    %1195 = vmatmul.mubr.f32.gmra.mxu0 %v566
    %v1196 = vpop.f32.mrf.mxu0
    %v1197 = vadd.f32 %v622, %v1196
    %v1198 = vpop.f32.mrf.mxu0
    %v1199 = vadd.f32 %v626, %v1198
    %1200 = vmatprep.mubr.f32.mxu0 %v569
    %1201 = vmatmul.mubr.f32.gmra.mxu0 %v568
    %v1202 = vpop.f32.mrf.mxu0
    %v1203 = vadd.f32 %v622, %v1202
    %v1204 = vpop.f32.mrf.mxu0
    %v1205 = vadd.f32 %v626, %v1204
    %1206 = vmatprep.mubr.f32.mxu0 %v571
    %1207 = vmatmul.mubr.f32.gmra.mxu0 %v570
    %v1208 = vpop.f32.mrf.mxu0
    %v1209 = vadd.f32 %v622, %v1208
    %v1210 = vpop.f32.mrf.mxu0
    %v1211 = vadd.f32 %v626, %v1210
    %1212 = vmatprep.mubr.f32.mxu0 %v573
    %1213 = vmatmul.mubr.f32.gmra.mxu0 %v572
    %v1214 = vpop.f32.mrf.mxu0
    %v1215 = vadd.f32 %v622, %v1214
    %v1216 = vpop.f32.mrf.mxu0
    %v1217 = vadd.f32 %v626, %v1216
    %1218 = vmatprep.mubr.f32.mxu0 %v575
    %1219 = vmatmul.mubr.f32.gmra.mxu0 %v574
    %v1220 = vpop.f32.mrf.mxu0
    %v1221 = vadd.f32 %v622, %v1220
    %v1222 = vpop.f32.mrf.mxu0
    %v1223 = vadd.f32 %v626, %v1222
    %1224 = vmatprep.mubr.f32.mxu0 %v577
    %1225 = vmatmul.mubr.f32.gmra.mxu0 %v576
    %v1226 = vpop.f32.mrf.mxu0
    %v1227 = vadd.f32 %v622, %v1226
    %v1228 = vpop.f32.mrf.mxu0
    %v1229 = vadd.f32 %v626, %v1228
    %1230 = vmatprep.mubr.f32.mxu0 %v579
    %1231 = vmatmul.mubr.f32.gmra.mxu0 %v578
    %v1232 = vpop.f32.mrf.mxu0
    %v1233 = vadd.f32 %v622, %v1232
    %v1234 = vpop.f32.mrf.mxu0
    %v1235 = vadd.f32 %v626, %v1234
    %1236 = vmatprep.mubr.f32.mxu0 %v581
    %1237 = vmatmul.mubr.f32.gmra.mxu0 %v580
    %v1238 = vpop.f32.mrf.mxu0
    %v1239 = vadd.f32 %v622, %v1238
    %v1240 = vpop.f32.mrf.mxu0
    %v1241 = vadd.f32 %v626, %v1240
    %1242 = vmatprep.mubr.f32.mxu0 %v583
    %1243 = vmatmul.mubr.f32.gmra.mxu0 %v582
    %v1244 = vpop.f32.mrf.mxu0
    %v1245 = vadd.f32 %v622, %v1244
    %v1246 = vpop.f32.mrf.mxu0
    %v1247 = vadd.f32 %v626, %v1246
    %1248 = vmatprep.mubr.f32.mxu0 %v585
    %1249 = vmatmul.mubr.f32.gmra.mxu0 %v584
    %v1250 = vpop.f32.mrf.mxu0
    %v1251 = vadd.f32 %v622, %v1250
    %v1252 = vpop.f32.mrf.mxu0
    %v1253 = vadd.f32 %v626, %v1252
    %1254 = vmatprep.mubr.f32.mxu0 %v587
    %1255 = vmatmul.mubr.f32.gmra.mxu0 %v586
    %v1256 = vpop.f32.mrf.mxu0
    %v1257 = vadd.f32 %v622, %v1256
    %v1258 = vpop.f32.mrf.mxu0
    %v1259 = vadd.f32 %v626, %v1258
    %1260 = vmatprep.mubr.f32.mxu0 %v589
    %1261 = vmatmul.mubr.f32.gmra.mxu0 %v588
    %v1262 = vpop.f32.mrf.mxu0
    %v1263 = vadd.f32 %v622, %v1262
    %v1264 = vpop.f32.mrf.mxu0
    %v1265 = vadd.f32 %v626, %v1264
    %1266 = vmatprep.mubr.f32.mxu0 %v591
    %1267 = vmatmul.mubr.f32.gmra.mxu0 %v590
    %v1268 = vpop.f32.mrf.mxu0
    %v1269 = vadd.f32 %v622, %v1268
    %v1270 = vpop.f32.mrf.mxu0
    %v1271 = vadd.f32 %v626, %v1270
    %1272 = vmatprep.mubr.f32.mxu0 %v593
    %1273 = vmatmul.mubr.f32.gmra.mxu0 %v592
    %v1274 = vpop.f32.mrf.mxu0
    %v1275 = vadd.f32 %v622, %v1274
    %v1276 = vpop.f32.mrf.mxu0
    %v1277 = vadd.f32 %v626, %v1276
    %1278 = vdwg.mxu0
    %1279 = vst [vmem:[#allocation4] sm:$0xff] %v702
    %1280 = vst [vmem:[#allocation4 + $0x8] sm:$0xff] %v704
    %1281 = vst [vmem:[#allocation4 + $0x10] sm:$0xff] %v863
    %1282 = vst [vmem:[#allocation4 + $0x18] sm:$0xff] %v865
    %1283 = vst [vmem:[#allocation4 + $0x20] sm:$0xff] %v1024
    %1284 = vst [vmem:[#allocation4 + $0x28] sm:$0xff] %v1026
    %1285 = vst [vmem:[#allocation4 + $0x30] sm:$0xff] %v1185
    %1286 = vst [vmem:[#allocation4 + $0x38] sm:$0xff] %v1187
    %1287 = vst [vmem:[#allocation4 + $0x40] sm:$0xff] %v708
    %1288 = vst [vmem:[#allocation4 + $0x48] sm:$0xff] %v710
    %1289 = vst [vmem:[#allocation4 + $0x50] sm:$0xff] %v869
    %1290 = vst [vmem:[#allocation4 + $0x58] sm:$0xff] %v871
    %1291 = vst [vmem:[#allocation4 + $0x60] sm:$0xff] %v1030
    %1292 = vst [vmem:[#allocation4 + $0x68] sm:$0xff] %v1032
    %1293 = vst [vmem:[#allocation4 + $0x70] sm:$0xff] %v1191
    %1294 = vst [vmem:[#allocation4 + $0x78] sm:$0xff] %v1193
    %1295 = vst [vmem:[#allocation4 + $0x80] sm:$0xff] %v714
    %1296 = vst [vmem:[#allocation4 + $0x88] sm:$0xff] %v716
    %1297 = vst [vmem:[#allocation4 + $0x90] sm:$0xff] %v875
    %1298 = vst [vmem:[#allocation4 + $0x98] sm:$0xff] %v877
    %1299 = vst [vmem:[#allocation4 + $0xa0] sm:$0xff] %v1036
    %1300 = vst [vmem:[#allocation4 + $0xa8] sm:$0xff] %v1038
    %1301 = vst [vmem:[#allocation4 + $0xb0] sm:$0xff] %v1197
    %1302 = vst [vmem:[#allocation4 + $0xb8] sm:$0xff] %v1199
    %1303 = vst [vmem:[#allocation4 + $0xc0] sm:$0xff] %v720
    %1304 = vst [vmem:[#allocation4 + $0xc8] sm:$0xff] %v722
    %1305 = vst [vmem:[#allocation4 + $0xd0] sm:$0xff] %v881
    %1306 = vst [vmem:[#allocation4 + $0xd8] sm:$0xff] %v883
    %1307 = vst [vmem:[#allocation4 + $0xe0] sm:$0xff] %v1042
    %1308 = vst [vmem:[#allocation4 + $0xe8] sm:$0xff] %v1044
    %1309 = vst [vmem:[#allocation4 + $0xf0] sm:$0xff] %v1203
    %1310 = vst [vmem:[#allocation4 + $0xf8] sm:$0xff] %v1205
    %1311 = vst [vmem:[#allocation4 + $0x100] sm:$0xff] %v726
    %1312 = vst [vmem:[#allocation4 + $0x108] sm:$0xff] %v728
    %1313 = vst [vmem:[#allocation4 + $0x110] sm:$0xff] %v887
    %1314 = vst [vmem:[#allocation4 + $0x118] sm:$0xff] %v889
    %1315 = vst [vmem:[#allocation4 + $0x120] sm:$0xff] %v1048
    %1316 = vst [vmem:[#allocation4 + $0x128] sm:$0xff] %v1050
    %1317 = vst [vmem:[#allocation4 + $0x130] sm:$0xff] %v1209
    %1318 = vst [vmem:[#allocation4 + $0x138] sm:$0xff] %v1211
    %1319 = vst [vmem:[#allocation4 + $0x140] sm:$0xff] %v732
    %1320 = vst [vmem:[#allocation4 + $0x148] sm:$0xff] %v734
    %1321 = vst [vmem:[#allocation4 + $0x150] sm:$0xff] %v893
    %1322 = vst [vmem:[#allocation4 + $0x158] sm:$0xff] %v895
    %1323 = vst [vmem:[#allocation4 + $0x160] sm:$0xff] %v1054
    %1324 = vst [vmem:[#allocation4 + $0x168] sm:$0xff] %v1056
    %1325 = vst [vmem:[#allocation4 + $0x170] sm:$0xff] %v1215
    %1326 = vst [vmem:[#allocation4 + $0x178] sm:$0xff] %v1217
    %1327 = vst [vmem:[#allocation4 + $0x180] sm:$0xff] %v738
    %1328 = vst [vmem:[#allocation4 + $0x188] sm:$0xff] %v740
    %1329 = vst [vmem:[#allocation4 + $0x190] sm:$0xff] %v899
    %1330 = vst [vmem:[#allocation4 + $0x198] sm:$0xff] %v901
    %1331 = vst [vmem:[#allocation4 + $0x1a0] sm:$0xff] %v1060
    %1332 = vst [vmem:[#allocation4 + $0x1a8] sm:$0xff] %v1062
    %1333 = vst [vmem:[#allocation4 + $0x1b0] sm:$0xff] %v1221
    %1334 = vst [vmem:[#allocation4 + $0x1b8] sm:$0xff] %v1223
    %1335 = vst [vmem:[#allocation4 + $0x1c0] sm:$0xff] %v744
    %1336 = vst [vmem:[#allocation4 + $0x1c8] sm:$0xff] %v746
    %1337 = vst [vmem:[#allocation4 + $0x1d0] sm:$0xff] %v905
    %1338 = vst [vmem:[#allocation4 + $0x1d8] sm:$0xff] %v907
    %1339 = vst [vmem:[#allocation4 + $0x1e0] sm:$0xff] %v1066
    %1340 = vst [vmem:[#allocation4 + $0x1e8] sm:$0xff] %v1068
    %1341 = vst [vmem:[#allocation4 + $0x1f0] sm:$0xff] %v1227
    %1342 = vst [vmem:[#allocation4 + $0x1f8] sm:$0xff] %v1229
    %1343 = vst [vmem:[#allocation4 + $0x200] sm:$0xff] %v750
    %1344 = vst [vmem:[#allocation4 + $0x208] sm:$0xff] %v752
    %1345 = vst [vmem:[#allocation4 + $0x210] sm:$0xff] %v911
    %1346 = vst [vmem:[#allocation4 + $0x218] sm:$0xff] %v913
    %1347 = vst [vmem:[#allocation4 + $0x220] sm:$0xff] %v1072
    %1348 = vst [vmem:[#allocation4 + $0x228] sm:$0xff] %v1074
    %1349 = vst [vmem:[#allocation4 + $0x230] sm:$0xff] %v1233
    %1350 = vst [vmem:[#allocation4 + $0x238] sm:$0xff] %v1235
    %1351 = vst [vmem:[#allocation4 + $0x240] sm:$0xff] %v756
    %1352 = vst [vmem:[#allocation4 + $0x248] sm:$0xff] %v758
    %1353 = vst [vmem:[#allocation4 + $0x250] sm:$0xff] %v917
    %1354 = vst [vmem:[#allocation4 + $0x258] sm:$0xff] %v919
    %1355 = vst [vmem:[#allocation4 + $0x260] sm:$0xff] %v1078
    %1356 = vst [vmem:[#allocation4 + $0x268] sm:$0xff] %v1080
    %1357 = vst [vmem:[#allocation4 + $0x270] sm:$0xff] %v1239
    %1358 = vst [vmem:[#allocation4 + $0x278] sm:$0xff] %v1241
    %1359 = vst [vmem:[#allocation4 + $0x280] sm:$0xff] %v762
    %1360 = vst [vmem:[#allocation4 + $0x288] sm:$0xff] %v764
    %1361 = vst [vmem:[#allocation4 + $0x290] sm:$0xff] %v923
    %1362 = vst [vmem:[#allocation4 + $0x298] sm:$0xff] %v925
    %1363 = vst [vmem:[#allocation4 + $0x2a0] sm:$0xff] %v1084
    %1364 = vst [vmem:[#allocation4 + $0x2a8] sm:$0xff] %v1086
    %1365 = vst [vmem:[#allocation4 + $0x2b0] sm:$0xff] %v1245
    %1366 = vst [vmem:[#allocation4 + $0x2b8] sm:$0xff] %v1247
    %1367 = vst [vmem:[#allocation4 + $0x2c0] sm:$0xff] %v768
    %1368 = vst [vmem:[#allocation4 + $0x2c8] sm:$0xff] %v770
    %1369 = vst [vmem:[#allocation4 + $0x2d0] sm:$0xff] %v929
    %1370 = vst [vmem:[#allocation4 + $0x2d8] sm:$0xff] %v931
    %1371 = vst [vmem:[#allocation4 + $0x2e0] sm:$0xff] %v1090
    %1372 = vst [vmem:[#allocation4 + $0x2e8] sm:$0xff] %v1092
    %1373 = vst [vmem:[#allocation4 + $0x2f0] sm:$0xff] %v1251
    %1374 = vst [vmem:[#allocation4 + $0x2f8] sm:$0xff] %v1253
    %1375 = vst [vmem:[#allocation4 + $0x300] sm:$0xff] %v774
    %1376 = vst [vmem:[#allocation4 + $0x308] sm:$0xff] %v776
    %1377 = vst [vmem:[#allocation4 + $0x310] sm:$0xff] %v935
    %1378 = vst [vmem:[#allocation4 + $0x318] sm:$0xff] %v937
    %1379 = vst [vmem:[#allocation4 + $0x320] sm:$0xff] %v1096
    %1380 = vst [vmem:[#allocation4 + $0x328] sm:$0xff] %v1098
    %1381 = vst [vmem:[#allocation4 + $0x330] sm:$0xff] %v1257
    %1382 = vst [vmem:[#allocation4 + $0x338] sm:$0xff] %v1259
    %1383 = vst [vmem:[#allocation4 + $0x340] sm:$0xff] %v780
    %1384 = vst [vmem:[#allocation4 + $0x348] sm:$0xff] %v782
    %1385 = vst [vmem:[#allocation4 + $0x350] sm:$0xff] %v941
    %1386 = vst [vmem:[#allocation4 + $0x358] sm:$0xff] %v943
    %1387 = vst [vmem:[#allocation4 + $0x360] sm:$0xff] %v1102
    %1388 = vst [vmem:[#allocation4 + $0x368] sm:$0xff] %v1104
    %1389 = vst [vmem:[#allocation4 + $0x370] sm:$0xff] %v1263
    %1390 = vst [vmem:[#allocation4 + $0x378] sm:$0xff] %v1265
    %1391 = vst [vmem:[#allocation4 + $0x380] sm:$0xff] %v786
    %1392 = vst [vmem:[#allocation4 + $0x388] sm:$0xff] %v788
    %1393 = vst [vmem:[#allocation4 + $0x390] sm:$0xff] %v947
    %1394 = vst [vmem:[#allocation4 + $0x398] sm:$0xff] %v949
    %1395 = vst [vmem:[#allocation4 + $0x3a0] sm:$0xff] %v1108
    %1396 = vst [vmem:[#allocation4 + $0x3a8] sm:$0xff] %v1110
    %1397 = vst [vmem:[#allocation4 + $0x3b0] sm:$0xff] %v1269
    %1398 = vst [vmem:[#allocation4 + $0x3b8] sm:$0xff] %v1271
    %1399 = vst [vmem:[#allocation4 + $0x3c0] sm:$0xff] %v792
    %1400 = vst [vmem:[#allocation4 + $0x3c8] sm:$0xff] %v794
    %1401 = vst [vmem:[#allocation4 + $0x3d0] sm:$0xff] %v953
    %1402 = vst [vmem:[#allocation4 + $0x3d8] sm:$0xff] %v955
    %1403 = vst [vmem:[#allocation4 + $0x3e0] sm:$0xff] %v1114
    %1404 = vst [vmem:[#allocation4 + $0x3e8] sm:$0xff] %v1116
    %1405 = vst [vmem:[#allocation4 + $0x3f0] sm:$0xff] %v1275
    %1406 = vst [vmem:[#allocation4 + $0x3f8] sm:$0xff] %v1277
    %v1407 = vld [vmem:[%s4] sm:$0xff]
    %v1408 = vld [vmem:[%s4 + $0x8] sm:$0xff]
    %v1409 = vld [vmem:[%s4 + $0x10] sm:$0xff]
    %v1410 = vld [vmem:[%s4 + $0x18] sm:$0xff]
    %v1411 = vld [vmem:[%s4 + $0x20] sm:$0xff]
    %v1412 = vld [vmem:[%s4 + $0x28] sm:$0xff]
    %v1413 = vld [vmem:[%s4 + $0x30] sm:$0xff]
    %v1414 = vld [vmem:[%s4 + $0x38] sm:$0xff]
    %v1415 = vld [vmem:[%s4 + $0x40] sm:$0xff]
    %v1416 = vld [vmem:[%s4 + $0x48] sm:$0xff]
    %v1417 = vld [vmem:[%s4 + $0x50] sm:$0xff]
    %v1418 = vld [vmem:[%s4 + $0x58] sm:$0xff]
    %v1419 = vld [vmem:[%s4 + $0x60] sm:$0xff]
    %v1420 = vld [vmem:[%s4 + $0x68] sm:$0xff]
    %v1421 = vld [vmem:[%s4 + $0x70] sm:$0xff]
    %v1422 = vld [vmem:[%s4 + $0x78] sm:$0xff]
    %v1423 = vld [vmem:[%s4 + $0x80] sm:$0xff]
    %v1424 = vld [vmem:[%s4 + $0x88] sm:$0xff]
    %v1425 = vld [vmem:[%s4 + $0x90] sm:$0xff]
    %v1426 = vld [vmem:[%s4 + $0x98] sm:$0xff]
    %v1427 = vld [vmem:[%s4 + $0xa0] sm:$0xff]
    %v1428 = vld [vmem:[%s4 + $0xa8] sm:$0xff]
    %v1429 = vld [vmem:[%s4 + $0xb0] sm:$0xff]
    %v1430 = vld [vmem:[%s4 + $0xb8] sm:$0xff]
    %v1431 = vld [vmem:[%s4 + $0xc0] sm:$0xff]
    %v1432 = vld [vmem:[%s4 + $0xc8] sm:$0xff]
    %v1433 = vld [vmem:[%s4 + $0xd0] sm:$0xff]
    %v1434 = vld [vmem:[%s4 + $0xd8] sm:$0xff]
    %v1435 = vld [vmem:[%s4 + $0xe0] sm:$0xff]
    %v1436 = vld [vmem:[%s4 + $0xe8] sm:$0xff]
    %v1437 = vld [vmem:[%s4 + $0xf0] sm:$0xff]
    %v1438 = vld [vmem:[%s4 + $0xf8] sm:$0xff]
    %v1439 = vld [vmem:[%s5] sm:$0x1]
    %v1440 = vld [vmem:[#allocation2] sm:$0xff]
    %v1441 = vld [vmem:[#allocation2 + $0x8] sm:$0xff]
    %v1442 = vld [vmem:[#allocation2 + $0x10] sm:$0xff]
    %v1443 = vld [vmem:[#allocation2 + $0x18] sm:$0xff]
    %v1444 = vld [vmem:[#allocation3] sm:$0xff]
    %v1445 = vld [vmem:[#allocation3 + $0x8] sm:$0xff]
    %v1446 = vld [vmem:[#allocation3 + $0x10] sm:$0xff]
    %v1447 = vld [vmem:[#allocation3 + $0x18] sm:$0xff]
    %v1448 = vld [vmem:[#allocation4] sm:$0xff]
    %v1449 = vld [vmem:[#allocation4 + $0x8] sm:$0xff]
    %v1450 = vld [vmem:[#allocation4 + $0x10] sm:$0xff]
    %v1451 = vld [vmem:[#allocation4 + $0x18] sm:$0xff]
    %v1452 = vld [vmem:[#allocation4 + $0x20] sm:$0xff]
    %v1453 = vld [vmem:[#allocation4 + $0x28] sm:$0xff]
    %v1454 = vld [vmem:[#allocation4 + $0x30] sm:$0xff]
    %v1455 = vld [vmem:[#allocation4 + $0x38] sm:$0xff]
    %v1456 = vld [vmem:[#allocation4 + $0x40] sm:$0xff]
    %v1457 = vld [vmem:[#allocation4 + $0x48] sm:$0xff]
    %v1458 = vld [vmem:[#allocation4 + $0x50] sm:$0xff]
    %v1459 = vld [vmem:[#allocation4 + $0x58] sm:$0xff]
    %v1460 = vld [vmem:[#allocation4 + $0x60] sm:$0xff]
    %v1461 = vld [vmem:[#allocation4 + $0x68] sm:$0xff]
    %v1462 = vld [vmem:[#allocation4 + $0x70] sm:$0xff]
    %v1463 = vld [vmem:[#allocation4 + $0x78] sm:$0xff]
    %1464 = vmatprep.subr.mxu0 %v426
    %1465 = vmatpush1.msra.mxu0 %v425
    %1466 = vmatprep.subr.mxu0 %v418
    %1467 = vmatpush1.msra.mxu0 %v417
    %1468 = vmatprep.subr.mxu0 %v410
    %1469 = vmatpush1.msra.mxu0 %v409
    %1470 = vmatprep.subr.mxu0 %v402
    %1471 = vmatpush1.msra.mxu0 %v401
    %1472 = vmatprep.subr.mxu0 %v394
    %1473 = vmatpush1.msra.mxu0 %v393
    %1474 = vmatprep.subr.mxu0 %v386
    %1475 = vmatpush1.msra.mxu0 %v385
    %1476 = vmatprep.subr.mxu0 %v378
    %1477 = vmatpush1.msra.mxu0 %v377
    %1478 = vmatprep.subr.mxu0 %v370
    %1479 = vmatpush1.msra.mxu0 %v369
    %1480 = vmatprep.subr.mxu0 %v362
    %1481 = vmatpush1.msra.mxu0 %v361
    %1482 = vmatprep.subr.mxu0 %v354
    %1483 = vmatpush1.msra.mxu0 %v353
    %1484 = vmatprep.subr.mxu0 %v346
    %1485 = vmatpush1.msra.mxu0 %v345
    %1486 = vmatprep.subr.mxu0 %v338
    %1487 = vmatpush1.msra.mxu0 %v337
    %1488 = vmatprep.subr.mxu0 %v330
    %1489 = vmatpush1.msra.mxu0 %v329
    %1490 = vmatprep.subr.mxu0 %v322
    %1491 = vmatpush1.msra.mxu0 %v321
    %1492 = vmatprep.subr.mxu0 %v314
    %1493 = vmatpush1.msra.mxu0 %v313
    %1494 = vmatprep.subr.mxu0 %v306
    %1495 = vmatpush1.msra.mxu0 %v305
    %1496 = vmatprep.subr.mxu0 %v554
    %1497 = vmatpush2.msra.mxu0 %v553
    %1498 = vmatprep.subr.mxu0 %v546
    %1499 = vmatpush2.msra.mxu0 %v545
    %1500 = vmatprep.subr.mxu0 %v538
    %1501 = vmatpush2.msra.mxu0 %v537
    %1502 = vmatprep.subr.mxu0 %v530
    %1503 = vmatpush2.msra.mxu0 %v529
    %1504 = vmatprep.subr.mxu0 %v522
    %1505 = vmatpush2.msra.mxu0 %v521
    %1506 = vmatprep.subr.mxu0 %v514
    %1507 = vmatpush2.msra.mxu0 %v513
    %1508 = vmatprep.subr.mxu0 %v506
    %1509 = vmatpush2.msra.mxu0 %v505
    %1510 = vmatprep.subr.mxu0 %v498
    %1511 = vmatpush2.msra.mxu0 %v497
    %1512 = vmatprep.subr.mxu0 %v490
    %1513 = vmatpush2.msra.mxu0 %v489
    %1514 = vmatprep.subr.mxu0 %v482
    %1515 = vmatpush2.msra.mxu0 %v481
    %1516 = vmatprep.subr.mxu0 %v474
    %1517 = vmatpush2.msra.mxu0 %v473
    %1518 = vmatprep.subr.mxu0 %v466
    %1519 = vmatpush2.msra.mxu0 %v465
    %1520 = vmatprep.subr.mxu0 %v458
    %1521 = vmatpush2.msra.mxu0 %v457
    %1522 = vmatprep.subr.mxu0 %v450
    %1523 = vmatpush2.msra.mxu0 %v449
    %1524 = vmatprep.subr.mxu0 %v442
    %1525 = vmatpush2.msra.mxu0 %v441
    %1526 = vmatprep.subr.mxu0 %v434
    %1527 = vmatpush2.msra.mxu0 %v433
    %1528 = vmatprep.mubr.f32.mxu0 %v1441
    %1529 = vmatmul.mubr.f32.gmra.mxu0 %v1440
    %v1530 = vpop.f32.mrf.mxu0
    %v1531 = vadd.f32 0.0, %v1530
    %v1532 = vpop.f32.mrf.mxu0
    %v1533 = vadd.f32 0.0, %v1532
    %1534 = vmatprep.mubr.f32.mxu0 %v1443
    %1535 = vmatmul.mubr.f32.gmra.mxu0 %v1442
    %v1536 = vpop.f32.mrf.mxu0
    %v1537 = vadd.f32 0.0, %v1536
    %v1538 = vpop.f32.mrf.mxu0
    %v1539 = vadd.f32 0.0, %v1538
    %1540 = vdwg.mxu0
    %1541 = vmatprep.subr.mxu0 %v428
    %1542 = vmatpush1.msra.mxu0 %v427
    %1543 = vmatprep.subr.mxu0 %v420
    %1544 = vmatpush1.msra.mxu0 %v419
    %1545 = vmatprep.subr.mxu0 %v412
    %1546 = vmatpush1.msra.mxu0 %v411
    %1547 = vmatprep.subr.mxu0 %v404
    %1548 = vmatpush1.msra.mxu0 %v403
    %1549 = vmatprep.subr.mxu0 %v396
    %1550 = vmatpush1.msra.mxu0 %v395
    %1551 = vmatprep.subr.mxu0 %v388
    %1552 = vmatpush1.msra.mxu0 %v387
    %1553 = vmatprep.subr.mxu0 %v380
    %1554 = vmatpush1.msra.mxu0 %v379
    %1555 = vmatprep.subr.mxu0 %v372
    %1556 = vmatpush1.msra.mxu0 %v371
    %1557 = vmatprep.subr.mxu0 %v364
    %1558 = vmatpush1.msra.mxu0 %v363
    %1559 = vmatprep.subr.mxu0 %v356
    %1560 = vmatpush1.msra.mxu0 %v355
    %1561 = vmatprep.subr.mxu0 %v348
    %1562 = vmatpush1.msra.mxu0 %v347
    %1563 = vmatprep.subr.mxu0 %v340
    %1564 = vmatpush1.msra.mxu0 %v339
    %1565 = vmatprep.subr.mxu0 %v332
    %1566 = vmatpush1.msra.mxu0 %v331
    %1567 = vmatprep.subr.mxu0 %v324
    %1568 = vmatpush1.msra.mxu0 %v323
    %1569 = vmatprep.subr.mxu0 %v316
    %1570 = vmatpush1.msra.mxu0 %v315
    %1571 = vmatprep.subr.mxu0 %v308
    %1572 = vmatpush1.msra.mxu0 %v307
    %1573 = vmatprep.subr.mxu0 %v556
    %1574 = vmatpush2.msra.mxu0 %v555
    %1575 = vmatprep.subr.mxu0 %v548
    %1576 = vmatpush2.msra.mxu0 %v547
    %1577 = vmatprep.subr.mxu0 %v540
    %1578 = vmatpush2.msra.mxu0 %v539
    %1579 = vmatprep.subr.mxu0 %v532
    %1580 = vmatpush2.msra.mxu0 %v531
    %1581 = vmatprep.subr.mxu0 %v524
    %1582 = vmatpush2.msra.mxu0 %v523
    %1583 = vmatprep.subr.mxu0 %v516
    %1584 = vmatpush2.msra.mxu0 %v515
    %1585 = vmatprep.subr.mxu0 %v508
    %1586 = vmatpush2.msra.mxu0 %v507
    %1587 = vmatprep.subr.mxu0 %v500
    %1588 = vmatpush2.msra.mxu0 %v499
    %1589 = vmatprep.subr.mxu0 %v492
    %1590 = vmatpush2.msra.mxu0 %v491
    %1591 = vmatprep.subr.mxu0 %v484
    %1592 = vmatpush2.msra.mxu0 %v483
    %1593 = vmatprep.subr.mxu0 %v476
    %1594 = vmatpush2.msra.mxu0 %v475
    %1595 = vmatprep.subr.mxu0 %v468
    %1596 = vmatpush2.msra.mxu0 %v467
    %1597 = vmatprep.subr.mxu0 %v460
    %1598 = vmatpush2.msra.mxu0 %v459
    %1599 = vmatprep.subr.mxu0 %v452
    %1600 = vmatpush2.msra.mxu0 %v451
    %1601 = vmatprep.subr.mxu0 %v444
    %1602 = vmatpush2.msra.mxu0 %v443
    %1603 = vmatprep.subr.mxu0 %v436
    %1604 = vmatpush2.msra.mxu0 %v435
    %1605 = vmatprep.mubr.f32.mxu0 %v1441
    %1606 = vmatmul.mubr.f32.gmra.mxu0 %v1440
    %v1607 = vpop.f32.mrf.mxu0
    %v1608 = vadd.f32 0.0, %v1607
    %v1609 = vpop.f32.mrf.mxu0
    %v1610 = vadd.f32 0.0, %v1609
    %1611 = vmatprep.mubr.f32.mxu0 %v1443
    %1612 = vmatmul.mubr.f32.gmra.mxu0 %v1442
    %v1613 = vpop.f32.mrf.mxu0
    %v1614 = vadd.f32 0.0, %v1613
    %v1615 = vpop.f32.mrf.mxu0
    %v1616 = vadd.f32 0.0, %v1615
    %1617 = vdwg.mxu0
    %1618 = vmatprep.subr.mxu0 %v430
    %1619 = vmatpush1.msra.mxu0 %v429
    %1620 = vmatprep.subr.mxu0 %v422
    %1621 = vmatpush1.msra.mxu0 %v421
    %1622 = vmatprep.subr.mxu0 %v414
    %1623 = vmatpush1.msra.mxu0 %v413
    %1624 = vmatprep.subr.mxu0 %v406
    %1625 = vmatpush1.msra.mxu0 %v405
    %1626 = vmatprep.subr.mxu0 %v398
    %1627 = vmatpush1.msra.mxu0 %v397
    %1628 = vmatprep.subr.mxu0 %v390
    %1629 = vmatpush1.msra.mxu0 %v389
    %1630 = vmatprep.subr.mxu0 %v382
    %1631 = vmatpush1.msra.mxu0 %v381
    %1632 = vmatprep.subr.mxu0 %v374
    %1633 = vmatpush1.msra.mxu0 %v373
    %1634 = vmatprep.subr.mxu0 %v366
    %1635 = vmatpush1.msra.mxu0 %v365
    %1636 = vmatprep.subr.mxu0 %v358
    %1637 = vmatpush1.msra.mxu0 %v357
    %1638 = vmatprep.subr.mxu0 %v350
    %1639 = vmatpush1.msra.mxu0 %v349
    %1640 = vmatprep.subr.mxu0 %v342
    %1641 = vmatpush1.msra.mxu0 %v341
    %1642 = vmatprep.subr.mxu0 %v334
    %1643 = vmatpush1.msra.mxu0 %v333
    %1644 = vmatprep.subr.mxu0 %v326
    %1645 = vmatpush1.msra.mxu0 %v325
    %1646 = vmatprep.subr.mxu0 %v318
    %1647 = vmatpush1.msra.mxu0 %v317
    %1648 = vmatprep.subr.mxu0 %v310
    %1649 = vmatpush1.msra.mxu0 %v309
    %1650 = vmatprep.subr.mxu0 %v558
    %1651 = vmatpush2.msra.mxu0 %v557
    %1652 = vmatprep.subr.mxu0 %v550
    %1653 = vmatpush2.msra.mxu0 %v549
    %1654 = vmatprep.subr.mxu0 %v542
    %1655 = vmatpush2.msra.mxu0 %v541
    %1656 = vmatprep.subr.mxu0 %v534
    %1657 = vmatpush2.msra.mxu0 %v533
    %1658 = vmatprep.subr.mxu0 %v526
    %1659 = vmatpush2.msra.mxu0 %v525
    %1660 = vmatprep.subr.mxu0 %v518
    %1661 = vmatpush2.msra.mxu0 %v517
    %1662 = vmatprep.subr.mxu0 %v510
    %1663 = vmatpush2.msra.mxu0 %v509
    %1664 = vmatprep.subr.mxu0 %v502
    %1665 = vmatpush2.msra.mxu0 %v501
    %1666 = vmatprep.subr.mxu0 %v494
    %1667 = vmatpush2.msra.mxu0 %v493
    %1668 = vmatprep.subr.mxu0 %v486
    %1669 = vmatpush2.msra.mxu0 %v485
    %1670 = vmatprep.subr.mxu0 %v478
    %1671 = vmatpush2.msra.mxu0 %v477
    %1672 = vmatprep.subr.mxu0 %v470
    %1673 = vmatpush2.msra.mxu0 %v469
    %1674 = vmatprep.subr.mxu0 %v462
    %1675 = vmatpush2.msra.mxu0 %v461
    %1676 = vmatprep.subr.mxu0 %v454
    %1677 = vmatpush2.msra.mxu0 %v453
    %1678 = vmatprep.subr.mxu0 %v446
    %1679 = vmatpush2.msra.mxu0 %v445
    %1680 = vmatprep.subr.mxu0 %v438
    %1681 = vmatpush2.msra.mxu0 %v437
    %1682 = vmatprep.mubr.f32.mxu0 %v1441
    %1683 = vmatmul.mubr.f32.gmra.mxu0 %v1440
    %v1684 = vpop.f32.mrf.mxu0
    %v1685 = vadd.f32 0.0, %v1684
    %v1686 = vpop.f32.mrf.mxu0
    %v1687 = vadd.f32 0.0, %v1686
    %1688 = vmatprep.mubr.f32.mxu0 %v1443
    %1689 = vmatmul.mubr.f32.gmra.mxu0 %v1442
    %v1690 = vpop.f32.mrf.mxu0
    %v1691 = vadd.f32 0.0, %v1690
    %v1692 = vpop.f32.mrf.mxu0
    %v1693 = vadd.f32 0.0, %v1692
    %1694 = vdwg.mxu0
    %1695 = vmatprep.subr.mxu0 %v432
    %1696 = vmatpush1.msra.mxu0 %v431
    %1697 = vmatprep.subr.mxu0 %v424
    %1698 = vmatpush1.msra.mxu0 %v423
    %1699 = vmatprep.subr.mxu0 %v416
    %1700 = vmatpush1.msra.mxu0 %v415
    %1701 = vmatprep.subr.mxu0 %v408
    %1702 = vmatpush1.msra.mxu0 %v407
    %1703 = vmatprep.subr.mxu0 %v400
    %1704 = vmatpush1.msra.mxu0 %v399
    %1705 = vmatprep.subr.mxu0 %v392
    %1706 = vmatpush1.msra.mxu0 %v391
    %1707 = vmatprep.subr.mxu0 %v384
    %1708 = vmatpush1.msra.mxu0 %v383
    %1709 = vmatprep.subr.mxu0 %v376
    %1710 = vmatpush1.msra.mxu0 %v375
    %1711 = vmatprep.subr.mxu0 %v368
    %1712 = vmatpush1.msra.mxu0 %v367
    %1713 = vmatprep.subr.mxu0 %v360
    %1714 = vmatpush1.msra.mxu0 %v359
    %1715 = vmatprep.subr.mxu0 %v352
    %1716 = vmatpush1.msra.mxu0 %v351
    %1717 = vmatprep.subr.mxu0 %v344
    %1718 = vmatpush1.msra.mxu0 %v343
    %1719 = vmatprep.subr.mxu0 %v336
    %1720 = vmatpush1.msra.mxu0 %v335
    %1721 = vmatprep.subr.mxu0 %v328
    %1722 = vmatpush1.msra.mxu0 %v327
    %1723 = vmatprep.subr.mxu0 %v320
    %1724 = vmatpush1.msra.mxu0 %v319
    %1725 = vmatprep.subr.mxu0 %v312
    %1726 = vmatpush1.msra.mxu0 %v311
    %1727 = vmatprep.subr.mxu0 %v560
    %1728 = vmatpush2.msra.mxu0 %v559
    %1729 = vmatprep.subr.mxu0 %v552
    %1730 = vmatpush2.msra.mxu0 %v551
    %1731 = vmatprep.subr.mxu0 %v544
    %1732 = vmatpush2.msra.mxu0 %v543
    %1733 = vmatprep.subr.mxu0 %v536
    %1734 = vmatpush2.msra.mxu0 %v535
    %1735 = vmatprep.subr.mxu0 %v528
    %1736 = vmatpush2.msra.mxu0 %v527
    %1737 = vmatprep.subr.mxu0 %v520
    %1738 = vmatpush2.msra.mxu0 %v519
    %1739 = vmatprep.subr.mxu0 %v512
    %1740 = vmatpush2.msra.mxu0 %v511
    %1741 = vmatprep.subr.mxu0 %v504
    %1742 = vmatpush2.msra.mxu0 %v503
    %1743 = vmatprep.subr.mxu0 %v496
    %1744 = vmatpush2.msra.mxu0 %v495
    %1745 = vmatprep.subr.mxu0 %v488
    %1746 = vmatpush2.msra.mxu0 %v487
    %1747 = vmatprep.subr.mxu0 %v480
    %1748 = vmatpush2.msra.mxu0 %v479
    %1749 = vmatprep.subr.mxu0 %v472
    %1750 = vmatpush2.msra.mxu0 %v471
    %1751 = vmatprep.subr.mxu0 %v464
    %1752 = vmatpush2.msra.mxu0 %v463
    %1753 = vmatprep.subr.mxu0 %v456
    %1754 = vmatpush2.msra.mxu0 %v455
    %1755 = vmatprep.subr.mxu0 %v448
    %1756 = vmatpush2.msra.mxu0 %v447
    %1757 = vmatprep.subr.mxu0 %v440
    %1758 = vmatpush2.msra.mxu0 %v439
    %1759 = vmatprep.mubr.f32.mxu0 %v1441
    %1760 = vmatmul.mubr.f32.gmra.mxu0 %v1440
    %v1761 = vpop.f32.mrf.mxu0
    %v1762 = vadd.f32 0.0, %v1761
    %v1763 = vpop.f32.mrf.mxu0
    %v1764 = vadd.f32 0.0, %v1763
    %1765 = vmatprep.mubr.f32.mxu0 %v1443
    %1766 = vmatmul.mubr.f32.gmra.mxu0 %v1442
    %v1767 = vpop.f32.mrf.mxu0
    %v1768 = vadd.f32 0.0, %v1767
    %v1769 = vpop.f32.mrf.mxu0
    %v1770 = vadd.f32 0.0, %v1769
    %1771 = vdwg.mxu0
    %v1772 = vadd.f32 %v1448, %v1531
    %v1773 = vadd.f32 %v1449, %v1533
    %v1774 = vadd.f32 %v1450, %v1608
    %v1775 = vadd.f32 %v1451, %v1610
    %v1776 = vadd.f32 %v1452, %v1685
    %v1777 = vadd.f32 %v1453, %v1687
    %v1778 = vadd.f32 %v1454, %v1762
    %v1779 = vadd.f32 %v1455, %v1764
    %v1780 = vadd.f32 %v1456, %v1537
    %v1781 = vadd.f32 %v1457, %v1539
    %v1782 = vadd.f32 %v1458, %v1614
    %v1783 = vadd.f32 %v1459, %v1616
    %v1784 = vadd.f32 %v1460, %v1691
    %v1785 = vadd.f32 %v1461, %v1693
    %v1786 = vadd.f32 %v1462, %v1768
    %v1787 = vadd.f32 %v1463, %v1770
    %v1788 = vxor.u32 %v1772, 2147483648
    %v1789 = vxor.u32 %v1773, 2147483648
    %v1790 = vxor.u32 %v1780, 2147483648
    %v1791 = vxor.u32 %v1781, 2147483648
    %v1792 = vmul.f32 %v1788, 1.442695
    %v1793 = vpow.pop %v1792
    %v1794 = vmul.f32 %v1789, 1.442695
    %v1795 = vpow.pop %v1794
    %v1796 = vmul.f32 %v1790, 1.442695
    %v1797 = vpow.pop %v1796
    %v1798 = vmul.f32 %v1791, 1.442695
    %v1799 = vpow.pop %v1798
    %v1800 = vadd.f32 %v1793, 1.0
    %v1801 = vadd.f32 %v1795, 1.0
    %v1802 = vadd.f32 %v1797, 1.0
    %v1803 = vadd.f32 %v1799, 1.0
    %v1804 = vrcp.pop %v1800
    %v1805 = vmul.f32 1.0, %v1804
    %v1806 = vrcp.pop %v1801
    %v1807 = vmul.f32 1.0, %v1806
    %v1808 = vrcp.pop %v1802
    %v1809 = vmul.f32 1.0, %v1808
    %v1810 = vrcp.pop %v1803
    %v1811 = vmul.f32 1.0, %v1810
    %v1812 = vxor.u32 %v1774, 2147483648
    %v1813 = vxor.u32 %v1775, 2147483648
    %v1814 = vxor.u32 %v1782, 2147483648
    %v1815 = vxor.u32 %v1783, 2147483648
    %v1816 = vmul.f32 %v1812, 1.442695
    %v1817 = vpow.pop %v1816
    %v1818 = vmul.f32 %v1813, 1.442695
    %v1819 = vpow.pop %v1818
    %v1820 = vmul.f32 %v1814, 1.442695
    %v1821 = vpow.pop %v1820
    %v1822 = vmul.f32 %v1815, 1.442695
    %v1823 = vpow.pop %v1822
    %v1824 = vadd.f32 %v1817, 1.0
    %v1825 = vadd.f32 %v1819, 1.0
    %v1826 = vadd.f32 %v1821, 1.0
    %v1827 = vadd.f32 %v1823, 1.0
    %v1828 = vrcp.pop %v1824
    %v1829 = vmul.f32 1.0, %v1828
    %v1830 = vrcp.pop %v1825
    %v1831 = vmul.f32 1.0, %v1830
    %v1832 = vrcp.pop %v1826
    %v1833 = vmul.f32 1.0, %v1832
    %v1834 = vrcp.pop %v1827
    %v1835 = vmul.f32 1.0, %v1834
    %v1836 = vtanh.pop %v1776
    %v1837 = vtanh.pop %v1777
    %v1838 = vtanh.pop %v1784
    %v1839 = vtanh.pop %v1785
    %v1840 = vxor.u32 %v1778, 2147483648
    %v1841 = vxor.u32 %v1779, 2147483648
    %v1842 = vxor.u32 %v1786, 2147483648
    %v1843 = vxor.u32 %v1787, 2147483648
    %v1844 = vmul.f32 %v1840, 1.442695
    %v1845 = vpow.pop %v1844
    %v1846 = vmul.f32 %v1841, 1.442695
    %v1847 = vpow.pop %v1846
    %v1848 = vmul.f32 %v1842, 1.442695
    %v1849 = vpow.pop %v1848
    %v1850 = vmul.f32 %v1843, 1.442695
    %v1851 = vpow.pop %v1850
    %v1852 = vadd.f32 %v1845, 1.0
    %v1853 = vadd.f32 %v1847, 1.0
    %v1854 = vadd.f32 %v1849, 1.0
    %v1855 = vadd.f32 %v1851, 1.0
    %v1856 = vrcp.pop %v1852
    %v1857 = vmul.f32 1.0, %v1856
    %v1858 = vrcp.pop %v1853
    %v1859 = vmul.f32 1.0, %v1858
    %v1860 = vrcp.pop %v1854
    %v1861 = vmul.f32 1.0, %v1860
    %v1862 = vrcp.pop %v1855
    %v1863 = vmul.f32 1.0, %v1862
    %v1864 = vmul.f32 %v1829, %v1444
    %v1865 = vmul.f32 %v1831, %v1445
    %v1866 = vmul.f32 %v1833, %v1446
    %v1867 = vmul.f32 %v1835, %v1447
    %v1868 = vmul.f32 %v1805, %v1836
    %v1869 = vmul.f32 %v1807, %v1837
    %v1870 = vmul.f32 %v1809, %v1838
    %v1871 = vmul.f32 %v1811, %v1839
    %v1872 = vadd.f32 %v1864, %v1868
    %v1873 = vadd.f32 %v1865, %v1869
    %v1874 = vadd.f32 %v1866, %v1870
    %v1875 = vadd.f32 %v1867, %v1871
    %v1876 = vtanh.pop %v1872
    %v1877 = vtanh.pop %v1873
    %v1878 = vtanh.pop %v1874
    %v1879 = vtanh.pop %v1875
    %v1880 = vmul.f32 %v1857, %v1876
    %v1881 = vmul.f32 %v1859, %v1877
    %v1882 = vmul.f32 %v1861, %v1878
    %v1883 = vmul.f32 %v1863, %v1879
    %v1885 = vlaneseq
    %v1886 = vshrl.u32 %v1885, 7
    %v1887 = vsub.s32 0, %v1886
    %v1888 = vrot.slane %v1439, %v1887
    %1890 = vmatprep.subr.mxu0 0.0
    %1891 = vmatpush1.msra.mxu0 %v1422
    %1892 = vmatprep.subr.mxu0 0.0
    %1893 = vmatpush1.msra.mxu0 %v1421
    %1894 = vmatprep.subr.mxu0 0.0
    %1895 = vmatpush1.msra.mxu0 %v1420
    %1896 = vmatprep.subr.mxu0 0.0
    %1897 = vmatpush1.msra.mxu0 %v1419
    %1898 = vmatprep.subr.mxu0 0.0
    %1899 = vmatpush1.msra.mxu0 %v1418
    %1900 = vmatprep.subr.mxu0 0.0
    %1901 = vmatpush1.msra.mxu0 %v1417
    %1902 = vmatprep.subr.mxu0 0.0
    %1903 = vmatpush1.msra.mxu0 %v1416
    %1904 = vmatprep.subr.mxu0 0.0
    %1905 = vmatpush1.msra.mxu0 %v1415
    %1906 = vmatprep.subr.mxu0 0.0
    %1907 = vmatpush1.msra.mxu0 %v1414
    %1908 = vmatprep.subr.mxu0 0.0
    %1909 = vmatpush1.msra.mxu0 %v1413
    %1910 = vmatprep.subr.mxu0 0.0
    %1911 = vmatpush1.msra.mxu0 %v1412
    %1912 = vmatprep.subr.mxu0 0.0
    %1913 = vmatpush1.msra.mxu0 %v1411
    %1914 = vmatprep.subr.mxu0 0.0
    %1915 = vmatpush1.msra.mxu0 %v1410
    %1916 = vmatprep.subr.mxu0 0.0
    %1917 = vmatpush1.msra.mxu0 %v1409
    %1918 = vmatprep.subr.mxu0 0.0
    %1919 = vmatpush1.msra.mxu0 %v1408
    %1920 = vmatprep.subr.mxu0 0.0
    %1921 = vmatpush1.msra.mxu0 %v1407
    %1922 = vmatprep.subr.mxu0 0.0
    %1923 = vmatpush2.msra.mxu0 %v1438
    %1924 = vmatprep.subr.mxu0 0.0
    %1925 = vmatpush2.msra.mxu0 %v1437
    %1926 = vmatprep.subr.mxu0 0.0
    %1927 = vmatpush2.msra.mxu0 %v1436
    %1928 = vmatprep.subr.mxu0 0.0
    %1929 = vmatpush2.msra.mxu0 %v1435
    %1930 = vmatprep.subr.mxu0 0.0
    %1931 = vmatpush2.msra.mxu0 %v1434
    %1932 = vmatprep.subr.mxu0 0.0
    %1933 = vmatpush2.msra.mxu0 %v1433
    %1934 = vmatprep.subr.mxu0 0.0
    %1935 = vmatpush2.msra.mxu0 %v1432
    %1936 = vmatprep.subr.mxu0 0.0
    %1937 = vmatpush2.msra.mxu0 %v1431
    %1938 = vmatprep.subr.mxu0 0.0
    %1939 = vmatpush2.msra.mxu0 %v1430
    %1940 = vmatprep.subr.mxu0 0.0
    %1941 = vmatpush2.msra.mxu0 %v1429
    %1942 = vmatprep.subr.mxu0 0.0
    %1943 = vmatpush2.msra.mxu0 %v1428
    %1944 = vmatprep.subr.mxu0 0.0
    %1945 = vmatpush2.msra.mxu0 %v1427
    %1946 = vmatprep.subr.mxu0 0.0
    %1947 = vmatpush2.msra.mxu0 %v1426
    %1948 = vmatprep.subr.mxu0 0.0
    %1949 = vmatpush2.msra.mxu0 %v1425
    %1950 = vmatprep.subr.mxu0 0.0
    %1951 = vmatpush2.msra.mxu0 %v1424
    %1952 = vmatprep.subr.mxu0 0.0
    %1953 = vmatpush2.msra.mxu0 %v1423
    %1954 = vmatprep.mubr.f32.mxu0 %v1881
    %1955 = vmatmul.mubr.f32.gmra.mxu0 %v1880
    %v1956 = vpop.f32.mrf.mxu0
    %v1957 = vadd.f32 %v1888, %v1956
    %v1958 = vpop.f32.mrf.mxu0
    %1959 = vmatprep.mubr.f32.mxu0 %v1883
    %1960 = vmatmul.mubr.f32.gmra.mxu0 %v1882
    %v1961 = vpop.f32.mrf.mxu0
    %v1962 = vadd.f32 %v1888, %v1961
    %v1963 = vpop.f32.mrf.mxu0
    %1964 = vdwg.mxu0
    %1965 = vst [vmem:[%s6] sm:$0xff] %v1957
    %1966 = vst [vmem:[%s6 + $0x8] sm:$0xff] %v1962
    %s1967 = scalar_lea.vmem [#allocation4], 128
    %v1968 = vld [vmem:[%s1967] sm:$0xff]
    %v1969 = vld [vmem:[%s1967 + $0x8] sm:$0xff]
    %v1970 = vld [vmem:[%s1967 + $0x10] sm:$0xff]
    %v1971 = vld [vmem:[%s1967 + $0x18] sm:$0xff]
    %v1972 = vld [vmem:[%s1967 + $0x20] sm:$0xff]
    %v1973 = vld [vmem:[%s1967 + $0x28] sm:$0xff]
    %v1974 = vld [vmem:[%s1967 + $0x30] sm:$0xff]
    %v1975 = vld [vmem:[%s1967 + $0x38] sm:$0xff]
    %v1976 = vld [vmem:[%s1967 + $0x40] sm:$0xff]
    %v1977 = vld [vmem:[%s1967 + $0x48] sm:$0xff]
    %v1978 = vld [vmem:[%s1967 + $0x50] sm:$0xff]
    %v1979 = vld [vmem:[%s1967 + $0x58] sm:$0xff]
    %v1980 = vld [vmem:[%s1967 + $0x60] sm:$0xff]
    %v1981 = vld [vmem:[%s1967 + $0x68] sm:$0xff]
    %v1982 = vld [vmem:[%s1967 + $0x70] sm:$0xff]
    %v1983 = vld [vmem:[%s1967 + $0x78] sm:$0xff]
    %1984 = vmatprep.subr.mxu0 %v426
    %1985 = vmatpush1.msra.mxu0 %v425
    %1986 = vmatprep.subr.mxu0 %v418
    %1987 = vmatpush1.msra.mxu0 %v417
    %1988 = vmatprep.subr.mxu0 %v410
    %1989 = vmatpush1.msra.mxu0 %v409
    %1990 = vmatprep.subr.mxu0 %v402
    %1991 = vmatpush1.msra.mxu0 %v401
    %1992 = vmatprep.subr.mxu0 %v394
    %1993 = vmatpush1.msra.mxu0 %v393
    %1994 = vmatprep.subr.mxu0 %v386
    %1995 = vmatpush1.msra.mxu0 %v385
    %1996 = vmatprep.subr.mxu0 %v378
    %1997 = vmatpush1.msra.mxu0 %v377
    %1998 = vmatprep.subr.mxu0 %v370
    %1999 = vmatpush1.msra.mxu0 %v369
    %2000 = vmatprep.subr.mxu0 %v362
    %2001 = vmatpush1.msra.mxu0 %v361
    %2002 = vmatprep.subr.mxu0 %v354
    %2003 = vmatpush1.msra.mxu0 %v353
    %2004 = vmatprep.subr.mxu0 %v346
    %2005 = vmatpush1.msra.mxu0 %v345
    %2006 = vmatprep.subr.mxu0 %v338
    %2007 = vmatpush1.msra.mxu0 %v337
    %2008 = vmatprep.subr.mxu0 %v330
    %2009 = vmatpush1.msra.mxu0 %v329
    %2010 = vmatprep.subr.mxu0 %v322
    %2011 = vmatpush1.msra.mxu0 %v321
    %2012 = vmatprep.subr.mxu0 %v314
    %2013 = vmatpush1.msra.mxu0 %v313
    %2014 = vmatprep.subr.mxu0 %v306
    %2015 = vmatpush1.msra.mxu0 %v305
    %2016 = vmatprep.subr.mxu0 %v554
    %2017 = vmatpush2.msra.mxu0 %v553
    %2018 = vmatprep.subr.mxu0 %v546
    %2019 = vmatpush2.msra.mxu0 %v545
    %2020 = vmatprep.subr.mxu0 %v538
    %2021 = vmatpush2.msra.mxu0 %v537
    %2022 = vmatprep.subr.mxu0 %v530
    %2023 = vmatpush2.msra.mxu0 %v529
    %2024 = vmatprep.subr.mxu0 %v522
    %2025 = vmatpush2.msra.mxu0 %v521
    %2026 = vmatprep.subr.mxu0 %v514
    %2027 = vmatpush2.msra.mxu0 %v513
    %2028 = vmatprep.subr.mxu0 %v506
    %2029 = vmatpush2.msra.mxu0 %v505
    %2030 = vmatprep.subr.mxu0 %v498
    %2031 = vmatpush2.msra.mxu0 %v497
    %2032 = vmatprep.subr.mxu0 %v490
    %2033 = vmatpush2.msra.mxu0 %v489
    %2034 = vmatprep.subr.mxu0 %v482
    %2035 = vmatpush2.msra.mxu0 %v481
    %2036 = vmatprep.subr.mxu0 %v474
    %2037 = vmatpush2.msra.mxu0 %v473
    %2038 = vmatprep.subr.mxu0 %v466
    %2039 = vmatpush2.msra.mxu0 %v465
    %2040 = vmatprep.subr.mxu0 %v458
    %2041 = vmatpush2.msra.mxu0 %v457
    %2042 = vmatprep.subr.mxu0 %v450
    %2043 = vmatpush2.msra.mxu0 %v449
    %2044 = vmatprep.subr.mxu0 %v442
    %2045 = vmatpush2.msra.mxu0 %v441
    %2046 = vmatprep.subr.mxu0 %v434
    %2047 = vmatpush2.msra.mxu0 %v433
    %2048 = vmatprep.mubr.f32.mxu0 %v1881
    %2049 = vmatmul.mubr.f32.gmra.mxu0 %v1880
    %v2050 = vpop.f32.mrf.mxu0
    %v2051 = vadd.f32 0.0, %v2050
    %v2052 = vpop.f32.mrf.mxu0
    %v2053 = vadd.f32 0.0, %v2052
    %2054 = vmatprep.mubr.f32.mxu0 %v1883
    %2055 = vmatmul.mubr.f32.gmra.mxu0 %v1882
    %v2056 = vpop.f32.mrf.mxu0
    %v2057 = vadd.f32 0.0, %v2056
    %v2058 = vpop.f32.mrf.mxu0
    %v2059 = vadd.f32 0.0, %v2058
    %2060 = vdwg.mxu0
    %2061 = vmatprep.subr.mxu0 %v428
    %2062 = vmatpush1.msra.mxu0 %v427
    %2063 = vmatprep.subr.mxu0 %v420
    %2064 = vmatpush1.msra.mxu0 %v419
    %2065 = vmatprep.subr.mxu0 %v412
    %2066 = vmatpush1.msra.mxu0 %v411
    %2067 = vmatprep.subr.mxu0 %v404
    %2068 = vmatpush1.msra.mxu0 %v403
    %2069 = vmatprep.subr.mxu0 %v396
    %2070 = vmatpush1.msra.mxu0 %v395
    %2071 = vmatprep.subr.mxu0 %v388
    %2072 = vmatpush1.msra.mxu0 %v387
    %2073 = vmatprep.subr.mxu0 %v380
    %2074 = vmatpush1.msra.mxu0 %v379
    %2075 = vmatprep.subr.mxu0 %v372
    %2076 = vmatpush1.msra.mxu0 %v371
    %2077 = vmatprep.subr.mxu0 %v364
    %2078 = vmatpush1.msra.mxu0 %v363
    %2079 = vmatprep.subr.mxu0 %v356
    %2080 = vmatpush1.msra.mxu0 %v355
    %2081 = vmatprep.subr.mxu0 %v348
    %2082 = vmatpush1.msra.mxu0 %v347
    %2083 = vmatprep.subr.mxu0 %v340
    %2084 = vmatpush1.msra.mxu0 %v339
    %2085 = vmatprep.subr.mxu0 %v332
    %2086 = vmatpush1.msra.mxu0 %v331
    %2087 = vmatprep.subr.mxu0 %v324
    %2088 = vmatpush1.msra.mxu0 %v323
    %2089 = vmatprep.subr.mxu0 %v316
    %2090 = vmatpush1.msra.mxu0 %v315
    %2091 = vmatprep.subr.mxu0 %v308
    %2092 = vmatpush1.msra.mxu0 %v307
    %2093 = vmatprep.subr.mxu0 %v556
    %2094 = vmatpush2.msra.mxu0 %v555
    %2095 = vmatprep.subr.mxu0 %v548
    %2096 = vmatpush2.msra.mxu0 %v547
    %2097 = vmatprep.subr.mxu0 %v540
    %2098 = vmatpush2.msra.mxu0 %v539
    %2099 = vmatprep.subr.mxu0 %v532
    %2100 = vmatpush2.msra.mxu0 %v531
    %2101 = vmatprep.subr.mxu0 %v524
    %2102 = vmatpush2.msra.mxu0 %v523
    %2103 = vmatprep.subr.mxu0 %v516
    %2104 = vmatpush2.msra.mxu0 %v515
    %2105 = vmatprep.subr.mxu0 %v508
    %2106 = vmatpush2.msra.mxu0 %v507
    %2107 = vmatprep.subr.mxu0 %v500
    %2108 = vmatpush2.msra.mxu0 %v499
    %2109 = vmatprep.subr.mxu0 %v492
    %2110 = vmatpush2.msra.mxu0 %v491
    %2111 = vmatprep.subr.mxu0 %v484
    %2112 = vmatpush2.msra.mxu0 %v483
    %2113 = vmatprep.subr.mxu0 %v476
    %2114 = vmatpush2.msra.mxu0 %v475
    %2115 = vmatprep.subr.mxu0 %v468
    %2116 = vmatpush2.msra.mxu0 %v467
    %2117 = vmatprep.subr.mxu0 %v460
    %2118 = vmatpush2.msra.mxu0 %v459
    %2119 = vmatprep.subr.mxu0 %v452
    %2120 = vmatpush2.msra.mxu0 %v451
    %2121 = vmatprep.subr.mxu0 %v444
    %2122 = vmatpush2.msra.mxu0 %v443
    %2123 = vmatprep.subr.mxu0 %v436
    %2124 = vmatpush2.msra.mxu0 %v435
    %2125 = vmatprep.mubr.f32.mxu0 %v1881
    %2126 = vmatmul.mubr.f32.gmra.mxu0 %v1880
    %v2127 = vpop.f32.mrf.mxu0
    %v2128 = vadd.f32 0.0, %v2127
    %v2129 = vpop.f32.mrf.mxu0
    %v2130 = vadd.f32 0.0, %v2129
    %2131 = vmatprep.mubr.f32.mxu0 %v1883
    %2132 = vmatmul.mubr.f32.gmra.mxu0 %v1882
    %v2133 = vpop.f32.mrf.mxu0
    %v2134 = vadd.f32 0.0, %v2133
    %v2135 = vpop.f32.mrf.mxu0
    %v2136 = vadd.f32 0.0, %v2135
    %2137 = vdwg.mxu0
    %2138 = vmatprep.subr.mxu0 %v430
    %2139 = vmatpush1.msra.mxu0 %v429
    %2140 = vmatprep.subr.mxu0 %v422
    %2141 = vmatpush1.msra.mxu0 %v421
    %2142 = vmatprep.subr.mxu0 %v414
    %2143 = vmatpush1.msra.mxu0 %v413
    %2144 = vmatprep.subr.mxu0 %v406
    %2145 = vmatpush1.msra.mxu0 %v405
    %2146 = vmatprep.subr.mxu0 %v398
    %2147 = vmatpush1.msra.mxu0 %v397
    %2148 = vmatprep.subr.mxu0 %v390
    %2149 = vmatpush1.msra.mxu0 %v389
    %2150 = vmatprep.subr.mxu0 %v382
    %2151 = vmatpush1.msra.mxu0 %v381
    %2152 = vmatprep.subr.mxu0 %v374
    %2153 = vmatpush1.msra.mxu0 %v373
    %2154 = vmatprep.subr.mxu0 %v366
    %2155 = vmatpush1.msra.mxu0 %v365
    %2156 = vmatprep.subr.mxu0 %v358
    %2157 = vmatpush1.msra.mxu0 %v357
    %2158 = vmatprep.subr.mxu0 %v350
    %2159 = vmatpush1.msra.mxu0 %v349
    %2160 = vmatprep.subr.mxu0 %v342
    %2161 = vmatpush1.msra.mxu0 %v341
    %2162 = vmatprep.subr.mxu0 %v334
    %2163 = vmatpush1.msra.mxu0 %v333
    %2164 = vmatprep.subr.mxu0 %v326
    %2165 = vmatpush1.msra.mxu0 %v325
    %2166 = vmatprep.subr.mxu0 %v318
    %2167 = vmatpush1.msra.mxu0 %v317
    %2168 = vmatprep.subr.mxu0 %v310
    %2169 = vmatpush1.msra.mxu0 %v309
    %2170 = vmatprep.subr.mxu0 %v558
    %2171 = vmatpush2.msra.mxu0 %v557
    %2172 = vmatprep.subr.mxu0 %v550
    %2173 = vmatpush2.msra.mxu0 %v549
    %2174 = vmatprep.subr.mxu0 %v542
    %2175 = vmatpush2.msra.mxu0 %v541
    %2176 = vmatprep.subr.mxu0 %v534
    %2177 = vmatpush2.msra.mxu0 %v533
    %2178 = vmatprep.subr.mxu0 %v526
    %2179 = vmatpush2.msra.mxu0 %v525
    %2180 = vmatprep.subr.mxu0 %v518
    %2181 = vmatpush2.msra.mxu0 %v517
    %2182 = vmatprep.subr.mxu0 %v510
    %2183 = vmatpush2.msra.mxu0 %v509
    %2184 = vmatprep.subr.mxu0 %v502
    %2185 = vmatpush2.msra.mxu0 %v501
    %2186 = vmatprep.subr.mxu0 %v494
    %2187 = vmatpush2.msra.mxu0 %v493
    %2188 = vmatprep.subr.mxu0 %v486
    %2189 = vmatpush2.msra.mxu0 %v485
    %2190 = vmatprep.subr.mxu0 %v478
    %2191 = vmatpush2.msra.mxu0 %v477
    %2192 = vmatprep.subr.mxu0 %v470
    %2193 = vmatpush2.msra.mxu0 %v469
    %2194 = vmatprep.subr.mxu0 %v462
    %2195 = vmatpush2.msra.mxu0 %v461
    %2196 = vmatprep.subr.mxu0 %v454
    %2197 = vmatpush2.msra.mxu0 %v453
    %2198 = vmatprep.subr.mxu0 %v446
    %2199 = vmatpush2.msra.mxu0 %v445
    %2200 = vmatprep.subr.mxu0 %v438
    %2201 = vmatpush2.msra.mxu0 %v437
    %2202 = vmatprep.mubr.f32.mxu0 %v1881
    %2203 = vmatmul.mubr.f32.gmra.mxu0 %v1880
    %v2204 = vpop.f32.mrf.mxu0
    %v2205 = vadd.f32 0.0, %v2204
    %v2206 = vpop.f32.mrf.mxu0
    %v2207 = vadd.f32 0.0, %v2206
    %2208 = vmatprep.mubr.f32.mxu0 %v1883
    %2209 = vmatmul.mubr.f32.gmra.mxu0 %v1882
    %v2210 = vpop.f32.mrf.mxu0
    %v2211 = vadd.f32 0.0, %v2210
    %v2212 = vpop.f32.mrf.mxu0
    %v2213 = vadd.f32 0.0, %v2212
    %2214 = vdwg.mxu0
    %2215 = vmatprep.subr.mxu0 %v432
    %2216 = vmatpush1.msra.mxu0 %v431
    %2217 = vmatprep.subr.mxu0 %v424
    %2218 = vmatpush1.msra.mxu0 %v423
    %2219 = vmatprep.subr.mxu0 %v416
    %2220 = vmatpush1.msra.mxu0 %v415
    %2221 = vmatprep.subr.mxu0 %v408
    %2222 = vmatpush1.msra.mxu0 %v407
    %2223 = vmatprep.subr.mxu0 %v400
    %2224 = vmatpush1.msra.mxu0 %v399
    %2225 = vmatprep.subr.mxu0 %v392
    %2226 = vmatpush1.msra.mxu0 %v391
    %2227 = vmatprep.subr.mxu0 %v384
    %2228 = vmatpush1.msra.mxu0 %v383
    %2229 = vmatprep.subr.mxu0 %v376
    %2230 = vmatpush1.msra.mxu0 %v375
    %2231 = vmatprep.subr.mxu0 %v368
    %2232 = vmatpush1.msra.mxu0 %v367
    %2233 = vmatprep.subr.mxu0 %v360
    %2234 = vmatpush1.msra.mxu0 %v359
    %2235 = vmatprep.subr.mxu0 %v352
    %2236 = vmatpush1.msra.mxu0 %v351
    %2237 = vmatprep.subr.mxu0 %v344
    %2238 = vmatpush1.msra.mxu0 %v343
    %2239 = vmatprep.subr.mxu0 %v336
    %2240 = vmatpush1.msra.mxu0 %v335
    %2241 = vmatprep.subr.mxu0 %v328
    %2242 = vmatpush1.msra.mxu0 %v327
    %2243 = vmatprep.subr.mxu0 %v320
    %2244 = vmatpush1.msra.mxu0 %v319
    %2245 = vmatprep.subr.mxu0 %v312
    %2246 = vmatpush1.msra.mxu0 %v311
    %2247 = vmatprep.subr.mxu0 %v560
    %2248 = vmatpush2.msra.mxu0 %v559
    %2249 = vmatprep.subr.mxu0 %v552
    %2250 = vmatpush2.msra.mxu0 %v551
    %2251 = vmatprep.subr.mxu0 %v544
    %2252 = vmatpush2.msra.mxu0 %v543
    %2253 = vmatprep.subr.mxu0 %v536
    %2254 = vmatpush2.msra.mxu0 %v535
    %2255 = vmatprep.subr.mxu0 %v528
    %2256 = vmatpush2.msra.mxu0 %v527
    %2257 = vmatprep.subr.mxu0 %v520
    %2258 = vmatpush2.msra.mxu0 %v519
    %2259 = vmatprep.subr.mxu0 %v512
    %2260 = vmatpush2.msra.mxu0 %v511
    %2261 = vmatprep.subr.mxu0 %v504
    %2262 = vmatpush2.msra.mxu0 %v503
    %2263 = vmatprep.subr.mxu0 %v496
    %2264 = vmatpush2.msra.mxu0 %v495
    %2265 = vmatprep.subr.mxu0 %v488
    %2266 = vmatpush2.msra.mxu0 %v487
    %2267 = vmatprep.subr.mxu0 %v480
    %2268 = vmatpush2.msra.mxu0 %v479
    %2269 = vmatprep.subr.mxu0 %v472
    %2270 = vmatpush2.msra.mxu0 %v471
    %2271 = vmatprep.subr.mxu0 %v464
    %2272 = vmatpush2.msra.mxu0 %v463
    %2273 = vmatprep.subr.mxu0 %v456
    %2274 = vmatpush2.msra.mxu0 %v455
    %2275 = vmatprep.subr.mxu0 %v448
    %2276 = vmatpush2.msra.mxu0 %v447
    %2277 = vmatprep.subr.mxu0 %v440
    %2278 = vmatpush2.msra.mxu0 %v439
    %2279 = vmatprep.mubr.f32.mxu0 %v1881
    %2280 = vmatmul.mubr.f32.gmra.mxu0 %v1880
    %v2281 = vpop.f32.mrf.mxu0
    %v2282 = vadd.f32 0.0, %v2281
    %v2283 = vpop.f32.mrf.mxu0
    %v2284 = vadd.f32 0.0, %v2283
    %2285 = vmatprep.mubr.f32.mxu0 %v1883
    %2286 = vmatmul.mubr.f32.gmra.mxu0 %v1882
    %v2287 = vpop.f32.mrf.mxu0
    %v2288 = vadd.f32 0.0, %v2287
    %v2289 = vpop.f32.mrf.mxu0
    %v2290 = vadd.f32 0.0, %v2289
    %2291 = vdwg.mxu0
    %v2292 = vadd.f32 %v1968, %v2051
    %v2293 = vadd.f32 %v1969, %v2053
    %v2294 = vadd.f32 %v1970, %v2128
    %v2295 = vadd.f32 %v1971, %v2130
    %v2296 = vadd.f32 %v1972, %v2205
    %v2297 = vadd.f32 %v1973, %v2207
    %v2298 = vadd.f32 %v1974, %v2282
    %v2299 = vadd.f32 %v1975, %v2284
    %v2300 = vadd.f32 %v1976, %v2057
    %v2301 = vadd.f32 %v1977, %v2059
    %v2302 = vadd.f32 %v1978, %v2134
    %v2303 = vadd.f32 %v1979, %v2136
    %v2304 = vadd.f32 %v1980, %v2211
    %v2305 = vadd.f32 %v1981, %v2213
    %v2306 = vadd.f32 %v1982, %v2288
    %v2307 = vadd.f32 %v1983, %v2290
    %v2308 = vxor.u32 %v2292, 2147483648
    %v2309 = vxor.u32 %v2293, 2147483648
    %v2310 = vxor.u32 %v2300, 2147483648
    %v2311 = vxor.u32 %v2301, 2147483648
    %v2312 = vmul.f32 %v2308, 1.442695
    %v2313 = vpow.pop %v2312
    %v2314 = vmul.f32 %v2309, 1.442695
    %v2315 = vpow.pop %v2314
    %v2316 = vmul.f32 %v2310, 1.442695
    %v2317 = vpow.pop %v2316
    %v2318 = vmul.f32 %v2311, 1.442695
    %v2319 = vpow.pop %v2318
    %v2320 = vadd.f32 %v2313, 1.0
    %v2321 = vadd.f32 %v2315, 1.0
    %v2322 = vadd.f32 %v2317, 1.0
    %v2323 = vadd.f32 %v2319, 1.0
    %v2324 = vrcp.pop %v2320
    %v2325 = vmul.f32 1.0, %v2324
    %v2326 = vrcp.pop %v2321
    %v2327 = vmul.f32 1.0, %v2326
    %v2328 = vrcp.pop %v2322
    %v2329 = vmul.f32 1.0, %v2328
    %v2330 = vrcp.pop %v2323
    %v2331 = vmul.f32 1.0, %v2330
    %v2332 = vxor.u32 %v2294, 2147483648
    %v2333 = vxor.u32 %v2295, 2147483648
    %v2334 = vxor.u32 %v2302, 2147483648
    %v2335 = vxor.u32 %v2303, 2147483648
    %v2336 = vmul.f32 %v2332, 1.442695
    %v2337 = vpow.pop %v2336
    %v2338 = vmul.f32 %v2333, 1.442695
    %v2339 = vpow.pop %v2338
    %v2340 = vmul.f32 %v2334, 1.442695
    %v2341 = vpow.pop %v2340
    %v2342 = vmul.f32 %v2335, 1.442695
    %v2343 = vpow.pop %v2342
    %v2344 = vadd.f32 %v2337, 1.0
    %v2345 = vadd.f32 %v2339, 1.0
    %v2346 = vadd.f32 %v2341, 1.0
    %v2347 = vadd.f32 %v2343, 1.0
    %v2348 = vrcp.pop %v2344
    %v2349 = vmul.f32 1.0, %v2348
    %v2350 = vrcp.pop %v2345
    %v2351 = vmul.f32 1.0, %v2350
    %v2352 = vrcp.pop %v2346
    %v2353 = vmul.f32 1.0, %v2352
    %v2354 = vrcp.pop %v2347
    %v2355 = vmul.f32 1.0, %v2354
    %v2356 = vtanh.pop %v2296
    %v2357 = vtanh.pop %v2297
    %v2358 = vtanh.pop %v2304
    %v2359 = vtanh.pop %v2305
    %v2360 = vxor.u32 %v2298, 2147483648
    %v2361 = vxor.u32 %v2299, 2147483648
    %v2362 = vxor.u32 %v2306, 2147483648
    %v2363 = vxor.u32 %v2307, 2147483648
    %v2364 = vmul.f32 %v2360, 1.442695
    %v2365 = vpow.pop %v2364
    %v2366 = vmul.f32 %v2361, 1.442695
    %v2367 = vpow.pop %v2366
    %v2368 = vmul.f32 %v2362, 1.442695
    %v2369 = vpow.pop %v2368
    %v2370 = vmul.f32 %v2363, 1.442695
    %v2371 = vpow.pop %v2370
    %v2372 = vadd.f32 %v2365, 1.0
    %v2373 = vadd.f32 %v2367, 1.0
    %v2374 = vadd.f32 %v2369, 1.0
    %v2375 = vadd.f32 %v2371, 1.0
    %v2376 = vrcp.pop %v2372
    %v2377 = vmul.f32 1.0, %v2376
    %v2378 = vrcp.pop %v2373
    %v2379 = vmul.f32 1.0, %v2378
    %v2380 = vrcp.pop %v2374
    %v2381 = vmul.f32 1.0, %v2380
    %v2382 = vrcp.pop %v2375
    %v2383 = vmul.f32 1.0, %v2382
    %v2384 = vmul.f32 %v2349, %v1872
    %v2385 = vmul.f32 %v2351, %v1873
    %v2386 = vmul.f32 %v2353, %v1874
    %v2387 = vmul.f32 %v2355, %v1875
    %v2388 = vmul.f32 %v2325, %v2356
    %v2389 = vmul.f32 %v2327, %v2357
    %v2390 = vmul.f32 %v2329, %v2358
    %v2391 = vmul.f32 %v2331, %v2359
    %v2392 = vadd.f32 %v2384, %v2388
    %v2393 = vadd.f32 %v2385, %v2389
    %v2394 = vadd.f32 %v2386, %v2390
    %v2395 = vadd.f32 %v2387, %v2391
    %v2396 = vtanh.pop %v2392
    %v2397 = vtanh.pop %v2393
    %v2398 = vtanh.pop %v2394
    %v2399 = vtanh.pop %v2395
    %v2400 = vmul.f32 %v2377, %v2396
    %v2401 = vmul.f32 %v2379, %v2397
    %v2402 = vmul.f32 %v2381, %v2398
    %v2403 = vmul.f32 %v2383, %v2399
    %2404 = vmatprep.subr.mxu0 0.0
    %2405 = vmatpush1.msra.mxu0 %v1422
    %2406 = vmatprep.subr.mxu0 0.0
    %2407 = vmatpush1.msra.mxu0 %v1421
    %2408 = vmatprep.subr.mxu0 0.0
    %2409 = vmatpush1.msra.mxu0 %v1420
    %2410 = vmatprep.subr.mxu0 0.0
    %2411 = vmatpush1.msra.mxu0 %v1419
    %2412 = vmatprep.subr.mxu0 0.0
    %2413 = vmatpush1.msra.mxu0 %v1418
    %2414 = vmatprep.subr.mxu0 0.0
    %2415 = vmatpush1.msra.mxu0 %v1417
    %2416 = vmatprep.subr.mxu0 0.0
    %2417 = vmatpush1.msra.mxu0 %v1416
    %2418 = vmatprep.subr.mxu0 0.0
    %2419 = vmatpush1.msra.mxu0 %v1415
    %2420 = vmatprep.subr.mxu0 0.0
    %2421 = vmatpush1.msra.mxu0 %v1414
    %2422 = vmatprep.subr.mxu0 0.0
    %2423 = vmatpush1.msra.mxu0 %v1413
    %2424 = vmatprep.subr.mxu0 0.0
    %2425 = vmatpush1.msra.mxu0 %v1412
    %2426 = vmatprep.subr.mxu0 0.0
    %2427 = vmatpush1.msra.mxu0 %v1411
    %2428 = vmatprep.subr.mxu0 0.0
    %2429 = vmatpush1.msra.mxu0 %v1410
    %2430 = vmatprep.subr.mxu0 0.0
    %2431 = vmatpush1.msra.mxu0 %v1409
    %2432 = vmatprep.subr.mxu0 0.0
    %2433 = vmatpush1.msra.mxu0 %v1408
    %2434 = vmatprep.subr.mxu0 0.0
    %2435 = vmatpush1.msra.mxu0 %v1407
    %2436 = vmatprep.subr.mxu0 0.0
    %2437 = vmatpush2.msra.mxu0 %v1438
    %2438 = vmatprep.subr.mxu0 0.0
    %2439 = vmatpush2.msra.mxu0 %v1437
    %2440 = vmatprep.subr.mxu0 0.0
    %2441 = vmatpush2.msra.mxu0 %v1436
    %2442 = vmatprep.subr.mxu0 0.0
    %2443 = vmatpush2.msra.mxu0 %v1435
    %2444 = vmatprep.subr.mxu0 0.0
    %2445 = vmatpush2.msra.mxu0 %v1434
    %2446 = vmatprep.subr.mxu0 0.0
    %2447 = vmatpush2.msra.mxu0 %v1433
    %2448 = vmatprep.subr.mxu0 0.0
    %2449 = vmatpush2.msra.mxu0 %v1432
    %2450 = vmatprep.subr.mxu0 0.0
    %2451 = vmatpush2.msra.mxu0 %v1431
    %2452 = vmatprep.subr.mxu0 0.0
    %2453 = vmatpush2.msra.mxu0 %v1430
    %2454 = vmatprep.subr.mxu0 0.0
    %2455 = vmatpush2.msra.mxu0 %v1429
    %2456 = vmatprep.subr.mxu0 0.0
    %2457 = vmatpush2.msra.mxu0 %v1428
    %2458 = vmatprep.subr.mxu0 0.0
    %2459 = vmatpush2.msra.mxu0 %v1427
    %2460 = vmatprep.subr.mxu0 0.0
    %2461 = vmatpush2.msra.mxu0 %v1426
    %2462 = vmatprep.subr.mxu0 0.0
    %2463 = vmatpush2.msra.mxu0 %v1425
    %2464 = vmatprep.subr.mxu0 0.0
    %2465 = vmatpush2.msra.mxu0 %v1424
    %2466 = vmatprep.subr.mxu0 0.0
    %2467 = vmatpush2.msra.mxu0 %v1423
    %2468 = vmatprep.mubr.f32.mxu0 %v2401
    %2469 = vmatmul.mubr.f32.gmra.mxu0 %v2400
    %v2470 = vpop.f32.mrf.mxu0
    %v2471 = vadd.f32 %v1888, %v2470
    %v2472 = vpop.f32.mrf.mxu0
    %2473 = vmatprep.mubr.f32.mxu0 %v2403
    %2474 = vmatmul.mubr.f32.gmra.mxu0 %v2402
    %v2475 = vpop.f32.mrf.mxu0
    %v2476 = vadd.f32 %v1888, %v2475
    %v2477 = vpop.f32.mrf.mxu0
    %2478 = vdwg.mxu0
    %s2479 = scalar_lea.vmem %s6, 16
    %2480 = vst [vmem:[%s2479] sm:$0xff] %v2471
    %2481 = vst [vmem:[%s2479 + $0x8] sm:$0xff] %v2476
    %s2482 = scalar_lea.vmem [#allocation4], 256
    %v2483 = vld [vmem:[%s2482] sm:$0xff]
    %v2484 = vld [vmem:[%s2482 + $0x8] sm:$0xff]
    %v2485 = vld [vmem:[%s2482 + $0x10] sm:$0xff]
    %v2486 = vld [vmem:[%s2482 + $0x18] sm:$0xff]
    %v2487 = vld [vmem:[%s2482 + $0x20] sm:$0xff]
    %v2488 = vld [vmem:[%s2482 + $0x28] sm:$0xff]
    %v2489 = vld [vmem:[%s2482 + $0x30] sm:$0xff]
    %v2490 = vld [vmem:[%s2482 + $0x38] sm:$0xff]
    %v2491 = vld [vmem:[%s2482 + $0x40] sm:$0xff]
    %v2492 = vld [vmem:[%s2482 + $0x48] sm:$0xff]
    %v2493 = vld [vmem:[%s2482 + $0x50] sm:$0xff]
    %v2494 = vld [vmem:[%s2482 + $0x58] sm:$0xff]
    %v2495 = vld [vmem:[%s2482 + $0x60] sm:$0xff]
    %v2496 = vld [vmem:[%s2482 + $0x68] sm:$0xff]
    %v2497 = vld [vmem:[%s2482 + $0x70] sm:$0xff]
    %v2498 = vld [vmem:[%s2482 + $0x78] sm:$0xff]
    %2499 = vmatprep.subr.mxu0 %v426
    %2500 = vmatpush1.msra.mxu0 %v425
    %2501 = vmatprep.subr.mxu0 %v418
    %2502 = vmatpush1.msra.mxu0 %v417
    %2503 = vmatprep.subr.mxu0 %v410
    %2504 = vmatpush1.msra.mxu0 %v409
    %2505 = vmatprep.subr.mxu0 %v402
    %2506 = vmatpush1.msra.mxu0 %v401
    %2507 = vmatprep.subr.mxu0 %v394
    %2508 = vmatpush1.msra.mxu0 %v393
    %2509 = vmatprep.subr.mxu0 %v386
    %2510 = vmatpush1.msra.mxu0 %v385
    %2511 = vmatprep.subr.mxu0 %v378
    %2512 = vmatpush1.msra.mxu0 %v377
    %2513 = vmatprep.subr.mxu0 %v370
    %2514 = vmatpush1.msra.mxu0 %v369
    %2515 = vmatprep.subr.mxu0 %v362
    %2516 = vmatpush1.msra.mxu0 %v361
    %2517 = vmatprep.subr.mxu0 %v354
    %2518 = vmatpush1.msra.mxu0 %v353
    %2519 = vmatprep.subr.mxu0 %v346
    %2520 = vmatpush1.msra.mxu0 %v345
    %2521 = vmatprep.subr.mxu0 %v338
    %2522 = vmatpush1.msra.mxu0 %v337
    %2523 = vmatprep.subr.mxu0 %v330
    %2524 = vmatpush1.msra.mxu0 %v329
    %2525 = vmatprep.subr.mxu0 %v322
    %2526 = vmatpush1.msra.mxu0 %v321
    %2527 = vmatprep.subr.mxu0 %v314
    %2528 = vmatpush1.msra.mxu0 %v313
    %2529 = vmatprep.subr.mxu0 %v306
    %2530 = vmatpush1.msra.mxu0 %v305
    %2531 = vmatprep.subr.mxu0 %v554
    %2532 = vmatpush2.msra.mxu0 %v553
    %2533 = vmatprep.subr.mxu0 %v546
    %2534 = vmatpush2.msra.mxu0 %v545
    %2535 = vmatprep.subr.mxu0 %v538
    %2536 = vmatpush2.msra.mxu0 %v537
    %2537 = vmatprep.subr.mxu0 %v530
    %2538 = vmatpush2.msra.mxu0 %v529
    %2539 = vmatprep.subr.mxu0 %v522
    %2540 = vmatpush2.msra.mxu0 %v521
    %2541 = vmatprep.subr.mxu0 %v514
    %2542 = vmatpush2.msra.mxu0 %v513
    %2543 = vmatprep.subr.mxu0 %v506
    %2544 = vmatpush2.msra.mxu0 %v505
    %2545 = vmatprep.subr.mxu0 %v498
    %2546 = vmatpush2.msra.mxu0 %v497
    %2547 = vmatprep.subr.mxu0 %v490
    %2548 = vmatpush2.msra.mxu0 %v489
    %2549 = vmatprep.subr.mxu0 %v482
    %2550 = vmatpush2.msra.mxu0 %v481
    %2551 = vmatprep.subr.mxu0 %v474
    %2552 = vmatpush2.msra.mxu0 %v473
    %2553 = vmatprep.subr.mxu0 %v466
    %2554 = vmatpush2.msra.mxu0 %v465
    %2555 = vmatprep.subr.mxu0 %v458
    %2556 = vmatpush2.msra.mxu0 %v457
    %2557 = vmatprep.subr.mxu0 %v450
    %2558 = vmatpush2.msra.mxu0 %v449
    %2559 = vmatprep.subr.mxu0 %v442
    %2560 = vmatpush2.msra.mxu0 %v441
    %2561 = vmatprep.subr.mxu0 %v434
    %2562 = vmatpush2.msra.mxu0 %v433
    %2563 = vmatprep.mubr.f32.mxu0 %v2401
    %2564 = vmatmul.mubr.f32.gmra.mxu0 %v2400
    %v2565 = vpop.f32.mrf.mxu0
    %v2566 = vadd.f32 0.0, %v2565
    %v2567 = vpop.f32.mrf.mxu0
    %v2568 = vadd.f32 0.0, %v2567
    %2569 = vmatprep.mubr.f32.mxu0 %v2403
    %2570 = vmatmul.mubr.f32.gmra.mxu0 %v2402
    %v2571 = vpop.f32.mrf.mxu0
    %v2572 = vadd.f32 0.0, %v2571
    %v2573 = vpop.f32.mrf.mxu0
    %v2574 = vadd.f32 0.0, %v2573
    %2575 = vdwg.mxu0
    %2576 = vmatprep.subr.mxu0 %v428
    %2577 = vmatpush1.msra.mxu0 %v427
    %2578 = vmatprep.subr.mxu0 %v420
    %2579 = vmatpush1.msra.mxu0 %v419
    %2580 = vmatprep.subr.mxu0 %v412
    %2581 = vmatpush1.msra.mxu0 %v411
    %2582 = vmatprep.subr.mxu0 %v404
    %2583 = vmatpush1.msra.mxu0 %v403
    %2584 = vmatprep.subr.mxu0 %v396
    %2585 = vmatpush1.msra.mxu0 %v395
    %2586 = vmatprep.subr.mxu0 %v388
    %2587 = vmatpush1.msra.mxu0 %v387
    %2588 = vmatprep.subr.mxu0 %v380
    %2589 = vmatpush1.msra.mxu0 %v379
    %2590 = vmatprep.subr.mxu0 %v372
    %2591 = vmatpush1.msra.mxu0 %v371
    %2592 = vmatprep.subr.mxu0 %v364
    %2593 = vmatpush1.msra.mxu0 %v363
    %2594 = vmatprep.subr.mxu0 %v356
    %2595 = vmatpush1.msra.mxu0 %v355
    %2596 = vmatprep.subr.mxu0 %v348
    %2597 = vmatpush1.msra.mxu0 %v347
    %2598 = vmatprep.subr.mxu0 %v340
    %2599 = vmatpush1.msra.mxu0 %v339
    %2600 = vmatprep.subr.mxu0 %v332
    %2601 = vmatpush1.msra.mxu0 %v331
    %2602 = vmatprep.subr.mxu0 %v324
    %2603 = vmatpush1.msra.mxu0 %v323
    %2604 = vmatprep.subr.mxu0 %v316
    %2605 = vmatpush1.msra.mxu0 %v315
    %2606 = vmatprep.subr.mxu0 %v308
    %2607 = vmatpush1.msra.mxu0 %v307
    %2608 = vmatprep.subr.mxu0 %v556
    %2609 = vmatpush2.msra.mxu0 %v555
    %2610 = vmatprep.subr.mxu0 %v548
    %2611 = vmatpush2.msra.mxu0 %v547
    %2612 = vmatprep.subr.mxu0 %v540
    %2613 = vmatpush2.msra.mxu0 %v539
    %2614 = vmatprep.subr.mxu0 %v532
    %2615 = vmatpush2.msra.mxu0 %v531
    %2616 = vmatprep.subr.mxu0 %v524
    %2617 = vmatpush2.msra.mxu0 %v523
    %2618 = vmatprep.subr.mxu0 %v516
    %2619 = vmatpush2.msra.mxu0 %v515
    %2620 = vmatprep.subr.mxu0 %v508
    %2621 = vmatpush2.msra.mxu0 %v507
    %2622 = vmatprep.subr.mxu0 %v500
    %2623 = vmatpush2.msra.mxu0 %v499
    %2624 = vmatprep.subr.mxu0 %v492
    %2625 = vmatpush2.msra.mxu0 %v491
    %2626 = vmatprep.subr.mxu0 %v484
    %2627 = vmatpush2.msra.mxu0 %v483
    %2628 = vmatprep.subr.mxu0 %v476
    %2629 = vmatpush2.msra.mxu0 %v475
    %2630 = vmatprep.subr.mxu0 %v468
    %2631 = vmatpush2.msra.mxu0 %v467
    %2632 = vmatprep.subr.mxu0 %v460
    %2633 = vmatpush2.msra.mxu0 %v459
    %2634 = vmatprep.subr.mxu0 %v452
    %2635 = vmatpush2.msra.mxu0 %v451
    %2636 = vmatprep.subr.mxu0 %v444
    %2637 = vmatpush2.msra.mxu0 %v443
    %2638 = vmatprep.subr.mxu0 %v436
    %2639 = vmatpush2.msra.mxu0 %v435
    %2640 = vmatprep.mubr.f32.mxu0 %v2401
    %2641 = vmatmul.mubr.f32.gmra.mxu0 %v2400
    %v2642 = vpop.f32.mrf.mxu0
    %v2643 = vadd.f32 0.0, %v2642
    %v2644 = vpop.f32.mrf.mxu0
    %v2645 = vadd.f32 0.0, %v2644
    %2646 = vmatprep.mubr.f32.mxu0 %v2403
    %2647 = vmatmul.mubr.f32.gmra.mxu0 %v2402
    %v2648 = vpop.f32.mrf.mxu0
    %v2649 = vadd.f32 0.0, %v2648
    %v2650 = vpop.f32.mrf.mxu0
    %v2651 = vadd.f32 0.0, %v2650
    %2652 = vdwg.mxu0
    %2653 = vmatprep.subr.mxu0 %v430
    %2654 = vmatpush1.msra.mxu0 %v429
    %2655 = vmatprep.subr.mxu0 %v422
    %2656 = vmatpush1.msra.mxu0 %v421
    %2657 = vmatprep.subr.mxu0 %v414
    %2658 = vmatpush1.msra.mxu0 %v413
    %2659 = vmatprep.subr.mxu0 %v406
    %2660 = vmatpush1.msra.mxu0 %v405
    %2661 = vmatprep.subr.mxu0 %v398
    %2662 = vmatpush1.msra.mxu0 %v397
    %2663 = vmatprep.subr.mxu0 %v390
    %2664 = vmatpush1.msra.mxu0 %v389
    %2665 = vmatprep.subr.mxu0 %v382
    %2666 = vmatpush1.msra.mxu0 %v381
    %2667 = vmatprep.subr.mxu0 %v374
    %2668 = vmatpush1.msra.mxu0 %v373
    %2669 = vmatprep.subr.mxu0 %v366
    %2670 = vmatpush1.msra.mxu0 %v365
    %2671 = vmatprep.subr.mxu0 %v358
    %2672 = vmatpush1.msra.mxu0 %v357
    %2673 = vmatprep.subr.mxu0 %v350
    %2674 = vmatpush1.msra.mxu0 %v349
    %2675 = vmatprep.subr.mxu0 %v342
    %2676 = vmatpush1.msra.mxu0 %v341
    %2677 = vmatprep.subr.mxu0 %v334
    %2678 = vmatpush1.msra.mxu0 %v333
    %2679 = vmatprep.subr.mxu0 %v326
    %2680 = vmatpush1.msra.mxu0 %v325
    %2681 = vmatprep.subr.mxu0 %v318
    %2682 = vmatpush1.msra.mxu0 %v317
    %2683 = vmatprep.subr.mxu0 %v310
    %2684 = vmatpush1.msra.mxu0 %v309
    %2685 = vmatprep.subr.mxu0 %v558
    %2686 = vmatpush2.msra.mxu0 %v557
    %2687 = vmatprep.subr.mxu0 %v550
    %2688 = vmatpush2.msra.mxu0 %v549
    %2689 = vmatprep.subr.mxu0 %v542
    %2690 = vmatpush2.msra.mxu0 %v541
    %2691 = vmatprep.subr.mxu0 %v534
    %2692 = vmatpush2.msra.mxu0 %v533
    %2693 = vmatprep.subr.mxu0 %v526
    %2694 = vmatpush2.msra.mxu0 %v525
    %2695 = vmatprep.subr.mxu0 %v518
    %2696 = vmatpush2.msra.mxu0 %v517
    %2697 = vmatprep.subr.mxu0 %v510
    %2698 = vmatpush2.msra.mxu0 %v509
    %2699 = vmatprep.subr.mxu0 %v502
    %2700 = vmatpush2.msra.mxu0 %v501
    %2701 = vmatprep.subr.mxu0 %v494
    %2702 = vmatpush2.msra.mxu0 %v493
    %2703 = vmatprep.subr.mxu0 %v486
    %2704 = vmatpush2.msra.mxu0 %v485
    %2705 = vmatprep.subr.mxu0 %v478
    %2706 = vmatpush2.msra.mxu0 %v477
    %2707 = vmatprep.subr.mxu0 %v470
    %2708 = vmatpush2.msra.mxu0 %v469
    %2709 = vmatprep.subr.mxu0 %v462
    %2710 = vmatpush2.msra.mxu0 %v461
    %2711 = vmatprep.subr.mxu0 %v454
    %2712 = vmatpush2.msra.mxu0 %v453
    %2713 = vmatprep.subr.mxu0 %v446
    %2714 = vmatpush2.msra.mxu0 %v445
    %2715 = vmatprep.subr.mxu0 %v438
    %2716 = vmatpush2.msra.mxu0 %v437
    %2717 = vmatprep.mubr.f32.mxu0 %v2401
    %2718 = vmatmul.mubr.f32.gmra.mxu0 %v2400
    %v2719 = vpop.f32.mrf.mxu0
    %v2720 = vadd.f32 0.0, %v2719
    %v2721 = vpop.f32.mrf.mxu0
    %v2722 = vadd.f32 0.0, %v2721
    %2723 = vmatprep.mubr.f32.mxu0 %v2403
    %2724 = vmatmul.mubr.f32.gmra.mxu0 %v2402
    %v2725 = vpop.f32.mrf.mxu0
    %v2726 = vadd.f32 0.0, %v2725
    %v2727 = vpop.f32.mrf.mxu0
    %v2728 = vadd.f32 0.0, %v2727
    %2729 = vdwg.mxu0
    %2730 = vmatprep.subr.mxu0 %v432
    %2731 = vmatpush1.msra.mxu0 %v431
    %2732 = vmatprep.subr.mxu0 %v424
    %2733 = vmatpush1.msra.mxu0 %v423
    %2734 = vmatprep.subr.mxu0 %v416
    %2735 = vmatpush1.msra.mxu0 %v415
    %2736 = vmatprep.subr.mxu0 %v408
    %2737 = vmatpush1.msra.mxu0 %v407
    %2738 = vmatprep.subr.mxu0 %v400
    %2739 = vmatpush1.msra.mxu0 %v399
    %2740 = vmatprep.subr.mxu0 %v392
    %2741 = vmatpush1.msra.mxu0 %v391
    %2742 = vmatprep.subr.mxu0 %v384
    %2743 = vmatpush1.msra.mxu0 %v383
    %2744 = vmatprep.subr.mxu0 %v376
    %2745 = vmatpush1.msra.mxu0 %v375
    %2746 = vmatprep.subr.mxu0 %v368
    %2747 = vmatpush1.msra.mxu0 %v367
    %2748 = vmatprep.subr.mxu0 %v360
    %2749 = vmatpush1.msra.mxu0 %v359
    %2750 = vmatprep.subr.mxu0 %v352
    %2751 = vmatpush1.msra.mxu0 %v351
    %2752 = vmatprep.subr.mxu0 %v344
    %2753 = vmatpush1.msra.mxu0 %v343
    %2754 = vmatprep.subr.mxu0 %v336
    %2755 = vmatpush1.msra.mxu0 %v335
    %2756 = vmatprep.subr.mxu0 %v328
    %2757 = vmatpush1.msra.mxu0 %v327
    %2758 = vmatprep.subr.mxu0 %v320
    %2759 = vmatpush1.msra.mxu0 %v319
    %2760 = vmatprep.subr.mxu0 %v312
    %2761 = vmatpush1.msra.mxu0 %v311
    %2762 = vmatprep.subr.mxu0 %v560
    %2763 = vmatpush2.msra.mxu0 %v559
    %2764 = vmatprep.subr.mxu0 %v552
    %2765 = vmatpush2.msra.mxu0 %v551
    %2766 = vmatprep.subr.mxu0 %v544
    %2767 = vmatpush2.msra.mxu0 %v543
    %2768 = vmatprep.subr.mxu0 %v536
    %2769 = vmatpush2.msra.mxu0 %v535
    %2770 = vmatprep.subr.mxu0 %v528
    %2771 = vmatpush2.msra.mxu0 %v527
    %2772 = vmatprep.subr.mxu0 %v520
    %2773 = vmatpush2.msra.mxu0 %v519
    %2774 = vmatprep.subr.mxu0 %v512
    %2775 = vmatpush2.msra.mxu0 %v511
    %2776 = vmatprep.subr.mxu0 %v504
    %2777 = vmatpush2.msra.mxu0 %v503
    %2778 = vmatprep.subr.mxu0 %v496
    %2779 = vmatpush2.msra.mxu0 %v495
    %2780 = vmatprep.subr.mxu0 %v488
    %2781 = vmatpush2.msra.mxu0 %v487
    %2782 = vmatprep.subr.mxu0 %v480
    %2783 = vmatpush2.msra.mxu0 %v479
    %2784 = vmatprep.subr.mxu0 %v472
    %2785 = vmatpush2.msra.mxu0 %v471
    %2786 = vmatprep.subr.mxu0 %v464
    %2787 = vmatpush2.msra.mxu0 %v463
    %2788 = vmatprep.subr.mxu0 %v456
    %2789 = vmatpush2.msra.mxu0 %v455
    %2790 = vmatprep.subr.mxu0 %v448
    %2791 = vmatpush2.msra.mxu0 %v447
    %2792 = vmatprep.subr.mxu0 %v440
    %2793 = vmatpush2.msra.mxu0 %v439
    %2794 = vmatprep.mubr.f32.mxu0 %v2401
    %2795 = vmatmul.mubr.f32.gmra.mxu0 %v2400
    %v2796 = vpop.f32.mrf.mxu0
    %v2797 = vadd.f32 0.0, %v2796
    %v2798 = vpop.f32.mrf.mxu0
    %v2799 = vadd.f32 0.0, %v2798
    %2800 = vmatprep.mubr.f32.mxu0 %v2403
    %2801 = vmatmul.mubr.f32.gmra.mxu0 %v2402
    %v2802 = vpop.f32.mrf.mxu0
    %v2803 = vadd.f32 0.0, %v2802
    %v2804 = vpop.f32.mrf.mxu0
    %v2805 = vadd.f32 0.0, %v2804
    %2806 = vdwg.mxu0
    %v2807 = vadd.f32 %v2483, %v2566
    %v2808 = vadd.f32 %v2484, %v2568
    %v2809 = vadd.f32 %v2485, %v2643
    %v2810 = vadd.f32 %v2486, %v2645
    %v2811 = vadd.f32 %v2487, %v2720
    %v2812 = vadd.f32 %v2488, %v2722
    %v2813 = vadd.f32 %v2489, %v2797
    %v2814 = vadd.f32 %v2490, %v2799
    %v2815 = vadd.f32 %v2491, %v2572
    %v2816 = vadd.f32 %v2492, %v2574
    %v2817 = vadd.f32 %v2493, %v2649
    %v2818 = vadd.f32 %v2494, %v2651
    %v2819 = vadd.f32 %v2495, %v2726
    %v2820 = vadd.f32 %v2496, %v2728
    %v2821 = vadd.f32 %v2497, %v2803
    %v2822 = vadd.f32 %v2498, %v2805
    %v2823 = vxor.u32 %v2807, 2147483648
    %v2824 = vxor.u32 %v2808, 2147483648
    %v2825 = vxor.u32 %v2815, 2147483648
    %v2826 = vxor.u32 %v2816, 2147483648
    %v2827 = vmul.f32 %v2823, 1.442695
    %v2828 = vpow.pop %v2827
    %v2829 = vmul.f32 %v2824, 1.442695
    %v2830 = vpow.pop %v2829
    %v2831 = vmul.f32 %v2825, 1.442695
    %v2832 = vpow.pop %v2831
    %v2833 = vmul.f32 %v2826, 1.442695
    %v2834 = vpow.pop %v2833
    %v2835 = vadd.f32 %v2828, 1.0
    %v2836 = vadd.f32 %v2830, 1.0
    %v2837 = vadd.f32 %v2832, 1.0
    %v2838 = vadd.f32 %v2834, 1.0
    %v2839 = vrcp.pop %v2835
    %v2840 = vmul.f32 1.0, %v2839
    %v2841 = vrcp.pop %v2836
    %v2842 = vmul.f32 1.0, %v2841
    %v2843 = vrcp.pop %v2837
    %v2844 = vmul.f32 1.0, %v2843
    %v2845 = vrcp.pop %v2838
    %v2846 = vmul.f32 1.0, %v2845
    %v2847 = vxor.u32 %v2809, 2147483648
    %v2848 = vxor.u32 %v2810, 2147483648
    %v2849 = vxor.u32 %v2817, 2147483648
    %v2850 = vxor.u32 %v2818, 2147483648
    %v2851 = vmul.f32 %v2847, 1.442695
    %v2852 = vpow.pop %v2851
    %v2853 = vmul.f32 %v2848, 1.442695
    %v2854 = vpow.pop %v2853
    %v2855 = vmul.f32 %v2849, 1.442695
    %v2856 = vpow.pop %v2855
    %v2857 = vmul.f32 %v2850, 1.442695
    %v2858 = vpow.pop %v2857
    %v2859 = vadd.f32 %v2852, 1.0
    %v2860 = vadd.f32 %v2854, 1.0
    %v2861 = vadd.f32 %v2856, 1.0
    %v2862 = vadd.f32 %v2858, 1.0
    %v2863 = vrcp.pop %v2859
    %v2864 = vmul.f32 1.0, %v2863
    %v2865 = vrcp.pop %v2860
    %v2866 = vmul.f32 1.0, %v2865
    %v2867 = vrcp.pop %v2861
    %v2868 = vmul.f32 1.0, %v2867
    %v2869 = vrcp.pop %v2862
    %v2870 = vmul.f32 1.0, %v2869
    %v2871 = vtanh.pop %v2811
    %v2872 = vtanh.pop %v2812
    %v2873 = vtanh.pop %v2819
    %v2874 = vtanh.pop %v2820
    %v2875 = vxor.u32 %v2813, 2147483648
    %v2876 = vxor.u32 %v2814, 2147483648
    %v2877 = vxor.u32 %v2821, 2147483648
    %v2878 = vxor.u32 %v2822, 2147483648
    %v2879 = vmul.f32 %v2875, 1.442695
    %v2880 = vpow.pop %v2879
    %v2881 = vmul.f32 %v2876, 1.442695
    %v2882 = vpow.pop %v2881
    %v2883 = vmul.f32 %v2877, 1.442695
    %v2884 = vpow.pop %v2883
    %v2885 = vmul.f32 %v2878, 1.442695
    %v2886 = vpow.pop %v2885
    %v2887 = vadd.f32 %v2880, 1.0
    %v2888 = vadd.f32 %v2882, 1.0
    %v2889 = vadd.f32 %v2884, 1.0
    %v2890 = vadd.f32 %v2886, 1.0
    %v2891 = vrcp.pop %v2887
    %v2892 = vmul.f32 1.0, %v2891
    %v2893 = vrcp.pop %v2888
    %v2894 = vmul.f32 1.0, %v2893
    %v2895 = vrcp.pop %v2889
    %v2896 = vmul.f32 1.0, %v2895
    %v2897 = vrcp.pop %v2890
    %v2898 = vmul.f32 1.0, %v2897
    %v2899 = vmul.f32 %v2864, %v2392
    %v2900 = vmul.f32 %v2866, %v2393
    %v2901 = vmul.f32 %v2868, %v2394
    %v2902 = vmul.f32 %v2870, %v2395
    %v2903 = vmul.f32 %v2840, %v2871
    %v2904 = vmul.f32 %v2842, %v2872
    %v2905 = vmul.f32 %v2844, %v2873
    %v2906 = vmul.f32 %v2846, %v2874
    %v2907 = vadd.f32 %v2899, %v2903
    %v2908 = vadd.f32 %v2900, %v2904
    %v2909 = vadd.f32 %v2901, %v2905
    %v2910 = vadd.f32 %v2902, %v2906
    %v2911 = vtanh.pop %v2907
    %v2912 = vtanh.pop %v2908
    %v2913 = vtanh.pop %v2909
    %v2914 = vtanh.pop %v2910
    %v2915 = vmul.f32 %v2892, %v2911
    %v2916 = vmul.f32 %v2894, %v2912
    %v2917 = vmul.f32 %v2896, %v2913
    %v2918 = vmul.f32 %v2898, %v2914
    %2919 = vmatprep.subr.mxu0 0.0
    %2920 = vmatpush1.msra.mxu0 %v1422
    %2921 = vmatprep.subr.mxu0 0.0
    %2922 = vmatpush1.msra.mxu0 %v1421
    %2923 = vmatprep.subr.mxu0 0.0
    %2924 = vmatpush1.msra.mxu0 %v1420
    %2925 = vmatprep.subr.mxu0 0.0
    %2926 = vmatpush1.msra.mxu0 %v1419
    %2927 = vmatprep.subr.mxu0 0.0
    %2928 = vmatpush1.msra.mxu0 %v1418
    %2929 = vmatprep.subr.mxu0 0.0
    %2930 = vmatpush1.msra.mxu0 %v1417
    %2931 = vmatprep.subr.mxu0 0.0
    %2932 = vmatpush1.msra.mxu0 %v1416
    %2933 = vmatprep.subr.mxu0 0.0
    %2934 = vmatpush1.msra.mxu0 %v1415
    %2935 = vmatprep.subr.mxu0 0.0
    %2936 = vmatpush1.msra.mxu0 %v1414
    %2937 = vmatprep.subr.mxu0 0.0
    %2938 = vmatpush1.msra.mxu0 %v1413
    %2939 = vmatprep.subr.mxu0 0.0
    %2940 = vmatpush1.msra.mxu0 %v1412
    %2941 = vmatprep.subr.mxu0 0.0
    %2942 = vmatpush1.msra.mxu0 %v1411
    %2943 = vmatprep.subr.mxu0 0.0
    %2944 = vmatpush1.msra.mxu0 %v1410
    %2945 = vmatprep.subr.mxu0 0.0
    %2946 = vmatpush1.msra.mxu0 %v1409
    %2947 = vmatprep.subr.mxu0 0.0
    %2948 = vmatpush1.msra.mxu0 %v1408
    %2949 = vmatprep.subr.mxu0 0.0
    %2950 = vmatpush1.msra.mxu0 %v1407
    %2951 = vmatprep.subr.mxu0 0.0
    %2952 = vmatpush2.msra.mxu0 %v1438
    %2953 = vmatprep.subr.mxu0 0.0
    %2954 = vmatpush2.msra.mxu0 %v1437
    %2955 = vmatprep.subr.mxu0 0.0
    %2956 = vmatpush2.msra.mxu0 %v1436
    %2957 = vmatprep.subr.mxu0 0.0
    %2958 = vmatpush2.msra.mxu0 %v1435
    %2959 = vmatprep.subr.mxu0 0.0
    %2960 = vmatpush2.msra.mxu0 %v1434
    %2961 = vmatprep.subr.mxu0 0.0
    %2962 = vmatpush2.msra.mxu0 %v1433
    %2963 = vmatprep.subr.mxu0 0.0
    %2964 = vmatpush2.msra.mxu0 %v1432
    %2965 = vmatprep.subr.mxu0 0.0
    %2966 = vmatpush2.msra.mxu0 %v1431
    %2967 = vmatprep.subr.mxu0 0.0
    %2968 = vmatpush2.msra.mxu0 %v1430
    %2969 = vmatprep.subr.mxu0 0.0
    %2970 = vmatpush2.msra.mxu0 %v1429
    %2971 = vmatprep.subr.mxu0 0.0
    %2972 = vmatpush2.msra.mxu0 %v1428
    %2973 = vmatprep.subr.mxu0 0.0
    %2974 = vmatpush2.msra.mxu0 %v1427
    %2975 = vmatprep.subr.mxu0 0.0
    %2976 = vmatpush2.msra.mxu0 %v1426
    %2977 = vmatprep.subr.mxu0 0.0
    %2978 = vmatpush2.msra.mxu0 %v1425
    %2979 = vmatprep.subr.mxu0 0.0
    %2980 = vmatpush2.msra.mxu0 %v1424
    %2981 = vmatprep.subr.mxu0 0.0
    %2982 = vmatpush2.msra.mxu0 %v1423
    %2983 = vmatprep.mubr.f32.mxu0 %v2916
    %2984 = vmatmul.mubr.f32.gmra.mxu0 %v2915
    %v2985 = vpop.f32.mrf.mxu0
    %v2986 = vadd.f32 %v1888, %v2985
    %v2987 = vpop.f32.mrf.mxu0
    %2988 = vmatprep.mubr.f32.mxu0 %v2918
    %2989 = vmatmul.mubr.f32.gmra.mxu0 %v2917
    %v2990 = vpop.f32.mrf.mxu0
    %v2991 = vadd.f32 %v1888, %v2990
    %v2992 = vpop.f32.mrf.mxu0
    %2993 = vdwg.mxu0
    %s2994 = scalar_lea.vmem %s6, 32
    %2995 = vst [vmem:[%s2994] sm:$0xff] %v2986
    %2996 = vst [vmem:[%s2994 + $0x8] sm:$0xff] %v2991
    %s2997 = scalar_lea.vmem [#allocation4], 384
    %v2998 = vld [vmem:[%s2997] sm:$0xff]
    %v2999 = vld [vmem:[%s2997 + $0x8] sm:$0xff]
    %v3000 = vld [vmem:[%s2997 + $0x10] sm:$0xff]
    %v3001 = vld [vmem:[%s2997 + $0x18] sm:$0xff]
    %v3002 = vld [vmem:[%s2997 + $0x20] sm:$0xff]
    %v3003 = vld [vmem:[%s2997 + $0x28] sm:$0xff]
    %v3004 = vld [vmem:[%s2997 + $0x30] sm:$0xff]
    %v3005 = vld [vmem:[%s2997 + $0x38] sm:$0xff]
    %v3006 = vld [vmem:[%s2997 + $0x40] sm:$0xff]
    %v3007 = vld [vmem:[%s2997 + $0x48] sm:$0xff]
    %v3008 = vld [vmem:[%s2997 + $0x50] sm:$0xff]
    %v3009 = vld [vmem:[%s2997 + $0x58] sm:$0xff]
    %v3010 = vld [vmem:[%s2997 + $0x60] sm:$0xff]
    %v3011 = vld [vmem:[%s2997 + $0x68] sm:$0xff]
    %v3012 = vld [vmem:[%s2997 + $0x70] sm:$0xff]
    %v3013 = vld [vmem:[%s2997 + $0x78] sm:$0xff]
    %3014 = vmatprep.subr.mxu0 %v426
    %3015 = vmatpush1.msra.mxu0 %v425
    %3016 = vmatprep.subr.mxu0 %v418
    %3017 = vmatpush1.msra.mxu0 %v417
    %3018 = vmatprep.subr.mxu0 %v410
    %3019 = vmatpush1.msra.mxu0 %v409
    %3020 = vmatprep.subr.mxu0 %v402
    %3021 = vmatpush1.msra.mxu0 %v401
    %3022 = vmatprep.subr.mxu0 %v394
    %3023 = vmatpush1.msra.mxu0 %v393
    %3024 = vmatprep.subr.mxu0 %v386
    %3025 = vmatpush1.msra.mxu0 %v385
    %3026 = vmatprep.subr.mxu0 %v378
    %3027 = vmatpush1.msra.mxu0 %v377
    %3028 = vmatprep.subr.mxu0 %v370
    %3029 = vmatpush1.msra.mxu0 %v369
    %3030 = vmatprep.subr.mxu0 %v362
    %3031 = vmatpush1.msra.mxu0 %v361
    %3032 = vmatprep.subr.mxu0 %v354
    %3033 = vmatpush1.msra.mxu0 %v353
    %3034 = vmatprep.subr.mxu0 %v346
    %3035 = vmatpush1.msra.mxu0 %v345
    %3036 = vmatprep.subr.mxu0 %v338
    %3037 = vmatpush1.msra.mxu0 %v337
    %3038 = vmatprep.subr.mxu0 %v330
    %3039 = vmatpush1.msra.mxu0 %v329
    %3040 = vmatprep.subr.mxu0 %v322
    %3041 = vmatpush1.msra.mxu0 %v321
    %3042 = vmatprep.subr.mxu0 %v314
    %3043 = vmatpush1.msra.mxu0 %v313
    %3044 = vmatprep.subr.mxu0 %v306
    %3045 = vmatpush1.msra.mxu0 %v305
    %3046 = vmatprep.subr.mxu0 %v554
    %3047 = vmatpush2.msra.mxu0 %v553
    %3048 = vmatprep.subr.mxu0 %v546
    %3049 = vmatpush2.msra.mxu0 %v545
    %3050 = vmatprep.subr.mxu0 %v538
    %3051 = vmatpush2.msra.mxu0 %v537
    %3052 = vmatprep.subr.mxu0 %v530
    %3053 = vmatpush2.msra.mxu0 %v529
    %3054 = vmatprep.subr.mxu0 %v522
    %3055 = vmatpush2.msra.mxu0 %v521
    %3056 = vmatprep.subr.mxu0 %v514
    %3057 = vmatpush2.msra.mxu0 %v513
    %3058 = vmatprep.subr.mxu0 %v506
    %3059 = vmatpush2.msra.mxu0 %v505
    %3060 = vmatprep.subr.mxu0 %v498
    %3061 = vmatpush2.msra.mxu0 %v497
    %3062 = vmatprep.subr.mxu0 %v490
    %3063 = vmatpush2.msra.mxu0 %v489
    %3064 = vmatprep.subr.mxu0 %v482
    %3065 = vmatpush2.msra.mxu0 %v481
    %3066 = vmatprep.subr.mxu0 %v474
    %3067 = vmatpush2.msra.mxu0 %v473
    %3068 = vmatprep.subr.mxu0 %v466
    %3069 = vmatpush2.msra.mxu0 %v465
    %3070 = vmatprep.subr.mxu0 %v458
    %3071 = vmatpush2.msra.mxu0 %v457
    %3072 = vmatprep.subr.mxu0 %v450
    %3073 = vmatpush2.msra.mxu0 %v449
    %3074 = vmatprep.subr.mxu0 %v442
    %3075 = vmatpush2.msra.mxu0 %v441
    %3076 = vmatprep.subr.mxu0 %v434
    %3077 = vmatpush2.msra.mxu0 %v433
    %3078 = vmatprep.mubr.f32.mxu0 %v2916
    %3079 = vmatmul.mubr.f32.gmra.mxu0 %v2915
    %v3080 = vpop.f32.mrf.mxu0
    %v3081 = vadd.f32 0.0, %v3080
    %v3082 = vpop.f32.mrf.mxu0
    %v3083 = vadd.f32 0.0, %v3082
    %3084 = vmatprep.mubr.f32.mxu0 %v2918
    %3085 = vmatmul.mubr.f32.gmra.mxu0 %v2917
    %v3086 = vpop.f32.mrf.mxu0
    %v3087 = vadd.f32 0.0, %v3086
    %v3088 = vpop.f32.mrf.mxu0
    %v3089 = vadd.f32 0.0, %v3088
    %3090 = vdwg.mxu0
    %3091 = vmatprep.subr.mxu0 %v428
    %3092 = vmatpush1.msra.mxu0 %v427
    %3093 = vmatprep.subr.mxu0 %v420
    %3094 = vmatpush1.msra.mxu0 %v419
    %3095 = vmatprep.subr.mxu0 %v412
    %3096 = vmatpush1.msra.mxu0 %v411
    %3097 = vmatprep.subr.mxu0 %v404
    %3098 = vmatpush1.msra.mxu0 %v403
    %3099 = vmatprep.subr.mxu0 %v396
    %3100 = vmatpush1.msra.mxu0 %v395
    %3101 = vmatprep.subr.mxu0 %v388
    %3102 = vmatpush1.msra.mxu0 %v387
    %3103 = vmatprep.subr.mxu0 %v380
    %3104 = vmatpush1.msra.mxu0 %v379
    %3105 = vmatprep.subr.mxu0 %v372
    %3106 = vmatpush1.msra.mxu0 %v371
    %3107 = vmatprep.subr.mxu0 %v364
    %3108 = vmatpush1.msra.mxu0 %v363
    %3109 = vmatprep.subr.mxu0 %v356
    %3110 = vmatpush1.msra.mxu0 %v355
    %3111 = vmatprep.subr.mxu0 %v348
    %3112 = vmatpush1.msra.mxu0 %v347
    %3113 = vmatprep.subr.mxu0 %v340
    %3114 = vmatpush1.msra.mxu0 %v339
    %3115 = vmatprep.subr.mxu0 %v332
    %3116 = vmatpush1.msra.mxu0 %v331
    %3117 = vmatprep.subr.mxu0 %v324
    %3118 = vmatpush1.msra.mxu0 %v323
    %3119 = vmatprep.subr.mxu0 %v316
    %3120 = vmatpush1.msra.mxu0 %v315
    %3121 = vmatprep.subr.mxu0 %v308
    %3122 = vmatpush1.msra.mxu0 %v307
    %3123 = vmatprep.subr.mxu0 %v556
    %3124 = vmatpush2.msra.mxu0 %v555
    %3125 = vmatprep.subr.mxu0 %v548
    %3126 = vmatpush2.msra.mxu0 %v547
    %3127 = vmatprep.subr.mxu0 %v540
    %3128 = vmatpush2.msra.mxu0 %v539
    %3129 = vmatprep.subr.mxu0 %v532
    %3130 = vmatpush2.msra.mxu0 %v531
    %3131 = vmatprep.subr.mxu0 %v524
    %3132 = vmatpush2.msra.mxu0 %v523
    %3133 = vmatprep.subr.mxu0 %v516
    %3134 = vmatpush2.msra.mxu0 %v515
    %3135 = vmatprep.subr.mxu0 %v508
    %3136 = vmatpush2.msra.mxu0 %v507
    %3137 = vmatprep.subr.mxu0 %v500
    %3138 = vmatpush2.msra.mxu0 %v499
    %3139 = vmatprep.subr.mxu0 %v492
    %3140 = vmatpush2.msra.mxu0 %v491
    %3141 = vmatprep.subr.mxu0 %v484
    %3142 = vmatpush2.msra.mxu0 %v483
    %3143 = vmatprep.subr.mxu0 %v476
    %3144 = vmatpush2.msra.mxu0 %v475
    %3145 = vmatprep.subr.mxu0 %v468
    %3146 = vmatpush2.msra.mxu0 %v467
    %3147 = vmatprep.subr.mxu0 %v460
    %3148 = vmatpush2.msra.mxu0 %v459
    %3149 = vmatprep.subr.mxu0 %v452
    %3150 = vmatpush2.msra.mxu0 %v451
    %3151 = vmatprep.subr.mxu0 %v444
    %3152 = vmatpush2.msra.mxu0 %v443
    %3153 = vmatprep.subr.mxu0 %v436
    %3154 = vmatpush2.msra.mxu0 %v435
    %3155 = vmatprep.mubr.f32.mxu0 %v2916
    %3156 = vmatmul.mubr.f32.gmra.mxu0 %v2915
    %v3157 = vpop.f32.mrf.mxu0
    %v3158 = vadd.f32 0.0, %v3157
    %v3159 = vpop.f32.mrf.mxu0
    %v3160 = vadd.f32 0.0, %v3159
    %3161 = vmatprep.mubr.f32.mxu0 %v2918
    %3162 = vmatmul.mubr.f32.gmra.mxu0 %v2917
    %v3163 = vpop.f32.mrf.mxu0
    %v3164 = vadd.f32 0.0, %v3163
    %v3165 = vpop.f32.mrf.mxu0
    %v3166 = vadd.f32 0.0, %v3165
    %3167 = vdwg.mxu0
    %3168 = vmatprep.subr.mxu0 %v430
    %3169 = vmatpush1.msra.mxu0 %v429
    %3170 = vmatprep.subr.mxu0 %v422
    %3171 = vmatpush1.msra.mxu0 %v421
    %3172 = vmatprep.subr.mxu0 %v414
    %3173 = vmatpush1.msra.mxu0 %v413
    %3174 = vmatprep.subr.mxu0 %v406
    %3175 = vmatpush1.msra.mxu0 %v405
    %3176 = vmatprep.subr.mxu0 %v398
    %3177 = vmatpush1.msra.mxu0 %v397
    %3178 = vmatprep.subr.mxu0 %v390
    %3179 = vmatpush1.msra.mxu0 %v389
    %3180 = vmatprep.subr.mxu0 %v382
    %3181 = vmatpush1.msra.mxu0 %v381
    %3182 = vmatprep.subr.mxu0 %v374
    %3183 = vmatpush1.msra.mxu0 %v373
    %3184 = vmatprep.subr.mxu0 %v366
    %3185 = vmatpush1.msra.mxu0 %v365
    %3186 = vmatprep.subr.mxu0 %v358
    %3187 = vmatpush1.msra.mxu0 %v357
    %3188 = vmatprep.subr.mxu0 %v350
    %3189 = vmatpush1.msra.mxu0 %v349
    %3190 = vmatprep.subr.mxu0 %v342
    %3191 = vmatpush1.msra.mxu0 %v341
    %3192 = vmatprep.subr.mxu0 %v334
    %3193 = vmatpush1.msra.mxu0 %v333
    %3194 = vmatprep.subr.mxu0 %v326
    %3195 = vmatpush1.msra.mxu0 %v325
    %3196 = vmatprep.subr.mxu0 %v318
    %3197 = vmatpush1.msra.mxu0 %v317
    %3198 = vmatprep.subr.mxu0 %v310
    %3199 = vmatpush1.msra.mxu0 %v309
    %3200 = vmatprep.subr.mxu0 %v558
    %3201 = vmatpush2.msra.mxu0 %v557
    %3202 = vmatprep.subr.mxu0 %v550
    %3203 = vmatpush2.msra.mxu0 %v549
    %3204 = vmatprep.subr.mxu0 %v542
    %3205 = vmatpush2.msra.mxu0 %v541
    %3206 = vmatprep.subr.mxu0 %v534
    %3207 = vmatpush2.msra.mxu0 %v533
    %3208 = vmatprep.subr.mxu0 %v526
    %3209 = vmatpush2.msra.mxu0 %v525
    %3210 = vmatprep.subr.mxu0 %v518
    %3211 = vmatpush2.msra.mxu0 %v517
    %3212 = vmatprep.subr.mxu0 %v510
    %3213 = vmatpush2.msra.mxu0 %v509
    %3214 = vmatprep.subr.mxu0 %v502
    %3215 = vmatpush2.msra.mxu0 %v501
    %3216 = vmatprep.subr.mxu0 %v494
    %3217 = vmatpush2.msra.mxu0 %v493
    %3218 = vmatprep.subr.mxu0 %v486
    %3219 = vmatpush2.msra.mxu0 %v485
    %3220 = vmatprep.subr.mxu0 %v478
    %3221 = vmatpush2.msra.mxu0 %v477
    %3222 = vmatprep.subr.mxu0 %v470
    %3223 = vmatpush2.msra.mxu0 %v469
    %3224 = vmatprep.subr.mxu0 %v462
    %3225 = vmatpush2.msra.mxu0 %v461
    %3226 = vmatprep.subr.mxu0 %v454
    %3227 = vmatpush2.msra.mxu0 %v453
    %3228 = vmatprep.subr.mxu0 %v446
    %3229 = vmatpush2.msra.mxu0 %v445
    %3230 = vmatprep.subr.mxu0 %v438
    %3231 = vmatpush2.msra.mxu0 %v437
    %3232 = vmatprep.mubr.f32.mxu0 %v2916
    %3233 = vmatmul.mubr.f32.gmra.mxu0 %v2915
    %v3234 = vpop.f32.mrf.mxu0
    %v3235 = vadd.f32 0.0, %v3234
    %v3236 = vpop.f32.mrf.mxu0
    %v3237 = vadd.f32 0.0, %v3236
    %3238 = vmatprep.mubr.f32.mxu0 %v2918
    %3239 = vmatmul.mubr.f32.gmra.mxu0 %v2917
    %v3240 = vpop.f32.mrf.mxu0
    %v3241 = vadd.f32 0.0, %v3240
    %v3242 = vpop.f32.mrf.mxu0
    %v3243 = vadd.f32 0.0, %v3242
    %3244 = vdwg.mxu0
    %3245 = vmatprep.subr.mxu0 %v432
    %3246 = vmatpush1.msra.mxu0 %v431
    %3247 = vmatprep.subr.mxu0 %v424
    %3248 = vmatpush1.msra.mxu0 %v423
    %3249 = vmatprep.subr.mxu0 %v416
    %3250 = vmatpush1.msra.mxu0 %v415
    %3251 = vmatprep.subr.mxu0 %v408
    %3252 = vmatpush1.msra.mxu0 %v407
    %3253 = vmatprep.subr.mxu0 %v400
    %3254 = vmatpush1.msra.mxu0 %v399
    %3255 = vmatprep.subr.mxu0 %v392
    %3256 = vmatpush1.msra.mxu0 %v391
    %3257 = vmatprep.subr.mxu0 %v384
    %3258 = vmatpush1.msra.mxu0 %v383
    %3259 = vmatprep.subr.mxu0 %v376
    %3260 = vmatpush1.msra.mxu0 %v375
    %3261 = vmatprep.subr.mxu0 %v368
    %3262 = vmatpush1.msra.mxu0 %v367
    %3263 = vmatprep.subr.mxu0 %v360
    %3264 = vmatpush1.msra.mxu0 %v359
    %3265 = vmatprep.subr.mxu0 %v352
    %3266 = vmatpush1.msra.mxu0 %v351
    %3267 = vmatprep.subr.mxu0 %v344
    %3268 = vmatpush1.msra.mxu0 %v343
    %3269 = vmatprep.subr.mxu0 %v336
    %3270 = vmatpush1.msra.mxu0 %v335
    %3271 = vmatprep.subr.mxu0 %v328
    %3272 = vmatpush1.msra.mxu0 %v327
    %3273 = vmatprep.subr.mxu0 %v320
    %3274 = vmatpush1.msra.mxu0 %v319
    %3275 = vmatprep.subr.mxu0 %v312
    %3276 = vmatpush1.msra.mxu0 %v311
    %3277 = vmatprep.subr.mxu0 %v560
    %3278 = vmatpush2.msra.mxu0 %v559
    %3279 = vmatprep.subr.mxu0 %v552
    %3280 = vmatpush2.msra.mxu0 %v551
    %3281 = vmatprep.subr.mxu0 %v544
    %3282 = vmatpush2.msra.mxu0 %v543
    %3283 = vmatprep.subr.mxu0 %v536
    %3284 = vmatpush2.msra.mxu0 %v535
    %3285 = vmatprep.subr.mxu0 %v528
    %3286 = vmatpush2.msra.mxu0 %v527
    %3287 = vmatprep.subr.mxu0 %v520
    %3288 = vmatpush2.msra.mxu0 %v519
    %3289 = vmatprep.subr.mxu0 %v512
    %3290 = vmatpush2.msra.mxu0 %v511
    %3291 = vmatprep.subr.mxu0 %v504
    %3292 = vmatpush2.msra.mxu0 %v503
    %3293 = vmatprep.subr.mxu0 %v496
    %3294 = vmatpush2.msra.mxu0 %v495
    %3295 = vmatprep.subr.mxu0 %v488
    %3296 = vmatpush2.msra.mxu0 %v487
    %3297 = vmatprep.subr.mxu0 %v480
    %3298 = vmatpush2.msra.mxu0 %v479
    %3299 = vmatprep.subr.mxu0 %v472
    %3300 = vmatpush2.msra.mxu0 %v471
    %3301 = vmatprep.subr.mxu0 %v464
    %3302 = vmatpush2.msra.mxu0 %v463
    %3303 = vmatprep.subr.mxu0 %v456
    %3304 = vmatpush2.msra.mxu0 %v455
    %3305 = vmatprep.subr.mxu0 %v448
    %3306 = vmatpush2.msra.mxu0 %v447
    %3307 = vmatprep.subr.mxu0 %v440
    %3308 = vmatpush2.msra.mxu0 %v439
    %3309 = vmatprep.mubr.f32.mxu0 %v2916
    %3310 = vmatmul.mubr.f32.gmra.mxu0 %v2915
    %v3311 = vpop.f32.mrf.mxu0
    %v3312 = vadd.f32 0.0, %v3311
    %v3313 = vpop.f32.mrf.mxu0
    %v3314 = vadd.f32 0.0, %v3313
    %3315 = vmatprep.mubr.f32.mxu0 %v2918
    %3316 = vmatmul.mubr.f32.gmra.mxu0 %v2917
    %v3317 = vpop.f32.mrf.mxu0
    %v3318 = vadd.f32 0.0, %v3317
    %v3319 = vpop.f32.mrf.mxu0
    %v3320 = vadd.f32 0.0, %v3319
    %3321 = vdwg.mxu0
    %v3322 = vadd.f32 %v2998, %v3081
    %v3323 = vadd.f32 %v2999, %v3083
    %v3324 = vadd.f32 %v3000, %v3158
    %v3325 = vadd.f32 %v3001, %v3160
    %v3326 = vadd.f32 %v3002, %v3235
    %v3327 = vadd.f32 %v3003, %v3237
    %v3328 = vadd.f32 %v3004, %v3312
    %v3329 = vadd.f32 %v3005, %v3314
    %v3330 = vadd.f32 %v3006, %v3087
    %v3331 = vadd.f32 %v3007, %v3089
    %v3332 = vadd.f32 %v3008, %v3164
    %v3333 = vadd.f32 %v3009, %v3166
    %v3334 = vadd.f32 %v3010, %v3241
    %v3335 = vadd.f32 %v3011, %v3243
    %v3336 = vadd.f32 %v3012, %v3318
    %v3337 = vadd.f32 %v3013, %v3320
    %v3338 = vxor.u32 %v3322, 2147483648
    %v3339 = vxor.u32 %v3323, 2147483648
    %v3340 = vxor.u32 %v3330, 2147483648
    %v3341 = vxor.u32 %v3331, 2147483648
    %v3342 = vmul.f32 %v3338, 1.442695
    %v3343 = vpow.pop %v3342
    %v3344 = vmul.f32 %v3339, 1.442695
    %v3345 = vpow.pop %v3344
    %v3346 = vmul.f32 %v3340, 1.442695
    %v3347 = vpow.pop %v3346
    %v3348 = vmul.f32 %v3341, 1.442695
    %v3349 = vpow.pop %v3348
    %v3350 = vadd.f32 %v3343, 1.0
    %v3351 = vadd.f32 %v3345, 1.0
    %v3352 = vadd.f32 %v3347, 1.0
    %v3353 = vadd.f32 %v3349, 1.0
    %v3354 = vrcp.pop %v3350
    %v3355 = vmul.f32 1.0, %v3354
    %v3356 = vrcp.pop %v3351
    %v3357 = vmul.f32 1.0, %v3356
    %v3358 = vrcp.pop %v3352
    %v3359 = vmul.f32 1.0, %v3358
    %v3360 = vrcp.pop %v3353
    %v3361 = vmul.f32 1.0, %v3360
    %v3362 = vxor.u32 %v3324, 2147483648
    %v3363 = vxor.u32 %v3325, 2147483648
    %v3364 = vxor.u32 %v3332, 2147483648
    %v3365 = vxor.u32 %v3333, 2147483648
    %v3366 = vmul.f32 %v3362, 1.442695
    %v3367 = vpow.pop %v3366
    %v3368 = vmul.f32 %v3363, 1.442695
    %v3369 = vpow.pop %v3368
    %v3370 = vmul.f32 %v3364, 1.442695
    %v3371 = vpow.pop %v3370
    %v3372 = vmul.f32 %v3365, 1.442695
    %v3373 = vpow.pop %v3372
    %v3374 = vadd.f32 %v3367, 1.0
    %v3375 = vadd.f32 %v3369, 1.0
    %v3376 = vadd.f32 %v3371, 1.0
    %v3377 = vadd.f32 %v3373, 1.0
    %v3378 = vrcp.pop %v3374
    %v3379 = vmul.f32 1.0, %v3378
    %v3380 = vrcp.pop %v3375
    %v3381 = vmul.f32 1.0, %v3380
    %v3382 = vrcp.pop %v3376
    %v3383 = vmul.f32 1.0, %v3382
    %v3384 = vrcp.pop %v3377
    %v3385 = vmul.f32 1.0, %v3384
    %v3386 = vtanh.pop %v3326
    %v3387 = vtanh.pop %v3327
    %v3388 = vtanh.pop %v3334
    %v3389 = vtanh.pop %v3335
    %v3390 = vxor.u32 %v3328, 2147483648
    %v3391 = vxor.u32 %v3329, 2147483648
    %v3392 = vxor.u32 %v3336, 2147483648
    %v3393 = vxor.u32 %v3337, 2147483648
    %v3394 = vmul.f32 %v3390, 1.442695
    %v3395 = vpow.pop %v3394
    %v3396 = vmul.f32 %v3391, 1.442695
    %v3397 = vpow.pop %v3396
    %v3398 = vmul.f32 %v3392, 1.442695
    %v3399 = vpow.pop %v3398
    %v3400 = vmul.f32 %v3393, 1.442695
    %v3401 = vpow.pop %v3400
    %v3402 = vadd.f32 %v3395, 1.0
    %v3403 = vadd.f32 %v3397, 1.0
    %v3404 = vadd.f32 %v3399, 1.0
    %v3405 = vadd.f32 %v3401, 1.0
    %v3406 = vrcp.pop %v3402
    %v3407 = vmul.f32 1.0, %v3406
    %v3408 = vrcp.pop %v3403
    %v3409 = vmul.f32 1.0, %v3408
    %v3410 = vrcp.pop %v3404
    %v3411 = vmul.f32 1.0, %v3410
    %v3412 = vrcp.pop %v3405
    %v3413 = vmul.f32 1.0, %v3412
    %v3414 = vmul.f32 %v3379, %v2907
    %v3415 = vmul.f32 %v3381, %v2908
    %v3416 = vmul.f32 %v3383, %v2909
    %v3417 = vmul.f32 %v3385, %v2910
    %v3418 = vmul.f32 %v3355, %v3386
    %v3419 = vmul.f32 %v3357, %v3387
    %v3420 = vmul.f32 %v3359, %v3388
    %v3421 = vmul.f32 %v3361, %v3389
    %v3422 = vadd.f32 %v3414, %v3418
    %v3423 = vadd.f32 %v3415, %v3419
    %v3424 = vadd.f32 %v3416, %v3420
    %v3425 = vadd.f32 %v3417, %v3421
    %v3426 = vtanh.pop %v3422
    %v3427 = vtanh.pop %v3423
    %v3428 = vtanh.pop %v3424
    %v3429 = vtanh.pop %v3425
    %v3430 = vmul.f32 %v3407, %v3426
    %v3431 = vmul.f32 %v3409, %v3427
    %v3432 = vmul.f32 %v3411, %v3428
    %v3433 = vmul.f32 %v3413, %v3429
    %3434 = vmatprep.subr.mxu0 0.0
    %3435 = vmatpush1.msra.mxu0 %v1422
    %3436 = vmatprep.subr.mxu0 0.0
    %3437 = vmatpush1.msra.mxu0 %v1421
    %3438 = vmatprep.subr.mxu0 0.0
    %3439 = vmatpush1.msra.mxu0 %v1420
    %3440 = vmatprep.subr.mxu0 0.0
    %3441 = vmatpush1.msra.mxu0 %v1419
    %3442 = vmatprep.subr.mxu0 0.0
    %3443 = vmatpush1.msra.mxu0 %v1418
    %3444 = vmatprep.subr.mxu0 0.0
    %3445 = vmatpush1.msra.mxu0 %v1417
    %3446 = vmatprep.subr.mxu0 0.0
    %3447 = vmatpush1.msra.mxu0 %v1416
    %3448 = vmatprep.subr.mxu0 0.0
    %3449 = vmatpush1.msra.mxu0 %v1415
    %3450 = vmatprep.subr.mxu0 0.0
    %3451 = vmatpush1.msra.mxu0 %v1414
    %3452 = vmatprep.subr.mxu0 0.0
    %3453 = vmatpush1.msra.mxu0 %v1413
    %3454 = vmatprep.subr.mxu0 0.0
    %3455 = vmatpush1.msra.mxu0 %v1412
    %3456 = vmatprep.subr.mxu0 0.0
    %3457 = vmatpush1.msra.mxu0 %v1411
    %3458 = vmatprep.subr.mxu0 0.0
    %3459 = vmatpush1.msra.mxu0 %v1410
    %3460 = vmatprep.subr.mxu0 0.0
    %3461 = vmatpush1.msra.mxu0 %v1409
    %3462 = vmatprep.subr.mxu0 0.0
    %3463 = vmatpush1.msra.mxu0 %v1408
    %3464 = vmatprep.subr.mxu0 0.0
    %3465 = vmatpush1.msra.mxu0 %v1407
    %3466 = vmatprep.subr.mxu0 0.0
    %3467 = vmatpush2.msra.mxu0 %v1438
    %3468 = vmatprep.subr.mxu0 0.0
    %3469 = vmatpush2.msra.mxu0 %v1437
    %3470 = vmatprep.subr.mxu0 0.0
    %3471 = vmatpush2.msra.mxu0 %v1436
    %3472 = vmatprep.subr.mxu0 0.0
    %3473 = vmatpush2.msra.mxu0 %v1435
    %3474 = vmatprep.subr.mxu0 0.0
    %3475 = vmatpush2.msra.mxu0 %v1434
    %3476 = vmatprep.subr.mxu0 0.0
    %3477 = vmatpush2.msra.mxu0 %v1433
    %3478 = vmatprep.subr.mxu0 0.0
    %3479 = vmatpush2.msra.mxu0 %v1432
    %3480 = vmatprep.subr.mxu0 0.0
    %3481 = vmatpush2.msra.mxu0 %v1431
    %3482 = vmatprep.subr.mxu0 0.0
    %3483 = vmatpush2.msra.mxu0 %v1430
    %3484 = vmatprep.subr.mxu0 0.0
    %3485 = vmatpush2.msra.mxu0 %v1429
    %3486 = vmatprep.subr.mxu0 0.0
    %3487 = vmatpush2.msra.mxu0 %v1428
    %3488 = vmatprep.subr.mxu0 0.0
    %3489 = vmatpush2.msra.mxu0 %v1427
    %3490 = vmatprep.subr.mxu0 0.0
    %3491 = vmatpush2.msra.mxu0 %v1426
    %3492 = vmatprep.subr.mxu0 0.0
    %3493 = vmatpush2.msra.mxu0 %v1425
    %3494 = vmatprep.subr.mxu0 0.0
    %3495 = vmatpush2.msra.mxu0 %v1424
    %3496 = vmatprep.subr.mxu0 0.0
    %3497 = vmatpush2.msra.mxu0 %v1423
    %3498 = vmatprep.mubr.f32.mxu0 %v3431
    %3499 = vmatmul.mubr.f32.gmra.mxu0 %v3430
    %v3500 = vpop.f32.mrf.mxu0
    %v3501 = vadd.f32 %v1888, %v3500
    %v3502 = vpop.f32.mrf.mxu0
    %3503 = vmatprep.mubr.f32.mxu0 %v3433
    %3504 = vmatmul.mubr.f32.gmra.mxu0 %v3432
    %v3505 = vpop.f32.mrf.mxu0
    %v3506 = vadd.f32 %v1888, %v3505
    %v3507 = vpop.f32.mrf.mxu0
    %3508 = vdwg.mxu0
    %s3509 = scalar_lea.vmem %s6, 48
    %3510 = vst [vmem:[%s3509] sm:$0xff] %v3501
    %3511 = vst [vmem:[%s3509 + $0x8] sm:$0xff] %v3506
    %s3512 = scalar_lea.vmem [#allocation4], 512
    %v3513 = vld [vmem:[%s3512] sm:$0xff]
    %v3514 = vld [vmem:[%s3512 + $0x8] sm:$0xff]
    %v3515 = vld [vmem:[%s3512 + $0x10] sm:$0xff]
    %v3516 = vld [vmem:[%s3512 + $0x18] sm:$0xff]
    %v3517 = vld [vmem:[%s3512 + $0x20] sm:$0xff]
    %v3518 = vld [vmem:[%s3512 + $0x28] sm:$0xff]
    %v3519 = vld [vmem:[%s3512 + $0x30] sm:$0xff]
    %v3520 = vld [vmem:[%s3512 + $0x38] sm:$0xff]
    %v3521 = vld [vmem:[%s3512 + $0x40] sm:$0xff]
    %v3522 = vld [vmem:[%s3512 + $0x48] sm:$0xff]
    %v3523 = vld [vmem:[%s3512 + $0x50] sm:$0xff]
    %v3524 = vld [vmem:[%s3512 + $0x58] sm:$0xff]
    %v3525 = vld [vmem:[%s3512 + $0x60] sm:$0xff]
    %v3526 = vld [vmem:[%s3512 + $0x68] sm:$0xff]
    %v3527 = vld [vmem:[%s3512 + $0x70] sm:$0xff]
    %v3528 = vld [vmem:[%s3512 + $0x78] sm:$0xff]
    %3529 = vmatprep.subr.mxu0 %v426
    %3530 = vmatpush1.msra.mxu0 %v425
    %3531 = vmatprep.subr.mxu0 %v418
    %3532 = vmatpush1.msra.mxu0 %v417
    %3533 = vmatprep.subr.mxu0 %v410
    %3534 = vmatpush1.msra.mxu0 %v409
    %3535 = vmatprep.subr.mxu0 %v402
    %3536 = vmatpush1.msra.mxu0 %v401
    %3537 = vmatprep.subr.mxu0 %v394
    %3538 = vmatpush1.msra.mxu0 %v393
    %3539 = vmatprep.subr.mxu0 %v386
    %3540 = vmatpush1.msra.mxu0 %v385
    %3541 = vmatprep.subr.mxu0 %v378
    %3542 = vmatpush1.msra.mxu0 %v377
    %3543 = vmatprep.subr.mxu0 %v370
    %3544 = vmatpush1.msra.mxu0 %v369
    %3545 = vmatprep.subr.mxu0 %v362
    %3546 = vmatpush1.msra.mxu0 %v361
    %3547 = vmatprep.subr.mxu0 %v354
    %3548 = vmatpush1.msra.mxu0 %v353
    %3549 = vmatprep.subr.mxu0 %v346
    %3550 = vmatpush1.msra.mxu0 %v345
    %3551 = vmatprep.subr.mxu0 %v338
    %3552 = vmatpush1.msra.mxu0 %v337
    %3553 = vmatprep.subr.mxu0 %v330
    %3554 = vmatpush1.msra.mxu0 %v329
    %3555 = vmatprep.subr.mxu0 %v322
    %3556 = vmatpush1.msra.mxu0 %v321
    %3557 = vmatprep.subr.mxu0 %v314
    %3558 = vmatpush1.msra.mxu0 %v313
    %3559 = vmatprep.subr.mxu0 %v306
    %3560 = vmatpush1.msra.mxu0 %v305
    %3561 = vmatprep.subr.mxu0 %v554
    %3562 = vmatpush2.msra.mxu0 %v553
    %3563 = vmatprep.subr.mxu0 %v546
    %3564 = vmatpush2.msra.mxu0 %v545
    %3565 = vmatprep.subr.mxu0 %v538
    %3566 = vmatpush2.msra.mxu0 %v537
    %3567 = vmatprep.subr.mxu0 %v530
    %3568 = vmatpush2.msra.mxu0 %v529
    %3569 = vmatprep.subr.mxu0 %v522
    %3570 = vmatpush2.msra.mxu0 %v521
    %3571 = vmatprep.subr.mxu0 %v514
    %3572 = vmatpush2.msra.mxu0 %v513
    %3573 = vmatprep.subr.mxu0 %v506
    %3574 = vmatpush2.msra.mxu0 %v505
    %3575 = vmatprep.subr.mxu0 %v498
    %3576 = vmatpush2.msra.mxu0 %v497
    %3577 = vmatprep.subr.mxu0 %v490
    %3578 = vmatpush2.msra.mxu0 %v489
    %3579 = vmatprep.subr.mxu0 %v482
    %3580 = vmatpush2.msra.mxu0 %v481
    %3581 = vmatprep.subr.mxu0 %v474
    %3582 = vmatpush2.msra.mxu0 %v473
    %3583 = vmatprep.subr.mxu0 %v466
    %3584 = vmatpush2.msra.mxu0 %v465
    %3585 = vmatprep.subr.mxu0 %v458
    %3586 = vmatpush2.msra.mxu0 %v457
    %3587 = vmatprep.subr.mxu0 %v450
    %3588 = vmatpush2.msra.mxu0 %v449
    %3589 = vmatprep.subr.mxu0 %v442
    %3590 = vmatpush2.msra.mxu0 %v441
    %3591 = vmatprep.subr.mxu0 %v434
    %3592 = vmatpush2.msra.mxu0 %v433
    %3593 = vmatprep.mubr.f32.mxu0 %v3431
    %3594 = vmatmul.mubr.f32.gmra.mxu0 %v3430
    %v3595 = vpop.f32.mrf.mxu0
    %v3596 = vadd.f32 0.0, %v3595
    %v3597 = vpop.f32.mrf.mxu0
    %v3598 = vadd.f32 0.0, %v3597
    %3599 = vmatprep.mubr.f32.mxu0 %v3433
    %3600 = vmatmul.mubr.f32.gmra.mxu0 %v3432
    %v3601 = vpop.f32.mrf.mxu0
    %v3602 = vadd.f32 0.0, %v3601
    %v3603 = vpop.f32.mrf.mxu0
    %v3604 = vadd.f32 0.0, %v3603
    %3605 = vdwg.mxu0
    %3606 = vmatprep.subr.mxu0 %v428
    %3607 = vmatpush1.msra.mxu0 %v427
    %3608 = vmatprep.subr.mxu0 %v420
    %3609 = vmatpush1.msra.mxu0 %v419
    %3610 = vmatprep.subr.mxu0 %v412
    %3611 = vmatpush1.msra.mxu0 %v411
    %3612 = vmatprep.subr.mxu0 %v404
    %3613 = vmatpush1.msra.mxu0 %v403
    %3614 = vmatprep.subr.mxu0 %v396
    %3615 = vmatpush1.msra.mxu0 %v395
    %3616 = vmatprep.subr.mxu0 %v388
    %3617 = vmatpush1.msra.mxu0 %v387
    %3618 = vmatprep.subr.mxu0 %v380
    %3619 = vmatpush1.msra.mxu0 %v379
    %3620 = vmatprep.subr.mxu0 %v372
    %3621 = vmatpush1.msra.mxu0 %v371
    %3622 = vmatprep.subr.mxu0 %v364
    %3623 = vmatpush1.msra.mxu0 %v363
    %3624 = vmatprep.subr.mxu0 %v356
    %3625 = vmatpush1.msra.mxu0 %v355
    %3626 = vmatprep.subr.mxu0 %v348
    %3627 = vmatpush1.msra.mxu0 %v347
    %3628 = vmatprep.subr.mxu0 %v340
    %3629 = vmatpush1.msra.mxu0 %v339
    %3630 = vmatprep.subr.mxu0 %v332
    %3631 = vmatpush1.msra.mxu0 %v331
    %3632 = vmatprep.subr.mxu0 %v324
    %3633 = vmatpush1.msra.mxu0 %v323
    %3634 = vmatprep.subr.mxu0 %v316
    %3635 = vmatpush1.msra.mxu0 %v315
    %3636 = vmatprep.subr.mxu0 %v308
    %3637 = vmatpush1.msra.mxu0 %v307
    %3638 = vmatprep.subr.mxu0 %v556
    %3639 = vmatpush2.msra.mxu0 %v555
    %3640 = vmatprep.subr.mxu0 %v548
    %3641 = vmatpush2.msra.mxu0 %v547
    %3642 = vmatprep.subr.mxu0 %v540
    %3643 = vmatpush2.msra.mxu0 %v539
    %3644 = vmatprep.subr.mxu0 %v532
    %3645 = vmatpush2.msra.mxu0 %v531
    %3646 = vmatprep.subr.mxu0 %v524
    %3647 = vmatpush2.msra.mxu0 %v523
    %3648 = vmatprep.subr.mxu0 %v516
    %3649 = vmatpush2.msra.mxu0 %v515
    %3650 = vmatprep.subr.mxu0 %v508
    %3651 = vmatpush2.msra.mxu0 %v507
    %3652 = vmatprep.subr.mxu0 %v500
    %3653 = vmatpush2.msra.mxu0 %v499
    %3654 = vmatprep.subr.mxu0 %v492
    %3655 = vmatpush2.msra.mxu0 %v491
    %3656 = vmatprep.subr.mxu0 %v484
    %3657 = vmatpush2.msra.mxu0 %v483
    %3658 = vmatprep.subr.mxu0 %v476
    %3659 = vmatpush2.msra.mxu0 %v475
    %3660 = vmatprep.subr.mxu0 %v468
    %3661 = vmatpush2.msra.mxu0 %v467
    %3662 = vmatprep.subr.mxu0 %v460
    %3663 = vmatpush2.msra.mxu0 %v459
    %3664 = vmatprep.subr.mxu0 %v452
    %3665 = vmatpush2.msra.mxu0 %v451
    %3666 = vmatprep.subr.mxu0 %v444
    %3667 = vmatpush2.msra.mxu0 %v443
    %3668 = vmatprep.subr.mxu0 %v436
    %3669 = vmatpush2.msra.mxu0 %v435
    %3670 = vmatprep.mubr.f32.mxu0 %v3431
    %3671 = vmatmul.mubr.f32.gmra.mxu0 %v3430
    %v3672 = vpop.f32.mrf.mxu0
    %v3673 = vadd.f32 0.0, %v3672
    %v3674 = vpop.f32.mrf.mxu0
    %v3675 = vadd.f32 0.0, %v3674
    %3676 = vmatprep.mubr.f32.mxu0 %v3433
    %3677 = vmatmul.mubr.f32.gmra.mxu0 %v3432
    %v3678 = vpop.f32.mrf.mxu0
    %v3679 = vadd.f32 0.0, %v3678
    %v3680 = vpop.f32.mrf.mxu0
    %v3681 = vadd.f32 0.0, %v3680
    %3682 = vdwg.mxu0
    %3683 = vmatprep.subr.mxu0 %v430
    %3684 = vmatpush1.msra.mxu0 %v429
    %3685 = vmatprep.subr.mxu0 %v422
    %3686 = vmatpush1.msra.mxu0 %v421
    %3687 = vmatprep.subr.mxu0 %v414
    %3688 = vmatpush1.msra.mxu0 %v413
    %3689 = vmatprep.subr.mxu0 %v406
    %3690 = vmatpush1.msra.mxu0 %v405
    %3691 = vmatprep.subr.mxu0 %v398
    %3692 = vmatpush1.msra.mxu0 %v397
    %3693 = vmatprep.subr.mxu0 %v390
    %3694 = vmatpush1.msra.mxu0 %v389
    %3695 = vmatprep.subr.mxu0 %v382
    %3696 = vmatpush1.msra.mxu0 %v381
    %3697 = vmatprep.subr.mxu0 %v374
    %3698 = vmatpush1.msra.mxu0 %v373
    %3699 = vmatprep.subr.mxu0 %v366
    %3700 = vmatpush1.msra.mxu0 %v365
    %3701 = vmatprep.subr.mxu0 %v358
    %3702 = vmatpush1.msra.mxu0 %v357
    %3703 = vmatprep.subr.mxu0 %v350
    %3704 = vmatpush1.msra.mxu0 %v349
    %3705 = vmatprep.subr.mxu0 %v342
    %3706 = vmatpush1.msra.mxu0 %v341
    %3707 = vmatprep.subr.mxu0 %v334
    %3708 = vmatpush1.msra.mxu0 %v333
    %3709 = vmatprep.subr.mxu0 %v326
    %3710 = vmatpush1.msra.mxu0 %v325
    %3711 = vmatprep.subr.mxu0 %v318
    %3712 = vmatpush1.msra.mxu0 %v317
    %3713 = vmatprep.subr.mxu0 %v310
    %3714 = vmatpush1.msra.mxu0 %v309
    %3715 = vmatprep.subr.mxu0 %v558
    %3716 = vmatpush2.msra.mxu0 %v557
    %3717 = vmatprep.subr.mxu0 %v550
    %3718 = vmatpush2.msra.mxu0 %v549
    %3719 = vmatprep.subr.mxu0 %v542
    %3720 = vmatpush2.msra.mxu0 %v541
    %3721 = vmatprep.subr.mxu0 %v534
    %3722 = vmatpush2.msra.mxu0 %v533
    %3723 = vmatprep.subr.mxu0 %v526
    %3724 = vmatpush2.msra.mxu0 %v525
    %3725 = vmatprep.subr.mxu0 %v518
    %3726 = vmatpush2.msra.mxu0 %v517
    %3727 = vmatprep.subr.mxu0 %v510
    %3728 = vmatpush2.msra.mxu0 %v509
    %3729 = vmatprep.subr.mxu0 %v502
    %3730 = vmatpush2.msra.mxu0 %v501
    %3731 = vmatprep.subr.mxu0 %v494
    %3732 = vmatpush2.msra.mxu0 %v493
    %3733 = vmatprep.subr.mxu0 %v486
    %3734 = vmatpush2.msra.mxu0 %v485
    %3735 = vmatprep.subr.mxu0 %v478
    %3736 = vmatpush2.msra.mxu0 %v477
    %3737 = vmatprep.subr.mxu0 %v470
    %3738 = vmatpush2.msra.mxu0 %v469
    %3739 = vmatprep.subr.mxu0 %v462
    %3740 = vmatpush2.msra.mxu0 %v461
    %3741 = vmatprep.subr.mxu0 %v454
    %3742 = vmatpush2.msra.mxu0 %v453
    %3743 = vmatprep.subr.mxu0 %v446
    %3744 = vmatpush2.msra.mxu0 %v445
    %3745 = vmatprep.subr.mxu0 %v438
    %3746 = vmatpush2.msra.mxu0 %v437
    %3747 = vmatprep.mubr.f32.mxu0 %v3431
    %3748 = vmatmul.mubr.f32.gmra.mxu0 %v3430
    %v3749 = vpop.f32.mrf.mxu0
    %v3750 = vadd.f32 0.0, %v3749
    %v3751 = vpop.f32.mrf.mxu0
    %v3752 = vadd.f32 0.0, %v3751
    %3753 = vmatprep.mubr.f32.mxu0 %v3433
    %3754 = vmatmul.mubr.f32.gmra.mxu0 %v3432
    %v3755 = vpop.f32.mrf.mxu0
    %v3756 = vadd.f32 0.0, %v3755
    %v3757 = vpop.f32.mrf.mxu0
    %v3758 = vadd.f32 0.0, %v3757
    %3759 = vdwg.mxu0
    %3760 = vmatprep.subr.mxu0 %v432
    %3761 = vmatpush1.msra.mxu0 %v431
    %3762 = vmatprep.subr.mxu0 %v424
    %3763 = vmatpush1.msra.mxu0 %v423
    %3764 = vmatprep.subr.mxu0 %v416
    %3765 = vmatpush1.msra.mxu0 %v415
    %3766 = vmatprep.subr.mxu0 %v408
    %3767 = vmatpush1.msra.mxu0 %v407
    %3768 = vmatprep.subr.mxu0 %v400
    %3769 = vmatpush1.msra.mxu0 %v399
    %3770 = vmatprep.subr.mxu0 %v392
    %3771 = vmatpush1.msra.mxu0 %v391
    %3772 = vmatprep.subr.mxu0 %v384
    %3773 = vmatpush1.msra.mxu0 %v383
    %3774 = vmatprep.subr.mxu0 %v376
    %3775 = vmatpush1.msra.mxu0 %v375
    %3776 = vmatprep.subr.mxu0 %v368
    %3777 = vmatpush1.msra.mxu0 %v367
    %3778 = vmatprep.subr.mxu0 %v360
    %3779 = vmatpush1.msra.mxu0 %v359
    %3780 = vmatprep.subr.mxu0 %v352
    %3781 = vmatpush1.msra.mxu0 %v351
    %3782 = vmatprep.subr.mxu0 %v344
    %3783 = vmatpush1.msra.mxu0 %v343
    %3784 = vmatprep.subr.mxu0 %v336
    %3785 = vmatpush1.msra.mxu0 %v335
    %3786 = vmatprep.subr.mxu0 %v328
    %3787 = vmatpush1.msra.mxu0 %v327
    %3788 = vmatprep.subr.mxu0 %v320
    %3789 = vmatpush1.msra.mxu0 %v319
    %3790 = vmatprep.subr.mxu0 %v312
    %3791 = vmatpush1.msra.mxu0 %v311
    %3792 = vmatprep.subr.mxu0 %v560
    %3793 = vmatpush2.msra.mxu0 %v559
    %3794 = vmatprep.subr.mxu0 %v552
    %3795 = vmatpush2.msra.mxu0 %v551
    %3796 = vmatprep.subr.mxu0 %v544
    %3797 = vmatpush2.msra.mxu0 %v543
    %3798 = vmatprep.subr.mxu0 %v536
    %3799 = vmatpush2.msra.mxu0 %v535
    %3800 = vmatprep.subr.mxu0 %v528
    %3801 = vmatpush2.msra.mxu0 %v527
    %3802 = vmatprep.subr.mxu0 %v520
    %3803 = vmatpush2.msra.mxu0 %v519
    %3804 = vmatprep.subr.mxu0 %v512
    %3805 = vmatpush2.msra.mxu0 %v511
    %3806 = vmatprep.subr.mxu0 %v504
    %3807 = vmatpush2.msra.mxu0 %v503
    %3808 = vmatprep.subr.mxu0 %v496
    %3809 = vmatpush2.msra.mxu0 %v495
    %3810 = vmatprep.subr.mxu0 %v488
    %3811 = vmatpush2.msra.mxu0 %v487
    %3812 = vmatprep.subr.mxu0 %v480
    %3813 = vmatpush2.msra.mxu0 %v479
    %3814 = vmatprep.subr.mxu0 %v472
    %3815 = vmatpush2.msra.mxu0 %v471
    %3816 = vmatprep.subr.mxu0 %v464
    %3817 = vmatpush2.msra.mxu0 %v463
    %3818 = vmatprep.subr.mxu0 %v456
    %3819 = vmatpush2.msra.mxu0 %v455
    %3820 = vmatprep.subr.mxu0 %v448
    %3821 = vmatpush2.msra.mxu0 %v447
    %3822 = vmatprep.subr.mxu0 %v440
    %3823 = vmatpush2.msra.mxu0 %v439
    %3824 = vmatprep.mubr.f32.mxu0 %v3431
    %3825 = vmatmul.mubr.f32.gmra.mxu0 %v3430
    %v3826 = vpop.f32.mrf.mxu0
    %v3827 = vadd.f32 0.0, %v3826
    %v3828 = vpop.f32.mrf.mxu0
    %v3829 = vadd.f32 0.0, %v3828
    %3830 = vmatprep.mubr.f32.mxu0 %v3433
    %3831 = vmatmul.mubr.f32.gmra.mxu0 %v3432
    %v3832 = vpop.f32.mrf.mxu0
    %v3833 = vadd.f32 0.0, %v3832
    %v3834 = vpop.f32.mrf.mxu0
    %v3835 = vadd.f32 0.0, %v3834
    %3836 = vdwg.mxu0
    %v3837 = vadd.f32 %v3513, %v3596
    %v3838 = vadd.f32 %v3514, %v3598
    %v3839 = vadd.f32 %v3515, %v3673
    %v3840 = vadd.f32 %v3516, %v3675
    %v3841 = vadd.f32 %v3517, %v3750
    %v3842 = vadd.f32 %v3518, %v3752
    %v3843 = vadd.f32 %v3519, %v3827
    %v3844 = vadd.f32 %v3520, %v3829
    %v3845 = vadd.f32 %v3521, %v3602
    %v3846 = vadd.f32 %v3522, %v3604
    %v3847 = vadd.f32 %v3523, %v3679
    %v3848 = vadd.f32 %v3524, %v3681
    %v3849 = vadd.f32 %v3525, %v3756
    %v3850 = vadd.f32 %v3526, %v3758
    %v3851 = vadd.f32 %v3527, %v3833
    %v3852 = vadd.f32 %v3528, %v3835
    %v3853 = vxor.u32 %v3837, 2147483648
    %v3854 = vxor.u32 %v3838, 2147483648
    %v3855 = vxor.u32 %v3845, 2147483648
    %v3856 = vxor.u32 %v3846, 2147483648
    %v3857 = vmul.f32 %v3853, 1.442695
    %v3858 = vpow.pop %v3857
    %v3859 = vmul.f32 %v3854, 1.442695
    %v3860 = vpow.pop %v3859
    %v3861 = vmul.f32 %v3855, 1.442695
    %v3862 = vpow.pop %v3861
    %v3863 = vmul.f32 %v3856, 1.442695
    %v3864 = vpow.pop %v3863
    %v3865 = vadd.f32 %v3858, 1.0
    %v3866 = vadd.f32 %v3860, 1.0
    %v3867 = vadd.f32 %v3862, 1.0
    %v3868 = vadd.f32 %v3864, 1.0
    %v3869 = vrcp.pop %v3865
    %v3870 = vmul.f32 1.0, %v3869
    %v3871 = vrcp.pop %v3866
    %v3872 = vmul.f32 1.0, %v3871
    %v3873 = vrcp.pop %v3867
    %v3874 = vmul.f32 1.0, %v3873
    %v3875 = vrcp.pop %v3868
    %v3876 = vmul.f32 1.0, %v3875
    %v3877 = vxor.u32 %v3839, 2147483648
    %v3878 = vxor.u32 %v3840, 2147483648
    %v3879 = vxor.u32 %v3847, 2147483648
    %v3880 = vxor.u32 %v3848, 2147483648
    %v3881 = vmul.f32 %v3877, 1.442695
    %v3882 = vpow.pop %v3881
    %v3883 = vmul.f32 %v3878, 1.442695
    %v3884 = vpow.pop %v3883
    %v3885 = vmul.f32 %v3879, 1.442695
    %v3886 = vpow.pop %v3885
    %v3887 = vmul.f32 %v3880, 1.442695
    %v3888 = vpow.pop %v3887
    %v3889 = vadd.f32 %v3882, 1.0
    %v3890 = vadd.f32 %v3884, 1.0
    %v3891 = vadd.f32 %v3886, 1.0
    %v3892 = vadd.f32 %v3888, 1.0
    %v3893 = vrcp.pop %v3889
    %v3894 = vmul.f32 1.0, %v3893
    %v3895 = vrcp.pop %v3890
    %v3896 = vmul.f32 1.0, %v3895
    %v3897 = vrcp.pop %v3891
    %v3898 = vmul.f32 1.0, %v3897
    %v3899 = vrcp.pop %v3892
    %v3900 = vmul.f32 1.0, %v3899
    %v3901 = vtanh.pop %v3841
    %v3902 = vtanh.pop %v3842
    %v3903 = vtanh.pop %v3849
    %v3904 = vtanh.pop %v3850
    %v3905 = vxor.u32 %v3843, 2147483648
    %v3906 = vxor.u32 %v3844, 2147483648
    %v3907 = vxor.u32 %v3851, 2147483648
    %v3908 = vxor.u32 %v3852, 2147483648
    %v3909 = vmul.f32 %v3905, 1.442695
    %v3910 = vpow.pop %v3909
    %v3911 = vmul.f32 %v3906, 1.442695
    %v3912 = vpow.pop %v3911
    %v3913 = vmul.f32 %v3907, 1.442695
    %v3914 = vpow.pop %v3913
    %v3915 = vmul.f32 %v3908, 1.442695
    %v3916 = vpow.pop %v3915
    %v3917 = vadd.f32 %v3910, 1.0
    %v3918 = vadd.f32 %v3912, 1.0
    %v3919 = vadd.f32 %v3914, 1.0
    %v3920 = vadd.f32 %v3916, 1.0
    %v3921 = vrcp.pop %v3917
    %v3922 = vmul.f32 1.0, %v3921
    %v3923 = vrcp.pop %v3918
    %v3924 = vmul.f32 1.0, %v3923
    %v3925 = vrcp.pop %v3919
    %v3926 = vmul.f32 1.0, %v3925
    %v3927 = vrcp.pop %v3920
    %v3928 = vmul.f32 1.0, %v3927
    %v3929 = vmul.f32 %v3894, %v3422
    %v3930 = vmul.f32 %v3896, %v3423
    %v3931 = vmul.f32 %v3898, %v3424
    %v3932 = vmul.f32 %v3900, %v3425
    %v3933 = vmul.f32 %v3870, %v3901
    %v3934 = vmul.f32 %v3872, %v3902
    %v3935 = vmul.f32 %v3874, %v3903
    %v3936 = vmul.f32 %v3876, %v3904
    %v3937 = vadd.f32 %v3929, %v3933
    %v3938 = vadd.f32 %v3930, %v3934
    %v3939 = vadd.f32 %v3931, %v3935
    %v3940 = vadd.f32 %v3932, %v3936
    %v3941 = vtanh.pop %v3937
    %v3942 = vtanh.pop %v3938
    %v3943 = vtanh.pop %v3939
    %v3944 = vtanh.pop %v3940
    %v3945 = vmul.f32 %v3922, %v3941
    %v3946 = vmul.f32 %v3924, %v3942
    %v3947 = vmul.f32 %v3926, %v3943
    %v3948 = vmul.f32 %v3928, %v3944
    %3949 = vmatprep.subr.mxu0 0.0
    %3950 = vmatpush1.msra.mxu0 %v1422
    %3951 = vmatprep.subr.mxu0 0.0
    %3952 = vmatpush1.msra.mxu0 %v1421
    %3953 = vmatprep.subr.mxu0 0.0
    %3954 = vmatpush1.msra.mxu0 %v1420
    %3955 = vmatprep.subr.mxu0 0.0
    %3956 = vmatpush1.msra.mxu0 %v1419
    %3957 = vmatprep.subr.mxu0 0.0
    %3958 = vmatpush1.msra.mxu0 %v1418
    %3959 = vmatprep.subr.mxu0 0.0
    %3960 = vmatpush1.msra.mxu0 %v1417
    %3961 = vmatprep.subr.mxu0 0.0
    %3962 = vmatpush1.msra.mxu0 %v1416
    %3963 = vmatprep.subr.mxu0 0.0
    %3964 = vmatpush1.msra.mxu0 %v1415
    %3965 = vmatprep.subr.mxu0 0.0
    %3966 = vmatpush1.msra.mxu0 %v1414
    %3967 = vmatprep.subr.mxu0 0.0
    %3968 = vmatpush1.msra.mxu0 %v1413
    %3969 = vmatprep.subr.mxu0 0.0
    %3970 = vmatpush1.msra.mxu0 %v1412
    %3971 = vmatprep.subr.mxu0 0.0
    %3972 = vmatpush1.msra.mxu0 %v1411
    %3973 = vmatprep.subr.mxu0 0.0
    %3974 = vmatpush1.msra.mxu0 %v1410
    %3975 = vmatprep.subr.mxu0 0.0
    %3976 = vmatpush1.msra.mxu0 %v1409
    %3977 = vmatprep.subr.mxu0 0.0
    %3978 = vmatpush1.msra.mxu0 %v1408
    %3979 = vmatprep.subr.mxu0 0.0
    %3980 = vmatpush1.msra.mxu0 %v1407
    %3981 = vmatprep.subr.mxu0 0.0
    %3982 = vmatpush2.msra.mxu0 %v1438
    %3983 = vmatprep.subr.mxu0 0.0
    %3984 = vmatpush2.msra.mxu0 %v1437
    %3985 = vmatprep.subr.mxu0 0.0
    %3986 = vmatpush2.msra.mxu0 %v1436
    %3987 = vmatprep.subr.mxu0 0.0
    %3988 = vmatpush2.msra.mxu0 %v1435
    %3989 = vmatprep.subr.mxu0 0.0
    %3990 = vmatpush2.msra.mxu0 %v1434
    %3991 = vmatprep.subr.mxu0 0.0
    %3992 = vmatpush2.msra.mxu0 %v1433
    %3993 = vmatprep.subr.mxu0 0.0
    %3994 = vmatpush2.msra.mxu0 %v1432
    %3995 = vmatprep.subr.mxu0 0.0
    %3996 = vmatpush2.msra.mxu0 %v1431
    %3997 = vmatprep.subr.mxu0 0.0
    %3998 = vmatpush2.msra.mxu0 %v1430
    %3999 = vmatprep.subr.mxu0 0.0
    %4000 = vmatpush2.msra.mxu0 %v1429
    %4001 = vmatprep.subr.mxu0 0.0
    %4002 = vmatpush2.msra.mxu0 %v1428
    %4003 = vmatprep.subr.mxu0 0.0
    %4004 = vmatpush2.msra.mxu0 %v1427
    %4005 = vmatprep.subr.mxu0 0.0
    %4006 = vmatpush2.msra.mxu0 %v1426
    %4007 = vmatprep.subr.mxu0 0.0
    %4008 = vmatpush2.msra.mxu0 %v1425
    %4009 = vmatprep.subr.mxu0 0.0
    %4010 = vmatpush2.msra.mxu0 %v1424
    %4011 = vmatprep.subr.mxu0 0.0
    %4012 = vmatpush2.msra.mxu0 %v1423
    %4013 = vmatprep.mubr.f32.mxu0 %v3946
    %4014 = vmatmul.mubr.f32.gmra.mxu0 %v3945
    %v4015 = vpop.f32.mrf.mxu0
    %v4016 = vadd.f32 %v1888, %v4015
    %v4017 = vpop.f32.mrf.mxu0
    %4018 = vmatprep.mubr.f32.mxu0 %v3948
    %4019 = vmatmul.mubr.f32.gmra.mxu0 %v3947
    %v4020 = vpop.f32.mrf.mxu0
    %v4021 = vadd.f32 %v1888, %v4020
    %v4022 = vpop.f32.mrf.mxu0
    %4023 = vdwg.mxu0
    %s4024 = scalar_lea.vmem %s6, 64
    %4025 = vst [vmem:[%s4024] sm:$0xff] %v4016
    %4026 = vst [vmem:[%s4024 + $0x8] sm:$0xff] %v4021
    %s4027 = scalar_lea.vmem [#allocation4], 640
    %v4028 = vld [vmem:[%s4027] sm:$0xff]
    %v4029 = vld [vmem:[%s4027 + $0x8] sm:$0xff]
    %v4030 = vld [vmem:[%s4027 + $0x10] sm:$0xff]
    %v4031 = vld [vmem:[%s4027 + $0x18] sm:$0xff]
    %v4032 = vld [vmem:[%s4027 + $0x20] sm:$0xff]
    %v4033 = vld [vmem:[%s4027 + $0x28] sm:$0xff]
    %v4034 = vld [vmem:[%s4027 + $0x30] sm:$0xff]
    %v4035 = vld [vmem:[%s4027 + $0x38] sm:$0xff]
    %v4036 = vld [vmem:[%s4027 + $0x40] sm:$0xff]
    %v4037 = vld [vmem:[%s4027 + $0x48] sm:$0xff]
    %v4038 = vld [vmem:[%s4027 + $0x50] sm:$0xff]
    %v4039 = vld [vmem:[%s4027 + $0x58] sm:$0xff]
    %v4040 = vld [vmem:[%s4027 + $0x60] sm:$0xff]
    %v4041 = vld [vmem:[%s4027 + $0x68] sm:$0xff]
    %v4042 = vld [vmem:[%s4027 + $0x70] sm:$0xff]
    %v4043 = vld [vmem:[%s4027 + $0x78] sm:$0xff]
    %4044 = vmatprep.subr.mxu0 %v426
    %4045 = vmatpush1.msra.mxu0 %v425
    %4046 = vmatprep.subr.mxu0 %v418
    %4047 = vmatpush1.msra.mxu0 %v417
    %4048 = vmatprep.subr.mxu0 %v410
    %4049 = vmatpush1.msra.mxu0 %v409
    %4050 = vmatprep.subr.mxu0 %v402
    %4051 = vmatpush1.msra.mxu0 %v401
    %4052 = vmatprep.subr.mxu0 %v394
    %4053 = vmatpush1.msra.mxu0 %v393
    %4054 = vmatprep.subr.mxu0 %v386
    %4055 = vmatpush1.msra.mxu0 %v385
    %4056 = vmatprep.subr.mxu0 %v378
    %4057 = vmatpush1.msra.mxu0 %v377
    %4058 = vmatprep.subr.mxu0 %v370
    %4059 = vmatpush1.msra.mxu0 %v369
    %4060 = vmatprep.subr.mxu0 %v362
    %4061 = vmatpush1.msra.mxu0 %v361
    %4062 = vmatprep.subr.mxu0 %v354
    %4063 = vmatpush1.msra.mxu0 %v353
    %4064 = vmatprep.subr.mxu0 %v346
    %4065 = vmatpush1.msra.mxu0 %v345
    %4066 = vmatprep.subr.mxu0 %v338
    %4067 = vmatpush1.msra.mxu0 %v337
    %4068 = vmatprep.subr.mxu0 %v330
    %4069 = vmatpush1.msra.mxu0 %v329
    %4070 = vmatprep.subr.mxu0 %v322
    %4071 = vmatpush1.msra.mxu0 %v321
    %4072 = vmatprep.subr.mxu0 %v314
    %4073 = vmatpush1.msra.mxu0 %v313
    %4074 = vmatprep.subr.mxu0 %v306
    %4075 = vmatpush1.msra.mxu0 %v305
    %4076 = vmatprep.subr.mxu0 %v554
    %4077 = vmatpush2.msra.mxu0 %v553
    %4078 = vmatprep.subr.mxu0 %v546
    %4079 = vmatpush2.msra.mxu0 %v545
    %4080 = vmatprep.subr.mxu0 %v538
    %4081 = vmatpush2.msra.mxu0 %v537
    %4082 = vmatprep.subr.mxu0 %v530
    %4083 = vmatpush2.msra.mxu0 %v529
    %4084 = vmatprep.subr.mxu0 %v522
    %4085 = vmatpush2.msra.mxu0 %v521
    %4086 = vmatprep.subr.mxu0 %v514
    %4087 = vmatpush2.msra.mxu0 %v513
    %4088 = vmatprep.subr.mxu0 %v506
    %4089 = vmatpush2.msra.mxu0 %v505
    %4090 = vmatprep.subr.mxu0 %v498
    %4091 = vmatpush2.msra.mxu0 %v497
    %4092 = vmatprep.subr.mxu0 %v490
    %4093 = vmatpush2.msra.mxu0 %v489
    %4094 = vmatprep.subr.mxu0 %v482
    %4095 = vmatpush2.msra.mxu0 %v481
    %4096 = vmatprep.subr.mxu0 %v474
    %4097 = vmatpush2.msra.mxu0 %v473
    %4098 = vmatprep.subr.mxu0 %v466
    %4099 = vmatpush2.msra.mxu0 %v465
    %4100 = vmatprep.subr.mxu0 %v458
    %4101 = vmatpush2.msra.mxu0 %v457
    %4102 = vmatprep.subr.mxu0 %v450
    %4103 = vmatpush2.msra.mxu0 %v449
    %4104 = vmatprep.subr.mxu0 %v442
    %4105 = vmatpush2.msra.mxu0 %v441
    %4106 = vmatprep.subr.mxu0 %v434
    %4107 = vmatpush2.msra.mxu0 %v433
    %4108 = vmatprep.mubr.f32.mxu0 %v3946
    %4109 = vmatmul.mubr.f32.gmra.mxu0 %v3945
    %v4110 = vpop.f32.mrf.mxu0
    %v4111 = vadd.f32 0.0, %v4110
    %v4112 = vpop.f32.mrf.mxu0
    %v4113 = vadd.f32 0.0, %v4112
    %4114 = vmatprep.mubr.f32.mxu0 %v3948
    %4115 = vmatmul.mubr.f32.gmra.mxu0 %v3947
    %v4116 = vpop.f32.mrf.mxu0
    %v4117 = vadd.f32 0.0, %v4116
    %v4118 = vpop.f32.mrf.mxu0
    %v4119 = vadd.f32 0.0, %v4118
    %4120 = vdwg.mxu0
    %4121 = vmatprep.subr.mxu0 %v428
    %4122 = vmatpush1.msra.mxu0 %v427
    %4123 = vmatprep.subr.mxu0 %v420
    %4124 = vmatpush1.msra.mxu0 %v419
    %4125 = vmatprep.subr.mxu0 %v412
    %4126 = vmatpush1.msra.mxu0 %v411
    %4127 = vmatprep.subr.mxu0 %v404
    %4128 = vmatpush1.msra.mxu0 %v403
    %4129 = vmatprep.subr.mxu0 %v396
    %4130 = vmatpush1.msra.mxu0 %v395
    %4131 = vmatprep.subr.mxu0 %v388
    %4132 = vmatpush1.msra.mxu0 %v387
    %4133 = vmatprep.subr.mxu0 %v380
    %4134 = vmatpush1.msra.mxu0 %v379
    %4135 = vmatprep.subr.mxu0 %v372
    %4136 = vmatpush1.msra.mxu0 %v371
    %4137 = vmatprep.subr.mxu0 %v364
    %4138 = vmatpush1.msra.mxu0 %v363
    %4139 = vmatprep.subr.mxu0 %v356
    %4140 = vmatpush1.msra.mxu0 %v355
    %4141 = vmatprep.subr.mxu0 %v348
    %4142 = vmatpush1.msra.mxu0 %v347
    %4143 = vmatprep.subr.mxu0 %v340
    %4144 = vmatpush1.msra.mxu0 %v339
    %4145 = vmatprep.subr.mxu0 %v332
    %4146 = vmatpush1.msra.mxu0 %v331
    %4147 = vmatprep.subr.mxu0 %v324
    %4148 = vmatpush1.msra.mxu0 %v323
    %4149 = vmatprep.subr.mxu0 %v316
    %4150 = vmatpush1.msra.mxu0 %v315
    %4151 = vmatprep.subr.mxu0 %v308
    %4152 = vmatpush1.msra.mxu0 %v307
    %4153 = vmatprep.subr.mxu0 %v556
    %4154 = vmatpush2.msra.mxu0 %v555
    %4155 = vmatprep.subr.mxu0 %v548
    %4156 = vmatpush2.msra.mxu0 %v547
    %4157 = vmatprep.subr.mxu0 %v540
    %4158 = vmatpush2.msra.mxu0 %v539
    %4159 = vmatprep.subr.mxu0 %v532
    %4160 = vmatpush2.msra.mxu0 %v531
    %4161 = vmatprep.subr.mxu0 %v524
    %4162 = vmatpush2.msra.mxu0 %v523
    %4163 = vmatprep.subr.mxu0 %v516
    %4164 = vmatpush2.msra.mxu0 %v515
    %4165 = vmatprep.subr.mxu0 %v508
    %4166 = vmatpush2.msra.mxu0 %v507
    %4167 = vmatprep.subr.mxu0 %v500
    %4168 = vmatpush2.msra.mxu0 %v499
    %4169 = vmatprep.subr.mxu0 %v492
    %4170 = vmatpush2.msra.mxu0 %v491
    %4171 = vmatprep.subr.mxu0 %v484
    %4172 = vmatpush2.msra.mxu0 %v483
    %4173 = vmatprep.subr.mxu0 %v476
    %4174 = vmatpush2.msra.mxu0 %v475
    %4175 = vmatprep.subr.mxu0 %v468
    %4176 = vmatpush2.msra.mxu0 %v467
    %4177 = vmatprep.subr.mxu0 %v460
    %4178 = vmatpush2.msra.mxu0 %v459
    %4179 = vmatprep.subr.mxu0 %v452
    %4180 = vmatpush2.msra.mxu0 %v451
    %4181 = vmatprep.subr.mxu0 %v444
    %4182 = vmatpush2.msra.mxu0 %v443
    %4183 = vmatprep.subr.mxu0 %v436
    %4184 = vmatpush2.msra.mxu0 %v435
    %4185 = vmatprep.mubr.f32.mxu0 %v3946
    %4186 = vmatmul.mubr.f32.gmra.mxu0 %v3945
    %v4187 = vpop.f32.mrf.mxu0
    %v4188 = vadd.f32 0.0, %v4187
    %v4189 = vpop.f32.mrf.mxu0
    %v4190 = vadd.f32 0.0, %v4189
    %4191 = vmatprep.mubr.f32.mxu0 %v3948
    %4192 = vmatmul.mubr.f32.gmra.mxu0 %v3947
    %v4193 = vpop.f32.mrf.mxu0
    %v4194 = vadd.f32 0.0, %v4193
    %v4195 = vpop.f32.mrf.mxu0
    %v4196 = vadd.f32 0.0, %v4195
    %4197 = vdwg.mxu0
    %4198 = vmatprep.subr.mxu0 %v430
    %4199 = vmatpush1.msra.mxu0 %v429
    %4200 = vmatprep.subr.mxu0 %v422
    %4201 = vmatpush1.msra.mxu0 %v421
    %4202 = vmatprep.subr.mxu0 %v414
    %4203 = vmatpush1.msra.mxu0 %v413
    %4204 = vmatprep.subr.mxu0 %v406
    %4205 = vmatpush1.msra.mxu0 %v405
    %4206 = vmatprep.subr.mxu0 %v398
    %4207 = vmatpush1.msra.mxu0 %v397
    %4208 = vmatprep.subr.mxu0 %v390
    %4209 = vmatpush1.msra.mxu0 %v389
    %4210 = vmatprep.subr.mxu0 %v382
    %4211 = vmatpush1.msra.mxu0 %v381
    %4212 = vmatprep.subr.mxu0 %v374
    %4213 = vmatpush1.msra.mxu0 %v373
    %4214 = vmatprep.subr.mxu0 %v366
    %4215 = vmatpush1.msra.mxu0 %v365
    %4216 = vmatprep.subr.mxu0 %v358
    %4217 = vmatpush1.msra.mxu0 %v357
    %4218 = vmatprep.subr.mxu0 %v350
    %4219 = vmatpush1.msra.mxu0 %v349
    %4220 = vmatprep.subr.mxu0 %v342
    %4221 = vmatpush1.msra.mxu0 %v341
    %4222 = vmatprep.subr.mxu0 %v334
    %4223 = vmatpush1.msra.mxu0 %v333
    %4224 = vmatprep.subr.mxu0 %v326
    %4225 = vmatpush1.msra.mxu0 %v325
    %4226 = vmatprep.subr.mxu0 %v318
    %4227 = vmatpush1.msra.mxu0 %v317
    %4228 = vmatprep.subr.mxu0 %v310
    %4229 = vmatpush1.msra.mxu0 %v309
    %4230 = vmatprep.subr.mxu0 %v558
    %4231 = vmatpush2.msra.mxu0 %v557
    %4232 = vmatprep.subr.mxu0 %v550
    %4233 = vmatpush2.msra.mxu0 %v549
    %4234 = vmatprep.subr.mxu0 %v542
    %4235 = vmatpush2.msra.mxu0 %v541
    %4236 = vmatprep.subr.mxu0 %v534
    %4237 = vmatpush2.msra.mxu0 %v533
    %4238 = vmatprep.subr.mxu0 %v526
    %4239 = vmatpush2.msra.mxu0 %v525
    %4240 = vmatprep.subr.mxu0 %v518
    %4241 = vmatpush2.msra.mxu0 %v517
    %4242 = vmatprep.subr.mxu0 %v510
    %4243 = vmatpush2.msra.mxu0 %v509
    %4244 = vmatprep.subr.mxu0 %v502
    %4245 = vmatpush2.msra.mxu0 %v501
    %4246 = vmatprep.subr.mxu0 %v494
    %4247 = vmatpush2.msra.mxu0 %v493
    %4248 = vmatprep.subr.mxu0 %v486
    %4249 = vmatpush2.msra.mxu0 %v485
    %4250 = vmatprep.subr.mxu0 %v478
    %4251 = vmatpush2.msra.mxu0 %v477
    %4252 = vmatprep.subr.mxu0 %v470
    %4253 = vmatpush2.msra.mxu0 %v469
    %4254 = vmatprep.subr.mxu0 %v462
    %4255 = vmatpush2.msra.mxu0 %v461
    %4256 = vmatprep.subr.mxu0 %v454
    %4257 = vmatpush2.msra.mxu0 %v453
    %4258 = vmatprep.subr.mxu0 %v446
    %4259 = vmatpush2.msra.mxu0 %v445
    %4260 = vmatprep.subr.mxu0 %v438
    %4261 = vmatpush2.msra.mxu0 %v437
    %4262 = vmatprep.mubr.f32.mxu0 %v3946
    %4263 = vmatmul.mubr.f32.gmra.mxu0 %v3945
    %v4264 = vpop.f32.mrf.mxu0
    %v4265 = vadd.f32 0.0, %v4264
    %v4266 = vpop.f32.mrf.mxu0
    %v4267 = vadd.f32 0.0, %v4266
    %4268 = vmatprep.mubr.f32.mxu0 %v3948
    %4269 = vmatmul.mubr.f32.gmra.mxu0 %v3947
    %v4270 = vpop.f32.mrf.mxu0
    %v4271 = vadd.f32 0.0, %v4270
    %v4272 = vpop.f32.mrf.mxu0
    %v4273 = vadd.f32 0.0, %v4272
    %4274 = vdwg.mxu0
    %4275 = vmatprep.subr.mxu0 %v432
    %4276 = vmatpush1.msra.mxu0 %v431
    %4277 = vmatprep.subr.mxu0 %v424
    %4278 = vmatpush1.msra.mxu0 %v423
    %4279 = vmatprep.subr.mxu0 %v416
    %4280 = vmatpush1.msra.mxu0 %v415
    %4281 = vmatprep.subr.mxu0 %v408
    %4282 = vmatpush1.msra.mxu0 %v407
    %4283 = vmatprep.subr.mxu0 %v400
    %4284 = vmatpush1.msra.mxu0 %v399
    %4285 = vmatprep.subr.mxu0 %v392
    %4286 = vmatpush1.msra.mxu0 %v391
    %4287 = vmatprep.subr.mxu0 %v384
    %4288 = vmatpush1.msra.mxu0 %v383
    %4289 = vmatprep.subr.mxu0 %v376
    %4290 = vmatpush1.msra.mxu0 %v375
    %4291 = vmatprep.subr.mxu0 %v368
    %4292 = vmatpush1.msra.mxu0 %v367
    %4293 = vmatprep.subr.mxu0 %v360
    %4294 = vmatpush1.msra.mxu0 %v359
    %4295 = vmatprep.subr.mxu0 %v352
    %4296 = vmatpush1.msra.mxu0 %v351
    %4297 = vmatprep.subr.mxu0 %v344
    %4298 = vmatpush1.msra.mxu0 %v343
    %4299 = vmatprep.subr.mxu0 %v336
    %4300 = vmatpush1.msra.mxu0 %v335
    %4301 = vmatprep.subr.mxu0 %v328
    %4302 = vmatpush1.msra.mxu0 %v327
    %4303 = vmatprep.subr.mxu0 %v320
    %4304 = vmatpush1.msra.mxu0 %v319
    %4305 = vmatprep.subr.mxu0 %v312
    %4306 = vmatpush1.msra.mxu0 %v311
    %4307 = vmatprep.subr.mxu0 %v560
    %4308 = vmatpush2.msra.mxu0 %v559
    %4309 = vmatprep.subr.mxu0 %v552
    %4310 = vmatpush2.msra.mxu0 %v551
    %4311 = vmatprep.subr.mxu0 %v544
    %4312 = vmatpush2.msra.mxu0 %v543
    %4313 = vmatprep.subr.mxu0 %v536
    %4314 = vmatpush2.msra.mxu0 %v535
    %4315 = vmatprep.subr.mxu0 %v528
    %4316 = vmatpush2.msra.mxu0 %v527
    %4317 = vmatprep.subr.mxu0 %v520
    %4318 = vmatpush2.msra.mxu0 %v519
    %4319 = vmatprep.subr.mxu0 %v512
    %4320 = vmatpush2.msra.mxu0 %v511
    %4321 = vmatprep.subr.mxu0 %v504
    %4322 = vmatpush2.msra.mxu0 %v503
    %4323 = vmatprep.subr.mxu0 %v496
    %4324 = vmatpush2.msra.mxu0 %v495
    %4325 = vmatprep.subr.mxu0 %v488
    %4326 = vmatpush2.msra.mxu0 %v487
    %4327 = vmatprep.subr.mxu0 %v480
    %4328 = vmatpush2.msra.mxu0 %v479
    %4329 = vmatprep.subr.mxu0 %v472
    %4330 = vmatpush2.msra.mxu0 %v471
    %4331 = vmatprep.subr.mxu0 %v464
    %4332 = vmatpush2.msra.mxu0 %v463
    %4333 = vmatprep.subr.mxu0 %v456
    %4334 = vmatpush2.msra.mxu0 %v455
    %4335 = vmatprep.subr.mxu0 %v448
    %4336 = vmatpush2.msra.mxu0 %v447
    %4337 = vmatprep.subr.mxu0 %v440
    %4338 = vmatpush2.msra.mxu0 %v439
    %4339 = vmatprep.mubr.f32.mxu0 %v3946
    %4340 = vmatmul.mubr.f32.gmra.mxu0 %v3945
    %v4341 = vpop.f32.mrf.mxu0
    %v4342 = vadd.f32 0.0, %v4341
    %v4343 = vpop.f32.mrf.mxu0
    %v4344 = vadd.f32 0.0, %v4343
    %4345 = vmatprep.mubr.f32.mxu0 %v3948
    %4346 = vmatmul.mubr.f32.gmra.mxu0 %v3947
    %v4347 = vpop.f32.mrf.mxu0
    %v4348 = vadd.f32 0.0, %v4347
    %v4349 = vpop.f32.mrf.mxu0
    %v4350 = vadd.f32 0.0, %v4349
    %4351 = vdwg.mxu0
    %v4352 = vadd.f32 %v4028, %v4111
    %v4353 = vadd.f32 %v4029, %v4113
    %v4354 = vadd.f32 %v4030, %v4188
    %v4355 = vadd.f32 %v4031, %v4190
    %v4356 = vadd.f32 %v4032, %v4265
    %v4357 = vadd.f32 %v4033, %v4267
    %v4358 = vadd.f32 %v4034, %v4342
    %v4359 = vadd.f32 %v4035, %v4344
    %v4360 = vadd.f32 %v4036, %v4117
    %v4361 = vadd.f32 %v4037, %v4119
    %v4362 = vadd.f32 %v4038, %v4194
    %v4363 = vadd.f32 %v4039, %v4196
    %v4364 = vadd.f32 %v4040, %v4271
    %v4365 = vadd.f32 %v4041, %v4273
    %v4366 = vadd.f32 %v4042, %v4348
    %v4367 = vadd.f32 %v4043, %v4350
    %v4368 = vxor.u32 %v4352, 2147483648
    %v4369 = vxor.u32 %v4353, 2147483648
    %v4370 = vxor.u32 %v4360, 2147483648
    %v4371 = vxor.u32 %v4361, 2147483648
    %v4372 = vmul.f32 %v4368, 1.442695
    %v4373 = vpow.pop %v4372
    %v4374 = vmul.f32 %v4369, 1.442695
    %v4375 = vpow.pop %v4374
    %v4376 = vmul.f32 %v4370, 1.442695
    %v4377 = vpow.pop %v4376
    %v4378 = vmul.f32 %v4371, 1.442695
    %v4379 = vpow.pop %v4378
    %v4380 = vadd.f32 %v4373, 1.0
    %v4381 = vadd.f32 %v4375, 1.0
    %v4382 = vadd.f32 %v4377, 1.0
    %v4383 = vadd.f32 %v4379, 1.0
    %v4384 = vrcp.pop %v4380
    %v4385 = vmul.f32 1.0, %v4384
    %v4386 = vrcp.pop %v4381
    %v4387 = vmul.f32 1.0, %v4386
    %v4388 = vrcp.pop %v4382
    %v4389 = vmul.f32 1.0, %v4388
    %v4390 = vrcp.pop %v4383
    %v4391 = vmul.f32 1.0, %v4390
    %v4392 = vxor.u32 %v4354, 2147483648
    %v4393 = vxor.u32 %v4355, 2147483648
    %v4394 = vxor.u32 %v4362, 2147483648
    %v4395 = vxor.u32 %v4363, 2147483648
    %v4396 = vmul.f32 %v4392, 1.442695
    %v4397 = vpow.pop %v4396
    %v4398 = vmul.f32 %v4393, 1.442695
    %v4399 = vpow.pop %v4398
    %v4400 = vmul.f32 %v4394, 1.442695
    %v4401 = vpow.pop %v4400
    %v4402 = vmul.f32 %v4395, 1.442695
    %v4403 = vpow.pop %v4402
    %v4404 = vadd.f32 %v4397, 1.0
    %v4405 = vadd.f32 %v4399, 1.0
    %v4406 = vadd.f32 %v4401, 1.0
    %v4407 = vadd.f32 %v4403, 1.0
    %v4408 = vrcp.pop %v4404
    %v4409 = vmul.f32 1.0, %v4408
    %v4410 = vrcp.pop %v4405
    %v4411 = vmul.f32 1.0, %v4410
    %v4412 = vrcp.pop %v4406
    %v4413 = vmul.f32 1.0, %v4412
    %v4414 = vrcp.pop %v4407
    %v4415 = vmul.f32 1.0, %v4414
    %v4416 = vtanh.pop %v4356
    %v4417 = vtanh.pop %v4357
    %v4418 = vtanh.pop %v4364
    %v4419 = vtanh.pop %v4365
    %v4420 = vxor.u32 %v4358, 2147483648
    %v4421 = vxor.u32 %v4359, 2147483648
    %v4422 = vxor.u32 %v4366, 2147483648
    %v4423 = vxor.u32 %v4367, 2147483648
    %v4424 = vmul.f32 %v4420, 1.442695
    %v4425 = vpow.pop %v4424
    %v4426 = vmul.f32 %v4421, 1.442695
    %v4427 = vpow.pop %v4426
    %v4428 = vmul.f32 %v4422, 1.442695
    %v4429 = vpow.pop %v4428
    %v4430 = vmul.f32 %v4423, 1.442695
    %v4431 = vpow.pop %v4430
    %v4432 = vadd.f32 %v4425, 1.0
    %v4433 = vadd.f32 %v4427, 1.0
    %v4434 = vadd.f32 %v4429, 1.0
    %v4435 = vadd.f32 %v4431, 1.0
    %v4436 = vrcp.pop %v4432
    %v4437 = vmul.f32 1.0, %v4436
    %v4438 = vrcp.pop %v4433
    %v4439 = vmul.f32 1.0, %v4438
    %v4440 = vrcp.pop %v4434
    %v4441 = vmul.f32 1.0, %v4440
    %v4442 = vrcp.pop %v4435
    %v4443 = vmul.f32 1.0, %v4442
    %v4444 = vmul.f32 %v4409, %v3937
    %v4445 = vmul.f32 %v4411, %v3938
    %v4446 = vmul.f32 %v4413, %v3939
    %v4447 = vmul.f32 %v4415, %v3940
    %v4448 = vmul.f32 %v4385, %v4416
    %v4449 = vmul.f32 %v4387, %v4417
    %v4450 = vmul.f32 %v4389, %v4418
    %v4451 = vmul.f32 %v4391, %v4419
    %v4452 = vadd.f32 %v4444, %v4448
    %v4453 = vadd.f32 %v4445, %v4449
    %v4454 = vadd.f32 %v4446, %v4450
    %v4455 = vadd.f32 %v4447, %v4451
    %v4456 = vtanh.pop %v4452
    %v4457 = vtanh.pop %v4453
    %v4458 = vtanh.pop %v4454
    %v4459 = vtanh.pop %v4455
    %v4460 = vmul.f32 %v4437, %v4456
    %v4461 = vmul.f32 %v4439, %v4457
    %v4462 = vmul.f32 %v4441, %v4458
    %v4463 = vmul.f32 %v4443, %v4459
    %4464 = vmatprep.subr.mxu0 0.0
    %4465 = vmatpush1.msra.mxu0 %v1422
    %4466 = vmatprep.subr.mxu0 0.0
    %4467 = vmatpush1.msra.mxu0 %v1421
    %4468 = vmatprep.subr.mxu0 0.0
    %4469 = vmatpush1.msra.mxu0 %v1420
    %4470 = vmatprep.subr.mxu0 0.0
    %4471 = vmatpush1.msra.mxu0 %v1419
    %4472 = vmatprep.subr.mxu0 0.0
    %4473 = vmatpush1.msra.mxu0 %v1418
    %4474 = vmatprep.subr.mxu0 0.0
    %4475 = vmatpush1.msra.mxu0 %v1417
    %4476 = vmatprep.subr.mxu0 0.0
    %4477 = vmatpush1.msra.mxu0 %v1416
    %4478 = vmatprep.subr.mxu0 0.0
    %4479 = vmatpush1.msra.mxu0 %v1415
    %4480 = vmatprep.subr.mxu0 0.0
    %4481 = vmatpush1.msra.mxu0 %v1414
    %4482 = vmatprep.subr.mxu0 0.0
    %4483 = vmatpush1.msra.mxu0 %v1413
    %4484 = vmatprep.subr.mxu0 0.0
    %4485 = vmatpush1.msra.mxu0 %v1412
    %4486 = vmatprep.subr.mxu0 0.0
    %4487 = vmatpush1.msra.mxu0 %v1411
    %4488 = vmatprep.subr.mxu0 0.0
    %4489 = vmatpush1.msra.mxu0 %v1410
    %4490 = vmatprep.subr.mxu0 0.0
    %4491 = vmatpush1.msra.mxu0 %v1409
    %4492 = vmatprep.subr.mxu0 0.0
    %4493 = vmatpush1.msra.mxu0 %v1408
    %4494 = vmatprep.subr.mxu0 0.0
    %4495 = vmatpush1.msra.mxu0 %v1407
    %4496 = vmatprep.subr.mxu0 0.0
    %4497 = vmatpush2.msra.mxu0 %v1438
    %4498 = vmatprep.subr.mxu0 0.0
    %4499 = vmatpush2.msra.mxu0 %v1437
    %4500 = vmatprep.subr.mxu0 0.0
    %4501 = vmatpush2.msra.mxu0 %v1436
    %4502 = vmatprep.subr.mxu0 0.0
    %4503 = vmatpush2.msra.mxu0 %v1435
    %4504 = vmatprep.subr.mxu0 0.0
    %4505 = vmatpush2.msra.mxu0 %v1434
    %4506 = vmatprep.subr.mxu0 0.0
    %4507 = vmatpush2.msra.mxu0 %v1433
    %4508 = vmatprep.subr.mxu0 0.0
    %4509 = vmatpush2.msra.mxu0 %v1432
    %4510 = vmatprep.subr.mxu0 0.0
    %4511 = vmatpush2.msra.mxu0 %v1431
    %4512 = vmatprep.subr.mxu0 0.0
    %4513 = vmatpush2.msra.mxu0 %v1430
    %4514 = vmatprep.subr.mxu0 0.0
    %4515 = vmatpush2.msra.mxu0 %v1429
    %4516 = vmatprep.subr.mxu0 0.0
    %4517 = vmatpush2.msra.mxu0 %v1428
    %4518 = vmatprep.subr.mxu0 0.0
    %4519 = vmatpush2.msra.mxu0 %v1427
    %4520 = vmatprep.subr.mxu0 0.0
    %4521 = vmatpush2.msra.mxu0 %v1426
    %4522 = vmatprep.subr.mxu0 0.0
    %4523 = vmatpush2.msra.mxu0 %v1425
    %4524 = vmatprep.subr.mxu0 0.0
    %4525 = vmatpush2.msra.mxu0 %v1424
    %4526 = vmatprep.subr.mxu0 0.0
    %4527 = vmatpush2.msra.mxu0 %v1423
    %4528 = vmatprep.mubr.f32.mxu0 %v4461
    %4529 = vmatmul.mubr.f32.gmra.mxu0 %v4460
    %v4530 = vpop.f32.mrf.mxu0
    %v4531 = vadd.f32 %v1888, %v4530
    %v4532 = vpop.f32.mrf.mxu0
    %4533 = vmatprep.mubr.f32.mxu0 %v4463
    %4534 = vmatmul.mubr.f32.gmra.mxu0 %v4462
    %v4535 = vpop.f32.mrf.mxu0
    %v4536 = vadd.f32 %v1888, %v4535
    %v4537 = vpop.f32.mrf.mxu0
    %4538 = vdwg.mxu0
    %s4539 = scalar_lea.vmem %s6, 80
    %4540 = vst [vmem:[%s4539] sm:$0xff] %v4531
    %4541 = vst [vmem:[%s4539 + $0x8] sm:$0xff] %v4536
    %s4542 = scalar_lea.vmem [#allocation4], 768
    %v4543 = vld [vmem:[%s4542] sm:$0xff]
    %v4544 = vld [vmem:[%s4542 + $0x8] sm:$0xff]
    %v4545 = vld [vmem:[%s4542 + $0x10] sm:$0xff]
    %v4546 = vld [vmem:[%s4542 + $0x18] sm:$0xff]
    %v4547 = vld [vmem:[%s4542 + $0x20] sm:$0xff]
    %v4548 = vld [vmem:[%s4542 + $0x28] sm:$0xff]
    %v4549 = vld [vmem:[%s4542 + $0x30] sm:$0xff]
    %v4550 = vld [vmem:[%s4542 + $0x38] sm:$0xff]
    %v4551 = vld [vmem:[%s4542 + $0x40] sm:$0xff]
    %v4552 = vld [vmem:[%s4542 + $0x48] sm:$0xff]
    %v4553 = vld [vmem:[%s4542 + $0x50] sm:$0xff]
    %v4554 = vld [vmem:[%s4542 + $0x58] sm:$0xff]
    %v4555 = vld [vmem:[%s4542 + $0x60] sm:$0xff]
    %v4556 = vld [vmem:[%s4542 + $0x68] sm:$0xff]
    %v4557 = vld [vmem:[%s4542 + $0x70] sm:$0xff]
    %v4558 = vld [vmem:[%s4542 + $0x78] sm:$0xff]
    %4559 = vmatprep.subr.mxu0 %v426
    %4560 = vmatpush1.msra.mxu0 %v425
    %4561 = vmatprep.subr.mxu0 %v418
    %4562 = vmatpush1.msra.mxu0 %v417
    %4563 = vmatprep.subr.mxu0 %v410
    %4564 = vmatpush1.msra.mxu0 %v409
    %4565 = vmatprep.subr.mxu0 %v402
    %4566 = vmatpush1.msra.mxu0 %v401
    %4567 = vmatprep.subr.mxu0 %v394
    %4568 = vmatpush1.msra.mxu0 %v393
    %4569 = vmatprep.subr.mxu0 %v386
    %4570 = vmatpush1.msra.mxu0 %v385
    %4571 = vmatprep.subr.mxu0 %v378
    %4572 = vmatpush1.msra.mxu0 %v377
    %4573 = vmatprep.subr.mxu0 %v370
    %4574 = vmatpush1.msra.mxu0 %v369
    %4575 = vmatprep.subr.mxu0 %v362
    %4576 = vmatpush1.msra.mxu0 %v361
    %4577 = vmatprep.subr.mxu0 %v354
    %4578 = vmatpush1.msra.mxu0 %v353
    %4579 = vmatprep.subr.mxu0 %v346
    %4580 = vmatpush1.msra.mxu0 %v345
    %4581 = vmatprep.subr.mxu0 %v338
    %4582 = vmatpush1.msra.mxu0 %v337
    %4583 = vmatprep.subr.mxu0 %v330
    %4584 = vmatpush1.msra.mxu0 %v329
    %4585 = vmatprep.subr.mxu0 %v322
    %4586 = vmatpush1.msra.mxu0 %v321
    %4587 = vmatprep.subr.mxu0 %v314
    %4588 = vmatpush1.msra.mxu0 %v313
    %4589 = vmatprep.subr.mxu0 %v306
    %4590 = vmatpush1.msra.mxu0 %v305
    %4591 = vmatprep.subr.mxu0 %v554
    %4592 = vmatpush2.msra.mxu0 %v553
    %4593 = vmatprep.subr.mxu0 %v546
    %4594 = vmatpush2.msra.mxu0 %v545
    %4595 = vmatprep.subr.mxu0 %v538
    %4596 = vmatpush2.msra.mxu0 %v537
    %4597 = vmatprep.subr.mxu0 %v530
    %4598 = vmatpush2.msra.mxu0 %v529
    %4599 = vmatprep.subr.mxu0 %v522
    %4600 = vmatpush2.msra.mxu0 %v521
    %4601 = vmatprep.subr.mxu0 %v514
    %4602 = vmatpush2.msra.mxu0 %v513
    %4603 = vmatprep.subr.mxu0 %v506
    %4604 = vmatpush2.msra.mxu0 %v505
    %4605 = vmatprep.subr.mxu0 %v498
    %4606 = vmatpush2.msra.mxu0 %v497
    %4607 = vmatprep.subr.mxu0 %v490
    %4608 = vmatpush2.msra.mxu0 %v489
    %4609 = vmatprep.subr.mxu0 %v482
    %4610 = vmatpush2.msra.mxu0 %v481
    %4611 = vmatprep.subr.mxu0 %v474
    %4612 = vmatpush2.msra.mxu0 %v473
    %4613 = vmatprep.subr.mxu0 %v466
    %4614 = vmatpush2.msra.mxu0 %v465
    %4615 = vmatprep.subr.mxu0 %v458
    %4616 = vmatpush2.msra.mxu0 %v457
    %4617 = vmatprep.subr.mxu0 %v450
    %4618 = vmatpush2.msra.mxu0 %v449
    %4619 = vmatprep.subr.mxu0 %v442
    %4620 = vmatpush2.msra.mxu0 %v441
    %4621 = vmatprep.subr.mxu0 %v434
    %4622 = vmatpush2.msra.mxu0 %v433
    %4623 = vmatprep.mubr.f32.mxu0 %v4461
    %4624 = vmatmul.mubr.f32.gmra.mxu0 %v4460
    %v4625 = vpop.f32.mrf.mxu0
    %v4626 = vadd.f32 0.0, %v4625
    %v4627 = vpop.f32.mrf.mxu0
    %v4628 = vadd.f32 0.0, %v4627
    %4629 = vmatprep.mubr.f32.mxu0 %v4463
    %4630 = vmatmul.mubr.f32.gmra.mxu0 %v4462
    %v4631 = vpop.f32.mrf.mxu0
    %v4632 = vadd.f32 0.0, %v4631
    %v4633 = vpop.f32.mrf.mxu0
    %v4634 = vadd.f32 0.0, %v4633
    %4635 = vdwg.mxu0
    %4636 = vmatprep.subr.mxu0 %v428
    %4637 = vmatpush1.msra.mxu0 %v427
    %4638 = vmatprep.subr.mxu0 %v420
    %4639 = vmatpush1.msra.mxu0 %v419
    %4640 = vmatprep.subr.mxu0 %v412
    %4641 = vmatpush1.msra.mxu0 %v411
    %4642 = vmatprep.subr.mxu0 %v404
    %4643 = vmatpush1.msra.mxu0 %v403
    %4644 = vmatprep.subr.mxu0 %v396
    %4645 = vmatpush1.msra.mxu0 %v395
    %4646 = vmatprep.subr.mxu0 %v388
    %4647 = vmatpush1.msra.mxu0 %v387
    %4648 = vmatprep.subr.mxu0 %v380
    %4649 = vmatpush1.msra.mxu0 %v379
    %4650 = vmatprep.subr.mxu0 %v372
    %4651 = vmatpush1.msra.mxu0 %v371
    %4652 = vmatprep.subr.mxu0 %v364
    %4653 = vmatpush1.msra.mxu0 %v363
    %4654 = vmatprep.subr.mxu0 %v356
    %4655 = vmatpush1.msra.mxu0 %v355
    %4656 = vmatprep.subr.mxu0 %v348
    %4657 = vmatpush1.msra.mxu0 %v347
    %4658 = vmatprep.subr.mxu0 %v340
    %4659 = vmatpush1.msra.mxu0 %v339
    %4660 = vmatprep.subr.mxu0 %v332
    %4661 = vmatpush1.msra.mxu0 %v331
    %4662 = vmatprep.subr.mxu0 %v324
    %4663 = vmatpush1.msra.mxu0 %v323
    %4664 = vmatprep.subr.mxu0 %v316
    %4665 = vmatpush1.msra.mxu0 %v315
    %4666 = vmatprep.subr.mxu0 %v308
    %4667 = vmatpush1.msra.mxu0 %v307
    %4668 = vmatprep.subr.mxu0 %v556
    %4669 = vmatpush2.msra.mxu0 %v555
    %4670 = vmatprep.subr.mxu0 %v548
    %4671 = vmatpush2.msra.mxu0 %v547
    %4672 = vmatprep.subr.mxu0 %v540
    %4673 = vmatpush2.msra.mxu0 %v539
    %4674 = vmatprep.subr.mxu0 %v532
    %4675 = vmatpush2.msra.mxu0 %v531
    %4676 = vmatprep.subr.mxu0 %v524
    %4677 = vmatpush2.msra.mxu0 %v523
    %4678 = vmatprep.subr.mxu0 %v516
    %4679 = vmatpush2.msra.mxu0 %v515
    %4680 = vmatprep.subr.mxu0 %v508
    %4681 = vmatpush2.msra.mxu0 %v507
    %4682 = vmatprep.subr.mxu0 %v500
    %4683 = vmatpush2.msra.mxu0 %v499
    %4684 = vmatprep.subr.mxu0 %v492
    %4685 = vmatpush2.msra.mxu0 %v491
    %4686 = vmatprep.subr.mxu0 %v484
    %4687 = vmatpush2.msra.mxu0 %v483
    %4688 = vmatprep.subr.mxu0 %v476
    %4689 = vmatpush2.msra.mxu0 %v475
    %4690 = vmatprep.subr.mxu0 %v468
    %4691 = vmatpush2.msra.mxu0 %v467
    %4692 = vmatprep.subr.mxu0 %v460
    %4693 = vmatpush2.msra.mxu0 %v459
    %4694 = vmatprep.subr.mxu0 %v452
    %4695 = vmatpush2.msra.mxu0 %v451
    %4696 = vmatprep.subr.mxu0 %v444
    %4697 = vmatpush2.msra.mxu0 %v443
    %4698 = vmatprep.subr.mxu0 %v436
    %4699 = vmatpush2.msra.mxu0 %v435
    %4700 = vmatprep.mubr.f32.mxu0 %v4461
    %4701 = vmatmul.mubr.f32.gmra.mxu0 %v4460
    %v4702 = vpop.f32.mrf.mxu0
    %v4703 = vadd.f32 0.0, %v4702
    %v4704 = vpop.f32.mrf.mxu0
    %v4705 = vadd.f32 0.0, %v4704
    %4706 = vmatprep.mubr.f32.mxu0 %v4463
    %4707 = vmatmul.mubr.f32.gmra.mxu0 %v4462
    %v4708 = vpop.f32.mrf.mxu0
    %v4709 = vadd.f32 0.0, %v4708
    %v4710 = vpop.f32.mrf.mxu0
    %v4711 = vadd.f32 0.0, %v4710
    %4712 = vdwg.mxu0
    %4713 = vmatprep.subr.mxu0 %v430
    %4714 = vmatpush1.msra.mxu0 %v429
    %4715 = vmatprep.subr.mxu0 %v422
    %4716 = vmatpush1.msra.mxu0 %v421
    %4717 = vmatprep.subr.mxu0 %v414
    %4718 = vmatpush1.msra.mxu0 %v413
    %4719 = vmatprep.subr.mxu0 %v406
    %4720 = vmatpush1.msra.mxu0 %v405
    %4721 = vmatprep.subr.mxu0 %v398
    %4722 = vmatpush1.msra.mxu0 %v397
    %4723 = vmatprep.subr.mxu0 %v390
    %4724 = vmatpush1.msra.mxu0 %v389
    %4725 = vmatprep.subr.mxu0 %v382
    %4726 = vmatpush1.msra.mxu0 %v381
    %4727 = vmatprep.subr.mxu0 %v374
    %4728 = vmatpush1.msra.mxu0 %v373
    %4729 = vmatprep.subr.mxu0 %v366
    %4730 = vmatpush1.msra.mxu0 %v365
    %4731 = vmatprep.subr.mxu0 %v358
    %4732 = vmatpush1.msra.mxu0 %v357
    %4733 = vmatprep.subr.mxu0 %v350
    %4734 = vmatpush1.msra.mxu0 %v349
    %4735 = vmatprep.subr.mxu0 %v342
    %4736 = vmatpush1.msra.mxu0 %v341
    %4737 = vmatprep.subr.mxu0 %v334
    %4738 = vmatpush1.msra.mxu0 %v333
    %4739 = vmatprep.subr.mxu0 %v326
    %4740 = vmatpush1.msra.mxu0 %v325
    %4741 = vmatprep.subr.mxu0 %v318
    %4742 = vmatpush1.msra.mxu0 %v317
    %4743 = vmatprep.subr.mxu0 %v310
    %4744 = vmatpush1.msra.mxu0 %v309
    %4745 = vmatprep.subr.mxu0 %v558
    %4746 = vmatpush2.msra.mxu0 %v557
    %4747 = vmatprep.subr.mxu0 %v550
    %4748 = vmatpush2.msra.mxu0 %v549
    %4749 = vmatprep.subr.mxu0 %v542
    %4750 = vmatpush2.msra.mxu0 %v541
    %4751 = vmatprep.subr.mxu0 %v534
    %4752 = vmatpush2.msra.mxu0 %v533
    %4753 = vmatprep.subr.mxu0 %v526
    %4754 = vmatpush2.msra.mxu0 %v525
    %4755 = vmatprep.subr.mxu0 %v518
    %4756 = vmatpush2.msra.mxu0 %v517
    %4757 = vmatprep.subr.mxu0 %v510
    %4758 = vmatpush2.msra.mxu0 %v509
    %4759 = vmatprep.subr.mxu0 %v502
    %4760 = vmatpush2.msra.mxu0 %v501
    %4761 = vmatprep.subr.mxu0 %v494
    %4762 = vmatpush2.msra.mxu0 %v493
    %4763 = vmatprep.subr.mxu0 %v486
    %4764 = vmatpush2.msra.mxu0 %v485
    %4765 = vmatprep.subr.mxu0 %v478
    %4766 = vmatpush2.msra.mxu0 %v477
    %4767 = vmatprep.subr.mxu0 %v470
    %4768 = vmatpush2.msra.mxu0 %v469
    %4769 = vmatprep.subr.mxu0 %v462
    %4770 = vmatpush2.msra.mxu0 %v461
    %4771 = vmatprep.subr.mxu0 %v454
    %4772 = vmatpush2.msra.mxu0 %v453
    %4773 = vmatprep.subr.mxu0 %v446
    %4774 = vmatpush2.msra.mxu0 %v445
    %4775 = vmatprep.subr.mxu0 %v438
    %4776 = vmatpush2.msra.mxu0 %v437
    %4777 = vmatprep.mubr.f32.mxu0 %v4461
    %4778 = vmatmul.mubr.f32.gmra.mxu0 %v4460
    %v4779 = vpop.f32.mrf.mxu0
    %v4780 = vadd.f32 0.0, %v4779
    %v4781 = vpop.f32.mrf.mxu0
    %v4782 = vadd.f32 0.0, %v4781
    %4783 = vmatprep.mubr.f32.mxu0 %v4463
    %4784 = vmatmul.mubr.f32.gmra.mxu0 %v4462
    %v4785 = vpop.f32.mrf.mxu0
    %v4786 = vadd.f32 0.0, %v4785
    %v4787 = vpop.f32.mrf.mxu0
    %v4788 = vadd.f32 0.0, %v4787
    %4789 = vdwg.mxu0
    %4790 = vmatprep.subr.mxu0 %v432
    %4791 = vmatpush1.msra.mxu0 %v431
    %4792 = vmatprep.subr.mxu0 %v424
    %4793 = vmatpush1.msra.mxu0 %v423
    %4794 = vmatprep.subr.mxu0 %v416
    %4795 = vmatpush1.msra.mxu0 %v415
    %4796 = vmatprep.subr.mxu0 %v408
    %4797 = vmatpush1.msra.mxu0 %v407
    %4798 = vmatprep.subr.mxu0 %v400
    %4799 = vmatpush1.msra.mxu0 %v399
    %4800 = vmatprep.subr.mxu0 %v392
    %4801 = vmatpush1.msra.mxu0 %v391
    %4802 = vmatprep.subr.mxu0 %v384
    %4803 = vmatpush1.msra.mxu0 %v383
    %4804 = vmatprep.subr.mxu0 %v376
    %4805 = vmatpush1.msra.mxu0 %v375
    %4806 = vmatprep.subr.mxu0 %v368
    %4807 = vmatpush1.msra.mxu0 %v367
    %4808 = vmatprep.subr.mxu0 %v360
    %4809 = vmatpush1.msra.mxu0 %v359
    %4810 = vmatprep.subr.mxu0 %v352
    %4811 = vmatpush1.msra.mxu0 %v351
    %4812 = vmatprep.subr.mxu0 %v344
    %4813 = vmatpush1.msra.mxu0 %v343
    %4814 = vmatprep.subr.mxu0 %v336
    %4815 = vmatpush1.msra.mxu0 %v335
    %4816 = vmatprep.subr.mxu0 %v328
    %4817 = vmatpush1.msra.mxu0 %v327
    %4818 = vmatprep.subr.mxu0 %v320
    %4819 = vmatpush1.msra.mxu0 %v319
    %4820 = vmatprep.subr.mxu0 %v312
    %4821 = vmatpush1.msra.mxu0 %v311
    %4822 = vmatprep.subr.mxu0 %v560
    %4823 = vmatpush2.msra.mxu0 %v559
    %4824 = vmatprep.subr.mxu0 %v552
    %4825 = vmatpush2.msra.mxu0 %v551
    %4826 = vmatprep.subr.mxu0 %v544
    %4827 = vmatpush2.msra.mxu0 %v543
    %4828 = vmatprep.subr.mxu0 %v536
    %4829 = vmatpush2.msra.mxu0 %v535
    %4830 = vmatprep.subr.mxu0 %v528
    %4831 = vmatpush2.msra.mxu0 %v527
    %4832 = vmatprep.subr.mxu0 %v520
    %4833 = vmatpush2.msra.mxu0 %v519
    %4834 = vmatprep.subr.mxu0 %v512
    %4835 = vmatpush2.msra.mxu0 %v511
    %4836 = vmatprep.subr.mxu0 %v504
    %4837 = vmatpush2.msra.mxu0 %v503
    %4838 = vmatprep.subr.mxu0 %v496
    %4839 = vmatpush2.msra.mxu0 %v495
    %4840 = vmatprep.subr.mxu0 %v488
    %4841 = vmatpush2.msra.mxu0 %v487
    %4842 = vmatprep.subr.mxu0 %v480
    %4843 = vmatpush2.msra.mxu0 %v479
    %4844 = vmatprep.subr.mxu0 %v472
    %4845 = vmatpush2.msra.mxu0 %v471
    %4846 = vmatprep.subr.mxu0 %v464
    %4847 = vmatpush2.msra.mxu0 %v463
    %4848 = vmatprep.subr.mxu0 %v456
    %4849 = vmatpush2.msra.mxu0 %v455
    %4850 = vmatprep.subr.mxu0 %v448
    %4851 = vmatpush2.msra.mxu0 %v447
    %4852 = vmatprep.subr.mxu0 %v440
    %4853 = vmatpush2.msra.mxu0 %v439
    %4854 = vmatprep.mubr.f32.mxu0 %v4461
    %4855 = vmatmul.mubr.f32.gmra.mxu0 %v4460
    %v4856 = vpop.f32.mrf.mxu0
    %v4857 = vadd.f32 0.0, %v4856
    %v4858 = vpop.f32.mrf.mxu0
    %v4859 = vadd.f32 0.0, %v4858
    %4860 = vmatprep.mubr.f32.mxu0 %v4463
    %4861 = vmatmul.mubr.f32.gmra.mxu0 %v4462
    %v4862 = vpop.f32.mrf.mxu0
    %v4863 = vadd.f32 0.0, %v4862
    %v4864 = vpop.f32.mrf.mxu0
    %v4865 = vadd.f32 0.0, %v4864
    %4866 = vdwg.mxu0
    %v4867 = vadd.f32 %v4543, %v4626
    %v4868 = vadd.f32 %v4544, %v4628
    %v4869 = vadd.f32 %v4545, %v4703
    %v4870 = vadd.f32 %v4546, %v4705
    %v4871 = vadd.f32 %v4547, %v4780
    %v4872 = vadd.f32 %v4548, %v4782
    %v4873 = vadd.f32 %v4549, %v4857
    %v4874 = vadd.f32 %v4550, %v4859
    %v4875 = vadd.f32 %v4551, %v4632
    %v4876 = vadd.f32 %v4552, %v4634
    %v4877 = vadd.f32 %v4553, %v4709
    %v4878 = vadd.f32 %v4554, %v4711
    %v4879 = vadd.f32 %v4555, %v4786
    %v4880 = vadd.f32 %v4556, %v4788
    %v4881 = vadd.f32 %v4557, %v4863
    %v4882 = vadd.f32 %v4558, %v4865
    %v4883 = vxor.u32 %v4867, 2147483648
    %v4884 = vxor.u32 %v4868, 2147483648
    %v4885 = vxor.u32 %v4875, 2147483648
    %v4886 = vxor.u32 %v4876, 2147483648
    %v4887 = vmul.f32 %v4883, 1.442695
    %v4888 = vpow.pop %v4887
    %v4889 = vmul.f32 %v4884, 1.442695
    %v4890 = vpow.pop %v4889
    %v4891 = vmul.f32 %v4885, 1.442695
    %v4892 = vpow.pop %v4891
    %v4893 = vmul.f32 %v4886, 1.442695
    %v4894 = vpow.pop %v4893
    %v4895 = vadd.f32 %v4888, 1.0
    %v4896 = vadd.f32 %v4890, 1.0
    %v4897 = vadd.f32 %v4892, 1.0
    %v4898 = vadd.f32 %v4894, 1.0
    %v4899 = vrcp.pop %v4895
    %v4900 = vmul.f32 1.0, %v4899
    %v4901 = vrcp.pop %v4896
    %v4902 = vmul.f32 1.0, %v4901
    %v4903 = vrcp.pop %v4897
    %v4904 = vmul.f32 1.0, %v4903
    %v4905 = vrcp.pop %v4898
    %v4906 = vmul.f32 1.0, %v4905
    %v4907 = vxor.u32 %v4869, 2147483648
    %v4908 = vxor.u32 %v4870, 2147483648
    %v4909 = vxor.u32 %v4877, 2147483648
    %v4910 = vxor.u32 %v4878, 2147483648
    %v4911 = vmul.f32 %v4907, 1.442695
    %v4912 = vpow.pop %v4911
    %v4913 = vmul.f32 %v4908, 1.442695
    %v4914 = vpow.pop %v4913
    %v4915 = vmul.f32 %v4909, 1.442695
    %v4916 = vpow.pop %v4915
    %v4917 = vmul.f32 %v4910, 1.442695
    %v4918 = vpow.pop %v4917
    %v4919 = vadd.f32 %v4912, 1.0
    %v4920 = vadd.f32 %v4914, 1.0
    %v4921 = vadd.f32 %v4916, 1.0
    %v4922 = vadd.f32 %v4918, 1.0
    %v4923 = vrcp.pop %v4919
    %v4924 = vmul.f32 1.0, %v4923
    %v4925 = vrcp.pop %v4920
    %v4926 = vmul.f32 1.0, %v4925
    %v4927 = vrcp.pop %v4921
    %v4928 = vmul.f32 1.0, %v4927
    %v4929 = vrcp.pop %v4922
    %v4930 = vmul.f32 1.0, %v4929
    %v4931 = vtanh.pop %v4871
    %v4932 = vtanh.pop %v4872
    %v4933 = vtanh.pop %v4879
    %v4934 = vtanh.pop %v4880
    %v4935 = vxor.u32 %v4873, 2147483648
    %v4936 = vxor.u32 %v4874, 2147483648
    %v4937 = vxor.u32 %v4881, 2147483648
    %v4938 = vxor.u32 %v4882, 2147483648
    %v4939 = vmul.f32 %v4935, 1.442695
    %v4940 = vpow.pop %v4939
    %v4941 = vmul.f32 %v4936, 1.442695
    %v4942 = vpow.pop %v4941
    %v4943 = vmul.f32 %v4937, 1.442695
    %v4944 = vpow.pop %v4943
    %v4945 = vmul.f32 %v4938, 1.442695
    %v4946 = vpow.pop %v4945
    %v4947 = vadd.f32 %v4940, 1.0
    %v4948 = vadd.f32 %v4942, 1.0
    %v4949 = vadd.f32 %v4944, 1.0
    %v4950 = vadd.f32 %v4946, 1.0
    %v4951 = vrcp.pop %v4947
    %v4952 = vmul.f32 1.0, %v4951
    %v4953 = vrcp.pop %v4948
    %v4954 = vmul.f32 1.0, %v4953
    %v4955 = vrcp.pop %v4949
    %v4956 = vmul.f32 1.0, %v4955
    %v4957 = vrcp.pop %v4950
    %v4958 = vmul.f32 1.0, %v4957
    %v4959 = vmul.f32 %v4924, %v4452
    %v4960 = vmul.f32 %v4926, %v4453
    %v4961 = vmul.f32 %v4928, %v4454
    %v4962 = vmul.f32 %v4930, %v4455
    %v4963 = vmul.f32 %v4900, %v4931
    %v4964 = vmul.f32 %v4902, %v4932
    %v4965 = vmul.f32 %v4904, %v4933
    %v4966 = vmul.f32 %v4906, %v4934
    %v4967 = vadd.f32 %v4959, %v4963
    %v4968 = vadd.f32 %v4960, %v4964
    %v4969 = vadd.f32 %v4961, %v4965
    %v4970 = vadd.f32 %v4962, %v4966
    %v4971 = vtanh.pop %v4967
    %v4972 = vtanh.pop %v4968
    %v4973 = vtanh.pop %v4969
    %v4974 = vtanh.pop %v4970
    %v4975 = vmul.f32 %v4952, %v4971
    %v4976 = vmul.f32 %v4954, %v4972
    %v4977 = vmul.f32 %v4956, %v4973
    %v4978 = vmul.f32 %v4958, %v4974
    %4979 = vmatprep.subr.mxu0 0.0
    %4980 = vmatpush1.msra.mxu0 %v1422
    %4981 = vmatprep.subr.mxu0 0.0
    %4982 = vmatpush1.msra.mxu0 %v1421
    %4983 = vmatprep.subr.mxu0 0.0
    %4984 = vmatpush1.msra.mxu0 %v1420
    %4985 = vmatprep.subr.mxu0 0.0
    %4986 = vmatpush1.msra.mxu0 %v1419
    %4987 = vmatprep.subr.mxu0 0.0
    %4988 = vmatpush1.msra.mxu0 %v1418
    %4989 = vmatprep.subr.mxu0 0.0
    %4990 = vmatpush1.msra.mxu0 %v1417
    %4991 = vmatprep.subr.mxu0 0.0
    %4992 = vmatpush1.msra.mxu0 %v1416
    %4993 = vmatprep.subr.mxu0 0.0
    %4994 = vmatpush1.msra.mxu0 %v1415
    %4995 = vmatprep.subr.mxu0 0.0
    %4996 = vmatpush1.msra.mxu0 %v1414
    %4997 = vmatprep.subr.mxu0 0.0
    %4998 = vmatpush1.msra.mxu0 %v1413
    %4999 = vmatprep.subr.mxu0 0.0
    %5000 = vmatpush1.msra.mxu0 %v1412
    %5001 = vmatprep.subr.mxu0 0.0
    %5002 = vmatpush1.msra.mxu0 %v1411
    %5003 = vmatprep.subr.mxu0 0.0
    %5004 = vmatpush1.msra.mxu0 %v1410
    %5005 = vmatprep.subr.mxu0 0.0
    %5006 = vmatpush1.msra.mxu0 %v1409
    %5007 = vmatprep.subr.mxu0 0.0
    %5008 = vmatpush1.msra.mxu0 %v1408
    %5009 = vmatprep.subr.mxu0 0.0
    %5010 = vmatpush1.msra.mxu0 %v1407
    %5011 = vmatprep.subr.mxu0 0.0
    %5012 = vmatpush2.msra.mxu0 %v1438
    %5013 = vmatprep.subr.mxu0 0.0
    %5014 = vmatpush2.msra.mxu0 %v1437
    %5015 = vmatprep.subr.mxu0 0.0
    %5016 = vmatpush2.msra.mxu0 %v1436
    %5017 = vmatprep.subr.mxu0 0.0
    %5018 = vmatpush2.msra.mxu0 %v1435
    %5019 = vmatprep.subr.mxu0 0.0
    %5020 = vmatpush2.msra.mxu0 %v1434
    %5021 = vmatprep.subr.mxu0 0.0
    %5022 = vmatpush2.msra.mxu0 %v1433
    %5023 = vmatprep.subr.mxu0 0.0
    %5024 = vmatpush2.msra.mxu0 %v1432
    %5025 = vmatprep.subr.mxu0 0.0
    %5026 = vmatpush2.msra.mxu0 %v1431
    %5027 = vmatprep.subr.mxu0 0.0
    %5028 = vmatpush2.msra.mxu0 %v1430
    %5029 = vmatprep.subr.mxu0 0.0
    %5030 = vmatpush2.msra.mxu0 %v1429
    %5031 = vmatprep.subr.mxu0 0.0
    %5032 = vmatpush2.msra.mxu0 %v1428
    %5033 = vmatprep.subr.mxu0 0.0
    %5034 = vmatpush2.msra.mxu0 %v1427
    %5035 = vmatprep.subr.mxu0 0.0
    %5036 = vmatpush2.msra.mxu0 %v1426
    %5037 = vmatprep.subr.mxu0 0.0
    %5038 = vmatpush2.msra.mxu0 %v1425
    %5039 = vmatprep.subr.mxu0 0.0
    %5040 = vmatpush2.msra.mxu0 %v1424
    %5041 = vmatprep.subr.mxu0 0.0
    %5042 = vmatpush2.msra.mxu0 %v1423
    %5043 = vmatprep.mubr.f32.mxu0 %v4976
    %5044 = vmatmul.mubr.f32.gmra.mxu0 %v4975
    %v5045 = vpop.f32.mrf.mxu0
    %v5046 = vadd.f32 %v1888, %v5045
    %v5047 = vpop.f32.mrf.mxu0
    %5048 = vmatprep.mubr.f32.mxu0 %v4978
    %5049 = vmatmul.mubr.f32.gmra.mxu0 %v4977
    %v5050 = vpop.f32.mrf.mxu0
    %v5051 = vadd.f32 %v1888, %v5050
    %v5052 = vpop.f32.mrf.mxu0
    %5053 = vdwg.mxu0
    %s5054 = scalar_lea.vmem %s6, 96
    %5055 = vst [vmem:[%s5054] sm:$0xff] %v5046
    %5056 = vst [vmem:[%s5054 + $0x8] sm:$0xff] %v5051
    %s5057 = scalar_lea.vmem [#allocation4], 896
    %v5058 = vld [vmem:[%s5057] sm:$0xff]
    %v5059 = vld [vmem:[%s5057 + $0x8] sm:$0xff]
    %v5060 = vld [vmem:[%s5057 + $0x10] sm:$0xff]
    %v5061 = vld [vmem:[%s5057 + $0x18] sm:$0xff]
    %v5062 = vld [vmem:[%s5057 + $0x20] sm:$0xff]
    %v5063 = vld [vmem:[%s5057 + $0x28] sm:$0xff]
    %v5064 = vld [vmem:[%s5057 + $0x30] sm:$0xff]
    %v5065 = vld [vmem:[%s5057 + $0x38] sm:$0xff]
    %v5066 = vld [vmem:[%s5057 + $0x40] sm:$0xff]
    %v5067 = vld [vmem:[%s5057 + $0x48] sm:$0xff]
    %v5068 = vld [vmem:[%s5057 + $0x50] sm:$0xff]
    %v5069 = vld [vmem:[%s5057 + $0x58] sm:$0xff]
    %v5070 = vld [vmem:[%s5057 + $0x60] sm:$0xff]
    %v5071 = vld [vmem:[%s5057 + $0x68] sm:$0xff]
    %v5072 = vld [vmem:[%s5057 + $0x70] sm:$0xff]
    %v5073 = vld [vmem:[%s5057 + $0x78] sm:$0xff]
    %5074 = vmatprep.subr.mxu0 %v426
    %5075 = vmatpush1.msra.mxu0 %v425
    %5076 = vmatprep.subr.mxu0 %v418
    %5077 = vmatpush1.msra.mxu0 %v417
    %5078 = vmatprep.subr.mxu0 %v410
    %5079 = vmatpush1.msra.mxu0 %v409
    %5080 = vmatprep.subr.mxu0 %v402
    %5081 = vmatpush1.msra.mxu0 %v401
    %5082 = vmatprep.subr.mxu0 %v394
    %5083 = vmatpush1.msra.mxu0 %v393
    %5084 = vmatprep.subr.mxu0 %v386
    %5085 = vmatpush1.msra.mxu0 %v385
    %5086 = vmatprep.subr.mxu0 %v378
    %5087 = vmatpush1.msra.mxu0 %v377
    %5088 = vmatprep.subr.mxu0 %v370
    %5089 = vmatpush1.msra.mxu0 %v369
    %5090 = vmatprep.subr.mxu0 %v362
    %5091 = vmatpush1.msra.mxu0 %v361
    %5092 = vmatprep.subr.mxu0 %v354
    %5093 = vmatpush1.msra.mxu0 %v353
    %5094 = vmatprep.subr.mxu0 %v346
    %5095 = vmatpush1.msra.mxu0 %v345
    %5096 = vmatprep.subr.mxu0 %v338
    %5097 = vmatpush1.msra.mxu0 %v337
    %5098 = vmatprep.subr.mxu0 %v330
    %5099 = vmatpush1.msra.mxu0 %v329
    %5100 = vmatprep.subr.mxu0 %v322
    %5101 = vmatpush1.msra.mxu0 %v321
    %5102 = vmatprep.subr.mxu0 %v314
    %5103 = vmatpush1.msra.mxu0 %v313
    %5104 = vmatprep.subr.mxu0 %v306
    %5105 = vmatpush1.msra.mxu0 %v305
    %5106 = vmatprep.subr.mxu0 %v554
    %5107 = vmatpush2.msra.mxu0 %v553
    %5108 = vmatprep.subr.mxu0 %v546
    %5109 = vmatpush2.msra.mxu0 %v545
    %5110 = vmatprep.subr.mxu0 %v538
    %5111 = vmatpush2.msra.mxu0 %v537
    %5112 = vmatprep.subr.mxu0 %v530
    %5113 = vmatpush2.msra.mxu0 %v529
    %5114 = vmatprep.subr.mxu0 %v522
    %5115 = vmatpush2.msra.mxu0 %v521
    %5116 = vmatprep.subr.mxu0 %v514
    %5117 = vmatpush2.msra.mxu0 %v513
    %5118 = vmatprep.subr.mxu0 %v506
    %5119 = vmatpush2.msra.mxu0 %v505
    %5120 = vmatprep.subr.mxu0 %v498
    %5121 = vmatpush2.msra.mxu0 %v497
    %5122 = vmatprep.subr.mxu0 %v490
    %5123 = vmatpush2.msra.mxu0 %v489
    %5124 = vmatprep.subr.mxu0 %v482
    %5125 = vmatpush2.msra.mxu0 %v481
    %5126 = vmatprep.subr.mxu0 %v474
    %5127 = vmatpush2.msra.mxu0 %v473
    %5128 = vmatprep.subr.mxu0 %v466
    %5129 = vmatpush2.msra.mxu0 %v465
    %5130 = vmatprep.subr.mxu0 %v458
    %5131 = vmatpush2.msra.mxu0 %v457
    %5132 = vmatprep.subr.mxu0 %v450
    %5133 = vmatpush2.msra.mxu0 %v449
    %5134 = vmatprep.subr.mxu0 %v442
    %5135 = vmatpush2.msra.mxu0 %v441
    %5136 = vmatprep.subr.mxu0 %v434
    %5137 = vmatpush2.msra.mxu0 %v433
    %5138 = vmatprep.mubr.f32.mxu0 %v4976
    %5139 = vmatmul.mubr.f32.gmra.mxu0 %v4975
    %v5140 = vpop.f32.mrf.mxu0
    %v5141 = vadd.f32 0.0, %v5140
    %v5142 = vpop.f32.mrf.mxu0
    %v5143 = vadd.f32 0.0, %v5142
    %5144 = vmatprep.mubr.f32.mxu0 %v4978
    %5145 = vmatmul.mubr.f32.gmra.mxu0 %v4977
    %v5146 = vpop.f32.mrf.mxu0
    %v5147 = vadd.f32 0.0, %v5146
    %v5148 = vpop.f32.mrf.mxu0
    %v5149 = vadd.f32 0.0, %v5148
    %5150 = vdwg.mxu0
    %5151 = vmatprep.subr.mxu0 %v428
    %5152 = vmatpush1.msra.mxu0 %v427
    %5153 = vmatprep.subr.mxu0 %v420
    %5154 = vmatpush1.msra.mxu0 %v419
    %5155 = vmatprep.subr.mxu0 %v412
    %5156 = vmatpush1.msra.mxu0 %v411
    %5157 = vmatprep.subr.mxu0 %v404
    %5158 = vmatpush1.msra.mxu0 %v403
    %5159 = vmatprep.subr.mxu0 %v396
    %5160 = vmatpush1.msra.mxu0 %v395
    %5161 = vmatprep.subr.mxu0 %v388
    %5162 = vmatpush1.msra.mxu0 %v387
    %5163 = vmatprep.subr.mxu0 %v380
    %5164 = vmatpush1.msra.mxu0 %v379
    %5165 = vmatprep.subr.mxu0 %v372
    %5166 = vmatpush1.msra.mxu0 %v371
    %5167 = vmatprep.subr.mxu0 %v364
    %5168 = vmatpush1.msra.mxu0 %v363
    %5169 = vmatprep.subr.mxu0 %v356
    %5170 = vmatpush1.msra.mxu0 %v355
    %5171 = vmatprep.subr.mxu0 %v348
    %5172 = vmatpush1.msra.mxu0 %v347
    %5173 = vmatprep.subr.mxu0 %v340
    %5174 = vmatpush1.msra.mxu0 %v339
    %5175 = vmatprep.subr.mxu0 %v332
    %5176 = vmatpush1.msra.mxu0 %v331
    %5177 = vmatprep.subr.mxu0 %v324
    %5178 = vmatpush1.msra.mxu0 %v323
    %5179 = vmatprep.subr.mxu0 %v316
    %5180 = vmatpush1.msra.mxu0 %v315
    %5181 = vmatprep.subr.mxu0 %v308
    %5182 = vmatpush1.msra.mxu0 %v307
    %5183 = vmatprep.subr.mxu0 %v556
    %5184 = vmatpush2.msra.mxu0 %v555
    %5185 = vmatprep.subr.mxu0 %v548
    %5186 = vmatpush2.msra.mxu0 %v547
    %5187 = vmatprep.subr.mxu0 %v540
    %5188 = vmatpush2.msra.mxu0 %v539
    %5189 = vmatprep.subr.mxu0 %v532
    %5190 = vmatpush2.msra.mxu0 %v531
    %5191 = vmatprep.subr.mxu0 %v524
    %5192 = vmatpush2.msra.mxu0 %v523
    %5193 = vmatprep.subr.mxu0 %v516
    %5194 = vmatpush2.msra.mxu0 %v515
    %5195 = vmatprep.subr.mxu0 %v508
    %5196 = vmatpush2.msra.mxu0 %v507
    %5197 = vmatprep.subr.mxu0 %v500
    %5198 = vmatpush2.msra.mxu0 %v499
    %5199 = vmatprep.subr.mxu0 %v492
    %5200 = vmatpush2.msra.mxu0 %v491
    %5201 = vmatprep.subr.mxu0 %v484
    %5202 = vmatpush2.msra.mxu0 %v483
    %5203 = vmatprep.subr.mxu0 %v476
    %5204 = vmatpush2.msra.mxu0 %v475
    %5205 = vmatprep.subr.mxu0 %v468
    %5206 = vmatpush2.msra.mxu0 %v467
    %5207 = vmatprep.subr.mxu0 %v460
    %5208 = vmatpush2.msra.mxu0 %v459
    %5209 = vmatprep.subr.mxu0 %v452
    %5210 = vmatpush2.msra.mxu0 %v451
    %5211 = vmatprep.subr.mxu0 %v444
    %5212 = vmatpush2.msra.mxu0 %v443
    %5213 = vmatprep.subr.mxu0 %v436
    %5214 = vmatpush2.msra.mxu0 %v435
    %5215 = vmatprep.mubr.f32.mxu0 %v4976
    %5216 = vmatmul.mubr.f32.gmra.mxu0 %v4975
    %v5217 = vpop.f32.mrf.mxu0
    %v5218 = vadd.f32 0.0, %v5217
    %v5219 = vpop.f32.mrf.mxu0
    %v5220 = vadd.f32 0.0, %v5219
    %5221 = vmatprep.mubr.f32.mxu0 %v4978
    %5222 = vmatmul.mubr.f32.gmra.mxu0 %v4977
    %v5223 = vpop.f32.mrf.mxu0
    %v5224 = vadd.f32 0.0, %v5223
    %v5225 = vpop.f32.mrf.mxu0
    %v5226 = vadd.f32 0.0, %v5225
    %5227 = vdwg.mxu0
    %5228 = vmatprep.subr.mxu0 %v430
    %5229 = vmatpush1.msra.mxu0 %v429
    %5230 = vmatprep.subr.mxu0 %v422
    %5231 = vmatpush1.msra.mxu0 %v421
    %5232 = vmatprep.subr.mxu0 %v414
    %5233 = vmatpush1.msra.mxu0 %v413
    %5234 = vmatprep.subr.mxu0 %v406
    %5235 = vmatpush1.msra.mxu0 %v405
    %5236 = vmatprep.subr.mxu0 %v398
    %5237 = vmatpush1.msra.mxu0 %v397
    %5238 = vmatprep.subr.mxu0 %v390
    %5239 = vmatpush1.msra.mxu0 %v389
    %5240 = vmatprep.subr.mxu0 %v382
    %5241 = vmatpush1.msra.mxu0 %v381
    %5242 = vmatprep.subr.mxu0 %v374
    %5243 = vmatpush1.msra.mxu0 %v373
    %5244 = vmatprep.subr.mxu0 %v366
    %5245 = vmatpush1.msra.mxu0 %v365
    %5246 = vmatprep.subr.mxu0 %v358
    %5247 = vmatpush1.msra.mxu0 %v357
    %5248 = vmatprep.subr.mxu0 %v350
    %5249 = vmatpush1.msra.mxu0 %v349
    %5250 = vmatprep.subr.mxu0 %v342
    %5251 = vmatpush1.msra.mxu0 %v341
    %5252 = vmatprep.subr.mxu0 %v334
    %5253 = vmatpush1.msra.mxu0 %v333
    %5254 = vmatprep.subr.mxu0 %v326
    %5255 = vmatpush1.msra.mxu0 %v325
    %5256 = vmatprep.subr.mxu0 %v318
    %5257 = vmatpush1.msra.mxu0 %v317
    %5258 = vmatprep.subr.mxu0 %v310
    %5259 = vmatpush1.msra.mxu0 %v309
    %5260 = vmatprep.subr.mxu0 %v558
    %5261 = vmatpush2.msra.mxu0 %v557
    %5262 = vmatprep.subr.mxu0 %v550
    %5263 = vmatpush2.msra.mxu0 %v549
    %5264 = vmatprep.subr.mxu0 %v542
    %5265 = vmatpush2.msra.mxu0 %v541
    %5266 = vmatprep.subr.mxu0 %v534
    %5267 = vmatpush2.msra.mxu0 %v533
    %5268 = vmatprep.subr.mxu0 %v526
    %5269 = vmatpush2.msra.mxu0 %v525
    %5270 = vmatprep.subr.mxu0 %v518
    %5271 = vmatpush2.msra.mxu0 %v517
    %5272 = vmatprep.subr.mxu0 %v510
    %5273 = vmatpush2.msra.mxu0 %v509
    %5274 = vmatprep.subr.mxu0 %v502
    %5275 = vmatpush2.msra.mxu0 %v501
    %5276 = vmatprep.subr.mxu0 %v494
    %5277 = vmatpush2.msra.mxu0 %v493
    %5278 = vmatprep.subr.mxu0 %v486
    %5279 = vmatpush2.msra.mxu0 %v485
    %5280 = vmatprep.subr.mxu0 %v478
    %5281 = vmatpush2.msra.mxu0 %v477
    %5282 = vmatprep.subr.mxu0 %v470
    %5283 = vmatpush2.msra.mxu0 %v469
    %5284 = vmatprep.subr.mxu0 %v462
    %5285 = vmatpush2.msra.mxu0 %v461
    %5286 = vmatprep.subr.mxu0 %v454
    %5287 = vmatpush2.msra.mxu0 %v453
    %5288 = vmatprep.subr.mxu0 %v446
    %5289 = vmatpush2.msra.mxu0 %v445
    %5290 = vmatprep.subr.mxu0 %v438
    %5291 = vmatpush2.msra.mxu0 %v437
    %5292 = vmatprep.mubr.f32.mxu0 %v4976
    %5293 = vmatmul.mubr.f32.gmra.mxu0 %v4975
    %v5294 = vpop.f32.mrf.mxu0
    %v5295 = vadd.f32 0.0, %v5294
    %v5296 = vpop.f32.mrf.mxu0
    %v5297 = vadd.f32 0.0, %v5296
    %5298 = vmatprep.mubr.f32.mxu0 %v4978
    %5299 = vmatmul.mubr.f32.gmra.mxu0 %v4977
    %v5300 = vpop.f32.mrf.mxu0
    %v5301 = vadd.f32 0.0, %v5300
    %v5302 = vpop.f32.mrf.mxu0
    %v5303 = vadd.f32 0.0, %v5302
    %5304 = vdwg.mxu0
    %5305 = vmatprep.subr.mxu0 %v432
    %5306 = vmatpush1.msra.mxu0 %v431
    %5307 = vmatprep.subr.mxu0 %v424
    %5308 = vmatpush1.msra.mxu0 %v423
    %5309 = vmatprep.subr.mxu0 %v416
    %5310 = vmatpush1.msra.mxu0 %v415
    %5311 = vmatprep.subr.mxu0 %v408
    %5312 = vmatpush1.msra.mxu0 %v407
    %5313 = vmatprep.subr.mxu0 %v400
    %5314 = vmatpush1.msra.mxu0 %v399
    %5315 = vmatprep.subr.mxu0 %v392
    %5316 = vmatpush1.msra.mxu0 %v391
    %5317 = vmatprep.subr.mxu0 %v384
    %5318 = vmatpush1.msra.mxu0 %v383
    %5319 = vmatprep.subr.mxu0 %v376
    %5320 = vmatpush1.msra.mxu0 %v375
    %5321 = vmatprep.subr.mxu0 %v368
    %5322 = vmatpush1.msra.mxu0 %v367
    %5323 = vmatprep.subr.mxu0 %v360
    %5324 = vmatpush1.msra.mxu0 %v359
    %5325 = vmatprep.subr.mxu0 %v352
    %5326 = vmatpush1.msra.mxu0 %v351
    %5327 = vmatprep.subr.mxu0 %v344
    %5328 = vmatpush1.msra.mxu0 %v343
    %5329 = vmatprep.subr.mxu0 %v336
    %5330 = vmatpush1.msra.mxu0 %v335
    %5331 = vmatprep.subr.mxu0 %v328
    %5332 = vmatpush1.msra.mxu0 %v327
    %5333 = vmatprep.subr.mxu0 %v320
    %5334 = vmatpush1.msra.mxu0 %v319
    %5335 = vmatprep.subr.mxu0 %v312
    %5336 = vmatpush1.msra.mxu0 %v311
    %5337 = vmatprep.subr.mxu0 %v560
    %5338 = vmatpush2.msra.mxu0 %v559
    %5339 = vmatprep.subr.mxu0 %v552
    %5340 = vmatpush2.msra.mxu0 %v551
    %5341 = vmatprep.subr.mxu0 %v544
    %5342 = vmatpush2.msra.mxu0 %v543
    %5343 = vmatprep.subr.mxu0 %v536
    %5344 = vmatpush2.msra.mxu0 %v535
    %5345 = vmatprep.subr.mxu0 %v528
    %5346 = vmatpush2.msra.mxu0 %v527
    %5347 = vmatprep.subr.mxu0 %v520
    %5348 = vmatpush2.msra.mxu0 %v519
    %5349 = vmatprep.subr.mxu0 %v512
    %5350 = vmatpush2.msra.mxu0 %v511
    %5351 = vmatprep.subr.mxu0 %v504
    %5352 = vmatpush2.msra.mxu0 %v503
    %5353 = vmatprep.subr.mxu0 %v496
    %5354 = vmatpush2.msra.mxu0 %v495
    %5355 = vmatprep.subr.mxu0 %v488
    %5356 = vmatpush2.msra.mxu0 %v487
    %5357 = vmatprep.subr.mxu0 %v480
    %5358 = vmatpush2.msra.mxu0 %v479
    %5359 = vmatprep.subr.mxu0 %v472
    %5360 = vmatpush2.msra.mxu0 %v471
    %5361 = vmatprep.subr.mxu0 %v464
    %5362 = vmatpush2.msra.mxu0 %v463
    %5363 = vmatprep.subr.mxu0 %v456
    %5364 = vmatpush2.msra.mxu0 %v455
    %5365 = vmatprep.subr.mxu0 %v448
    %5366 = vmatpush2.msra.mxu0 %v447
    %5367 = vmatprep.subr.mxu0 %v440
    %5368 = vmatpush2.msra.mxu0 %v439
    %5369 = vmatprep.mubr.f32.mxu0 %v4976
    %5370 = vmatmul.mubr.f32.gmra.mxu0 %v4975
    %v5371 = vpop.f32.mrf.mxu0
    %v5372 = vadd.f32 0.0, %v5371
    %v5373 = vpop.f32.mrf.mxu0
    %v5374 = vadd.f32 0.0, %v5373
    %5375 = vmatprep.mubr.f32.mxu0 %v4978
    %5376 = vmatmul.mubr.f32.gmra.mxu0 %v4977
    %v5377 = vpop.f32.mrf.mxu0
    %v5378 = vadd.f32 0.0, %v5377
    %v5379 = vpop.f32.mrf.mxu0
    %v5380 = vadd.f32 0.0, %v5379
    %5381 = vdwg.mxu0
    %v5382 = vadd.f32 %v5058, %v5141
    %v5383 = vadd.f32 %v5059, %v5143
    %v5384 = vadd.f32 %v5060, %v5218
    %v5385 = vadd.f32 %v5061, %v5220
    %v5386 = vadd.f32 %v5062, %v5295
    %v5387 = vadd.f32 %v5063, %v5297
    %v5388 = vadd.f32 %v5064, %v5372
    %v5389 = vadd.f32 %v5065, %v5374
    %v5390 = vadd.f32 %v5066, %v5147
    %v5391 = vadd.f32 %v5067, %v5149
    %v5392 = vadd.f32 %v5068, %v5224
    %v5393 = vadd.f32 %v5069, %v5226
    %v5394 = vadd.f32 %v5070, %v5301
    %v5395 = vadd.f32 %v5071, %v5303
    %v5396 = vadd.f32 %v5072, %v5378
    %v5397 = vadd.f32 %v5073, %v5380
    %v5398 = vxor.u32 %v5382, 2147483648
    %v5399 = vxor.u32 %v5383, 2147483648
    %v5400 = vxor.u32 %v5390, 2147483648
    %v5401 = vxor.u32 %v5391, 2147483648
    %v5402 = vmul.f32 %v5398, 1.442695
    %v5403 = vpow.pop %v5402
    %v5404 = vmul.f32 %v5399, 1.442695
    %v5405 = vpow.pop %v5404
    %v5406 = vmul.f32 %v5400, 1.442695
    %v5407 = vpow.pop %v5406
    %v5408 = vmul.f32 %v5401, 1.442695
    %v5409 = vpow.pop %v5408
    %v5410 = vadd.f32 %v5403, 1.0
    %v5411 = vadd.f32 %v5405, 1.0
    %v5412 = vadd.f32 %v5407, 1.0
    %v5413 = vadd.f32 %v5409, 1.0
    %v5414 = vrcp.pop %v5410
    %v5415 = vmul.f32 1.0, %v5414
    %v5416 = vrcp.pop %v5411
    %v5417 = vmul.f32 1.0, %v5416
    %v5418 = vrcp.pop %v5412
    %v5419 = vmul.f32 1.0, %v5418
    %v5420 = vrcp.pop %v5413
    %v5421 = vmul.f32 1.0, %v5420
    %v5422 = vxor.u32 %v5384, 2147483648
    %v5423 = vxor.u32 %v5385, 2147483648
    %v5424 = vxor.u32 %v5392, 2147483648
    %v5425 = vxor.u32 %v5393, 2147483648
    %v5426 = vmul.f32 %v5422, 1.442695
    %v5427 = vpow.pop %v5426
    %v5428 = vmul.f32 %v5423, 1.442695
    %v5429 = vpow.pop %v5428
    %v5430 = vmul.f32 %v5424, 1.442695
    %v5431 = vpow.pop %v5430
    %v5432 = vmul.f32 %v5425, 1.442695
    %v5433 = vpow.pop %v5432
    %v5434 = vadd.f32 %v5427, 1.0
    %v5435 = vadd.f32 %v5429, 1.0
    %v5436 = vadd.f32 %v5431, 1.0
    %v5437 = vadd.f32 %v5433, 1.0
    %v5438 = vrcp.pop %v5434
    %v5439 = vmul.f32 1.0, %v5438
    %v5440 = vrcp.pop %v5435
    %v5441 = vmul.f32 1.0, %v5440
    %v5442 = vrcp.pop %v5436
    %v5443 = vmul.f32 1.0, %v5442
    %v5444 = vrcp.pop %v5437
    %v5445 = vmul.f32 1.0, %v5444
    %v5446 = vtanh.pop %v5386
    %v5447 = vtanh.pop %v5387
    %v5448 = vtanh.pop %v5394
    %v5449 = vtanh.pop %v5395
    %v5450 = vxor.u32 %v5388, 2147483648
    %v5451 = vxor.u32 %v5389, 2147483648
    %v5452 = vxor.u32 %v5396, 2147483648
    %v5453 = vxor.u32 %v5397, 2147483648
    %v5454 = vmul.f32 %v5450, 1.442695
    %v5455 = vpow.pop %v5454
    %v5456 = vmul.f32 %v5451, 1.442695
    %v5457 = vpow.pop %v5456
    %v5458 = vmul.f32 %v5452, 1.442695
    %v5459 = vpow.pop %v5458
    %v5460 = vmul.f32 %v5453, 1.442695
    %v5461 = vpow.pop %v5460
    %v5462 = vadd.f32 %v5455, 1.0
    %v5463 = vadd.f32 %v5457, 1.0
    %v5464 = vadd.f32 %v5459, 1.0
    %v5465 = vadd.f32 %v5461, 1.0
    %v5466 = vrcp.pop %v5462
    %v5467 = vmul.f32 1.0, %v5466
    %v5468 = vrcp.pop %v5463
    %v5469 = vmul.f32 1.0, %v5468
    %v5470 = vrcp.pop %v5464
    %v5471 = vmul.f32 1.0, %v5470
    %v5472 = vrcp.pop %v5465
    %v5473 = vmul.f32 1.0, %v5472
    %v5474 = vmul.f32 %v5439, %v4967
    %v5475 = vmul.f32 %v5441, %v4968
    %v5476 = vmul.f32 %v5443, %v4969
    %v5477 = vmul.f32 %v5445, %v4970
    %v5478 = vmul.f32 %v5415, %v5446
    %v5479 = vmul.f32 %v5417, %v5447
    %v5480 = vmul.f32 %v5419, %v5448
    %v5481 = vmul.f32 %v5421, %v5449
    %v5482 = vadd.f32 %v5474, %v5478
    %v5483 = vadd.f32 %v5475, %v5479
    %v5484 = vadd.f32 %v5476, %v5480
    %v5485 = vadd.f32 %v5477, %v5481
    %v5486 = vtanh.pop %v5482
    %v5487 = vtanh.pop %v5483
    %v5488 = vtanh.pop %v5484
    %v5489 = vtanh.pop %v5485
    %v5490 = vmul.f32 %v5467, %v5486
    %v5491 = vmul.f32 %v5469, %v5487
    %v5492 = vmul.f32 %v5471, %v5488
    %v5493 = vmul.f32 %v5473, %v5489
    %5494 = vmatprep.subr.mxu0 0.0
    %5495 = vmatpush1.msra.mxu0 %v1422
    %5496 = vmatprep.subr.mxu0 0.0
    %5497 = vmatpush1.msra.mxu0 %v1421
    %5498 = vmatprep.subr.mxu0 0.0
    %5499 = vmatpush1.msra.mxu0 %v1420
    %5500 = vmatprep.subr.mxu0 0.0
    %5501 = vmatpush1.msra.mxu0 %v1419
    %5502 = vmatprep.subr.mxu0 0.0
    %5503 = vmatpush1.msra.mxu0 %v1418
    %5504 = vmatprep.subr.mxu0 0.0
    %5505 = vmatpush1.msra.mxu0 %v1417
    %5506 = vmatprep.subr.mxu0 0.0
    %5507 = vmatpush1.msra.mxu0 %v1416
    %5508 = vmatprep.subr.mxu0 0.0
    %5509 = vmatpush1.msra.mxu0 %v1415
    %5510 = vmatprep.subr.mxu0 0.0
    %5511 = vmatpush1.msra.mxu0 %v1414
    %5512 = vmatprep.subr.mxu0 0.0
    %5513 = vmatpush1.msra.mxu0 %v1413
    %5514 = vmatprep.subr.mxu0 0.0
    %5515 = vmatpush1.msra.mxu0 %v1412
    %5516 = vmatprep.subr.mxu0 0.0
    %5517 = vmatpush1.msra.mxu0 %v1411
    %5518 = vmatprep.subr.mxu0 0.0
    %5519 = vmatpush1.msra.mxu0 %v1410
    %5520 = vmatprep.subr.mxu0 0.0
    %5521 = vmatpush1.msra.mxu0 %v1409
    %5522 = vmatprep.subr.mxu0 0.0
    %5523 = vmatpush1.msra.mxu0 %v1408
    %5524 = vmatprep.subr.mxu0 0.0
    %5525 = vmatpush1.msra.mxu0 %v1407
    %5526 = vmatprep.subr.mxu0 0.0
    %5527 = vmatpush2.msra.mxu0 %v1438
    %5528 = vmatprep.subr.mxu0 0.0
    %5529 = vmatpush2.msra.mxu0 %v1437
    %5530 = vmatprep.subr.mxu0 0.0
    %5531 = vmatpush2.msra.mxu0 %v1436
    %5532 = vmatprep.subr.mxu0 0.0
    %5533 = vmatpush2.msra.mxu0 %v1435
    %5534 = vmatprep.subr.mxu0 0.0
    %5535 = vmatpush2.msra.mxu0 %v1434
    %5536 = vmatprep.subr.mxu0 0.0
    %5537 = vmatpush2.msra.mxu0 %v1433
    %5538 = vmatprep.subr.mxu0 0.0
    %5539 = vmatpush2.msra.mxu0 %v1432
    %5540 = vmatprep.subr.mxu0 0.0
    %5541 = vmatpush2.msra.mxu0 %v1431
    %5542 = vmatprep.subr.mxu0 0.0
    %5543 = vmatpush2.msra.mxu0 %v1430
    %5544 = vmatprep.subr.mxu0 0.0
    %5545 = vmatpush2.msra.mxu0 %v1429
    %5546 = vmatprep.subr.mxu0 0.0
    %5547 = vmatpush2.msra.mxu0 %v1428
    %5548 = vmatprep.subr.mxu0 0.0
    %5549 = vmatpush2.msra.mxu0 %v1427
    %5550 = vmatprep.subr.mxu0 0.0
    %5551 = vmatpush2.msra.mxu0 %v1426
    %5552 = vmatprep.subr.mxu0 0.0
    %5553 = vmatpush2.msra.mxu0 %v1425
    %5554 = vmatprep.subr.mxu0 0.0
    %5555 = vmatpush2.msra.mxu0 %v1424
    %5556 = vmatprep.subr.mxu0 0.0
    %5557 = vmatpush2.msra.mxu0 %v1423
    %5558 = vmatprep.mubr.f32.mxu0 %v5491
    %5559 = vmatmul.mubr.f32.gmra.mxu0 %v5490
    %v5560 = vpop.f32.mrf.mxu0
    %v5561 = vadd.f32 %v1888, %v5560
    %v5562 = vpop.f32.mrf.mxu0
    %5563 = vmatprep.mubr.f32.mxu0 %v5493
    %5564 = vmatmul.mubr.f32.gmra.mxu0 %v5492
    %v5565 = vpop.f32.mrf.mxu0
    %v5566 = vadd.f32 %v1888, %v5565
    %v5567 = vpop.f32.mrf.mxu0
    %5568 = vdwg.mxu0
    %s5569 = scalar_lea.vmem %s6, 112
    %5570 = vst [vmem:[%s5569] sm:$0xff] %v5561
    %5571 = vst [vmem:[%s5569 + $0x8] sm:$0xff] %v5566
    %5572 = vst [vmem:[#allocation2] sm:$0xff] %v5490
    %5573 = vst [vmem:[#allocation2 + $0x8] sm:$0xff] %v5491
    %5574 = vst [vmem:[#allocation2 + $0x10] sm:$0xff] %v5492
    %5575 = vst [vmem:[#allocation2 + $0x18] sm:$0xff] %v5493
    %5576 = vst [vmem:[#allocation3] sm:$0xff] %v5482
    %5577 = vst [vmem:[#allocation3 + $0x8] sm:$0xff] %v5483
    %5578 = vst [vmem:[#allocation3 + $0x10] sm:$0xff] %v5484
    %5579 = vst [vmem:[#allocation3 + $0x18] sm:$0xff] %v5485
    // Predicated region
    $region34: #{auto_encoder_forward.3} parent=1 // pred_check
      _
    $region35: #{auto_encoder_forward.3} parent=1 // pred_check_branch
      %5581 = sbr.rel (0) target = $region37
    $region36: #{auto_encoder_forward.3} parent=1 // pred_region
      _
    $region37: #{auto_encoder_forward.3} parent=1 // pred_fallthru
      _
    // Predicated region
    $region38: #{auto_encoder_forward.3} parent=1 // pred_check
      _
    $region39: #{auto_encoder_forward.3} parent=1 // pred_check_branch
      %5583 = sbr.rel (0) target = $region41
    $region40: #{auto_encoder_forward.3} parent=1 // pred_region
      _
    $region41: #{auto_encoder_forward.3} parent=1 // pred_fallthru
      _
    %5584 = vsyncpa [#allocation6], 1

</llo_original>
